<compile_context>
chip_gen: v7x
topology: tpu7x:2x2x1
jax: 0.10.0
libtpu: 0.0.40
codegen_flags: <defaults>
</compile_context>

<pallas_src>
import functools

import jax
import jax.numpy as jnp
from jax import lax
from jax.experimental import pallas as pl
from jax.experimental.pallas import tpu as pltpu


LANE = 128
_UNROLL_MAX_BLOCKS = 8          # static unroll up to this many ResNet blocks


def _round_up(n, m):
    return ((n + m - 1) // m) * m


# ---------------------------------------------------------------------------
# Kernel
# ---------------------------------------------------------------------------
def cmlp_kernel(x_ref, c_ref,
                wx_ref, bx_ref, wc_ref, bc_ref,
                w1x_ref, w1c_ref, b1_ref,
                w2x_ref, w2c_ref, b2_ref,
                wox_ref, woc_ref, bo_ref,
                o_ref, *, n_blocks, unroll):
    """One batch tile of the full CMLP forward.

    x_ref: (TM, in_dim) cdt      c_ref: (TM, c_dim) cdt
    wx_ref: (in_dim, H) cdt      wc_ref: (c_dim, H) cdt      (H = hid_dim // 2)
    w1x/w1c/w2x/w2c: (L, H, H) cdt  -- W1/W2 transposed and split into the
                                       rows multiplying hx resp. hc (no concat)
    wox/woc: (H, out_p) cdt      biases: f32       o_ref: (TM, out_p) f32
    """
    f32 = jnp.float32
    cdt = wx_ref.dtype

    # Input projections (fc_in_x / fc_in_c) + ReLU, f32 MXU accumulation.
    hx = jnp.dot(x_ref[...], wx_ref[...], preferred_element_type=f32) + bx_ref[...]
    hx = jnp.maximum(hx, 0.0)                                   # (TM, H) f32
    hc = jnp.dot(c_ref[...], wc_ref[...], preferred_element_type=f32) + bc_ref[...]
    hc = jnp.maximum(hc, 0.0)                                   # (TM, H) f32
    hc_c = hc.astype(cdt)        # conditioning features, reused by every block

    def block(l, hx):
        # cat([hx, hc]) @ W1.T  ==  hx @ W1x + hc @ W1c   (no VMEM concat)
        h = (jnp.dot(hx.astype(cdt), w1x_ref[l], preferred_element_type=f32)
             + jnp.dot(hc_c, w1c_ref[l], preferred_element_type=f32)
             + b1_ref[l])
        h = jnp.maximum(h, 0.0)
        y = (jnp.dot(h.astype(cdt), w2x_ref[l], preferred_element_type=f32)
             + jnp.dot(hc_c, w2c_ref[l], preferred_element_type=f32)
             + b2_ref[l])
        return jnp.maximum(y + hx, 0.0)           # residual + ReLU, in f32

    if unroll:
        for l in range(n_blocks):                 # static l → static ref slices
            hx = block(l, hx)
    else:
        hx = lax.fori_loop(0, n_blocks, block, hx)

    # Output projection (last_activation = identity).
    out = (jnp.dot(hx.astype(cdt), wox_ref[...], preferred_element_type=f32)
           + jnp.dot(hc_c, woc_ref[...], preferred_element_type=f32)
           + bo_ref[...])
    o_ref[...] = out.astype(o_ref.dtype)


# ---------------------------------------------------------------------------
# One-time weight preprocessing (NOT per forward call)
# ---------------------------------------------------------------------------
def prepare_cmlp_params(params, *, compute_dtype=jnp.bfloat16,
                        activation="relu", last_activation=None,
                        use_batchnorms=False, use_lipschitz_norm=False):
    """Convert PyTorch-layout params ((out, in) weights) into kernel layout."""
    if activation != "relu" or last_activation is not None:
        raise NotImplementedError("only activation='relu', last_activation=None")
    if use_batchnorms or use_lipschitz_norm:
        raise NotImplementedError("BatchNorm1d / LipschitzLinear not implemented")

    (wx, bx, wc, bc, w1s, b1s, w2s, b2s, wo, bo) = params
    half = wx.shape[0]                        # hid_dim // 2
    if half % LANE != 0:
        raise ValueError(f"hid_dim // 2 = {half} must be a multiple of {LANE}")
    L = w1s.shape[0]
    out_dim = wo.shape[0]
    out_p = _round_up(out_dim, LANE)
    f32, cdt = jnp.float32, compute_dtype

    w1t = jnp.transpose(w1s, (0, 2, 1)).astype(cdt)          # (L, 2H, H)
    w2t = jnp.transpose(w2s, (0, 2, 1)).astype(cdt)
    wot = jnp.pad(wo.T.astype(cdt), ((0, 0), (0, out_p - out_dim)))  # (2H, out_p)

    return {
        "wx": wx.T.astype(cdt),                              # (in_dim, H)
        "bx": bx.reshape(1, half).astype(f32),
        "wc": wc.T.astype(cdt),                              # (c_dim, H)
        "bc": bc.reshape(1, half).astype(f32),
        "w1x": w1t[:, :half, :], "w1c": w1t[:, half:, :],    # (L, H, H) each
        "b1": b1s.reshape(L, 1, half).astype(f32),
        "w2x": w2t[:, :half, :], "w2c": w2t[:, half:, :],
        "b2": b2s.reshape(L, 1, half).astype(f32),
        "wox": wot[:half, :], "woc": wot[half:, :],          # (H, out_p) each
        "bo": jnp.pad(bo.reshape(1, out_dim).astype(f32),
                      ((0, 0), (0, out_p - out_dim))),
    }


# ---------------------------------------------------------------------------
# Forward wrapper
# ---------------------------------------------------------------------------
def cmlp_forward(x, c, prep, *, out_dim, block_m=None, unroll_blocks=None):
    """x: (B, in_dim), c: (B, c_dim); prep from prepare_cmlp_params()."""
    B, in_dim = x.shape
    c_dim = c.shape[1]
    half = prep["wx"].shape[1]
    L = prep["w1x"].shape[0]
    out_p = prep["wox"].shape[1]
    cdt = prep["wx"].dtype
    assert prep["wx"].shape[0] == in_dim and prep["wc"].shape[0] == c_dim

    # Batch tile: MXU-native 128 by default; 256 for large batches to fill the
    # 256-wide MXU M dim on v6e/v7x and amortize per-grid-step overhead.
    if block_m is None:
        block_m = 256 if B >= 2048 else 128
    TM = min(block_m, _round_up(B, 8))
    B_p = _round_up(B, TM)
    grid = (B_p // TM,)

    if unroll_blocks is None:
        unroll_blocks = L <= _UNROLL_MAX_BLOCKS

    # Per-call activation prep only: pad batch (padded rows compute relu(bias)
    # garbage that is sliced off below -- do not remove the slice) and cast to
    # the compute dtype. Feature dims stay un-padded (full-extent block dims),
    # so input DMA traffic is proportional to the real in/c dims.
    x_k = jnp.pad(x, ((0, B_p - B), (0, 0))).astype(cdt)
    c_k = jnp.pad(c, ((0, B_p - B), (0, 0))).astype(cdt)

    batch_spec = lambda w: pl.BlockSpec((TM, w), lambda i: (i, 0))

    def make_specs(buffered):
        # Constant index maps keep weights resident across the grid (no re-DMA);
        # Buffered(1) also drops their useless second pipeline buffer (halves
        # resident weight VMEM -- matters most on v7x with 64 MiB/TC).
        kw = {"pipeline_mode": pl.Buffered(1)} if buffered else {}
        const2d = lambda s: pl.BlockSpec(s, lambda i: (0, 0), **kw)
        const3d = lambda s: pl.BlockSpec(s, lambda i: (0, 0, 0), **kw)
        return [
            batch_spec(in_dim),              # x  (pipelined per batch tile)
            batch_spec(c_dim),               # c
            const2d((in_dim, half)),         # Wx   (resident across grid)
            const2d((1, half)),              # bx
            const2d((c_dim, half)),          # Wc
            const2d((1, half)),              # bc
            const3d((L, half, half)),        # W1 (hx half)
            const3d((L, half, half)),        # W1 (hc half)
            const3d((L, 1, half)),           # b1
            const3d((L, half, half)),        # W2 (hx half)
            const3d((L, half, half)),        # W2 (hc half)
            const3d((L, 1, half)),           # b2
            const2d((half, out_p)),          # Wo (hx half)
            const2d((half, out_p)),          # Wo (hc half)
            const2d((1, out_p)),             # bo
        ]

    # VMEM budget from the actual footprint (scoped defaults: 16 MiB v5e,
    # 32 MiB v6e/v7x). Weights single-buffered, batch tiles double-buffered.
    itemsize = jnp.dtype(cdt).itemsize
    weight_bytes = sum(int(v.size) * jnp.dtype(v.dtype).itemsize
                       for v in prep.values())
    tile_bytes = TM * (in_dim + c_dim) * itemsize + TM * out_p * 4
    inter_bytes = 8 * TM * half * 4            # hx/hc/h/y f32 working set
    vmem_limit = int(1.5 * (weight_bytes + 2 * tile_bytes + inter_bytes)) + (8 << 20)
    vmem_limit = max(32 << 20, min(vmem_limit, 96 << 20))
    # TODO(synk): for very large hid_dim on v7x (64 MiB/TC), stream per-block
    # W1/W2 over an inner 'arbitrary' grid axis instead of keeping them resident.

    kernel = functools.partial(cmlp_kernel, n_blocks=L, unroll=unroll_blocks)
    args = (x_k, c_k,
            prep["wx"], prep["bx"], prep["wc"], prep["bc"],
            prep["w1x"], prep["w1c"], prep["b1"],
            prep["w2x"], prep["w2c"], prep["b2"],
            prep["wox"], prep["woc"], prep["bo"])

    def call(buffered):
        return pl.pallas_call(
            kernel,
            out_shape=jax.ShapeDtypeStruct((B_p, out_p), jnp.float32),
            grid=grid,
            in_specs=make_specs(buffered),
            out_specs=batch_spec(out_p),
            compiler_params=pltpu.CompilerParams(
                dimension_semantics=("parallel",),
                vmem_limit_bytes=vmem_limit),
        )(*args)

    try:
        out = call(buffered=True)
    except Exception:
        # Fallback for jax versions where BlockSpec rejects pipeline_mode /
        # single-buffering; semantics are identical (just more weight VMEM).
        out = call(buffered=False)

    return out[:B, :out_dim]


# ---------------------------------------------------------------------------
# Parameter init (mimics nn.Linear) and pure-JAX reference
# ---------------------------------------------------------------------------
def init_cmlp_params(key, in_dim, c_dim, out_dim, hid_dim, n_resnet_blocks):
    """Deterministic init mimicking nn.Linear's U(-1/sqrt(fan_in), 1/sqrt(fan_in))."""
    half = hid_dim // 2

    def linear(k, fan_in, fan_out):
        kw, kb = jax.random.split(k)
        bound = 1.0 / jnp.sqrt(fan_in)
        w = jax.random.uniform(kw, (fan_out, fan_in), jnp.float32, -bound, bound)
        b = jax.random.uniform(kb, (fan_out,), jnp.float32, -bound, bound)
        return w, b

    keys = jax.random.split(key, 3 + 2 * n_resnet_blocks)
    wx, bx = linear(keys[0], in_dim, half)
    wc, bc = linear(keys[1], c_dim, half)
    w1s, b1s, w2s, b2s = [], [], [], []
    for l in range(n_resnet_blocks):
        w1, b1 = linear(keys[2 + 2 * l], hid_dim, half)
        w2, b2 = linear(keys[3 + 2 * l], hid_dim, half)
        w1s.append(w1); b1s.append(b1); w2s.append(w2); b2s.append(b2)
    wo, bo = linear(keys[2 + 2 * n_resnet_blocks], hid_dim, out_dim)
    return (wx, bx, wc, bc,
            jnp.stack(w1s), jnp.stack(b1s), jnp.stack(w2s), jnp.stack(b2s),
            wo, bo)


def cmlp_ref(x, c, params, *, n_resnet_blocks, compute_dtype=None):
    """Pure-JAX reference of the PyTorch CMLP forward.

    If compute_dtype is given, matmul operands are rounded to it first
    (mirrors the kernel's mixed-precision policy: bf16 operands, f32 accum).
    """
    (wx, bx, wc, bc, w1s, b1s, w2s, b2s, wo, bo) = params
    if compute_dtype is None:
        q = lambda a: a.astype(jnp.float32)
    else:
        q = lambda a: a.astype(compute_dtype).astype(jnp.float32)
    relu = lambda a: jnp.maximum(a, 0.0)

    hx = relu(q(x) @ q(wx).T + bx)
    hc = relu(q(c) @ q(wc).T + bc)
    for l in range(n_resnet_blocks):
        h = relu(jnp.concatenate([q(hx), q(hc)], axis=1) @ q(w1s[l]).T + b1s[l])
        y = jnp.concatenate([q(h), q(hc)], axis=1) @ q(w2s[l]).T + b2s[l]
        hx = relu(y + hx)
    return jnp.concatenate([q(hx), q(hc)], axis=1) @ q(wo).T + bo


if __name__ == "__main__":
    key = jax.random.PRNGKey(0)
    kx, kc, kp = jax.random.split(key, 3)

    # Small but lane/MXU-friendly shapes: hid_dim//2 = 128, batch tiled by 128.
    batch, in_dim, c_dim, out_dim = 256, 8, 8, 4
    hid_dim, n_blocks = 256, 2

    x = jax.random.normal(kx, (batch, in_dim), jnp.float32)
    c = jax.random.normal(kc, (batch, c_dim), jnp.float32)
    params = init_cmlp_params(kp, in_dim, c_dim, out_dim, hid_dim, n_blocks)

    # One-time weight preprocessing; reuse `prep` across forward calls.
    prep = prepare_cmlp_params(params, compute_dtype=jnp.bfloat16)

    out = cmlp_forward(x, c, prep, out_dim=out_dim)
    out = jax.block_until_ready(out)
    assert out.shape == (batch, out_dim)

    # Tight check against a reference that uses the same mixed-precision policy.
    ref_mixed = cmlp_ref(x, c, params, n_resnet_blocks=n_blocks,
                         compute_dtype=jnp.bfloat16)
    assert jnp.allclose(out, ref_mixed, atol=1e-3, rtol=1e-3), float(
        jnp.max(jnp.abs(out - ref_mixed)))

    # Loose check against the pure-f32 module semantics (bf16 rounding only).
    # For f32 parity, use prepare_cmlp_params(..., compute_dtype=jnp.float32).
    ref_f32 = cmlp_ref(x, c, params, n_resnet_blocks=n_blocks)
    assert jnp.allclose(out, ref_f32, atol=5e-2, rtol=5e-2), float(
        jnp.max(jnp.abs(out - ref_f32)))

    # Exercise the fori_loop (dynamic block-index) path used for large L.
    out_loop = cmlp_forward(x, c, prep, out_dim=out_dim, unroll_blocks=False)
    out_loop = jax.block_until_ready(out_loop)
    assert jnp.allclose(out, out_loop, atol=1e-6, rtol=1e-6), float(
        jnp.max(jnp.abs(out - out_loop)))

    print("KERNEL_OK")
</pallas_src>

<mosaic_0001>
module attributes {stable_mosaic.version = 11 : i64} {
  func.func @cmlp_kernel(%arg0: i32, %arg1: memref<128x8xbf16, #tpu.memory_space<vmem>>, %arg2: memref<128x8xbf16, #tpu.memory_space<vmem>>, %arg3: memref<8x128xbf16, #tpu.memory_space<vmem>>, %arg4: memref<1x128xf32, #tpu.memory_space<vmem>>, %arg5: memref<8x128xbf16, #tpu.memory_space<vmem>>, %arg6: memref<1x128xf32, #tpu.memory_space<vmem>>, %arg7: memref<2x128x128xbf16, #tpu.memory_space<vmem>>, %arg8: memref<2x128x128xbf16, #tpu.memory_space<vmem>>, %arg9: memref<2x1x128xf32, #tpu.memory_space<vmem>>, %arg10: memref<2x128x128xbf16, #tpu.memory_space<vmem>>, %arg11: memref<2x128x128xbf16, #tpu.memory_space<vmem>>, %arg12: memref<2x1x128xf32, #tpu.memory_space<vmem>>, %arg13: memref<128x128xbf16, #tpu.memory_space<vmem>>, %arg14: memref<128x128xbf16, #tpu.memory_space<vmem>>, %arg15: memref<1x128xf32, #tpu.memory_space<vmem>>, %arg16: memref<128x128xf32, #tpu.memory_space<vmem>>) attributes {dimension_semantics = [#tpu.dimension_semantics<parallel>], iteration_bounds = array<i64: 2>, scalar_prefetch = 0 : i64, scratch_operands = 0 : i64, tpu.core_type = #tpu.core_type<tc>, window_params = [{transform_indices = @transform_0, window_bounds = array<i64: 128, 8>}, {transform_indices = @transform_1, window_bounds = array<i64: 128, 8>}, {pipeline_mode = #tpu.pipeline_mode<synchronous>, transform_indices = @transform_2, window_bounds = array<i64: 8, 128>}, {pipeline_mode = #tpu.pipeline_mode<synchronous>, transform_indices = @transform_3, window_bounds = array<i64: 1, 128>}, {pipeline_mode = #tpu.pipeline_mode<synchronous>, transform_indices = @transform_4, window_bounds = array<i64: 8, 128>}, {pipeline_mode = #tpu.pipeline_mode<synchronous>, transform_indices = @transform_5, window_bounds = array<i64: 1, 128>}, {pipeline_mode = #tpu.pipeline_mode<synchronous>, transform_indices = @transform_6, window_bounds = array<i64: 2, 128, 128>}, {pipeline_mode = #tpu.pipeline_mode<synchronous>, transform_indices = @transform_7, window_bounds = array<i64: 2, 128, 128>}, {pipeline_mode = #tpu.pipeline_mode<synchronous>, transform_indices = @transform_8, window_bounds = array<i64: 2, 1, 128>}, {pipeline_mode = #tpu.pipeline_mode<synchronous>, transform_indices = @transform_9, window_bounds = array<i64: 2, 128, 128>}, {pipeline_mode = #tpu.pipeline_mode<synchronous>, transform_indices = @transform_10, window_bounds = array<i64: 2, 128, 128>}, {pipeline_mode = #tpu.pipeline_mode<synchronous>, transform_indices = @transform_11, window_bounds = array<i64: 2, 1, 128>}, {pipeline_mode = #tpu.pipeline_mode<synchronous>, transform_indices = @transform_12, window_bounds = array<i64: 128, 128>}, {pipeline_mode = #tpu.pipeline_mode<synchronous>, transform_indices = @transform_13, window_bounds = array<i64: 128, 128>}, {pipeline_mode = #tpu.pipeline_mode<synchronous>, transform_indices = @transform_14, window_bounds = array<i64: 1, 128>}, {transform_indices = @transform_15, window_bounds = array<i64: 128, 128>}]} {
    %c0 = arith.constant 0 : index
    %c0_0 = arith.constant 0 : index
    %0 = vector.load %arg1[%c0, %c0_0] : memref<128x8xbf16, #tpu.memory_space<vmem>>, vector<128x8xbf16>
    %c0_1 = arith.constant 0 : index
    %c0_2 = arith.constant 0 : index
    %1 = vector.load %arg3[%c0_1, %c0_2] : memref<8x128xbf16, #tpu.memory_space<vmem>>, vector<8x128xbf16>
    %cst = arith.constant dense<0.000000e+00> : vector<128x128xf32>
    %2 = tpu.matmul %0, %1, %cst {dimension_numbers = #tpu.dot_dimension_numbers<[1], [0], [0], [1], [0, 0, 1, 1], [], []>} : vector<128x8xbf16>, vector<8x128xbf16>, vector<128x128xf32> -> vector<128x128xf32>
    %c0_3 = arith.constant 0 : index
    %c0_4 = arith.constant 0 : index
    %3 = vector.load %arg4[%c0_3, %c0_4] : memref<1x128xf32, #tpu.memory_space<vmem>>, vector<1x128xf32>
    %4 = vector.broadcast %3 : vector<1x128xf32> to vector<128x128xf32>
    %5 = arith.addf %2, %4 : vector<128x128xf32>
    %cst_5 = arith.constant 0.000000e+00 : f32
    %6 = vector.broadcast %cst_5 : f32 to vector<128x128xf32>
    %7 = arith.maximumf %5, %6 : vector<128x128xf32>
    %c0_6 = arith.constant 0 : index
    %c0_7 = arith.constant 0 : index
    %8 = vector.load %arg2[%c0_6, %c0_7] : memref<128x8xbf16, #tpu.memory_space<vmem>>, vector<128x8xbf16>
    %c0_8 = arith.constant 0 : index
    %c0_9 = arith.constant 0 : index
    %9 = vector.load %arg5[%c0_8, %c0_9] : memref<8x128xbf16, #tpu.memory_space<vmem>>, vector<8x128xbf16>
    %cst_10 = arith.constant dense<0.000000e+00> : vector<128x128xf32>
    %10 = tpu.matmul %8, %9, %cst_10 {dimension_numbers = #tpu.dot_dimension_numbers<[1], [0], [0], [1], [0, 0, 1, 1], [], []>} : vector<128x8xbf16>, vector<8x128xbf16>, vector<128x128xf32> -> vector<128x128xf32>
    %c0_11 = arith.constant 0 : index
    %c0_12 = arith.constant 0 : index
    %11 = vector.load %arg6[%c0_11, %c0_12] : memref<1x128xf32, #tpu.memory_space<vmem>>, vector<1x128xf32>
    %12 = vector.broadcast %11 : vector<1x128xf32> to vector<128x128xf32>
    %13 = arith.addf %10, %12 : vector<128x128xf32>
    %cst_13 = arith.constant 0.000000e+00 : f32
    %14 = vector.broadcast %cst_13 : f32 to vector<128x128xf32>
    %15 = arith.maximumf %13, %14 : vector<128x128xf32>
    %16 = arith.truncf %15 : vector<128x128xf32> to vector<128x128xbf16>
    %17 = arith.truncf %7 : vector<128x128xf32> to vector<128x128xbf16>
    %c0_14 = arith.constant 0 : index
    %c0_15 = arith.constant 0 : index
    %c0_16 = arith.constant 0 : index
    %18 = vector.load %arg7[%c0_14, %c0_15, %c0_16] : memref<2x128x128xbf16, #tpu.memory_space<vmem>>, vector<1x128x128xbf16>
    %19 = vector.shape_cast %18 : vector<1x128x128xbf16> to vector<128x128xbf16>
    %cst_17 = arith.constant dense<0.000000e+00> : vector<128x128xf32>
    %20 = tpu.matmul %17, %19, %cst_17 {dimension_numbers = #tpu.dot_dimension_numbers<[1], [0], [0], [1], [0, 0, 1, 1], [], []>} : vector<128x128xbf16>, vector<128x128xbf16>, vector<128x128xf32> -> vector<128x128xf32>
    %c0_18 = arith.constant 0 : index
    %c0_19 = arith.constant 0 : index
    %c0_20 = arith.constant 0 : index
    %21 = vector.load %arg8[%c0_18, %c0_19, %c0_20] : memref<2x128x128xbf16, #tpu.memory_space<vmem>>, vector<1x128x128xbf16>
    %22 = vector.shape_cast %21 : vector<1x128x128xbf16> to vector<128x128xbf16>
    %cst_21 = arith.constant dense<0.000000e+00> : vector<128x128xf32>
    %23 = tpu.matmul %16, %22, %cst_21 {dimension_numbers = #tpu.dot_dimension_numbers<[1], [0], [0], [1], [0, 0, 1, 1], [], []>} : vector<128x128xbf16>, vector<128x128xbf16>, vector<128x128xf32> -> vector<128x128xf32>
    %24 = arith.addf %20, %23 : vector<128x128xf32>
    %c0_22 = arith.constant 0 : index
    %c0_23 = arith.constant 0 : index
    %c0_24 = arith.constant 0 : index
    %25 = vector.load %arg9[%c0_22, %c0_23, %c0_24] : memref<2x1x128xf32, #tpu.memory_space<vmem>>, vector<1x1x128xf32>
    %26 = vector.shape_cast %25 : vector<1x1x128xf32> to vector<1x128xf32>
    %27 = vector.broadcast %26 : vector<1x128xf32> to vector<128x128xf32>
    %28 = arith.addf %24, %27 : vector<128x128xf32>
    %cst_25 = arith.constant 0.000000e+00 : f32
    %29 = vector.broadcast %cst_25 : f32 to vector<128x128xf32>
    %30 = arith.maximumf %28, %29 : vector<128x128xf32>
    %31 = arith.truncf %30 : vector<128x128xf32> to vector<128x128xbf16>
    %c0_26 = arith.constant 0 : index
    %c0_27 = arith.constant 0 : index
    %c0_28 = arith.constant 0 : index
    %32 = vector.load %arg10[%c0_26, %c0_27, %c0_28] : memref<2x128x128xbf16, #tpu.memory_space<vmem>>, vector<1x128x128xbf16>
    %33 = vector.shape_cast %32 : vector<1x128x128xbf16> to vector<128x128xbf16>
    %cst_29 = arith.constant dense<0.000000e+00> : vector<128x128xf32>
    %34 = tpu.matmul %31, %33, %cst_29 {dimension_numbers = #tpu.dot_dimension_numbers<[1], [0], [0], [1], [0, 0, 1, 1], [], []>} : vector<128x128xbf16>, vector<128x128xbf16>, vector<128x128xf32> -> vector<128x128xf32>
    %c0_30 = arith.constant 0 : index
    %c0_31 = arith.constant 0 : index
    %c0_32 = arith.constant 0 : index
    %35 = vector.load %arg11[%c0_30, %c0_31, %c0_32] : memref<2x128x128xbf16, #tpu.memory_space<vmem>>, vector<1x128x128xbf16>
    %36 = vector.shape_cast %35 : vector<1x128x128xbf16> to vector<128x128xbf16>
    %cst_33 = arith.constant dense<0.000000e+00> : vector<128x128xf32>
    %37 = tpu.matmul %16, %36, %cst_33 {dimension_numbers = #tpu.dot_dimension_numbers<[1], [0], [0], [1], [0, 0, 1, 1], [], []>} : vector<128x128xbf16>, vector<128x128xbf16>, vector<128x128xf32> -> vector<128x128xf32>
    %38 = arith.addf %34, %37 : vector<128x128xf32>
    %c0_34 = arith.constant 0 : index
    %c0_35 = arith.constant 0 : index
    %c0_36 = arith.constant 0 : index
    %39 = vector.load %arg12[%c0_34, %c0_35, %c0_36] : memref<2x1x128xf32, #tpu.memory_space<vmem>>, vector<1x1x128xf32>
    %40 = vector.shape_cast %39 : vector<1x1x128xf32> to vector<1x128xf32>
    %41 = vector.broadcast %40 : vector<1x128xf32> to vector<128x128xf32>
    %42 = arith.addf %38, %41 : vector<128x128xf32>
    %43 = arith.addf %42, %7 : vector<128x128xf32>
    %cst_37 = arith.constant 0.000000e+00 : f32
    %44 = vector.broadcast %cst_37 : f32 to vector<128x128xf32>
    %45 = arith.maximumf %43, %44 : vector<128x128xf32>
    %46 = arith.truncf %45 : vector<128x128xf32> to vector<128x128xbf16>
    %c1 = arith.constant 1 : index
    %c0_38 = arith.constant 0 : index
    %c0_39 = arith.constant 0 : index
    %47 = vector.load %arg7[%c1, %c0_38, %c0_39] : memref<2x128x128xbf16, #tpu.memory_space<vmem>>, vector<1x128x128xbf16>
    %48 = vector.shape_cast %47 : vector<1x128x128xbf16> to vector<128x128xbf16>
    %cst_40 = arith.constant dense<0.000000e+00> : vector<128x128xf32>
    %49 = tpu.matmul %46, %48, %cst_40 {dimension_numbers = #tpu.dot_dimension_numbers<[1], [0], [0], [1], [0, 0, 1, 1], [], []>} : vector<128x128xbf16>, vector<128x128xbf16>, vector<128x128xf32> -> vector<128x128xf32>
    %c1_41 = arith.constant 1 : index
    %c0_42 = arith.constant 0 : index
    %c0_43 = arith.constant 0 : index
    %50 = vector.load %arg8[%c1_41, %c0_42, %c0_43] : memref<2x128x128xbf16, #tpu.memory_space<vmem>>, vector<1x128x128xbf16>
    %51 = vector.shape_cast %50 : vector<1x128x128xbf16> to vector<128x128xbf16>
    %cst_44 = arith.constant dense<0.000000e+00> : vector<128x128xf32>
    %52 = tpu.matmul %16, %51, %cst_44 {dimension_numbers = #tpu.dot_dimension_numbers<[1], [0], [0], [1], [0, 0, 1, 1], [], []>} : vector<128x128xbf16>, vector<128x128xbf16>, vector<128x128xf32> -> vector<128x128xf32>
    %53 = arith.addf %49, %52 : vector<128x128xf32>
    %c1_45 = arith.constant 1 : index
    %c0_46 = arith.constant 0 : index
    %c0_47 = arith.constant 0 : index
    %54 = vector.load %arg9[%c1_45, %c0_46, %c0_47] : memref<2x1x128xf32, #tpu.memory_space<vmem>>, vector<1x1x128xf32>
    %55 = vector.shape_cast %54 : vector<1x1x128xf32> to vector<1x128xf32>
    %56 = vector.broadcast %55 : vector<1x128xf32> to vector<128x128xf32>
    %57 = arith.addf %53, %56 : vector<128x128xf32>
    %cst_48 = arith.constant 0.000000e+00 : f32
    %58 = vector.broadcast %cst_48 : f32 to vector<128x128xf32>
    %59 = arith.maximumf %57, %58 : vector<128x128xf32>
    %60 = arith.truncf %59 : vector<128x128xf32> to vector<128x128xbf16>
    %c1_49 = arith.constant 1 : index
    %c0_50 = arith.constant 0 : index
    %c0_51 = arith.constant 0 : index
    %61 = vector.load %arg10[%c1_49, %c0_50, %c0_51] : memref<2x128x128xbf16, #tpu.memory_space<vmem>>, vector<1x128x128xbf16>
    %62 = vector.shape_cast %61 : vector<1x128x128xbf16> to vector<128x128xbf16>
    %cst_52 = arith.constant dense<0.000000e+00> : vector<128x128xf32>
    %63 = tpu.matmul %60, %62, %cst_52 {dimension_numbers = #tpu.dot_dimension_numbers<[1], [0], [0], [1], [0, 0, 1, 1], [], []>} : vector<128x128xbf16>, vector<128x128xbf16>, vector<128x128xf32> -> vector<128x128xf32>
    %c1_53 = arith.constant 1 : index
    %c0_54 = arith.constant 0 : index
    %c0_55 = arith.constant 0 : index
    %64 = vector.load %arg11[%c1_53, %c0_54, %c0_55] : memref<2x128x128xbf16, #tpu.memory_space<vmem>>, vector<1x128x128xbf16>
    %65 = vector.shape_cast %64 : vector<1x128x128xbf16> to vector<128x128xbf16>
    %cst_56 = arith.constant dense<0.000000e+00> : vector<128x128xf32>
    %66 = tpu.matmul %16, %65, %cst_56 {dimension_numbers = #tpu.dot_dimension_numbers<[1], [0], [0], [1], [0, 0, 1, 1], [], []>} : vector<128x128xbf16>, vector<128x128xbf16>, vector<128x128xf32> -> vector<128x128xf32>
    %67 = arith.addf %63, %66 : vector<128x128xf32>
    %c1_57 = arith.constant 1 : index
    %c0_58 = arith.constant 0 : index
    %c0_59 = arith.constant 0 : index
    %68 = vector.load %arg12[%c1_57, %c0_58, %c0_59] : memref<2x1x128xf32, #tpu.memory_space<vmem>>, vector<1x1x128xf32>
    %69 = vector.shape_cast %68 : vector<1x1x128xf32> to vector<1x128xf32>
    %70 = vector.broadcast %69 : vector<1x128xf32> to vector<128x128xf32>
    %71 = arith.addf %67, %70 : vector<128x128xf32>
    %72 = arith.addf %71, %45 : vector<128x128xf32>
    %cst_60 = arith.constant 0.000000e+00 : f32
    %73 = vector.broadcast %cst_60 : f32 to vector<128x128xf32>
    %74 = arith.maximumf %72, %73 : vector<128x128xf32>
    %75 = arith.truncf %74 : vector<128x128xf32> to vector<128x128xbf16>
    %c0_61 = arith.constant 0 : index
    %c0_62 = arith.constant 0 : index
    %76 = vector.load %arg13[%c0_61, %c0_62] : memref<128x128xbf16, #tpu.memory_space<vmem>>, vector<128x128xbf16>
    %cst_63 = arith.constant dense<0.000000e+00> : vector<128x128xf32>
    %77 = tpu.matmul %75, %76, %cst_63 {dimension_numbers = #tpu.dot_dimension_numbers<[1], [0], [0], [1], [0, 0, 1, 1], [], []>} : vector<128x128xbf16>, vector<128x128xbf16>, vector<128x128xf32> -> vector<128x128xf32>
    %c0_64 = arith.constant 0 : index
    %c0_65 = arith.constant 0 : index
    %78 = vector.load %arg14[%c0_64, %c0_65] : memref<128x128xbf16, #tpu.memory_space<vmem>>, vector<128x128xbf16>
    %cst_66 = arith.constant dense<0.000000e+00> : vector<128x128xf32>
    %79 = tpu.matmul %16, %78, %cst_66 {dimension_numbers = #tpu.dot_dimension_numbers<[1], [0], [0], [1], [0, 0, 1, 1], [], []>} : vector<128x128xbf16>, vector<128x128xbf16>, vector<128x128xf32> -> vector<128x128xf32>
    %80 = arith.addf %77, %79 : vector<128x128xf32>
    %c0_67 = arith.constant 0 : index
    %c0_68 = arith.constant 0 : index
    %81 = vector.load %arg15[%c0_67, %c0_68] : memref<1x128xf32, #tpu.memory_space<vmem>>, vector<1x128xf32>
    %82 = vector.broadcast %81 : vector<1x128xf32> to vector<128x128xf32>
    %83 = arith.addf %80, %82 : vector<128x128xf32>
    %c0_69 = arith.constant 0 : index
    %c0_70 = arith.constant 0 : index
    %84 = vector.load %arg16[%c0_69, %c0_70] : memref<128x128xf32, #tpu.memory_space<vmem>>, vector<128x128xf32>
    tpu.vector_store %arg16[%c0_69, %c0_70], %83 {strides = array<i32>} : memref<128x128xf32, #tpu.memory_space<vmem>>, vector<128x128xf32>,
    return
  }
  func.func @transform_0(%arg0: i32) -> (i32, i32) {
    %c0_i32 = arith.constant 0 : i32
    %c0_i32_0 = arith.constant 0 : i32
    return %arg0, %c0_i32 : i32, i32
  }
  func.func @transform_1(%arg0: i32) -> (i32, i32) {
    %c0_i32 = arith.constant 0 : i32
    %c0_i32_0 = arith.constant 0 : i32
    return %arg0, %c0_i32 : i32, i32
  }
  func.func @transform_2(%arg0: i32) -> (i32, i32) {
    %c0_i32 = arith.constant 0 : i32
    %c0_i32_0 = arith.constant 0 : i32
    %c0_i32_1 = arith.constant 0 : i32
    return %c0_i32, %c0_i32_0 : i32, i32
  }
  func.func @transform_3(%arg0: i32) -> (i32, i32) {
    %c0_i32 = arith.constant 0 : i32
    %c0_i32_0 = arith.constant 0 : i32
    %c0_i32_1 = arith.constant 0 : i32
    return %c0_i32, %c0_i32_0 : i32, i32
  }
  func.func @transform_4(%arg0: i32) -> (i32, i32) {
    %c0_i32 = arith.constant 0 : i32
    %c0_i32_0 = arith.constant 0 : i32
    %c0_i32_1 = arith.constant 0 : i32
    return %c0_i32, %c0_i32_0 : i32, i32
  }
  func.func @transform_5(%arg0: i32) -> (i32, i32) {
    %c0_i32 = arith.constant 0 : i32
    %c0_i32_0 = arith.constant 0 : i32
    %c0_i32_1 = arith.constant 0 : i32
    return %c0_i32, %c0_i32_0 : i32, i32
  }
  func.func @transform_6(%arg0: i32) -> (i32, i32, i32) {
    %c0_i32 = arith.constant 0 : i32
    %c0_i32_0 = arith.constant 0 : i32
    %c0_i32_1 = arith.constant 0 : i32
    %c0_i32_2 = arith.constant 0 : i32
    return %c0_i32, %c0_i32_0, %c0_i32_1 : i32, i32, i32
  }
  func.func @transform_7(%arg0: i32) -> (i32, i32, i32) {
    %c0_i32 = arith.constant 0 : i32
    %c0_i32_0 = arith.constant 0 : i32
    %c0_i32_1 = arith.constant 0 : i32
    %c0_i32_2 = arith.constant 0 : i32
    return %c0_i32, %c0_i32_0, %c0_i32_1 : i32, i32, i32
  }
  func.func @transform_8(%arg0: i32) -> (i32, i32, i32) {
    %c0_i32 = arith.constant 0 : i32
    %c0_i32_0 = arith.constant 0 : i32
    %c0_i32_1 = arith.constant 0 : i32
    %c0_i32_2 = arith.constant 0 : i32
    return %c0_i32, %c0_i32_0, %c0_i32_1 : i32, i32, i32
  }
  func.func @transform_9(%arg0: i32) -> (i32, i32, i32) {
    %c0_i32 = arith.constant 0 : i32
    %c0_i32_0 = arith.constant 0 : i32
    %c0_i32_1 = arith.constant 0 : i32
    %c0_i32_2 = arith.constant 0 : i32
    return %c0_i32, %c0_i32_0, %c0_i32_1 : i32, i32, i32
  }
  func.func @transform_10(%arg0: i32) -> (i32, i32, i32) {
    %c0_i32 = arith.constant 0 : i32
    %c0_i32_0 = arith.constant 0 : i32
    %c0_i32_1 = arith.constant 0 : i32
    %c0_i32_2 = arith.constant 0 : i32
    return %c0_i32, %c0_i32_0, %c0_i32_1 : i32, i32, i32
  }
  func.func @transform_11(%arg0: i32) -> (i32, i32, i32) {
    %c0_i32 = arith.constant 0 : i32
    %c0_i32_0 = arith.constant 0 : i32
    %c0_i32_1 = arith.constant 0 : i32
    %c0_i32_2 = arith.constant 0 : i32
    return %c0_i32, %c0_i32_0, %c0_i32_1 : i32, i32, i32
  }
  func.func @transform_12(%arg0: i32) -> (i32, i32) {
    %c0_i32 = arith.constant 0 : i32
    %c0_i32_0 = arith.constant 0 : i32
    %c0_i32_1 = arith.constant 0 : i32
    return %c0_i32, %c0_i32_0 : i32, i32
  }
  func.func @transform_13(%arg0: i32) -> (i32, i32) {
    %c0_i32 = arith.constant 0 : i32
    %c0_i32_0 = arith.constant 0 : i32
    %c0_i32_1 = arith.constant 0 : i32
    return %c0_i32, %c0_i32_0 : i32, i32
  }
  func.func @transform_14(%arg0: i32) -> (i32, i32) {
    %c0_i32 = arith.constant 0 : i32
    %c0_i32_0 = arith.constant 0 : i32
    %c0_i32_1 = arith.constant 0 : i32
    return %c0_i32, %c0_i32_0 : i32, i32
  }
  func.func @transform_15(%arg0: i32) -> (i32, i32) {
    %c0_i32 = arith.constant 0 : i32
    %c0_i32_0 = arith.constant 0 : i32
    return %arg0, %c0_i32 : i32, i32
  }
}

module attributes {stable_mosaic.version = 11 : i64} {
  func.func @cmlp_kernel(%arg0: i32, %arg1: memref<128x8xbf16, #tpu.memory_space<vmem>>, %arg2: memref<128x8xbf16, #tpu.memory_space<vmem>>, %arg3: memref<8x128xbf16, #tpu.memory_space<vmem>>, %arg4: memref<1x128xf32, #tpu.memory_space<vmem>>, %arg5: memref<8x128xbf16, #tpu.memory_space<vmem>>, %arg6: memref<1x128xf32, #tpu.memory_space<vmem>>, %arg7: memref<2x128x128xbf16, #tpu.memory_space<vmem>>, %arg8: memref<2x128x128xbf16, #tpu.memory_space<vmem>>, %arg9: memref<2x1x128xf32, #tpu.memory_space<vmem>>, %arg10: memref<2x128x128xbf16, #tpu.memory_space<vmem>>, %arg11: memref<2x128x128xbf16, #tpu.memory_space<vmem>>, %arg12: memref<2x1x128xf32, #tpu.memory_space<vmem>>, %arg13: memref<128x128xbf16, #tpu.memory_space<vmem>>, %arg14: memref<128x128xbf16, #tpu.memory_space<vmem>>, %arg15: memref<1x128xf32, #tpu.memory_space<vmem>>, %arg16: memref<128x128xf32, #tpu.memory_space<vmem>>) attributes {dimension_semantics = [#tpu.dimension_semantics<parallel>], iteration_bounds = array<i64: 2>, scalar_prefetch = 0 : i64, scratch_operands = 0 : i64, tpu.core_type = #tpu.core_type<tc>, window_params = [{transform_indices = @transform_0, window_bounds = array<i64: 128, 8>}, {transform_indices = @transform_1, window_bounds = array<i64: 128, 8>}, {pipeline_mode = #tpu.pipeline_mode<synchronous>, transform_indices = @transform_2, window_bounds = array<i64: 8, 128>}, {pipeline_mode = #tpu.pipeline_mode<synchronous>, transform_indices = @transform_3, window_bounds = array<i64: 1, 128>}, {pipeline_mode = #tpu.pipeline_mode<synchronous>, transform_indices = @transform_4, window_bounds = array<i64: 8, 128>}, {pipeline_mode = #tpu.pipeline_mode<synchronous>, transform_indices = @transform_5, window_bounds = array<i64: 1, 128>}, {pipeline_mode = #tpu.pipeline_mode<synchronous>, transform_indices = @transform_6, window_bounds = array<i64: 2, 128, 128>}, {pipeline_mode = #tpu.pipeline_mode<synchronous>, transform_indices = @transform_7, window_bounds = array<i64: 2, 128, 128>}, {pipeline_mode = #tpu.pipeline_mode<synchronous>, transform_indices = @transform_8, window_bounds = array<i64: 2, 1, 128>}, {pipeline_mode = #tpu.pipeline_mode<synchronous>, transform_indices = @transform_9, window_bounds = array<i64: 2, 128, 128>}, {pipeline_mode = #tpu.pipeline_mode<synchronous>, transform_indices = @transform_10, window_bounds = array<i64: 2, 128, 128>}, {pipeline_mode = #tpu.pipeline_mode<synchronous>, transform_indices = @transform_11, window_bounds = array<i64: 2, 1, 128>}, {pipeline_mode = #tpu.pipeline_mode<synchronous>, transform_indices = @transform_12, window_bounds = array<i64: 128, 128>}, {pipeline_mode = #tpu.pipeline_mode<synchronous>, transform_indices = @transform_13, window_bounds = array<i64: 128, 128>}, {pipeline_mode = #tpu.pipeline_mode<synchronous>, transform_indices = @transform_14, window_bounds = array<i64: 1, 128>}, {transform_indices = @transform_15, window_bounds = array<i64: 128, 128>}]} {
    %c0 = arith.constant 0 : index
    %c0_0 = arith.constant 0 : index
    %0 = vector.load %arg1[%c0, %c0_0] : memref<128x8xbf16, #tpu.memory_space<vmem>>, vector<128x8xbf16>
    %c0_1 = arith.constant 0 : index
    %c0_2 = arith.constant 0 : index
    %1 = vector.load %arg3[%c0_1, %c0_2] : memref<8x128xbf16, #tpu.memory_space<vmem>>, vector<8x128xbf16>
    %cst = arith.constant dense<0.000000e+00> : vector<128x128xf32>
    %2 = tpu.matmul %0, %1, %cst {dimension_numbers = #tpu.dot_dimension_numbers<[1], [0], [0], [1], [0, 0, 1, 1], [], []>} : vector<128x8xbf16>, vector<8x128xbf16>, vector<128x128xf32> -> vector<128x128xf32>
    %c0_3 = arith.constant 0 : index
    %c0_4 = arith.constant 0 : index
    %3 = vector.load %arg4[%c0_3, %c0_4] : memref<1x128xf32, #tpu.memory_space<vmem>>, vector<1x128xf32>
    %4 = vector.broadcast %3 : vector<1x128xf32> to vector<128x128xf32>
    %5 = arith.addf %2, %4 : vector<128x128xf32>
    %cst_5 = arith.constant 0.000000e+00 : f32
    %6 = vector.broadcast %cst_5 : f32 to vector<128x128xf32>
    %7 = arith.maximumf %5, %6 : vector<128x128xf32>
    %c0_6 = arith.constant 0 : index
    %c0_7 = arith.constant 0 : index
    %8 = vector.load %arg2[%c0_6, %c0_7] : memref<128x8xbf16, #tpu.memory_space<vmem>>, vector<128x8xbf16>
    %c0_8 = arith.constant 0 : index
    %c0_9 = arith.constant 0 : index
    %9 = vector.load %arg5[%c0_8, %c0_9] : memref<8x128xbf16, #tpu.memory_space<vmem>>, vector<8x128xbf16>
    %cst_10 = arith.constant dense<0.000000e+00> : vector<128x128xf32>
    %10 = tpu.matmul %8, %9, %cst_10 {dimension_numbers = #tpu.dot_dimension_numbers<[1], [0], [0], [1], [0, 0, 1, 1], [], []>} : vector<128x8xbf16>, vector<8x128xbf16>, vector<128x128xf32> -> vector<128x128xf32>
    %c0_11 = arith.constant 0 : index
    %c0_12 = arith.constant 0 : index
    %11 = vector.load %arg6[%c0_11, %c0_12] : memref<1x128xf32, #tpu.memory_space<vmem>>, vector<1x128xf32>
    %12 = vector.broadcast %11 : vector<1x128xf32> to vector<128x128xf32>
    %13 = arith.addf %10, %12 : vector<128x128xf32>
    %cst_13 = arith.constant 0.000000e+00 : f32
    %14 = vector.broadcast %cst_13 : f32 to vector<128x128xf32>
    %15 = arith.maximumf %13, %14 : vector<128x128xf32>
    %16 = arith.truncf %15 : vector<128x128xf32> to vector<128x128xbf16>
    %17 = arith.truncf %7 : vector<128x128xf32> to vector<128x128xbf16>
    %c0_14 = arith.constant 0 : index
    %c0_15 = arith.constant 0 : index
    %c0_16 = arith.constant 0 : index
    %18 = vector.load %arg7[%c0_14, %c0_15, %c0_16] : memref<2x128x128xbf16, #tpu.memory_space<vmem>>, vector<1x128x128xbf16>
    %19 = vector.shape_cast %18 : vector<1x128x128xbf16> to vector<128x128xbf16>
    %cst_17 = arith.constant dense<0.000000e+00> : vector<128x128xf32>
    %20 = tpu.matmul %17, %19, %cst_17 {dimension_numbers = #tpu.dot_dimension_numbers<[1], [0], [0], [1], [0, 0, 1, 1], [], []>} : vector<128x128xbf16>, vector<128x128xbf16>, vector<128x128xf32> -> vector<128x128xf32>
    %c0_18 = arith.constant 0 : index
    %c0_19 = arith.constant 0 : index
    %c0_20 = arith.constant 0 : index
    %21 = vector.load %arg8[%c0_18, %c0_19, %c0_20] : memref<2x128x128xbf16, #tpu.memory_space<vmem>>, vector<1x128x128xbf16>
    %22 = vector.shape_cast %21 : vector<1x128x128xbf16> to vector<128x128xbf16>
    %cst_21 = arith.constant dense<0.000000e+00> : vector<128x128xf32>
    %23 = tpu.matmul %16, %22, %cst_21 {dimension_numbers = #tpu.dot_dimension_numbers<[1], [0], [0], [1], [0, 0, 1, 1], [], []>} : vector<128x128xbf16>, vector<128x128xbf16>, vector<128x128xf32> -> vector<128x128xf32>
    %24 = arith.addf %20, %23 : vector<128x128xf32>
    %c0_22 = arith.constant 0 : index
    %c0_23 = arith.constant 0 : index
    %c0_24 = arith.constant 0 : index
    %25 = vector.load %arg9[%c0_22, %c0_23, %c0_24] : memref<2x1x128xf32, #tpu.memory_space<vmem>>, vector<1x1x128xf32>
    %26 = vector.shape_cast %25 : vector<1x1x128xf32> to vector<1x128xf32>
    %27 = vector.broadcast %26 : vector<1x128xf32> to vector<128x128xf32>
    %28 = arith.addf %24, %27 : vector<128x128xf32>
    %cst_25 = arith.constant 0.000000e+00 : f32
    %29 = vector.broadcast %cst_25 : f32 to vector<128x128xf32>
    %30 = arith.maximumf %28, %29 : vector<128x128xf32>
    %31 = arith.truncf %30 : vector<128x128xf32> to vector<128x128xbf16>
    %c0_26 = arith.constant 0 : index
    %c0_27 = arith.constant 0 : index
    %c0_28 = arith.constant 0 : index
    %32 = vector.load %arg10[%c0_26, %c0_27, %c0_28] : memref<2x128x128xbf16, #tpu.memory_space<vmem>>, vector<1x128x128xbf16>
    %33 = vector.shape_cast %32 : vector<1x128x128xbf16> to vector<128x128xbf16>
    %cst_29 = arith.constant dense<0.000000e+00> : vector<128x128xf32>
    %34 = tpu.matmul %31, %33, %cst_29 {dimension_numbers = #tpu.dot_dimension_numbers<[1], [0], [0], [1], [0, 0, 1, 1], [], []>} : vector<128x128xbf16>, vector<128x128xbf16>, vector<128x128xf32> -> vector<128x128xf32>
    %c0_30 = arith.constant 0 : index
    %c0_31 = arith.constant 0 : index
    %c0_32 = arith.constant 0 : index
    %35 = vector.load %arg11[%c0_30, %c0_31, %c0_32] : memref<2x128x128xbf16, #tpu.memory_space<vmem>>, vector<1x128x128xbf16>
    %36 = vector.shape_cast %35 : vector<1x128x128xbf16> to vector<128x128xbf16>
    %cst_33 = arith.constant dense<0.000000e+00> : vector<128x128xf32>
    %37 = tpu.matmul %16, %36, %cst_33 {dimension_numbers = #tpu.dot_dimension_numbers<[1], [0], [0], [1], [0, 0, 1, 1], [], []>} : vector<128x128xbf16>, vector<128x128xbf16>, vector<128x128xf32> -> vector<128x128xf32>
    %38 = arith.addf %34, %37 : vector<128x128xf32>
    %c0_34 = arith.constant 0 : index
    %c0_35 = arith.constant 0 : index
    %c0_36 = arith.constant 0 : index
    %39 = vector.load %arg12[%c0_34, %c0_35, %c0_36] : memref<2x1x128xf32, #tpu.memory_space<vmem>>, vector<1x1x128xf32>
    %40 = vector.shape_cast %39 : vector<1x1x128xf32> to vector<1x128xf32>
    %41 = vector.broadcast %40 : vector<1x128xf32> to vector<128x128xf32>
    %42 = arith.addf %38, %41 : vector<128x128xf32>
    %43 = arith.addf %42, %7 : vector<128x128xf32>
    %cst_37 = arith.constant 0.000000e+00 : f32
    %44 = vector.broadcast %cst_37 : f32 to vector<128x128xf32>
    %45 = arith.maximumf %43, %44 : vector<128x128xf32>
    %46 = arith.truncf %45 : vector<128x128xf32> to vector<128x128xbf16>
    %c1 = arith.constant 1 : index
    %c0_38 = arith.constant 0 : index
    %c0_39 = arith.constant 0 : index
    %47 = vector.load %arg7[%c1, %c0_38, %c0_39] : memref<2x128x128xbf16, #tpu.memory_space<vmem>>, vector<1x128x128xbf16>
    %48 = vector.shape_cast %47 : vector<1x128x128xbf16> to vector<128x128xbf16>
    %cst_40 = arith.constant dense<0.000000e+00> : vector<128x128xf32>
    %49 = tpu.matmul %46, %48, %cst_40 {dimension_numbers = #tpu.dot_dimension_numbers<[1], [0], [0], [1], [0, 0, 1, 1], [], []>} : vector<128x128xbf16>, vector<128x128xbf16>, vector<128x128xf32> -> vector<128x128xf32>
    %c1_41 = arith.constant 1 : index
    %c0_42 = arith.constant 0 : index
    %c0_43 = arith.constant 0 : index
    %50 = vector.load %arg8[%c1_41, %c0_42, %c0_43] : memref<2x128x128xbf16, #tpu.memory_space<vmem>>, vector<1x128x128xbf16>
    %51 = vector.shape_cast %50 : vector<1x128x128xbf16> to vector<128x128xbf16>
    %cst_44 = arith.constant dense<0.000000e+00> : vector<128x128xf32>
    %52 = tpu.matmul %16, %51, %cst_44 {dimension_numbers = #tpu.dot_dimension_numbers<[1], [0], [0], [1], [0, 0, 1, 1], [], []>} : vector<128x128xbf16>, vector<128x128xbf16>, vector<128x128xf32> -> vector<128x128xf32>
    %53 = arith.addf %49, %52 : vector<128x128xf32>
    %c1_45 = arith.constant 1 : index
    %c0_46 = arith.constant 0 : index
    %c0_47 = arith.constant 0 : index
    %54 = vector.load %arg9[%c1_45, %c0_46, %c0_47] : memref<2x1x128xf32, #tpu.memory_space<vmem>>, vector<1x1x128xf32>
    %55 = vector.shape_cast %54 : vector<1x1x128xf32> to vector<1x128xf32>
    %56 = vector.broadcast %55 : vector<1x128xf32> to vector<128x128xf32>
    %57 = arith.addf %53, %56 : vector<128x128xf32>
    %cst_48 = arith.constant 0.000000e+00 : f32
    %58 = vector.broadcast %cst_48 : f32 to vector<128x128xf32>
    %59 = arith.maximumf %57, %58 : vector<128x128xf32>
    %60 = arith.truncf %59 : vector<128x128xf32> to vector<128x128xbf16>
    %c1_49 = arith.constant 1 : index
    %c0_50 = arith.constant 0 : index
    %c0_51 = arith.constant 0 : index
    %61 = vector.load %arg10[%c1_49, %c0_50, %c0_51] : memref<2x128x128xbf16, #tpu.memory_space<vmem>>, vector<1x128x128xbf16>
    %62 = vector.shape_cast %61 : vector<1x128x128xbf16> to vector<128x128xbf16>
    %cst_52 = arith.constant dense<0.000000e+00> : vector<128x128xf32>
    %63 = tpu.matmul %60, %62, %cst_52 {dimension_numbers = #tpu.dot_dimension_numbers<[1], [0], [0], [1], [0, 0, 1, 1], [], []>} : vector<128x128xbf16>, vector<128x128xbf16>, vector<128x128xf32> -> vector<128x128xf32>
    %c1_53 = arith.constant 1 : index
    %c0_54 = arith.constant 0 : index
    %c0_55 = arith.constant 0 : index
    %64 = vector.load %arg11[%c1_53, %c0_54, %c0_55] : memref<2x128x128xbf16, #tpu.memory_space<vmem>>, vector<1x128x128xbf16>
    %65 = vector.shape_cast %64 : vector<1x128x128xbf16> to vector<128x128xbf16>
    %cst_56 = arith.constant dense<0.000000e+00> : vector<128x128xf32>
    %66 = tpu.matmul %16, %65, %cst_56 {dimension_numbers = #tpu.dot_dimension_numbers<[1], [0], [0], [1], [0, 0, 1, 1], [], []>} : vector<128x128xbf16>, vector<128x128xbf16>, vector<128x128xf32> -> vector<128x128xf32>
    %67 = arith.addf %63, %66 : vector<128x128xf32>
    %c1_57 = arith.constant 1 : index
    %c0_58 = arith.constant 0 : index
    %c0_59 = arith.constant 0 : index
    %68 = vector.load %arg12[%c1_57, %c0_58, %c0_59] : memref<2x1x128xf32, #tpu.memory_space<vmem>>, vector<1x1x128xf32>
    %69 = vector.shape_cast %68 : vector<1x1x128xf32> to vector<1x128xf32>
    %70 = vector.broadcast %69 : vector<1x128xf32> to vector<128x128xf32>
    %71 = arith.addf %67, %70 : vector<128x128xf32>
    %72 = arith.addf %71, %45 : vector<128x128xf32>
    %cst_60 = arith.constant 0.000000e+00 : f32
    %73 = vector.broadcast %cst_60 : f32 to vector<128x128xf32>
    %74 = arith.maximumf %72, %73 : vector<128x128xf32>
    %75 = arith.truncf %74 : vector<128x128xf32> to vector<128x128xbf16>
    %c0_61 = arith.constant 0 : index
    %c0_62 = arith.constant 0 : index
    %76 = vector.load %arg13[%c0_61, %c0_62] : memref<128x128xbf16, #tpu.memory_space<vmem>>, vector<128x128xbf16>
    %cst_63 = arith.constant dense<0.000000e+00> : vector<128x128xf32>
    %77 = tpu.matmul %75, %76, %cst_63 {dimension_numbers = #tpu.dot_dimension_numbers<[1], [0], [0], [1], [0, 0, 1, 1], [], []>} : vector<128x128xbf16>, vector<128x128xbf16>, vector<128x128xf32> -> vector<128x128xf32>
    %c0_64 = arith.constant 0 : index
    %c0_65 = arith.constant 0 : index
    %78 = vector.load %arg14[%c0_64, %c0_65] : memref<128x128xbf16, #tpu.memory_space<vmem>>, vector<128x128xbf16>
    %cst_66 = arith.constant dense<0.000000e+00> : vector<128x128xf32>
    %79 = tpu.matmul %16, %78, %cst_66 {dimension_numbers = #tpu.dot_dimension_numbers<[1], [0], [0], [1], [0, 0, 1, 1], [], []>} : vector<128x128xbf16>, vector<128x128xbf16>, vector<128x128xf32> -> vector<128x128xf32>
    %80 = arith.addf %77, %79 : vector<128x128xf32>
    %c0_67 = arith.constant 0 : index
    %c0_68 = arith.constant 0 : index
    %81 = vector.load %arg15[%c0_67, %c0_68] : memref<1x128xf32, #tpu.memory_space<vmem>>, vector<1x128xf32>
    %82 = vector.broadcast %81 : vector<1x128xf32> to vector<128x128xf32>
    %83 = arith.addf %80, %82 : vector<128x128xf32>
    %c0_69 = arith.constant 0 : index
    %c0_70 = arith.constant 0 : index
    %84 = vector.load %arg16[%c0_69, %c0_70] : memref<128x128xf32, #tpu.memory_space<vmem>>, vector<128x128xf32>
    tpu.vector_store %arg16[%c0_69, %c0_70], %83 {strides = array<i32>} : memref<128x128xf32, #tpu.memory_space<vmem>>, vector<128x128xf32>,
    return
  }
  func.func @transform_0(%arg0: i32) -> (i32, i32) {
    %c0_i32 = arith.constant 0 : i32
    %c0_i32_0 = arith.constant 0 : i32
    return %arg0, %c0_i32 : i32, i32
  }
  func.func @transform_1(%arg0: i32) -> (i32, i32) {
    %c0_i32 = arith.constant 0 : i32
    %c0_i32_0 = arith.constant 0 : i32
    return %arg0, %c0_i32 : i32, i32
  }
  func.func @transform_2(%arg0: i32) -> (i32, i32) {
    %c0_i32 = arith.constant 0 : i32
    %c0_i32_0 = arith.constant 0 : i32
    %c0_i32_1 = arith.constant 0 : i32
    return %c0_i32, %c0_i32_0 : i32, i32
  }
  func.func @transform_3(%arg0: i32) -> (i32, i32) {
    %c0_i32 = arith.constant 0 : i32
    %c0_i32_0 = arith.constant 0 : i32
    %c0_i32_1 = arith.constant 0 : i32
    return %c0_i32, %c0_i32_0 : i32, i32
  }
  func.func @transform_4(%arg0: i32) -> (i32, i32) {
    %c0_i32 = arith.constant 0 : i32
    %c0_i32_0 = arith.constant 0 : i32
    %c0_i32_1 = arith.constant 0 : i32
    return %c0_i32, %c0_i32_0 : i32, i32
  }
  func.func @transform_5(%arg0: i32) -> (i32, i32) {
    %c0_i32 = arith.constant 0 : i32
    %c0_i32_0 = arith.constant 0 : i32
    %c0_i32_1 = arith.constant 0 : i32
    return %c0_i32, %c0_i32_0 : i32, i32
  }
  func.func @transform_6(%arg0: i32) -> (i32, i32, i32) {
    %c0_i32 = arith.constant 0 : i32
    %c0_i32_0 = arith.constant 0 : i32
    %c0_i32_1 = arith.constant 0 : i32
    %c0_i32_2 = arith.constant 0 : i32
    return %c0_i32, %c0_i32_0, %c0_i32_1 : i32, i32, i32
  }
  func.func @transform_7(%arg0: i32) -> (i32, i32, i32) {
    %c0_i32 = arith.constant 0 : i32
    %c0_i32_0 = arith.constant 0 : i32
    %c0_i32_1 = arith.constant 0 : i32
    %c0_i32_2 = arith.constant 0 : i32
    return %c0_i32, %c0_i32_0, %c0_i32_1 : i32, i32, i32
  }
  func.func @transform_8(%arg0: i32) -> (i32, i32, i32) {
    %c0_i32 = arith.constant 0 : i32
    %c0_i32_0 = arith.constant 0 : i32
    %c0_i32_1 = arith.constant 0 : i32
    %c0_i32_2 = arith.constant 0 : i32
    return %c0_i32, %c0_i32_0, %c0_i32_1 : i32, i32, i32
  }
  func.func @transform_9(%arg0: i32) -> (i32, i32, i32) {
    %c0_i32 = arith.constant 0 : i32
    %c0_i32_0 = arith.constant 0 : i32
    %c0_i32_1 = arith.constant 0 : i32
    %c0_i32_2 = arith.constant 0 : i32
    return %c0_i32, %c0_i32_0, %c0_i32_1 : i32, i32, i32
  }
  func.func @transform_10(%arg0: i32) -> (i32, i32, i32) {
    %c0_i32 = arith.constant 0 : i32
    %c0_i32_0 = arith.constant 0 : i32
    %c0_i32_1 = arith.constant 0 : i32
    %c0_i32_2 = arith.constant 0 : i32
    return %c0_i32, %c0_i32_0, %c0_i32_1 : i32, i32, i32
  }
  func.func @transform_11(%arg0: i32) -> (i32, i32, i32) {
    %c0_i32 = arith.constant 0 : i32
    %c0_i32_0 = arith.constant 0 : i32
    %c0_i32_1 = arith.constant 0 : i32
    %c0_i32_2 = arith.constant 0 : i32
    return %c0_i32, %c0_i32_0, %c0_i32_1 : i32, i32, i32
  }
  func.func @transform_12(%arg0: i32) -> (i32, i32) {
    %c0_i32 = arith.constant 0 : i32
    %c0_i32_0 = arith.constant 0 : i32
    %c0_i32_1 = arith.constant 0 : i32
    return %c0_i32, %c0_i32_0 : i32, i32
  }
  func.func @transform_13(%arg0: i32) -> (i32, i32) {
    %c0_i32 = arith.constant 0 : i32
    %c0_i32_0 = arith.constant 0 : i32
    %c0_i32_1 = arith.constant 0 : i32
    return %c0_i32, %c0_i32_0 : i32, i32
  }
  func.func @transform_14(%arg0: i32) -> (i32, i32) {
    %c0_i32 = arith.constant 0 : i32
    %c0_i32_0 = arith.constant 0 : i32
    %c0_i32_1 = arith.constant 0 : i32
    return %c0_i32, %c0_i32_0 : i32, i32
  }
  func.func @transform_15(%arg0: i32) -> (i32, i32) {
    %c0_i32 = arith.constant 0 : i32
    %c0_i32_0 = arith.constant 0 : i32
    return %arg0, %c0_i32 : i32, i32
  }
}

</mosaic_0001>

<llo_original>
// kernel: tpu_custom_call.1
$region0: #{tpu_custom_call.1}
  #allocation0 [shape = 'u32[]', space=smem, size = 0x4, offset = 0x4, fixed_abs, tag = 'smem constant byte address 0x4 - core index']
  #allocation1 [shape = 'u32[144,128]{1,0:T(1,128)}', space=vmem, size = 0x12000, scoped, tag = 'internal scratch']
  %s0 = inlined_call_operand.vmem [shape: bf16[256,8], index: 0, kind: input, shape index: {}]
  %s1 = inlined_call_operand.vmem [shape: bf16[256,8], index: 1, kind: input, shape index: {}]
  %s2 = inlined_call_operand.hbm [shape: bf16[8,128], index: 2, kind: input, shape index: {}]
  %s3 = inlined_call_operand.vmem [shape: f32[1,128], index: 3, kind: input, shape index: {}]
  %s4 = inlined_call_operand.hbm [shape: bf16[8,128], index: 4, kind: input, shape index: {}]
  %s5 = inlined_call_operand.hbm [shape: f32[1,128], index: 5, kind: input, shape index: {}]
  %s6 = inlined_call_operand.vmem [shape: bf16[2,128,128], index: 6, kind: input, shape index: {}]
  %s7 = inlined_call_operand.vmem [shape: bf16[2,128,128], index: 7, kind: input, shape index: {}]
  %s8 = inlined_call_operand.hbm [shape: f32[2,1,128], index: 8, kind: input, shape index: {}]
  %s9 = inlined_call_operand.hbm [shape: bf16[2,128,128], index: 9, kind: input, shape index: {}]
  %s10 = inlined_call_operand.hbm [shape: bf16[2,128,128], index: 10, kind: input, shape index: {}]
  %s11 = inlined_call_operand.hbm [shape: f32[2,1,128], index: 11, kind: input, shape index: {}]
  %s12 = inlined_call_operand.hbm [shape: bf16[128,128], index: 12, kind: input, shape index: {}]
  %s13 = inlined_call_operand.vmem [shape: bf16[128,128], index: 13, kind: input, shape index: {}]
  %s14 = inlined_call_operand.vmem [shape: f32[1,128], index: 14, kind: input, shape index: {}]
  %s15 = inlined_call_operand.hbm [shape: f32[256,128], index: 15, kind: output, shape index: {}]
  %s16 = sld [smem:[#allocation0]]
  $region125: #{tpu_custom_call.1} parent=0
    _
  %s18 = ssub.s32 1, %s16
  %s19 = scalar_select 0, %s18, %s16
  $region1: #{tpu_custom_call.1} parent=0
    #allocation2 [shape = 'u8[2048]{0}', space=vmem, size = 0x800, scoped, tag = 'input window, operand 2, single buffered']
    #allocation3 [shape = 's32[2]{0}', space=sflag, size = 0x8, scoped, tag = 'scoped memory for tpu_custom_call.1']
    #allocation4 [shape = 's32[2]{0}', space=sflag, size = 0x8, scoped, tag = 'scoped memory for tpu_custom_call.1']
    #allocation5 [shape = 'u8[2048]{0}', space=vmem, size = 0x800, scoped, tag = 'input window, operand 4, single buffered']
    #allocation6 [shape = 's32[1]{0}', space=sflag, size = 0x4, scoped, tag = 'scoped memory for tpu_custom_call.1']
    #allocation7 [shape = 'u8[512]{0}', space=vmem, size = 0x400, scoped, tag = 'input window, operand 5, single buffered']
    #allocation8 [shape = 'u8[1024]{0}', space=vmem, size = 0x400, scoped, tag = 'input window, operand 8, single buffered']
    #allocation9 [shape = 's32[1]{0}', space=sflag, size = 0x4, scoped, tag = 'scoped memory for tpu_custom_call.1']
    #allocation10 [shape = 'u8[65536]{0}', space=vmem, size = 0x10000, scoped, tag = 'input window, operand 9, single buffered']
    #allocation11 [shape = 'u8[65536]{0}', space=vmem, size = 0x10000, scoped, tag = 'input window, operand 10, single buffered']
    #allocation12 [shape = 's32[1]{0}', space=sflag, size = 0x4, scoped, tag = 'scoped memory for tpu_custom_call.1']
    #allocation13 [shape = 'u8[1024]{0}', space=vmem, size = 0x400, scoped, tag = 'input window, operand 11, single buffered']
    #allocation14 [shape = 'u8[32768]{0}', space=vmem, size = 0x8000, scoped, tag = 'input window, operand 12, single buffered']
    #allocation15 [shape = 's32[1]{0}', space=sflag, size = 0x4, scoped, tag = 'scoped memory for tpu_custom_call.1']
    #allocation16 [shape = 'u8[131072]{0}', space=vmem, size = 0x20000, scoped, tag = 'output window, operand 0']
    %20 = vsyncpa [#allocation3], 0
    %21 = vsyncpa [#allocation6], 0
    %22 = vsyncpa [#allocation9], 0
    %23 = vsyncpa [#allocation12], 0
    %24 = vsyncpa [#allocation15], 0
    %25 = vsyncpa [#allocation4], 0
    %s26 = scalar_lea.sflag [#allocation4], 1
    %27 = vsyncpa %s26, 0
    loop: start=0, step=1, limit=4
    $region2: #{tpu_custom_call.1} parent=1 // loop_pre_header
      _
    $region3: #{tpu_custom_call.1} parent=1 // loop_header
      %s29 = sphi 0, %s33
      %p30 = scmp.ge.s32.totalorder %s29, 4
      %s39 = sphi 0, %s41
      %s42 = sphi 0, %s39
      %s43 = sphi 0, %s42
      %s59 = sphi 0, %s43
      %s65 = sphi 0, %s67
      %s68 = sphi 0, %s65
      %s69 = sphi 0, %s68
      %s85 = sphi 0, %s69
      %s89 = sphi 0, %s89
      %s91 = sphi 0, %s89
      %s92 = sphi 0, %s91
      %s106 = sphi 0, %s92
      %s110 = sphi 0, %s110
      %s112 = sphi 0, %s110
      %s113 = sphi 0, %s112
      %s127 = sphi 0, %s113
      %s131 = sphi 0, %s131
      %s133 = sphi 0, %s131
      %s134 = sphi 0, %s133
      %s148 = sphi 0, %s134
      %s152 = sphi 0, %s152
      %s154 = sphi 0, %s152
      %s155 = sphi 0, %s154
      %s169 = sphi 0, %s155
      %s173 = sphi 0, %s173
      %s175 = sphi 0, %s173
      %s176 = sphi 0, %s175
      %s190 = sphi 0, %s176
      %s194 = sphi 0, %s194
      %s196 = sphi 0, %s194
      %s197 = sphi 0, %s196
      %s211 = sphi 0, %s197
      %s215 = sphi 0, %s215
      %s217 = sphi 0, %s215
      %s218 = sphi 0, %s217
      %s232 = sphi 0, %s218
      %s236 = sphi 0, %s236
      %s238 = sphi 0, %s236
      %s239 = sphi 0, %s238
      %s253 = sphi 0, %s239
      %s257 = sphi 0, %s257
      %s259 = sphi 0, %s257
      %s260 = sphi 0, %s259
      %s274 = sphi 0, %s260
      %s278 = sphi 0, %s278
      %s280 = sphi 0, %s278
      %s281 = sphi 0, %s280
      %s295 = sphi 0, %s281
      %s299 = sphi 0, %s299
      %s301 = sphi 0, %s299
      %s302 = sphi 0, %s301
      %s316 = sphi 0, %s302
      %s320 = sphi 0, %s320
      %s322 = sphi 0, %s320
      %s323 = sphi 0, %s322
      %s337 = sphi 0, %s323
      %s341 = sphi 0, %s341
      %s343 = sphi 0, %s341
      %s344 = sphi 0, %s343
      %s358 = sphi 0, %s344
      %s364 = sphi 0, %s366
      %s367 = sphi 0, %s364
      %s368 = sphi 0, %s367
      %s384 = sphi 0, %s368
    $region4: #{tpu_custom_call.1} parent=1 // loop_header_branch
      %32 = sbr.rel (%p30) target = $region8
    $region5: #{tpu_custom_call.1} parent=1 // loop_body
      %s34 = ssub.s32 %s29, 1
      %s35 = ssub.s32 %s29, 2
      %s36 = sadd.s32 %s29, 1
      %s37 = ssub.s32 %s29, %s36
      %p38 = scmp.eq.s32.totalorder %s37, 0
      %s40 = sadd.s32 %s39, 1
      %s41 = scalar_select %p38, %s39, %s40
      %p44 = pneg %p38
      %p45 = scmp.eq.s32.totalorder %s29, 1
      %p46 = por %p44, %p45
      %p47 = scmp.ne.s32.totalorder %s39, %s42
      %p48 = scmp.eq.s32.totalorder %s29, 0
      %p49 = por %p47, %p48
      %p50 = scmp.ne.s32.totalorder %s39, %s42
      %p51 = scmp.eq.s32.totalorder %s34, 1
      %p52 = por %p50, %p51
      %p53 = scmp.ne.s32.totalorder %s42, %s43
      %p54 = scmp.eq.s32.totalorder %s34, 0
      %p55 = por %p53, %p54
      %p56 = scmp.ne.s32.totalorder %s42, %s43
      %p57 = scmp.eq.s32.totalorder %s35, 1
      %p58 = por %p56, %p57
      %p60 = scmp.ne.s32.totalorder %s43, %s59
      %p61 = scmp.eq.s32.totalorder %s35, 0
      %p62 = por %p60, %p61
      %s63 = ssub.s32 %s29, %s36
      %p64 = scmp.eq.s32.totalorder %s63, 0
      %s66 = sadd.s32 %s65, 1
      %s67 = scalar_select %p64, %s65, %s66
      %p70 = pneg %p64
      %p71 = scmp.eq.s32.totalorder %s29, 1
      %p72 = por %p70, %p71
      %p73 = scmp.ne.s32.totalorder %s65, %s68
      %p74 = scmp.eq.s32.totalorder %s29, 0
      %p75 = por %p73, %p74
      %p76 = scmp.ne.s32.totalorder %s65, %s68
      %p77 = scmp.eq.s32.totalorder %s34, 1
      %p78 = por %p76, %p77
      %p79 = scmp.ne.s32.totalorder %s68, %s69
      %p80 = scmp.eq.s32.totalorder %s34, 0
      %p81 = por %p79, %p80
      %p82 = scmp.ne.s32.totalorder %s68, %s69
      %p83 = scmp.eq.s32.totalorder %s35, 1
      %p84 = por %p82, %p83
      %p86 = scmp.ne.s32.totalorder %s69, %s85
      %p87 = scmp.eq.s32.totalorder %s35, 0
      %p88 = por %p86, %p87
      %s90 = sadd.s32 %s89, 1
      %p93 = scmp.eq.s32.totalorder %s29, 1
      %p94 = scmp.ne.s32.totalorder %s89, %s91
      %p95 = scmp.eq.s32.totalorder %s29, 0
      %p96 = por %p94, %p95
      %p97 = scmp.ne.s32.totalorder %s89, %s91
      %p98 = scmp.eq.s32.totalorder %s34, 1
      %p99 = por %p97, %p98
      %p100 = scmp.ne.s32.totalorder %s91, %s92
      %p101 = scmp.eq.s32.totalorder %s34, 0
      %p102 = por %p100, %p101
      %p103 = scmp.ne.s32.totalorder %s91, %s92
      %p104 = scmp.eq.s32.totalorder %s35, 1
      %p105 = por %p103, %p104
      %p107 = scmp.ne.s32.totalorder %s92, %s106
      %p108 = scmp.eq.s32.totalorder %s35, 0
      %p109 = por %p107, %p108
      %s111 = sadd.s32 %s110, 1
      %p114 = scmp.eq.s32.totalorder %s29, 1
      %p115 = scmp.ne.s32.totalorder %s110, %s112
      %p116 = scmp.eq.s32.totalorder %s29, 0
      %p117 = por %p115, %p116
      %p118 = scmp.ne.s32.totalorder %s110, %s112
      %p119 = scmp.eq.s32.totalorder %s34, 1
      %p120 = por %p118, %p119
      %p121 = scmp.ne.s32.totalorder %s112, %s113
      %p122 = scmp.eq.s32.totalorder %s34, 0
      %p123 = por %p121, %p122
      %p124 = scmp.ne.s32.totalorder %s112, %s113
      %p125 = scmp.eq.s32.totalorder %s35, 1
      %p126 = por %p124, %p125
      %p128 = scmp.ne.s32.totalorder %s113, %s127
      %p129 = scmp.eq.s32.totalorder %s35, 0
      %p130 = por %p128, %p129
      %s132 = sadd.s32 %s131, 1
      %p135 = scmp.eq.s32.totalorder %s29, 1
      %p136 = scmp.ne.s32.totalorder %s131, %s133
      %p137 = scmp.eq.s32.totalorder %s29, 0
      %p138 = por %p136, %p137
      %p139 = scmp.ne.s32.totalorder %s131, %s133
      %p140 = scmp.eq.s32.totalorder %s34, 1
      %p141 = por %p139, %p140
      %p142 = scmp.ne.s32.totalorder %s133, %s134
      %p143 = scmp.eq.s32.totalorder %s34, 0
      %p144 = por %p142, %p143
      %p145 = scmp.ne.s32.totalorder %s133, %s134
      %p146 = scmp.eq.s32.totalorder %s35, 1
      %p147 = por %p145, %p146
      %p149 = scmp.ne.s32.totalorder %s134, %s148
      %p150 = scmp.eq.s32.totalorder %s35, 0
      %p151 = por %p149, %p150
      %s153 = sadd.s32 %s152, 1
      %p156 = scmp.eq.s32.totalorder %s29, 1
      %p157 = scmp.ne.s32.totalorder %s152, %s154
      %p158 = scmp.eq.s32.totalorder %s29, 0
      %p159 = por %p157, %p158
      %p160 = scmp.ne.s32.totalorder %s152, %s154
      %p161 = scmp.eq.s32.totalorder %s34, 1
      %p162 = por %p160, %p161
      %p163 = scmp.ne.s32.totalorder %s154, %s155
      %p164 = scmp.eq.s32.totalorder %s34, 0
      %p165 = por %p163, %p164
      %p166 = scmp.ne.s32.totalorder %s154, %s155
      %p167 = scmp.eq.s32.totalorder %s35, 1
      %p168 = por %p166, %p167
      %p170 = scmp.ne.s32.totalorder %s155, %s169
      %p171 = scmp.eq.s32.totalorder %s35, 0
      %p172 = por %p170, %p171
      %s174 = sadd.s32 %s173, 1
      %p177 = scmp.eq.s32.totalorder %s29, 1
      %p178 = scmp.ne.s32.totalorder %s173, %s175
      %p179 = scmp.eq.s32.totalorder %s29, 0
      %p180 = por %p178, %p179
      %p181 = scmp.ne.s32.totalorder %s173, %s175
      %p182 = scmp.eq.s32.totalorder %s34, 1
      %p183 = por %p181, %p182
      %p184 = scmp.ne.s32.totalorder %s175, %s176
      %p185 = scmp.eq.s32.totalorder %s34, 0
      %p186 = por %p184, %p185
      %p187 = scmp.ne.s32.totalorder %s175, %s176
      %p188 = scmp.eq.s32.totalorder %s35, 1
      %p189 = por %p187, %p188
      %p191 = scmp.ne.s32.totalorder %s176, %s190
      %p192 = scmp.eq.s32.totalorder %s35, 0
      %p193 = por %p191, %p192
      %s195 = sadd.s32 %s194, 1
      %p198 = scmp.eq.s32.totalorder %s29, 1
      %p199 = scmp.ne.s32.totalorder %s194, %s196
      %p200 = scmp.eq.s32.totalorder %s29, 0
      %p201 = por %p199, %p200
      %p202 = scmp.ne.s32.totalorder %s194, %s196
      %p203 = scmp.eq.s32.totalorder %s34, 1
      %p204 = por %p202, %p203
      %p205 = scmp.ne.s32.totalorder %s196, %s197
      %p206 = scmp.eq.s32.totalorder %s34, 0
      %p207 = por %p205, %p206
      %p208 = scmp.ne.s32.totalorder %s196, %s197
      %p209 = scmp.eq.s32.totalorder %s35, 1
      %p210 = por %p208, %p209
      %p212 = scmp.ne.s32.totalorder %s197, %s211
      %p213 = scmp.eq.s32.totalorder %s35, 0
      %p214 = por %p212, %p213
      %s216 = sadd.s32 %s215, 1
      %p219 = scmp.eq.s32.totalorder %s29, 1
      %p220 = scmp.ne.s32.totalorder %s215, %s217
      %p221 = scmp.eq.s32.totalorder %s29, 0
      %p222 = por %p220, %p221
      %p223 = scmp.ne.s32.totalorder %s215, %s217
      %p224 = scmp.eq.s32.totalorder %s34, 1
      %p225 = por %p223, %p224
      %p226 = scmp.ne.s32.totalorder %s217, %s218
      %p227 = scmp.eq.s32.totalorder %s34, 0
      %p228 = por %p226, %p227
      %p229 = scmp.ne.s32.totalorder %s217, %s218
      %p230 = scmp.eq.s32.totalorder %s35, 1
      %p231 = por %p229, %p230
      %p233 = scmp.ne.s32.totalorder %s218, %s232
      %p234 = scmp.eq.s32.totalorder %s35, 0
      %p235 = por %p233, %p234
      %s237 = sadd.s32 %s236, 1
      %p240 = scmp.eq.s32.totalorder %s29, 1
      %p241 = scmp.ne.s32.totalorder %s236, %s238
      %p242 = scmp.eq.s32.totalorder %s29, 0
      %p243 = por %p241, %p242
      %p244 = scmp.ne.s32.totalorder %s236, %s238
      %p245 = scmp.eq.s32.totalorder %s34, 1
      %p246 = por %p244, %p245
      %p247 = scmp.ne.s32.totalorder %s238, %s239
      %p248 = scmp.eq.s32.totalorder %s34, 0
      %p249 = por %p247, %p248
      %p250 = scmp.ne.s32.totalorder %s238, %s239
      %p251 = scmp.eq.s32.totalorder %s35, 1
      %p252 = por %p250, %p251
      %p254 = scmp.ne.s32.totalorder %s239, %s253
      %p255 = scmp.eq.s32.totalorder %s35, 0
      %p256 = por %p254, %p255
      %s258 = sadd.s32 %s257, 1
      %p261 = scmp.eq.s32.totalorder %s29, 1
      %p262 = scmp.ne.s32.totalorder %s257, %s259
      %p263 = scmp.eq.s32.totalorder %s29, 0
      %p264 = por %p262, %p263
      %p265 = scmp.ne.s32.totalorder %s257, %s259
      %p266 = scmp.eq.s32.totalorder %s34, 1
      %p267 = por %p265, %p266
      %p268 = scmp.ne.s32.totalorder %s259, %s260
      %p269 = scmp.eq.s32.totalorder %s34, 0
      %p270 = por %p268, %p269
      %p271 = scmp.ne.s32.totalorder %s259, %s260
      %p272 = scmp.eq.s32.totalorder %s35, 1
      %p273 = por %p271, %p272
      %p275 = scmp.ne.s32.totalorder %s260, %s274
      %p276 = scmp.eq.s32.totalorder %s35, 0
      %p277 = por %p275, %p276
      %s279 = sadd.s32 %s278, 1
      %p282 = scmp.eq.s32.totalorder %s29, 1
      %p283 = scmp.ne.s32.totalorder %s278, %s280
      %p284 = scmp.eq.s32.totalorder %s29, 0
      %p285 = por %p283, %p284
      %p286 = scmp.ne.s32.totalorder %s278, %s280
      %p287 = scmp.eq.s32.totalorder %s34, 1
      %p288 = por %p286, %p287
      %p289 = scmp.ne.s32.totalorder %s280, %s281
      %p290 = scmp.eq.s32.totalorder %s34, 0
      %p291 = por %p289, %p290
      %p292 = scmp.ne.s32.totalorder %s280, %s281
      %p293 = scmp.eq.s32.totalorder %s35, 1
      %p294 = por %p292, %p293
      %p296 = scmp.ne.s32.totalorder %s281, %s295
      %p297 = scmp.eq.s32.totalorder %s35, 0
      %p298 = por %p296, %p297
      %s300 = sadd.s32 %s299, 1
      %p303 = scmp.eq.s32.totalorder %s29, 1
      %p304 = scmp.ne.s32.totalorder %s299, %s301
      %p305 = scmp.eq.s32.totalorder %s29, 0
      %p306 = por %p304, %p305
      %p307 = scmp.ne.s32.totalorder %s299, %s301
      %p308 = scmp.eq.s32.totalorder %s34, 1
      %p309 = por %p307, %p308
      %p310 = scmp.ne.s32.totalorder %s301, %s302
      %p311 = scmp.eq.s32.totalorder %s34, 0
      %p312 = por %p310, %p311
      %p313 = scmp.ne.s32.totalorder %s301, %s302
      %p314 = scmp.eq.s32.totalorder %s35, 1
      %p315 = por %p313, %p314
      %p317 = scmp.ne.s32.totalorder %s302, %s316
      %p318 = scmp.eq.s32.totalorder %s35, 0
      %p319 = por %p317, %p318
      %s321 = sadd.s32 %s320, 1
      %p324 = scmp.eq.s32.totalorder %s29, 1
      %p325 = scmp.ne.s32.totalorder %s320, %s322
      %p326 = scmp.eq.s32.totalorder %s29, 0
      %p327 = por %p325, %p326
      %p328 = scmp.ne.s32.totalorder %s320, %s322
      %p329 = scmp.eq.s32.totalorder %s34, 1
      %p330 = por %p328, %p329
      %p331 = scmp.ne.s32.totalorder %s322, %s323
      %p332 = scmp.eq.s32.totalorder %s34, 0
      %p333 = por %p331, %p332
      %p334 = scmp.ne.s32.totalorder %s322, %s323
      %p335 = scmp.eq.s32.totalorder %s35, 1
      %p336 = por %p334, %p335
      %p338 = scmp.ne.s32.totalorder %s323, %s337
      %p339 = scmp.eq.s32.totalorder %s35, 0
      %p340 = por %p338, %p339
      %s342 = sadd.s32 %s341, 1
      %p345 = scmp.eq.s32.totalorder %s29, 1
      %p346 = scmp.ne.s32.totalorder %s341, %s343
      %p347 = scmp.eq.s32.totalorder %s29, 0
      %p348 = por %p346, %p347
      %p349 = scmp.ne.s32.totalorder %s341, %s343
      %p350 = scmp.eq.s32.totalorder %s34, 1
      %p351 = por %p349, %p350
      %p352 = scmp.ne.s32.totalorder %s343, %s344
      %p353 = scmp.eq.s32.totalorder %s34, 0
      %p354 = por %p352, %p353
      %p355 = scmp.ne.s32.totalorder %s343, %s344
      %p356 = scmp.eq.s32.totalorder %s35, 1
      %p357 = por %p355, %p356
      %p359 = scmp.ne.s32.totalorder %s344, %s358
      %p360 = scmp.eq.s32.totalorder %s35, 0
      %p361 = por %p359, %p360
      %s362 = ssub.s32 %s29, %s36
      %p363 = scmp.eq.s32.totalorder %s362, 0
      %s365 = sadd.s32 %s364, 1
      %s366 = scalar_select %p363, %s364, %s365
      %p369 = pneg %p363
      %p370 = scmp.eq.s32.totalorder %s29, 1
      %p371 = por %p369, %p370
      %p372 = scmp.ne.s32.totalorder %s364, %s367
      %p373 = scmp.eq.s32.totalorder %s29, 0
      %p374 = por %p372, %p373
      %p375 = scmp.ne.s32.totalorder %s364, %s367
      %p376 = scmp.eq.s32.totalorder %s34, 1
      %p377 = por %p375, %p376
      %p378 = scmp.ne.s32.totalorder %s367, %s368
      %p379 = scmp.eq.s32.totalorder %s34, 0
      %p380 = por %p378, %p379
      %p381 = scmp.ne.s32.totalorder %s367, %s368
      %p382 = scmp.eq.s32.totalorder %s35, 1
      %p383 = por %p381, %p382
      %p385 = scmp.ne.s32.totalorder %s368, %s384
      %p386 = scmp.eq.s32.totalorder %s35, 0
      %p387 = por %p385, %p386
      %p388 = scmp.le.s32.totalorder 1, %s29
      %p389 = scmp.lt.s32.totalorder %s29, 3
      %p390 = pnand %p388, %p389
      %p391 = pneg %p390
      // Predicated region
      $region9: #{tpu_custom_call.1} parent=5 // pred_check
        _
      $region10: #{tpu_custom_call.1} parent=5 // pred_check_branch
        %393 = sbr.rel (%p390) target = $region12
      $region11: #{tpu_custom_call.1} parent=5 // pred_region
        %s394 = ssub.s32 %s29, 1
        // Predicated region
        $region13: #{tpu_custom_call.1} parent=11 // pred_check
          %p395 = pneg %p102
        $region14: #{tpu_custom_call.1} parent=11 // pred_check_branch
          %397 = sbr.rel (%p395) target = $region16
        $region15: #{tpu_custom_call.1} parent=11 // pred_region
          %s399 = ssub.s32 64, 64
          %400 = vsyncadd [#allocation3], %s399
          %s402 = sshll.u32 [#allocation2], 4
          %s403 = int_to_ptr.vmem [resolvable:$true] %s402
          %405 = dma.hbm_to_vmem [thread:$0]  %s2, 64, %s403, [#allocation3]
        $region16: #{tpu_custom_call.1} parent=11 // pred_fallthru
          _
        // Predicated region
        $region17: #{tpu_custom_call.1} parent=11 // pred_check
          %p406 = pneg %p123
        $region18: #{tpu_custom_call.1} parent=11 // pred_check_branch
          %408 = sbr.rel (%p406) target = $region20
        $region19: #{tpu_custom_call.1} parent=11 // pred_region
          _
        $region20: #{tpu_custom_call.1} parent=11 // pred_fallthru
          _
        // Predicated region
        $region21: #{tpu_custom_call.1} parent=11 // pred_check
          %p409 = pneg %p144
        $region22: #{tpu_custom_call.1} parent=11 // pred_check_branch
          %411 = sbr.rel (%p409) target = $region24
        $region23: #{tpu_custom_call.1} parent=11 // pred_region
          %s413 = ssub.s32 64, 64
          %414 = vsyncadd [#allocation6], %s413
          %s416 = sshll.u32 [#allocation5], 4
          %s417 = int_to_ptr.vmem [resolvable:$true] %s416
          %419 = dma.hbm_to_vmem [thread:$0]  %s4, 64, %s417, [#allocation6]
        $region24: #{tpu_custom_call.1} parent=11 // pred_fallthru
          _
        // Predicated region
        $region25: #{tpu_custom_call.1} parent=11 // pred_check
          %p420 = pneg %p165
        $region26: #{tpu_custom_call.1} parent=11 // pred_check_branch
          %422 = sbr.rel (%p420) target = $region28
        $region27: #{tpu_custom_call.1} parent=11 // pred_region
          %s424 = ssub.s32 16, 16
          %425 = vsyncadd [#allocation6], %s424
          %s427 = sshll.u32 [#allocation7], 4
          %s428 = int_to_ptr.vmem [resolvable:$true] %s427
          %430 = dma.hbm_to_vmem [thread:$0]  %s5, 16, %s428, [#allocation6]
        $region28: #{tpu_custom_call.1} parent=11 // pred_fallthru
          _
        // Predicated region
        $region29: #{tpu_custom_call.1} parent=11 // pred_check
          %p431 = pneg %p186
        $region30: #{tpu_custom_call.1} parent=11 // pred_check_branch
          %433 = sbr.rel (%p431) target = $region32
        $region31: #{tpu_custom_call.1} parent=11 // pred_region
          _
        $region32: #{tpu_custom_call.1} parent=11 // pred_fallthru
          _
        // Predicated region
        $region33: #{tpu_custom_call.1} parent=11 // pred_check
          %p434 = pneg %p207
        $region34: #{tpu_custom_call.1} parent=11 // pred_check_branch
          %436 = sbr.rel (%p434) target = $region36
        $region35: #{tpu_custom_call.1} parent=11 // pred_region
          _
        $region36: #{tpu_custom_call.1} parent=11 // pred_fallthru
          _
        // Predicated region
        $region37: #{tpu_custom_call.1} parent=11 // pred_check
          %p437 = pneg %p228
        $region38: #{tpu_custom_call.1} parent=11 // pred_check_branch
          %439 = sbr.rel (%p437) target = $region40
        $region39: #{tpu_custom_call.1} parent=11 // pred_region
          %s441 = ssub.s32 32, 32
          %442 = vsyncadd [#allocation9], %s441
          %s443 = sshll.u32 [#allocation8], 4
          %s444 = int_to_ptr.vmem [resolvable:$true] %s443
          %449 = dma.hbm_to_vmem [thread:$0]  %s8, 32, %s444, [#allocation9], 16, 16, 1
        $region40: #{tpu_custom_call.1} parent=11 // pred_fallthru
          _
        // Predicated region
        $region41: #{tpu_custom_call.1} parent=11 // pred_check
          %p450 = pneg %p249
        $region42: #{tpu_custom_call.1} parent=11 // pred_check_branch
          %452 = sbr.rel (%p450) target = $region44
        $region43: #{tpu_custom_call.1} parent=11 // pred_region
          %s454 = ssub.s32 2048, 2048
          %455 = vsyncadd [#allocation9], %s454
          %s456 = sshll.u32 [#allocation10], 4
          %s457 = int_to_ptr.vmem [resolvable:$true] %s456
          %462 = dma.hbm_to_vmem [thread:$0]  %s9, 2048, %s457, [#allocation9], 64, 64, 4
        $region44: #{tpu_custom_call.1} parent=11 // pred_fallthru
          _
        // Predicated region
        $region45: #{tpu_custom_call.1} parent=11 // pred_check
          %p463 = pneg %p270
        $region46: #{tpu_custom_call.1} parent=11 // pred_check_branch
          %465 = sbr.rel (%p463) target = $region48
        $region47: #{tpu_custom_call.1} parent=11 // pred_region
          %s467 = ssub.s32 2048, 2048
          %468 = vsyncadd [#allocation12], %s467
          %s469 = sshll.u32 [#allocation11], 4
          %s470 = int_to_ptr.vmem [resolvable:$true] %s469
          %475 = dma.hbm_to_vmem [thread:$0]  %s10, 2048, %s470, [#allocation12], 64, 64, 4
        $region48: #{tpu_custom_call.1} parent=11 // pred_fallthru
          _
        // Predicated region
        $region49: #{tpu_custom_call.1} parent=11 // pred_check
          %p476 = pneg %p291
        $region50: #{tpu_custom_call.1} parent=11 // pred_check_branch
          %478 = sbr.rel (%p476) target = $region52
        $region51: #{tpu_custom_call.1} parent=11 // pred_region
          %s480 = ssub.s32 32, 32
          %481 = vsyncadd [#allocation12], %s480
          %s482 = sshll.u32 [#allocation13], 4
          %s483 = int_to_ptr.vmem [resolvable:$true] %s482
          %488 = dma.hbm_to_vmem [thread:$0]  %s11, 32, %s483, [#allocation12], 16, 16, 1
        $region52: #{tpu_custom_call.1} parent=11 // pred_fallthru
          _
        // Predicated region
        $region53: #{tpu_custom_call.1} parent=11 // pred_check
          %p489 = pneg %p312
        $region54: #{tpu_custom_call.1} parent=11 // pred_check_branch
          %491 = sbr.rel (%p489) target = $region56
        $region55: #{tpu_custom_call.1} parent=11 // pred_region
          %s493 = ssub.s32 1024, 1024
          %494 = vsyncadd [#allocation15], %s493
          %s495 = sshll.u32 [#allocation14], 4
          %s496 = int_to_ptr.vmem [resolvable:$true] %s495
          %501 = dma.hbm_to_vmem [thread:$0]  %s12, 1024, %s496, [#allocation15], 64, 64, 4
        $region56: #{tpu_custom_call.1} parent=11 // pred_fallthru
          _
        // Predicated region
        $region57: #{tpu_custom_call.1} parent=11 // pred_check
          %p502 = pneg %p333
        $region58: #{tpu_custom_call.1} parent=11 // pred_check_branch
          %504 = sbr.rel (%p502) target = $region60
        $region59: #{tpu_custom_call.1} parent=11 // pred_region
          _
        $region60: #{tpu_custom_call.1} parent=11 // pred_fallthru
          _
        // Predicated region
        $region61: #{tpu_custom_call.1} parent=11 // pred_check
          %p505 = pneg %p354
        $region62: #{tpu_custom_call.1} parent=11 // pred_check_branch
          %507 = sbr.rel (%p505) target = $region64
        $region63: #{tpu_custom_call.1} parent=11 // pred_region
          _
        $region64: #{tpu_custom_call.1} parent=11 // pred_fallthru
          _
      $region12: #{tpu_custom_call.1} parent=5 // pred_fallthru
        _
      %p508 = scmp.lt.s32.totalorder %s29, 2
      // Predicated region
      $region65: #{tpu_custom_call.1} parent=5 // pred_check
        %p509 = pneg %p508
      $region66: #{tpu_custom_call.1} parent=5 // pred_check_branch
        %511 = sbr.rel (%p509) target = $region68
      $region67: #{tpu_custom_call.1} parent=5 // pred_region
        // Predicated region
        $region69: #{tpu_custom_call.1} parent=67 // pred_check
          %p512 = pneg %p49
        $region70: #{tpu_custom_call.1} parent=67 // pred_check_branch
          %514 = sbr.rel (%p512) target = $region72
        $region71: #{tpu_custom_call.1} parent=67 // pred_region
          %s515 = smul.u32 16, %s29
          %p516 = scmp.lt.s32.totalorder %s515, 31
          %s517 = scalar_select %p516, %s515, 31
          %s518 = smul.addr %s517, 4
          %s519 = scalar_lea.vmem %s0, %s518
          %s520 = smul.u32 16, %s29
        $region72: #{tpu_custom_call.1} parent=67 // pred_fallthru
          _
        // Predicated region
        $region73: #{tpu_custom_call.1} parent=67 // pred_check
          %p521 = pneg %p75
        $region74: #{tpu_custom_call.1} parent=67 // pred_check_branch
          %523 = sbr.rel (%p521) target = $region76
        $region75: #{tpu_custom_call.1} parent=67 // pred_region
          %s524 = smul.u32 16, %s29
          %p525 = scmp.lt.s32.totalorder %s524, 31
          %s526 = scalar_select %p525, %s524, 31
          %s527 = smul.addr %s526, 4
          %s528 = scalar_lea.vmem %s1, %s527
          %s529 = smul.u32 16, %s29
        $region76: #{tpu_custom_call.1} parent=67 // pred_fallthru
          _
      $region68: #{tpu_custom_call.1} parent=5 // pred_fallthru
        _
      %p530 = scmp.le.s32.totalorder 1, %s29
      %p531 = scmp.lt.s32.totalorder %s29, 3
      %p532 = pnand %p530, %p531
      %p533 = pneg %p532
      // Predicated region
      $region77: #{tpu_custom_call.1} parent=5 // pred_check
        _
      $region78: #{tpu_custom_call.1} parent=5 // pred_check_branch
        %535 = sbr.rel (%p532) target = $region80
      $region79: #{tpu_custom_call.1} parent=5 // pred_region
        %s536 = ssub.s32 %s29, 1
        // Predicated region
        $region81: #{tpu_custom_call.1} parent=79 // pred_check
          %p537 = pneg %p102
        $region82: #{tpu_custom_call.1} parent=79 // pred_check_branch
          %539 = sbr.rel (%p537) target = $region84
        $region83: #{tpu_custom_call.1} parent=79 // pred_region
          %540 = dma.done [#allocation3], 64
        $region84: #{tpu_custom_call.1} parent=79 // pred_fallthru
          _
        // Predicated region
        $region85: #{tpu_custom_call.1} parent=79 // pred_check
          %p541 = pneg %p144
        $region86: #{tpu_custom_call.1} parent=79 // pred_check_branch
          %543 = sbr.rel (%p541) target = $region88
        $region87: #{tpu_custom_call.1} parent=79 // pred_region
          %544 = dma.done [#allocation6], 64
        $region88: #{tpu_custom_call.1} parent=79 // pred_fallthru
          _
        // Predicated region
        $region89: #{tpu_custom_call.1} parent=79 // pred_check
          %p545 = pneg %p165
        $region90: #{tpu_custom_call.1} parent=79 // pred_check_branch
          %547 = sbr.rel (%p545) target = $region92
        $region91: #{tpu_custom_call.1} parent=79 // pred_region
          %548 = dma.done [#allocation6], 16
        $region92: #{tpu_custom_call.1} parent=79 // pred_fallthru
          _
        // Predicated region
        $region93: #{tpu_custom_call.1} parent=79 // pred_check
          %p549 = pneg %p228
        $region94: #{tpu_custom_call.1} parent=79 // pred_check_branch
          %551 = sbr.rel (%p549) target = $region96
        $region95: #{tpu_custom_call.1} parent=79 // pred_region
          %552 = dma.done [#allocation9], 32
        $region96: #{tpu_custom_call.1} parent=79 // pred_fallthru
          _
        // Predicated region
        $region97: #{tpu_custom_call.1} parent=79 // pred_check
          %p553 = pneg %p249
        $region98: #{tpu_custom_call.1} parent=79 // pred_check_branch
          %555 = sbr.rel (%p553) target = $region100
        $region99: #{tpu_custom_call.1} parent=79 // pred_region
          %556 = dma.done [#allocation9], 2048
        $region100: #{tpu_custom_call.1} parent=79 // pred_fallthru
          _
        // Predicated region
        $region101: #{tpu_custom_call.1} parent=79 // pred_check
          %p557 = pneg %p270
        $region102: #{tpu_custom_call.1} parent=79 // pred_check_branch
          %559 = sbr.rel (%p557) target = $region104
        $region103: #{tpu_custom_call.1} parent=79 // pred_region
          %560 = dma.done [#allocation12], 2048
        $region104: #{tpu_custom_call.1} parent=79 // pred_fallthru
          _
        // Predicated region
        $region105: #{tpu_custom_call.1} parent=79 // pred_check
          %p561 = pneg %p291
        $region106: #{tpu_custom_call.1} parent=79 // pred_check_branch
          %563 = sbr.rel (%p561) target = $region108
        $region107: #{tpu_custom_call.1} parent=79 // pred_region
          %564 = dma.done [#allocation12], 32
        $region108: #{tpu_custom_call.1} parent=79 // pred_fallthru
          _
        // Predicated region
        $region109: #{tpu_custom_call.1} parent=79 // pred_check
          %p565 = pneg %p312
        $region110: #{tpu_custom_call.1} parent=79 // pred_check_branch
          %567 = sbr.rel (%p565) target = $region112
        $region111: #{tpu_custom_call.1} parent=79 // pred_region
          %568 = dma.done [#allocation15], 1024
        $region112: #{tpu_custom_call.1} parent=79 // pred_fallthru
          _
        %s569 = smul.u32 16, %s34
        %p570 = scmp.lt.s32.totalorder %s569, 31
        %s571 = scalar_select %p570, %s569, 31
        %s572 = smul.addr %s571, 4
        %s573 = scalar_lea.vmem %s0, %s572
        %p574 = pneg %p55
        %p575 = pneg %p52
        %s576 = smul.u32 16, %s34
        %p577 = scmp.lt.s32.totalorder %s576, 31
        %s578 = scalar_select %p577, %s576, 31
        %s579 = smul.addr %s578, 4
        %s580 = scalar_lea.vmem %s1, %s579
        %p581 = pneg %p81
        %p582 = pneg %p78
        %p583 = pneg %p102
        %p584 = pneg %p99
        %p585 = pneg %p123
        %p586 = pneg %p120
        %p587 = pneg %p144
        %p588 = pneg %p141
        %p589 = pneg %p165
        %p590 = pneg %p162
        %p591 = pneg %p186
        %p592 = pneg %p183
        %p593 = pneg %p207
        %p594 = pneg %p204
        %p595 = pneg %p228
        %p596 = pneg %p225
        %p597 = pneg %p249
        %p598 = pneg %p246
        %p599 = pneg %p270
        %p600 = pneg %p267
        %p601 = pneg %p291
        %p602 = pneg %p288
        %p603 = pneg %p312
        %p604 = pneg %p309
        %p605 = pneg %p333
        %p606 = pneg %p330
        %p607 = pneg %p354
        %p608 = pneg %p351
        %p609 = pneg %p380
        %p610 = pneg %p377
        %s611 = sand.u32 %s367, 1
        %s612 = scalar_lea.sflag [#allocation4], %s611
        %s613 = sand.u32 %s367, 1
        %s614 = smul.addr %s613, 128
        %s615 = scalar_lea.vmem [#allocation16], %s614
        %s616 = smul.u32 16, %s34
        %p617 = scmp.lt.s32.totalorder %s616, 31
        %s618 = scalar_select %p617, %s616, 31
        %s619 = smul.addr %s618, 4
        %s620 = scalar_lea.vmem %s0, %s619
        %s621 = smul.u32 16, %s34
        %s622 = smul.u32 16, %s34
        %p623 = scmp.lt.s32.totalorder %s622, 31
        %s624 = scalar_select %p623, %s622, 31
        %s625 = smul.addr %s624, 4
        %s626 = scalar_lea.vmem %s1, %s625
        %s627 = smul.u32 16, %s34
        %s628 = smul.u32 16, %s34
        %v630 = vld [vmem:[%s620] sm:$0xf]
        %v631 = vld [vmem:[%s620 + $0x4] sm:$0xf]
        %v632 = vld [vmem:[%s620 + $0x8] sm:$0xf]
        %v633 = vld [vmem:[%s620 + $0xc] sm:$0xf]
        %v634 = vld [vmem:[%s620 + $0x10] sm:$0xf]
        %v635 = vld [vmem:[%s620 + $0x14] sm:$0xf]
        %v636 = vld [vmem:[%s620 + $0x18] sm:$0xf]
        %v637 = vld [vmem:[%s620 + $0x1c] sm:$0xf]
        %v638 = vld [vmem:[%s620 + $0x20] sm:$0xf]
        %v639 = vld [vmem:[%s620 + $0x24] sm:$0xf]
        %v640 = vld [vmem:[%s620 + $0x28] sm:$0xf]
        %v641 = vld [vmem:[%s620 + $0x2c] sm:$0xf]
        %v642 = vld [vmem:[%s620 + $0x30] sm:$0xf]
        %v643 = vld [vmem:[%s620 + $0x34] sm:$0xf]
        %v644 = vld [vmem:[%s620 + $0x38] sm:$0xf]
        %v645 = vld [vmem:[%s620 + $0x3c] sm:$0xf]
        %v646 = vld [vmem:[#allocation2] sm:$0xf]
        %v647 = vld [vmem:[%s3] sm:$0x1]
        %v649 = vlaneseq
        %v650 = vshrl.u32 %v649, 7
        %v651 = vsub.s32 0, %v650
        %v652 = vrot.slane %v647, %v651
        %v670 = vunpack.c.l.b16 %v630
        %v671 = vunpack.c.l.b16 %v631
        %v672 = vunpack.c.l.b16 %v632
        %v673 = vunpack.c.l.b16 %v633
        %v674 = vunpack.c.l.b16 %v634
        %v675 = vunpack.c.l.b16 %v635
        %v676 = vunpack.c.l.b16 %v636
        %v677 = vunpack.c.l.b16 %v637
        %v678 = vunpack.c.l.b16 %v638
        %v679 = vunpack.c.l.b16 %v639
        %v680 = vunpack.c.l.b16 %v640
        %v681 = vunpack.c.l.b16 %v641
        %v682 = vunpack.c.l.b16 %v642
        %v683 = vunpack.c.l.b16 %v643
        %v684 = vunpack.c.l.b16 %v644
        %v685 = vunpack.c.l.b16 %v645
        %v686 = vpack.c.b16 %v671, %v670
        %v687 = vpack.c.b16 %v673, %v672
        %v688 = vpack.c.b16 %v675, %v674
        %v689 = vpack.c.b16 %v677, %v676
        %v690 = vpack.c.b16 %v679, %v678
        %v691 = vpack.c.b16 %v681, %v680
        %v692 = vpack.c.b16 %v683, %v682
        %v693 = vpack.c.b16 %v685, %v684
        %vm694 = vcmask 64512
        %v696 = vsel %vm694, %v686, 0
        %v699 = vsel %vm694, %v687, 0
        %v702 = vsel %vm694, %v688, 0
        %v705 = vsel %vm694, %v689, 0
        %v708 = vsel %vm694, %v690, 0
        %v711 = vsel %vm694, %v691, 0
        %v714 = vsel %vm694, %v692, 0
        %v717 = vsel %vm694, %v693, 0
        %vm719 = vcmask 1043456
        %v721 = vsel %vm719, %v646, 0
        %723 = vmatprep.subr.bf16.mxu0 0
        %724 = vmatpush1.bf16.msra.mxu0 %v721
        %725 = vmatprep.subr.bf16.mxu0 0
        %726 = vmatpush1.bf16.msra.mxu0 0
        %727 = vmatprep.subr.bf16.mxu0 0
        %728 = vmatpush1.bf16.msra.mxu0 0
        %729 = vmatprep.subr.bf16.mxu0 0
        %730 = vmatpush1.bf16.msra.mxu0 0
        %731 = vmatprep.subr.bf16.mxu0 0
        %732 = vmatpush1.bf16.msra.mxu0 0
        %733 = vmatprep.subr.bf16.mxu0 0
        %734 = vmatpush1.bf16.msra.mxu0 0
        %735 = vmatprep.subr.bf16.mxu0 0
        %736 = vmatpush1.bf16.msra.mxu0 0
        %737 = vmatprep.subr.bf16.mxu0 0
        %738 = vmatpush1.bf16.msra.mxu0 0
        %739 = vmatprep.subr.bf16.mxu0 0
        %740 = vmatpush1.bf16.msra.mxu0 0
        %741 = vmatprep.subr.bf16.mxu0 0
        %742 = vmatpush1.bf16.msra.mxu0 0
        %743 = vmatprep.subr.bf16.mxu0 0
        %744 = vmatpush1.bf16.msra.mxu0 0
        %745 = vmatprep.subr.bf16.mxu0 0
        %746 = vmatpush1.bf16.msra.mxu0 0
        %747 = vmatprep.subr.bf16.mxu0 0
        %748 = vmatpush1.bf16.msra.mxu0 0
        %749 = vmatprep.subr.bf16.mxu0 0
        %750 = vmatpush1.bf16.msra.mxu0 0
        %751 = vmatprep.subr.bf16.mxu0 0
        %752 = vmatpush1.bf16.msra.mxu0 0
        %753 = vmatprep.subr.bf16.mxu0 0
        %754 = vmatpush1.bf16.msra.mxu0 0
        %755 = vmatprep.mubr.bf16.mxu0 0
        %756 = vmatmul.mubr.bf16.gmra.mrb[0].mxu0 %v696
        %v757 = vpop.f32.mrb[0].mxu0
        %v758 = vadd.f32 %v652, %v757
        %v759 = vpop.f32.mrb[0].mxu0
        %v760 = vpop.f32.mrb[0].mxu0
        %v761 = vadd.f32 %v652, %v760
        %v762 = vpop.f32.mrb[0].mxu0
        %763 = vmatprep.mubr.bf16.mxu0 0
        %764 = vmatmul.mubr.bf16.gmra.mrb[0].mxu0 %v699
        %v765 = vpop.f32.mrb[0].mxu0
        %v766 = vadd.f32 %v652, %v765
        %v767 = vpop.f32.mrb[0].mxu0
        %v768 = vpop.f32.mrb[0].mxu0
        %v769 = vadd.f32 %v652, %v768
        %v770 = vpop.f32.mrb[0].mxu0
        %771 = vmatprep.mubr.bf16.mxu0 0
        %772 = vmatmul.mubr.bf16.gmra.mrb[0].mxu0 %v702
        %v773 = vpop.f32.mrb[0].mxu0
        %v774 = vadd.f32 %v652, %v773
        %v775 = vpop.f32.mrb[0].mxu0
        %v776 = vpop.f32.mrb[0].mxu0
        %v777 = vadd.f32 %v652, %v776
        %v778 = vpop.f32.mrb[0].mxu0
        %779 = vmatprep.mubr.bf16.mxu0 0
        %780 = vmatmul.mubr.bf16.gmra.mrb[0].mxu0 %v705
        %v781 = vpop.f32.mrb[0].mxu0
        %v782 = vadd.f32 %v652, %v781
        %v783 = vpop.f32.mrb[0].mxu0
        %v784 = vpop.f32.mrb[0].mxu0
        %v785 = vadd.f32 %v652, %v784
        %v786 = vpop.f32.mrb[0].mxu0
        %787 = vmatprep.mubr.bf16.mxu0 0
        %788 = vmatmul.mubr.bf16.gmra.mrb[0].mxu0 %v708
        %v789 = vpop.f32.mrb[0].mxu0
        %v790 = vadd.f32 %v652, %v789
        %v791 = vpop.f32.mrb[0].mxu0
        %v792 = vpop.f32.mrb[0].mxu0
        %v793 = vadd.f32 %v652, %v792
        %v794 = vpop.f32.mrb[0].mxu0
        %795 = vmatprep.mubr.bf16.mxu0 0
        %796 = vmatmul.mubr.bf16.gmra.mrb[0].mxu0 %v711
        %v797 = vpop.f32.mrb[0].mxu0
        %v798 = vadd.f32 %v652, %v797
        %v799 = vpop.f32.mrb[0].mxu0
        %v800 = vpop.f32.mrb[0].mxu0
        %v801 = vadd.f32 %v652, %v800
        %v802 = vpop.f32.mrb[0].mxu0
        %803 = vmatprep.mubr.bf16.mxu0 0
        %804 = vmatmul.mubr.bf16.gmra.mrb[0].mxu0 %v714
        %v805 = vpop.f32.mrb[0].mxu0
        %v806 = vadd.f32 %v652, %v805
        %v807 = vpop.f32.mrb[0].mxu0
        %v808 = vpop.f32.mrb[0].mxu0
        %v809 = vadd.f32 %v652, %v808
        %v810 = vpop.f32.mrb[0].mxu0
        %811 = vmatprep.mubr.bf16.mxu0 0
        %812 = vmatmul.mubr.bf16.gmra.mrb[0].mxu0 %v717
        %v813 = vpop.f32.mrb[0].mxu0
        %v814 = vadd.f32 %v652, %v813
        %v815 = vpop.f32.mrb[0].mxu0
        %v816 = vpop.f32.mrb[0].mxu0
        %v817 = vadd.f32 %v652, %v816
        %v818 = vpop.f32.mrb[0].mxu0
        %819 = vdwg.mxu0
        %v820 = vmax.f32 %v758, 0.0
        %v821 = vmax.f32 %v761, 0.0
        %v822 = vmax.f32 %v766, 0.0
        %v823 = vmax.f32 %v769, 0.0
        %v824 = vmax.f32 %v774, 0.0
        %v825 = vmax.f32 %v777, 0.0
        %v826 = vmax.f32 %v782, 0.0
        %v827 = vmax.f32 %v785, 0.0
        %v828 = vmax.f32 %v790, 0.0
        %v829 = vmax.f32 %v793, 0.0
        %v830 = vmax.f32 %v798, 0.0
        %v831 = vmax.f32 %v801, 0.0
        %v832 = vmax.f32 %v806, 0.0
        %v833 = vmax.f32 %v809, 0.0
        %v834 = vmax.f32 %v814, 0.0
        %v835 = vmax.f32 %v817, 0.0
        %v836 = vld [vmem:[%s626] sm:$0xf]
        %v837 = vld [vmem:[%s626 + $0x4] sm:$0xf]
        %v838 = vld [vmem:[%s626 + $0x8] sm:$0xf]
        %v839 = vld [vmem:[%s626 + $0xc] sm:$0xf]
        %v840 = vld [vmem:[%s626 + $0x10] sm:$0xf]
        %v841 = vld [vmem:[%s626 + $0x14] sm:$0xf]
        %v842 = vld [vmem:[%s626 + $0x18] sm:$0xf]
        %v843 = vld [vmem:[%s626 + $0x1c] sm:$0xf]
        %v844 = vld [vmem:[%s626 + $0x20] sm:$0xf]
        %v845 = vld [vmem:[%s626 + $0x24] sm:$0xf]
        %v846 = vld [vmem:[%s626 + $0x28] sm:$0xf]
        %v847 = vld [vmem:[%s626 + $0x2c] sm:$0xf]
        %v848 = vld [vmem:[%s626 + $0x30] sm:$0xf]
        %v849 = vld [vmem:[%s626 + $0x34] sm:$0xf]
        %v850 = vld [vmem:[%s626 + $0x38] sm:$0xf]
        %v851 = vld [vmem:[%s626 + $0x3c] sm:$0xf]
        %v852 = vld [vmem:[#allocation5] sm:$0xf]
        %v853 = vld [vmem:[#allocation7] sm:$0x1]
        %v855 = vlaneseq
        %v856 = vshrl.u32 %v855, 7
        %v857 = vsub.s32 0, %v856
        %v858 = vrot.slane %v853, %v857
        %v876 = vunpack.c.l.b16 %v836
        %v877 = vunpack.c.l.b16 %v837
        %v878 = vunpack.c.l.b16 %v838
        %v879 = vunpack.c.l.b16 %v839
        %v880 = vunpack.c.l.b16 %v840
        %v881 = vunpack.c.l.b16 %v841
        %v882 = vunpack.c.l.b16 %v842
        %v883 = vunpack.c.l.b16 %v843
        %v884 = vunpack.c.l.b16 %v844
        %v885 = vunpack.c.l.b16 %v845
        %v886 = vunpack.c.l.b16 %v846
        %v887 = vunpack.c.l.b16 %v847
        %v888 = vunpack.c.l.b16 %v848
        %v889 = vunpack.c.l.b16 %v849
        %v890 = vunpack.c.l.b16 %v850
        %v891 = vunpack.c.l.b16 %v851
        %v892 = vpack.c.b16 %v877, %v876
        %v893 = vpack.c.b16 %v879, %v878
        %v894 = vpack.c.b16 %v881, %v880
        %v895 = vpack.c.b16 %v883, %v882
        %v896 = vpack.c.b16 %v885, %v884
        %v897 = vpack.c.b16 %v887, %v886
        %v898 = vpack.c.b16 %v889, %v888
        %v899 = vpack.c.b16 %v891, %v890
        %v901 = vsel %vm694, %v892, 0
        %v904 = vsel %vm694, %v893, 0
        %v907 = vsel %vm694, %v894, 0
        %v910 = vsel %vm694, %v895, 0
        %v913 = vsel %vm694, %v896, 0
        %v916 = vsel %vm694, %v897, 0
        %v919 = vsel %vm694, %v898, 0
        %v922 = vsel %vm694, %v899, 0
        %v925 = vsel %vm719, %v852, 0
        %927 = vmatprep.subr.bf16.mxu0 0
        %928 = vmatpush1.bf16.msra.mxu0 %v925
        %929 = vmatprep.subr.bf16.mxu0 0
        %930 = vmatpush1.bf16.msra.mxu0 0
        %931 = vmatprep.subr.bf16.mxu0 0
        %932 = vmatpush1.bf16.msra.mxu0 0
        %933 = vmatprep.subr.bf16.mxu0 0
        %934 = vmatpush1.bf16.msra.mxu0 0
        %935 = vmatprep.subr.bf16.mxu0 0
        %936 = vmatpush1.bf16.msra.mxu0 0
        %937 = vmatprep.subr.bf16.mxu0 0
        %938 = vmatpush1.bf16.msra.mxu0 0
        %939 = vmatprep.subr.bf16.mxu0 0
        %940 = vmatpush1.bf16.msra.mxu0 0
        %941 = vmatprep.subr.bf16.mxu0 0
        %942 = vmatpush1.bf16.msra.mxu0 0
        %943 = vmatprep.subr.bf16.mxu0 0
        %944 = vmatpush1.bf16.msra.mxu0 0
        %945 = vmatprep.subr.bf16.mxu0 0
        %946 = vmatpush1.bf16.msra.mxu0 0
        %947 = vmatprep.subr.bf16.mxu0 0
        %948 = vmatpush1.bf16.msra.mxu0 0
        %949 = vmatprep.subr.bf16.mxu0 0
        %950 = vmatpush1.bf16.msra.mxu0 0
        %951 = vmatprep.subr.bf16.mxu0 0
        %952 = vmatpush1.bf16.msra.mxu0 0
        %953 = vmatprep.subr.bf16.mxu0 0
        %954 = vmatpush1.bf16.msra.mxu0 0
        %955 = vmatprep.subr.bf16.mxu0 0
        %956 = vmatpush1.bf16.msra.mxu0 0
        %957 = vmatprep.subr.bf16.mxu0 0
        %958 = vmatpush1.bf16.msra.mxu0 0
        %959 = vmatprep.mubr.bf16.mxu0 0
        %960 = vmatmul.mubr.bf16.gmra.mrb[0].mxu0 %v901
        %v961 = vpop.f32.mrb[0].mxu0
        %v962 = vadd.f32 %v858, %v961
        %v963 = vpop.f32.mrb[0].mxu0
        %v964 = vpop.f32.mrb[0].mxu0
        %v965 = vadd.f32 %v858, %v964
        %v966 = vpop.f32.mrb[0].mxu0
        %967 = vmatprep.mubr.bf16.mxu0 0
        %968 = vmatmul.mubr.bf16.gmra.mrb[0].mxu0 %v904
        %v969 = vpop.f32.mrb[0].mxu0
        %v970 = vadd.f32 %v858, %v969
        %v971 = vpop.f32.mrb[0].mxu0
        %v972 = vpop.f32.mrb[0].mxu0
        %v973 = vadd.f32 %v858, %v972
        %v974 = vpop.f32.mrb[0].mxu0
        %975 = vmatprep.mubr.bf16.mxu0 0
        %976 = vmatmul.mubr.bf16.gmra.mrb[0].mxu0 %v907
        %v977 = vpop.f32.mrb[0].mxu0
        %v978 = vadd.f32 %v858, %v977
        %v979 = vpop.f32.mrb[0].mxu0
        %v980 = vpop.f32.mrb[0].mxu0
        %v981 = vadd.f32 %v858, %v980
        %v982 = vpop.f32.mrb[0].mxu0
        %983 = vmatprep.mubr.bf16.mxu0 0
        %984 = vmatmul.mubr.bf16.gmra.mrb[0].mxu0 %v910
        %v985 = vpop.f32.mrb[0].mxu0
        %v986 = vadd.f32 %v858, %v985
        %v987 = vpop.f32.mrb[0].mxu0
        %v988 = vpop.f32.mrb[0].mxu0
        %v989 = vadd.f32 %v858, %v988
        %v990 = vpop.f32.mrb[0].mxu0
        %991 = vmatprep.mubr.bf16.mxu0 0
        %992 = vmatmul.mubr.bf16.gmra.mrb[0].mxu0 %v913
        %v993 = vpop.f32.mrb[0].mxu0
        %v994 = vadd.f32 %v858, %v993
        %v995 = vpop.f32.mrb[0].mxu0
        %v996 = vpop.f32.mrb[0].mxu0
        %v997 = vadd.f32 %v858, %v996
        %v998 = vpop.f32.mrb[0].mxu0
        %999 = vmatprep.mubr.bf16.mxu0 0
        %1000 = vmatmul.mubr.bf16.gmra.mrb[0].mxu0 %v916
        %v1001 = vpop.f32.mrb[0].mxu0
        %v1002 = vadd.f32 %v858, %v1001
        %v1003 = vpop.f32.mrb[0].mxu0
        %v1004 = vpop.f32.mrb[0].mxu0
        %v1005 = vadd.f32 %v858, %v1004
        %v1006 = vpop.f32.mrb[0].mxu0
        %1007 = vmatprep.mubr.bf16.mxu0 0
        %1008 = vmatmul.mubr.bf16.gmra.mrb[0].mxu0 %v919
        %v1009 = vpop.f32.mrb[0].mxu0
        %v1010 = vadd.f32 %v858, %v1009
        %v1011 = vpop.f32.mrb[0].mxu0
        %v1012 = vpop.f32.mrb[0].mxu0
        %v1013 = vadd.f32 %v858, %v1012
        %v1014 = vpop.f32.mrb[0].mxu0
        %1015 = vmatprep.mubr.bf16.mxu0 0
        %1016 = vmatmul.mubr.bf16.gmra.mrb[0].mxu0 %v922
        %v1017 = vpop.f32.mrb[0].mxu0
        %v1018 = vadd.f32 %v858, %v1017
        %v1019 = vpop.f32.mrb[0].mxu0
        %v1020 = vpop.f32.mrb[0].mxu0
        %v1021 = vadd.f32 %v858, %v1020
        %v1022 = vpop.f32.mrb[0].mxu0
        %1023 = vdwg.mxu0
        %v1024 = vmax.f32 %v962, 0.0
        %v1025 = vmax.f32 %v965, 0.0
        %v1026 = vmax.f32 %v970, 0.0
        %v1027 = vmax.f32 %v973, 0.0
        %v1028 = vmax.f32 %v978, 0.0
        %v1029 = vmax.f32 %v981, 0.0
        %v1030 = vmax.f32 %v986, 0.0
        %v1031 = vmax.f32 %v989, 0.0
        %v1032 = vmax.f32 %v994, 0.0
        %v1033 = vmax.f32 %v997, 0.0
        %v1034 = vmax.f32 %v1002, 0.0
        %v1035 = vmax.f32 %v1005, 0.0
        %v1036 = vmax.f32 %v1010, 0.0
        %v1037 = vmax.f32 %v1013, 0.0
        %v1038 = vmax.f32 %v1018, 0.0
        %v1039 = vmax.f32 %v1021, 0.0
        %v1040 = vpack.c.bf16 %v1025, %v1024
        %v1041 = vpack.c.bf16 %v1027, %v1026
        %v1042 = vpack.c.bf16 %v1029, %v1028
        %v1043 = vpack.c.bf16 %v1031, %v1030
        %v1044 = vpack.c.bf16 %v1033, %v1032
        %v1045 = vpack.c.bf16 %v1035, %v1034
        %v1046 = vpack.c.bf16 %v1037, %v1036
        %v1047 = vpack.c.bf16 %v1039, %v1038
        %v1048 = vpack.c.bf16 %v821, %v820
        %v1049 = vpack.c.bf16 %v823, %v822
        %v1050 = vpack.c.bf16 %v825, %v824
        %v1051 = vpack.c.bf16 %v827, %v826
        %v1052 = vpack.c.bf16 %v829, %v828
        %v1053 = vpack.c.bf16 %v831, %v830
        %v1054 = vpack.c.bf16 %v833, %v832
        %v1055 = vpack.c.bf16 %v835, %v834
        %v1056 = vld [vmem:[%s6] sm:$0xf]
        %v1057 = vld [vmem:[%s6 + $0x4] sm:$0xf]
        %v1058 = vld [vmem:[%s6 + $0x8] sm:$0xf]
        %v1059 = vld [vmem:[%s6 + $0xc] sm:$0xf]
        %v1060 = vld [vmem:[%s6 + $0x10] sm:$0xf]
        %v1061 = vld [vmem:[%s6 + $0x14] sm:$0xf]
        %v1062 = vld [vmem:[%s6 + $0x18] sm:$0xf]
        %v1063 = vld [vmem:[%s6 + $0x1c] sm:$0xf]
        %v1064 = vld [vmem:[%s6 + $0x20] sm:$0xf]
        %v1065 = vld [vmem:[%s6 + $0x24] sm:$0xf]
        %v1066 = vld [vmem:[%s6 + $0x28] sm:$0xf]
        %v1067 = vld [vmem:[%s6 + $0x2c] sm:$0xf]
        %v1068 = vld [vmem:[%s6 + $0x30] sm:$0xf]
        %v1069 = vld [vmem:[%s6 + $0x34] sm:$0xf]
        %v1070 = vld [vmem:[%s6 + $0x38] sm:$0xf]
        %v1071 = vld [vmem:[%s6 + $0x3c] sm:$0xf]
        %v1072 = vld [vmem:[%s7] sm:$0xf]
        %v1073 = vld [vmem:[%s7 + $0x4] sm:$0xf]
        %v1074 = vld [vmem:[%s7 + $0x8] sm:$0xf]
        %v1075 = vld [vmem:[%s7 + $0xc] sm:$0xf]
        %v1076 = vld [vmem:[%s7 + $0x10] sm:$0xf]
        %v1077 = vld [vmem:[%s7 + $0x14] sm:$0xf]
        %v1078 = vld [vmem:[%s7 + $0x18] sm:$0xf]
        %v1079 = vld [vmem:[%s7 + $0x1c] sm:$0xf]
        %v1080 = vld [vmem:[%s7 + $0x20] sm:$0xf]
        %v1081 = vld [vmem:[%s7 + $0x24] sm:$0xf]
        %v1082 = vld [vmem:[%s7 + $0x28] sm:$0xf]
        %v1083 = vld [vmem:[%s7 + $0x2c] sm:$0xf]
        %v1084 = vld [vmem:[%s7 + $0x30] sm:$0xf]
        %v1085 = vld [vmem:[%s7 + $0x34] sm:$0xf]
        %v1086 = vld [vmem:[%s7 + $0x38] sm:$0xf]
        %v1087 = vld [vmem:[%s7 + $0x3c] sm:$0xf]
        %v1104 = vunpack.c.l.b16 %v1072
        %v1105 = vunpack.c.l.b16 %v1073
        %v1106 = vunpack.c.l.b16 %v1074
        %v1107 = vunpack.c.l.b16 %v1075
        %v1108 = vunpack.c.l.b16 %v1076
        %v1109 = vunpack.c.l.b16 %v1077
        %v1110 = vunpack.c.l.b16 %v1078
        %v1111 = vunpack.c.l.b16 %v1079
        %v1112 = vunpack.c.l.b16 %v1080
        %v1113 = vunpack.c.l.b16 %v1081
        %v1114 = vunpack.c.l.b16 %v1082
        %v1115 = vunpack.c.l.b16 %v1083
        %v1116 = vunpack.c.l.b16 %v1084
        %v1117 = vunpack.c.l.b16 %v1085
        %v1118 = vunpack.c.l.b16 %v1086
        %v1119 = vunpack.c.l.b16 %v1087
        %v1120 = vpack.c.b16 %v1105, %v1104
        %v1121 = vpack.c.b16 %v1107, %v1106
        %v1122 = vpack.c.b16 %v1109, %v1108
        %v1123 = vpack.c.b16 %v1111, %v1110
        %v1124 = vpack.c.b16 %v1113, %v1112
        %v1125 = vpack.c.b16 %v1115, %v1114
        %v1126 = vpack.c.b16 %v1117, %v1116
        %v1127 = vpack.c.b16 %v1119, %v1118
        %1136 = vmatprep.subr.bf16.mxu0 0
        %1137 = vmatpush1.bf16.msra.mxu0 %v1120
        %1138 = vmatprep.subr.bf16.mxu0 0
        %1139 = vmatpush1.bf16.msra.mxu0 %v1121
        %1140 = vmatprep.subr.bf16.mxu0 0
        %1141 = vmatpush1.bf16.msra.mxu0 %v1122
        %1142 = vmatprep.subr.bf16.mxu0 0
        %1143 = vmatpush1.bf16.msra.mxu0 %v1123
        %1144 = vmatprep.subr.bf16.mxu0 0
        %1145 = vmatpush1.bf16.msra.mxu0 %v1124
        %1146 = vmatprep.subr.bf16.mxu0 0
        %1147 = vmatpush1.bf16.msra.mxu0 %v1125
        %1148 = vmatprep.subr.bf16.mxu0 0
        %1149 = vmatpush1.bf16.msra.mxu0 %v1126
        %1150 = vmatprep.subr.bf16.mxu0 0
        %1151 = vmatpush1.bf16.msra.mxu0 %v1127
        %1152 = vmatprep.subr.bf16.mxu0 0
        %1153 = vmatpush1.bf16.msra.mxu0 0
        %1154 = vmatprep.subr.bf16.mxu0 0
        %1155 = vmatpush1.bf16.msra.mxu0 0
        %1156 = vmatprep.subr.bf16.mxu0 0
        %1157 = vmatpush1.bf16.msra.mxu0 0
        %1158 = vmatprep.subr.bf16.mxu0 0
        %1159 = vmatpush1.bf16.msra.mxu0 0
        %1160 = vmatprep.subr.bf16.mxu0 0
        %1161 = vmatpush1.bf16.msra.mxu0 0
        %1162 = vmatprep.subr.bf16.mxu0 0
        %1163 = vmatpush1.bf16.msra.mxu0 0
        %1164 = vmatprep.subr.bf16.mxu0 0
        %1165 = vmatpush1.bf16.msra.mxu0 0
        %1166 = vmatprep.subr.bf16.mxu0 0
        %1167 = vmatpush1.bf16.msra.mxu0 0
        %1168 = vmatprep.mubr.bf16.mxu0 0
        %1169 = vmatmul.mubr.bf16.gmra.mrb[0].mxu0 %v1040
        %v1170 = vpop.f32.mrb[0].mxu0
        %v1171 = vadd.f32 0.0, %v1170
        %v1172 = vpop.f32.mrb[0].mxu0
        %v1173 = vpop.f32.mrb[0].mxu0
        %v1174 = vadd.f32 0.0, %v1173
        %v1175 = vpop.f32.mrb[0].mxu0
        %1176 = vmatprep.mubr.bf16.mxu0 0
        %1177 = vmatmul.mubr.bf16.gmra.mrb[0].mxu0 %v1041
        %v1178 = vpop.f32.mrb[0].mxu0
        %v1179 = vadd.f32 0.0, %v1178
        %v1180 = vpop.f32.mrb[0].mxu0
        %v1181 = vpop.f32.mrb[0].mxu0
        %v1182 = vadd.f32 0.0, %v1181
        %v1183 = vpop.f32.mrb[0].mxu0
        %1184 = vmatprep.mubr.bf16.mxu0 0
        %1185 = vmatmul.mubr.bf16.gmra.mrb[0].mxu0 %v1042
        %v1186 = vpop.f32.mrb[0].mxu0
        %v1187 = vadd.f32 0.0, %v1186
        %v1188 = vpop.f32.mrb[0].mxu0
        %v1189 = vpop.f32.mrb[0].mxu0
        %v1190 = vadd.f32 0.0, %v1189
        %v1191 = vpop.f32.mrb[0].mxu0
        %1192 = vmatprep.mubr.bf16.mxu0 0
        %1193 = vmatmul.mubr.bf16.gmra.mrb[0].mxu0 %v1043
        %v1194 = vpop.f32.mrb[0].mxu0
        %v1195 = vadd.f32 0.0, %v1194
        %v1196 = vpop.f32.mrb[0].mxu0
        %v1197 = vpop.f32.mrb[0].mxu0
        %v1198 = vadd.f32 0.0, %v1197
        %v1199 = vpop.f32.mrb[0].mxu0
        %1200 = vmatprep.mubr.bf16.mxu0 0
        %1201 = vmatmul.mubr.bf16.gmra.mrb[0].mxu0 %v1044
        %v1202 = vpop.f32.mrb[0].mxu0
        %v1203 = vadd.f32 0.0, %v1202
        %v1204 = vpop.f32.mrb[0].mxu0
        %v1205 = vpop.f32.mrb[0].mxu0
        %v1206 = vadd.f32 0.0, %v1205
        %v1207 = vpop.f32.mrb[0].mxu0
        %1208 = vmatprep.mubr.bf16.mxu0 0
        %1209 = vmatmul.mubr.bf16.gmra.mrb[0].mxu0 %v1045
        %v1210 = vpop.f32.mrb[0].mxu0
        %v1211 = vadd.f32 0.0, %v1210
        %v1212 = vpop.f32.mrb[0].mxu0
        %v1213 = vpop.f32.mrb[0].mxu0
        %v1214 = vadd.f32 0.0, %v1213
        %v1215 = vpop.f32.mrb[0].mxu0
        %1216 = vmatprep.mubr.bf16.mxu0 0
        %1217 = vmatmul.mubr.bf16.gmra.mrb[0].mxu0 %v1046
        %v1218 = vpop.f32.mrb[0].mxu0
        %v1219 = vadd.f32 0.0, %v1218
        %v1220 = vpop.f32.mrb[0].mxu0
        %v1221 = vpop.f32.mrb[0].mxu0
        %v1222 = vadd.f32 0.0, %v1221
        %v1223 = vpop.f32.mrb[0].mxu0
        %1224 = vmatprep.mubr.bf16.mxu0 0
        %1225 = vmatmul.mubr.bf16.gmra.mrb[0].mxu0 %v1047
        %v1226 = vpop.f32.mrb[0].mxu0
        %v1227 = vadd.f32 0.0, %v1226
        %v1228 = vpop.f32.mrb[0].mxu0
        %v1229 = vpop.f32.mrb[0].mxu0
        %v1230 = vadd.f32 0.0, %v1229
        %v1231 = vpop.f32.mrb[0].mxu0
        %1232 = vdwg.mxu0
        %v1249 = vunpack.c.l.b16 %v1056
        %v1250 = vunpack.c.l.b16 %v1057
        %v1251 = vunpack.c.l.b16 %v1058
        %v1252 = vunpack.c.l.b16 %v1059
        %v1253 = vunpack.c.l.b16 %v1060
        %v1254 = vunpack.c.l.b16 %v1061
        %v1255 = vunpack.c.l.b16 %v1062
        %v1256 = vunpack.c.l.b16 %v1063
        %v1257 = vunpack.c.l.b16 %v1064
        %v1258 = vunpack.c.l.b16 %v1065
        %v1259 = vunpack.c.l.b16 %v1066
        %v1260 = vunpack.c.l.b16 %v1067
        %v1261 = vunpack.c.l.b16 %v1068
        %v1262 = vunpack.c.l.b16 %v1069
        %v1263 = vunpack.c.l.b16 %v1070
        %v1264 = vunpack.c.l.b16 %v1071
        %v1265 = vpack.c.b16 %v1250, %v1249
        %v1266 = vpack.c.b16 %v1252, %v1251
        %v1267 = vpack.c.b16 %v1254, %v1253
        %v1268 = vpack.c.b16 %v1256, %v1255
        %v1269 = vpack.c.b16 %v1258, %v1257
        %v1270 = vpack.c.b16 %v1260, %v1259
        %v1271 = vpack.c.b16 %v1262, %v1261
        %v1272 = vpack.c.b16 %v1264, %v1263
        %1281 = vmatprep.subr.bf16.mxu0 0
        %1282 = vmatpush1.bf16.msra.mxu0 %v1265
        %1283 = vmatprep.subr.bf16.mxu0 0
        %1284 = vmatpush1.bf16.msra.mxu0 %v1266
        %1285 = vmatprep.subr.bf16.mxu0 0
        %1286 = vmatpush1.bf16.msra.mxu0 %v1267
        %1287 = vmatprep.subr.bf16.mxu0 0
        %1288 = vmatpush1.bf16.msra.mxu0 %v1268
        %1289 = vmatprep.subr.bf16.mxu0 0
        %1290 = vmatpush1.bf16.msra.mxu0 %v1269
        %1291 = vmatprep.subr.bf16.mxu0 0
        %1292 = vmatpush1.bf16.msra.mxu0 %v1270
        %1293 = vmatprep.subr.bf16.mxu0 0
        %1294 = vmatpush1.bf16.msra.mxu0 %v1271
        %1295 = vmatprep.subr.bf16.mxu0 0
        %1296 = vmatpush1.bf16.msra.mxu0 %v1272
        %1297 = vmatprep.subr.bf16.mxu0 0
        %1298 = vmatpush1.bf16.msra.mxu0 0
        %1299 = vmatprep.subr.bf16.mxu0 0
        %1300 = vmatpush1.bf16.msra.mxu0 0
        %1301 = vmatprep.subr.bf16.mxu0 0
        %1302 = vmatpush1.bf16.msra.mxu0 0
        %1303 = vmatprep.subr.bf16.mxu0 0
        %1304 = vmatpush1.bf16.msra.mxu0 0
        %1305 = vmatprep.subr.bf16.mxu0 0
        %1306 = vmatpush1.bf16.msra.mxu0 0
        %1307 = vmatprep.subr.bf16.mxu0 0
        %1308 = vmatpush1.bf16.msra.mxu0 0
        %1309 = vmatprep.subr.bf16.mxu0 0
        %1310 = vmatpush1.bf16.msra.mxu0 0
        %1311 = vmatprep.subr.bf16.mxu0 0
        %1312 = vmatpush1.bf16.msra.mxu0 0
        %1313 = vmatprep.mubr.bf16.mxu0 0
        %1314 = vmatmul.mubr.bf16.gmra.mrb[0].mxu0 %v1048
        %v1315 = vpop.f32.mrb[0].mxu0
        %v1316 = vadd.f32 %v1171, %v1315
        %v1317 = vpop.f32.mrb[0].mxu0
        %v1318 = vpop.f32.mrb[0].mxu0
        %v1319 = vadd.f32 %v1174, %v1318
        %v1320 = vpop.f32.mrb[0].mxu0
        %1321 = vmatprep.mubr.bf16.mxu0 0
        %1322 = vmatmul.mubr.bf16.gmra.mrb[0].mxu0 %v1049
        %v1323 = vpop.f32.mrb[0].mxu0
        %v1324 = vadd.f32 %v1179, %v1323
        %v1325 = vpop.f32.mrb[0].mxu0
        %v1326 = vpop.f32.mrb[0].mxu0
        %v1327 = vadd.f32 %v1182, %v1326
        %v1328 = vpop.f32.mrb[0].mxu0
        %1329 = vmatprep.mubr.bf16.mxu0 0
        %1330 = vmatmul.mubr.bf16.gmra.mrb[0].mxu0 %v1050
        %v1331 = vpop.f32.mrb[0].mxu0
        %v1332 = vadd.f32 %v1187, %v1331
        %v1333 = vpop.f32.mrb[0].mxu0
        %v1334 = vpop.f32.mrb[0].mxu0
        %v1335 = vadd.f32 %v1190, %v1334
        %v1336 = vpop.f32.mrb[0].mxu0
        %1337 = vmatprep.mubr.bf16.mxu0 0
        %1338 = vmatmul.mubr.bf16.gmra.mrb[0].mxu0 %v1051
        %v1339 = vpop.f32.mrb[0].mxu0
        %v1340 = vadd.f32 %v1195, %v1339
        %v1341 = vpop.f32.mrb[0].mxu0
        %v1342 = vpop.f32.mrb[0].mxu0
        %v1343 = vadd.f32 %v1198, %v1342
        %v1344 = vpop.f32.mrb[0].mxu0
        %1345 = vmatprep.mubr.bf16.mxu0 0
        %1346 = vmatmul.mubr.bf16.gmra.mrb[0].mxu0 %v1052
        %v1347 = vpop.f32.mrb[0].mxu0
        %v1348 = vadd.f32 %v1203, %v1347
        %v1349 = vpop.f32.mrb[0].mxu0
        %v1350 = vpop.f32.mrb[0].mxu0
        %v1351 = vadd.f32 %v1206, %v1350
        %v1352 = vpop.f32.mrb[0].mxu0
        %1353 = vmatprep.mubr.bf16.mxu0 0
        %1354 = vmatmul.mubr.bf16.gmra.mrb[0].mxu0 %v1053
        %v1355 = vpop.f32.mrb[0].mxu0
        %v1356 = vadd.f32 %v1211, %v1355
        %v1357 = vpop.f32.mrb[0].mxu0
        %v1358 = vpop.f32.mrb[0].mxu0
        %v1359 = vadd.f32 %v1214, %v1358
        %v1360 = vpop.f32.mrb[0].mxu0
        %1361 = vmatprep.mubr.bf16.mxu0 0
        %1362 = vmatmul.mubr.bf16.gmra.mrb[0].mxu0 %v1054
        %v1363 = vpop.f32.mrb[0].mxu0
        %v1364 = vadd.f32 %v1219, %v1363
        %v1365 = vpop.f32.mrb[0].mxu0
        %v1366 = vpop.f32.mrb[0].mxu0
        %v1367 = vadd.f32 %v1222, %v1366
        %v1368 = vpop.f32.mrb[0].mxu0
        %1369 = vmatprep.mubr.bf16.mxu0 0
        %1370 = vmatmul.mubr.bf16.gmra.mrb[0].mxu0 %v1055
        %v1371 = vpop.f32.mrb[0].mxu0
        %v1372 = vadd.f32 %v1227, %v1371
        %v1373 = vpop.f32.mrb[0].mxu0
        %v1374 = vpop.f32.mrb[0].mxu0
        %v1375 = vadd.f32 %v1230, %v1374
        %v1376 = vpop.f32.mrb[0].mxu0
        %1377 = vdwg.mxu0
        %v1378 = vld [vmem:[#allocation8] sm:$0x1]
        %v1380 = vlaneseq
        %v1381 = vshrl.u32 %v1380, 7
        %v1382 = vsub.s32 0, %v1381
        %v1383 = vrot.slane %v1378, %v1382
        %v1385 = vadd.f32 %v1316, %v1383
        %v1386 = vadd.f32 %v1319, %v1383
        %v1387 = vadd.f32 %v1324, %v1383
        %v1388 = vadd.f32 %v1327, %v1383
        %v1389 = vadd.f32 %v1332, %v1383
        %v1390 = vadd.f32 %v1335, %v1383
        %v1391 = vadd.f32 %v1340, %v1383
        %v1392 = vadd.f32 %v1343, %v1383
        %v1393 = vadd.f32 %v1348, %v1383
        %v1394 = vadd.f32 %v1351, %v1383
        %v1395 = vadd.f32 %v1356, %v1383
        %v1396 = vadd.f32 %v1359, %v1383
        %v1397 = vadd.f32 %v1364, %v1383
        %v1398 = vadd.f32 %v1367, %v1383
        %v1399 = vadd.f32 %v1372, %v1383
        %v1400 = vadd.f32 %v1375, %v1383
        %v1401 = vmax.f32 %v1385, 0.0
        %v1402 = vmax.f32 %v1386, 0.0
        %v1403 = vmax.f32 %v1387, 0.0
        %v1404 = vmax.f32 %v1388, 0.0
        %v1405 = vmax.f32 %v1389, 0.0
        %v1406 = vmax.f32 %v1390, 0.0
        %v1407 = vmax.f32 %v1391, 0.0
        %v1408 = vmax.f32 %v1392, 0.0
        %v1409 = vmax.f32 %v1393, 0.0
        %v1410 = vmax.f32 %v1394, 0.0
        %v1411 = vmax.f32 %v1395, 0.0
        %v1412 = vmax.f32 %v1396, 0.0
        %v1413 = vmax.f32 %v1397, 0.0
        %v1414 = vmax.f32 %v1398, 0.0
        %v1415 = vmax.f32 %v1399, 0.0
        %v1416 = vmax.f32 %v1400, 0.0
        %v1417 = vpack.c.bf16 %v1402, %v1401
        %v1418 = vpack.c.bf16 %v1404, %v1403
        %v1419 = vpack.c.bf16 %v1406, %v1405
        %v1420 = vpack.c.bf16 %v1408, %v1407
        %v1421 = vpack.c.bf16 %v1410, %v1409
        %v1422 = vpack.c.bf16 %v1412, %v1411
        %v1423 = vpack.c.bf16 %v1414, %v1413
        %v1424 = vpack.c.bf16 %v1416, %v1415
        %v1425 = vld [vmem:[#allocation10] sm:$0xf]
        %v1426 = vld [vmem:[#allocation10 + $0x4] sm:$0xf]
        %v1427 = vld [vmem:[#allocation10 + $0x8] sm:$0xf]
        %v1428 = vld [vmem:[#allocation10 + $0xc] sm:$0xf]
        %v1429 = vld [vmem:[#allocation10 + $0x10] sm:$0xf]
        %v1430 = vld [vmem:[#allocation10 + $0x14] sm:$0xf]
        %v1431 = vld [vmem:[#allocation10 + $0x18] sm:$0xf]
        %v1432 = vld [vmem:[#allocation10 + $0x1c] sm:$0xf]
        %v1433 = vld [vmem:[#allocation10 + $0x20] sm:$0xf]
        %v1434 = vld [vmem:[#allocation10 + $0x24] sm:$0xf]
        %v1435 = vld [vmem:[#allocation10 + $0x28] sm:$0xf]
        %v1436 = vld [vmem:[#allocation10 + $0x2c] sm:$0xf]
        %v1437 = vld [vmem:[#allocation10 + $0x30] sm:$0xf]
        %v1438 = vld [vmem:[#allocation10 + $0x34] sm:$0xf]
        %v1439 = vld [vmem:[#allocation10 + $0x38] sm:$0xf]
        %v1440 = vld [vmem:[#allocation10 + $0x3c] sm:$0xf]
        %v1441 = vld [vmem:[#allocation11] sm:$0xf]
        %v1442 = vld [vmem:[#allocation11 + $0x4] sm:$0xf]
        %v1443 = vld [vmem:[#allocation11 + $0x8] sm:$0xf]
        %v1444 = vld [vmem:[#allocation11 + $0xc] sm:$0xf]
        %v1445 = vld [vmem:[#allocation11 + $0x10] sm:$0xf]
        %v1446 = vld [vmem:[#allocation11 + $0x14] sm:$0xf]
        %v1447 = vld [vmem:[#allocation11 + $0x18] sm:$0xf]
        %v1448 = vld [vmem:[#allocation11 + $0x1c] sm:$0xf]
        %v1449 = vld [vmem:[#allocation11 + $0x20] sm:$0xf]
        %v1450 = vld [vmem:[#allocation11 + $0x24] sm:$0xf]
        %v1451 = vld [vmem:[#allocation11 + $0x28] sm:$0xf]
        %v1452 = vld [vmem:[#allocation11 + $0x2c] sm:$0xf]
        %v1453 = vld [vmem:[#allocation11 + $0x30] sm:$0xf]
        %v1454 = vld [vmem:[#allocation11 + $0x34] sm:$0xf]
        %v1455 = vld [vmem:[#allocation11 + $0x38] sm:$0xf]
        %v1456 = vld [vmem:[#allocation11 + $0x3c] sm:$0xf]
        %v1473 = vunpack.c.l.b16 %v1441
        %v1474 = vunpack.c.l.b16 %v1442
        %v1475 = vunpack.c.l.b16 %v1443
        %v1476 = vunpack.c.l.b16 %v1444
        %v1477 = vunpack.c.l.b16 %v1445
        %v1478 = vunpack.c.l.b16 %v1446
        %v1479 = vunpack.c.l.b16 %v1447
        %v1480 = vunpack.c.l.b16 %v1448
        %v1481 = vunpack.c.l.b16 %v1449
        %v1482 = vunpack.c.l.b16 %v1450
        %v1483 = vunpack.c.l.b16 %v1451
        %v1484 = vunpack.c.l.b16 %v1452
        %v1485 = vunpack.c.l.b16 %v1453
        %v1486 = vunpack.c.l.b16 %v1454
        %v1487 = vunpack.c.l.b16 %v1455
        %v1488 = vunpack.c.l.b16 %v1456
        %v1489 = vpack.c.b16 %v1474, %v1473
        %v1490 = vpack.c.b16 %v1476, %v1475
        %v1491 = vpack.c.b16 %v1478, %v1477
        %v1492 = vpack.c.b16 %v1480, %v1479
        %v1493 = vpack.c.b16 %v1482, %v1481
        %v1494 = vpack.c.b16 %v1484, %v1483
        %v1495 = vpack.c.b16 %v1486, %v1485
        %v1496 = vpack.c.b16 %v1488, %v1487
        %1505 = vmatprep.subr.bf16.mxu0 0
        %1506 = vmatpush1.bf16.msra.mxu0 %v1489
        %1507 = vmatprep.subr.bf16.mxu0 0
        %1508 = vmatpush1.bf16.msra.mxu0 %v1490
        %1509 = vmatprep.subr.bf16.mxu0 0
        %1510 = vmatpush1.bf16.msra.mxu0 %v1491
        %1511 = vmatprep.subr.bf16.mxu0 0
        %1512 = vmatpush1.bf16.msra.mxu0 %v1492
        %1513 = vmatprep.subr.bf16.mxu0 0
        %1514 = vmatpush1.bf16.msra.mxu0 %v1493
        %1515 = vmatprep.subr.bf16.mxu0 0
        %1516 = vmatpush1.bf16.msra.mxu0 %v1494
        %1517 = vmatprep.subr.bf16.mxu0 0
        %1518 = vmatpush1.bf16.msra.mxu0 %v1495
        %1519 = vmatprep.subr.bf16.mxu0 0
        %1520 = vmatpush1.bf16.msra.mxu0 %v1496
        %1521 = vmatprep.subr.bf16.mxu0 0
        %1522 = vmatpush1.bf16.msra.mxu0 0
        %1523 = vmatprep.subr.bf16.mxu0 0
        %1524 = vmatpush1.bf16.msra.mxu0 0
        %1525 = vmatprep.subr.bf16.mxu0 0
        %1526 = vmatpush1.bf16.msra.mxu0 0
        %1527 = vmatprep.subr.bf16.mxu0 0
        %1528 = vmatpush1.bf16.msra.mxu0 0
        %1529 = vmatprep.subr.bf16.mxu0 0
        %1530 = vmatpush1.bf16.msra.mxu0 0
        %1531 = vmatprep.subr.bf16.mxu0 0
        %1532 = vmatpush1.bf16.msra.mxu0 0
        %1533 = vmatprep.subr.bf16.mxu0 0
        %1534 = vmatpush1.bf16.msra.mxu0 0
        %1535 = vmatprep.subr.bf16.mxu0 0
        %1536 = vmatpush1.bf16.msra.mxu0 0
        %1537 = vmatprep.mubr.bf16.mxu0 0
        %1538 = vmatmul.mubr.bf16.gmra.mrb[0].mxu0 %v1040
        %v1539 = vpop.f32.mrb[0].mxu0
        %v1540 = vadd.f32 0.0, %v1539
        %v1541 = vpop.f32.mrb[0].mxu0
        %v1542 = vpop.f32.mrb[0].mxu0
        %v1543 = vadd.f32 0.0, %v1542
        %v1544 = vpop.f32.mrb[0].mxu0
        %1545 = vmatprep.mubr.bf16.mxu0 0
        %1546 = vmatmul.mubr.bf16.gmra.mrb[0].mxu0 %v1041
        %v1547 = vpop.f32.mrb[0].mxu0
        %v1548 = vadd.f32 0.0, %v1547
        %v1549 = vpop.f32.mrb[0].mxu0
        %v1550 = vpop.f32.mrb[0].mxu0
        %v1551 = vadd.f32 0.0, %v1550
        %v1552 = vpop.f32.mrb[0].mxu0
        %1553 = vmatprep.mubr.bf16.mxu0 0
        %1554 = vmatmul.mubr.bf16.gmra.mrb[0].mxu0 %v1042
        %v1555 = vpop.f32.mrb[0].mxu0
        %v1556 = vadd.f32 0.0, %v1555
        %v1557 = vpop.f32.mrb[0].mxu0
        %v1558 = vpop.f32.mrb[0].mxu0
        %v1559 = vadd.f32 0.0, %v1558
        %v1560 = vpop.f32.mrb[0].mxu0
        %1561 = vmatprep.mubr.bf16.mxu0 0
        %1562 = vmatmul.mubr.bf16.gmra.mrb[0].mxu0 %v1043
        %v1563 = vpop.f32.mrb[0].mxu0
        %v1564 = vadd.f32 0.0, %v1563
        %v1565 = vpop.f32.mrb[0].mxu0
        %v1566 = vpop.f32.mrb[0].mxu0
        %v1567 = vadd.f32 0.0, %v1566
        %v1568 = vpop.f32.mrb[0].mxu0
        %1569 = vmatprep.mubr.bf16.mxu0 0
        %1570 = vmatmul.mubr.bf16.gmra.mrb[0].mxu0 %v1044
        %v1571 = vpop.f32.mrb[0].mxu0
        %v1572 = vadd.f32 0.0, %v1571
        %v1573 = vpop.f32.mrb[0].mxu0
        %v1574 = vpop.f32.mrb[0].mxu0
        %v1575 = vadd.f32 0.0, %v1574
        %v1576 = vpop.f32.mrb[0].mxu0
        %1577 = vmatprep.mubr.bf16.mxu0 0
        %1578 = vmatmul.mubr.bf16.gmra.mrb[0].mxu0 %v1045
        %v1579 = vpop.f32.mrb[0].mxu0
        %v1580 = vadd.f32 0.0, %v1579
        %v1581 = vpop.f32.mrb[0].mxu0
        %v1582 = vpop.f32.mrb[0].mxu0
        %v1583 = vadd.f32 0.0, %v1582
        %v1584 = vpop.f32.mrb[0].mxu0
        %1585 = vmatprep.mubr.bf16.mxu0 0
        %1586 = vmatmul.mubr.bf16.gmra.mrb[0].mxu0 %v1046
        %v1587 = vpop.f32.mrb[0].mxu0
        %v1588 = vadd.f32 0.0, %v1587
        %v1589 = vpop.f32.mrb[0].mxu0
        %v1590 = vpop.f32.mrb[0].mxu0
        %v1591 = vadd.f32 0.0, %v1590
        %v1592 = vpop.f32.mrb[0].mxu0
        %1593 = vmatprep.mubr.bf16.mxu0 0
        %1594 = vmatmul.mubr.bf16.gmra.mrb[0].mxu0 %v1047
        %v1595 = vpop.f32.mrb[0].mxu0
        %v1596 = vadd.f32 0.0, %v1595
        %v1597 = vpop.f32.mrb[0].mxu0
        %v1598 = vpop.f32.mrb[0].mxu0
        %v1599 = vadd.f32 0.0, %v1598
        %v1600 = vpop.f32.mrb[0].mxu0
        %1601 = vdwg.mxu0
        %v1618 = vunpack.c.l.b16 %v1425
        %v1619 = vunpack.c.l.b16 %v1426
        %v1620 = vunpack.c.l.b16 %v1427
        %v1621 = vunpack.c.l.b16 %v1428
        %v1622 = vunpack.c.l.b16 %v1429
        %v1623 = vunpack.c.l.b16 %v1430
        %v1624 = vunpack.c.l.b16 %v1431
        %v1625 = vunpack.c.l.b16 %v1432
        %v1626 = vunpack.c.l.b16 %v1433
        %v1627 = vunpack.c.l.b16 %v1434
        %v1628 = vunpack.c.l.b16 %v1435
        %v1629 = vunpack.c.l.b16 %v1436
        %v1630 = vunpack.c.l.b16 %v1437
        %v1631 = vunpack.c.l.b16 %v1438
        %v1632 = vunpack.c.l.b16 %v1439
        %v1633 = vunpack.c.l.b16 %v1440
        %v1634 = vpack.c.b16 %v1619, %v1618
        %v1635 = vpack.c.b16 %v1621, %v1620
        %v1636 = vpack.c.b16 %v1623, %v1622
        %v1637 = vpack.c.b16 %v1625, %v1624
        %v1638 = vpack.c.b16 %v1627, %v1626
        %v1639 = vpack.c.b16 %v1629, %v1628
        %v1640 = vpack.c.b16 %v1631, %v1630
        %v1641 = vpack.c.b16 %v1633, %v1632
        %1650 = vmatprep.subr.bf16.mxu0 0
        %1651 = vmatpush1.bf16.msra.mxu0 %v1634
        %1652 = vmatprep.subr.bf16.mxu0 0
        %1653 = vmatpush1.bf16.msra.mxu0 %v1635
        %1654 = vmatprep.subr.bf16.mxu0 0
        %1655 = vmatpush1.bf16.msra.mxu0 %v1636
        %1656 = vmatprep.subr.bf16.mxu0 0
        %1657 = vmatpush1.bf16.msra.mxu0 %v1637
        %1658 = vmatprep.subr.bf16.mxu0 0
        %1659 = vmatpush1.bf16.msra.mxu0 %v1638
        %1660 = vmatprep.subr.bf16.mxu0 0
        %1661 = vmatpush1.bf16.msra.mxu0 %v1639
        %1662 = vmatprep.subr.bf16.mxu0 0
        %1663 = vmatpush1.bf16.msra.mxu0 %v1640
        %1664 = vmatprep.subr.bf16.mxu0 0
        %1665 = vmatpush1.bf16.msra.mxu0 %v1641
        %1666 = vmatprep.subr.bf16.mxu0 0
        %1667 = vmatpush1.bf16.msra.mxu0 0
        %1668 = vmatprep.subr.bf16.mxu0 0
        %1669 = vmatpush1.bf16.msra.mxu0 0
        %1670 = vmatprep.subr.bf16.mxu0 0
        %1671 = vmatpush1.bf16.msra.mxu0 0
        %1672 = vmatprep.subr.bf16.mxu0 0
        %1673 = vmatpush1.bf16.msra.mxu0 0
        %1674 = vmatprep.subr.bf16.mxu0 0
        %1675 = vmatpush1.bf16.msra.mxu0 0
        %1676 = vmatprep.subr.bf16.mxu0 0
        %1677 = vmatpush1.bf16.msra.mxu0 0
        %1678 = vmatprep.subr.bf16.mxu0 0
        %1679 = vmatpush1.bf16.msra.mxu0 0
        %1680 = vmatprep.subr.bf16.mxu0 0
        %1681 = vmatpush1.bf16.msra.mxu0 0
        %1682 = vmatprep.mubr.bf16.mxu0 0
        %1683 = vmatmul.mubr.bf16.gmra.mrb[0].mxu0 %v1417
        %v1684 = vpop.f32.mrb[0].mxu0
        %v1685 = vadd.f32 %v1540, %v1684
        %v1686 = vpop.f32.mrb[0].mxu0
        %v1687 = vpop.f32.mrb[0].mxu0
        %v1688 = vadd.f32 %v1543, %v1687
        %v1689 = vpop.f32.mrb[0].mxu0
        %1690 = vmatprep.mubr.bf16.mxu0 0
        %1691 = vmatmul.mubr.bf16.gmra.mrb[0].mxu0 %v1418
        %v1692 = vpop.f32.mrb[0].mxu0
        %v1693 = vadd.f32 %v1548, %v1692
        %v1694 = vpop.f32.mrb[0].mxu0
        %v1695 = vpop.f32.mrb[0].mxu0
        %v1696 = vadd.f32 %v1551, %v1695
        %v1697 = vpop.f32.mrb[0].mxu0
        %1698 = vmatprep.mubr.bf16.mxu0 0
        %1699 = vmatmul.mubr.bf16.gmra.mrb[0].mxu0 %v1419
        %v1700 = vpop.f32.mrb[0].mxu0
        %v1701 = vadd.f32 %v1556, %v1700
        %v1702 = vpop.f32.mrb[0].mxu0
        %v1703 = vpop.f32.mrb[0].mxu0
        %v1704 = vadd.f32 %v1559, %v1703
        %v1705 = vpop.f32.mrb[0].mxu0
        %1706 = vmatprep.mubr.bf16.mxu0 0
        %1707 = vmatmul.mubr.bf16.gmra.mrb[0].mxu0 %v1420
        %v1708 = vpop.f32.mrb[0].mxu0
        %v1709 = vadd.f32 %v1564, %v1708
        %v1710 = vpop.f32.mrb[0].mxu0
        %v1711 = vpop.f32.mrb[0].mxu0
        %v1712 = vadd.f32 %v1567, %v1711
        %v1713 = vpop.f32.mrb[0].mxu0
        %1714 = vmatprep.mubr.bf16.mxu0 0
        %1715 = vmatmul.mubr.bf16.gmra.mrb[0].mxu0 %v1421
        %v1716 = vpop.f32.mrb[0].mxu0
        %v1717 = vadd.f32 %v1572, %v1716
        %v1718 = vpop.f32.mrb[0].mxu0
        %v1719 = vpop.f32.mrb[0].mxu0
        %v1720 = vadd.f32 %v1575, %v1719
        %v1721 = vpop.f32.mrb[0].mxu0
        %1722 = vmatprep.mubr.bf16.mxu0 0
        %1723 = vmatmul.mubr.bf16.gmra.mrb[0].mxu0 %v1422
        %v1724 = vpop.f32.mrb[0].mxu0
        %v1725 = vadd.f32 %v1580, %v1724
        %v1726 = vpop.f32.mrb[0].mxu0
        %v1727 = vpop.f32.mrb[0].mxu0
        %v1728 = vadd.f32 %v1583, %v1727
        %v1729 = vpop.f32.mrb[0].mxu0
        %1730 = vmatprep.mubr.bf16.mxu0 0
        %1731 = vmatmul.mubr.bf16.gmra.mrb[0].mxu0 %v1423
        %v1732 = vpop.f32.mrb[0].mxu0
        %v1733 = vadd.f32 %v1588, %v1732
        %v1734 = vpop.f32.mrb[0].mxu0
        %v1735 = vpop.f32.mrb[0].mxu0
        %v1736 = vadd.f32 %v1591, %v1735
        %v1737 = vpop.f32.mrb[0].mxu0
        %1738 = vmatprep.mubr.bf16.mxu0 0
        %1739 = vmatmul.mubr.bf16.gmra.mrb[0].mxu0 %v1424
        %v1740 = vpop.f32.mrb[0].mxu0
        %v1741 = vadd.f32 %v1596, %v1740
        %v1742 = vpop.f32.mrb[0].mxu0
        %v1743 = vpop.f32.mrb[0].mxu0
        %v1744 = vadd.f32 %v1599, %v1743
        %v1745 = vpop.f32.mrb[0].mxu0
        %1746 = vdwg.mxu0
        %v1747 = vld [vmem:[#allocation13] sm:$0x1]
        %v1749 = vlaneseq
        %v1750 = vshrl.u32 %v1749, 7
        %v1751 = vsub.s32 0, %v1750
        %v1752 = vrot.slane %v1747, %v1751
        %v1754 = vadd.f32 %v1685, %v1752
        %v1755 = vadd.f32 %v1688, %v1752
        %v1756 = vadd.f32 %v1693, %v1752
        %v1757 = vadd.f32 %v1696, %v1752
        %v1758 = vadd.f32 %v1701, %v1752
        %v1759 = vadd.f32 %v1704, %v1752
        %v1760 = vadd.f32 %v1709, %v1752
        %v1761 = vadd.f32 %v1712, %v1752
        %v1762 = vadd.f32 %v1717, %v1752
        %v1763 = vadd.f32 %v1720, %v1752
        %v1764 = vadd.f32 %v1725, %v1752
        %v1765 = vadd.f32 %v1728, %v1752
        %v1766 = vadd.f32 %v1733, %v1752
        %v1767 = vadd.f32 %v1736, %v1752
        %v1768 = vadd.f32 %v1741, %v1752
        %v1769 = vadd.f32 %v1744, %v1752
        %v1770 = vadd.f32 %v1754, %v820
        %v1771 = vadd.f32 %v1755, %v821
        %v1772 = vadd.f32 %v1756, %v822
        %v1773 = vadd.f32 %v1757, %v823
        %v1774 = vadd.f32 %v1758, %v824
        %v1775 = vadd.f32 %v1759, %v825
        %v1776 = vadd.f32 %v1760, %v826
        %v1777 = vadd.f32 %v1761, %v827
        %v1778 = vadd.f32 %v1762, %v828
        %v1779 = vadd.f32 %v1763, %v829
        %v1780 = vadd.f32 %v1764, %v830
        %v1781 = vadd.f32 %v1765, %v831
        %v1782 = vadd.f32 %v1766, %v832
        %v1783 = vadd.f32 %v1767, %v833
        %v1784 = vadd.f32 %v1768, %v834
        %v1785 = vadd.f32 %v1769, %v835
        %v1786 = vmax.f32 %v1770, 0.0
        %v1787 = vmax.f32 %v1771, 0.0
        %v1788 = vmax.f32 %v1772, 0.0
        %v1789 = vmax.f32 %v1773, 0.0
        %v1790 = vmax.f32 %v1774, 0.0
        %v1791 = vmax.f32 %v1775, 0.0
        %v1792 = vmax.f32 %v1776, 0.0
        %v1793 = vmax.f32 %v1777, 0.0
        %v1794 = vmax.f32 %v1778, 0.0
        %v1795 = vmax.f32 %v1779, 0.0
        %v1796 = vmax.f32 %v1780, 0.0
        %v1797 = vmax.f32 %v1781, 0.0
        %v1798 = vmax.f32 %v1782, 0.0
        %v1799 = vmax.f32 %v1783, 0.0
        %v1800 = vmax.f32 %v1784, 0.0
        %v1801 = vmax.f32 %v1785, 0.0
        %v1802 = vpack.c.bf16 %v1787, %v1786
        %v1803 = vpack.c.bf16 %v1789, %v1788
        %v1804 = vpack.c.bf16 %v1791, %v1790
        %v1805 = vpack.c.bf16 %v1793, %v1792
        %v1806 = vpack.c.bf16 %v1795, %v1794
        %v1807 = vpack.c.bf16 %v1797, %v1796
        %v1808 = vpack.c.bf16 %v1799, %v1798
        %v1809 = vpack.c.bf16 %v1801, %v1800
        %s1810 = scalar_lea.vmem %s6, 64
        %v1811 = vld [vmem:[%s1810] sm:$0xf]
        %v1812 = vld [vmem:[%s1810 + $0x4] sm:$0xf]
        %v1813 = vld [vmem:[%s1810 + $0x8] sm:$0xf]
        %v1814 = vld [vmem:[%s1810 + $0xc] sm:$0xf]
        %v1815 = vld [vmem:[%s1810 + $0x10] sm:$0xf]
        %v1816 = vld [vmem:[%s1810 + $0x14] sm:$0xf]
        %v1817 = vld [vmem:[%s1810 + $0x18] sm:$0xf]
        %v1818 = vld [vmem:[%s1810 + $0x1c] sm:$0xf]
        %v1819 = vld [vmem:[%s1810 + $0x20] sm:$0xf]
        %v1820 = vld [vmem:[%s1810 + $0x24] sm:$0xf]
        %v1821 = vld [vmem:[%s1810 + $0x28] sm:$0xf]
        %v1822 = vld [vmem:[%s1810 + $0x2c] sm:$0xf]
        %v1823 = vld [vmem:[%s1810 + $0x30] sm:$0xf]
        %v1824 = vld [vmem:[%s1810 + $0x34] sm:$0xf]
        %v1825 = vld [vmem:[%s1810 + $0x38] sm:$0xf]
        %v1826 = vld [vmem:[%s1810 + $0x3c] sm:$0xf]
        %s1827 = scalar_lea.vmem %s7, 64
        %v1828 = vld [vmem:[%s1827] sm:$0xf]
        %v1829 = vld [vmem:[%s1827 + $0x4] sm:$0xf]
        %v1830 = vld [vmem:[%s1827 + $0x8] sm:$0xf]
        %v1831 = vld [vmem:[%s1827 + $0xc] sm:$0xf]
        %v1832 = vld [vmem:[%s1827 + $0x10] sm:$0xf]
        %v1833 = vld [vmem:[%s1827 + $0x14] sm:$0xf]
        %v1834 = vld [vmem:[%s1827 + $0x18] sm:$0xf]
        %v1835 = vld [vmem:[%s1827 + $0x1c] sm:$0xf]
        %v1836 = vld [vmem:[%s1827 + $0x20] sm:$0xf]
        %v1837 = vld [vmem:[%s1827 + $0x24] sm:$0xf]
        %v1838 = vld [vmem:[%s1827 + $0x28] sm:$0xf]
        %v1839 = vld [vmem:[%s1827 + $0x2c] sm:$0xf]
        %v1840 = vld [vmem:[%s1827 + $0x30] sm:$0xf]
        %v1841 = vld [vmem:[%s1827 + $0x34] sm:$0xf]
        %v1842 = vld [vmem:[%s1827 + $0x38] sm:$0xf]
        %v1843 = vld [vmem:[%s1827 + $0x3c] sm:$0xf]
        %v1860 = vunpack.c.l.b16 %v1828
        %v1861 = vunpack.c.l.b16 %v1829
        %v1862 = vunpack.c.l.b16 %v1830
        %v1863 = vunpack.c.l.b16 %v1831
        %v1864 = vunpack.c.l.b16 %v1832
        %v1865 = vunpack.c.l.b16 %v1833
        %v1866 = vunpack.c.l.b16 %v1834
        %v1867 = vunpack.c.l.b16 %v1835
        %v1868 = vunpack.c.l.b16 %v1836
        %v1869 = vunpack.c.l.b16 %v1837
        %v1870 = vunpack.c.l.b16 %v1838
        %v1871 = vunpack.c.l.b16 %v1839
        %v1872 = vunpack.c.l.b16 %v1840
        %v1873 = vunpack.c.l.b16 %v1841
        %v1874 = vunpack.c.l.b16 %v1842
        %v1875 = vunpack.c.l.b16 %v1843
        %v1876 = vpack.c.b16 %v1861, %v1860
        %v1877 = vpack.c.b16 %v1863, %v1862
        %v1878 = vpack.c.b16 %v1865, %v1864
        %v1879 = vpack.c.b16 %v1867, %v1866
        %v1880 = vpack.c.b16 %v1869, %v1868
        %v1881 = vpack.c.b16 %v1871, %v1870
        %v1882 = vpack.c.b16 %v1873, %v1872
        %v1883 = vpack.c.b16 %v1875, %v1874
        %1892 = vmatprep.subr.bf16.mxu0 0
        %1893 = vmatpush1.bf16.msra.mxu0 %v1876
        %1894 = vmatprep.subr.bf16.mxu0 0
        %1895 = vmatpush1.bf16.msra.mxu0 %v1877
        %1896 = vmatprep.subr.bf16.mxu0 0
        %1897 = vmatpush1.bf16.msra.mxu0 %v1878
        %1898 = vmatprep.subr.bf16.mxu0 0
        %1899 = vmatpush1.bf16.msra.mxu0 %v1879
        %1900 = vmatprep.subr.bf16.mxu0 0
        %1901 = vmatpush1.bf16.msra.mxu0 %v1880
        %1902 = vmatprep.subr.bf16.mxu0 0
        %1903 = vmatpush1.bf16.msra.mxu0 %v1881
        %1904 = vmatprep.subr.bf16.mxu0 0
        %1905 = vmatpush1.bf16.msra.mxu0 %v1882
        %1906 = vmatprep.subr.bf16.mxu0 0
        %1907 = vmatpush1.bf16.msra.mxu0 %v1883
        %1908 = vmatprep.subr.bf16.mxu0 0
        %1909 = vmatpush1.bf16.msra.mxu0 0
        %1910 = vmatprep.subr.bf16.mxu0 0
        %1911 = vmatpush1.bf16.msra.mxu0 0
        %1912 = vmatprep.subr.bf16.mxu0 0
        %1913 = vmatpush1.bf16.msra.mxu0 0
        %1914 = vmatprep.subr.bf16.mxu0 0
        %1915 = vmatpush1.bf16.msra.mxu0 0
        %1916 = vmatprep.subr.bf16.mxu0 0
        %1917 = vmatpush1.bf16.msra.mxu0 0
        %1918 = vmatprep.subr.bf16.mxu0 0
        %1919 = vmatpush1.bf16.msra.mxu0 0
        %1920 = vmatprep.subr.bf16.mxu0 0
        %1921 = vmatpush1.bf16.msra.mxu0 0
        %1922 = vmatprep.subr.bf16.mxu0 0
        %1923 = vmatpush1.bf16.msra.mxu0 0
        %1924 = vmatprep.mubr.bf16.mxu0 0
        %1925 = vmatmul.mubr.bf16.gmra.mrb[0].mxu0 %v1040
        %v1926 = vpop.f32.mrb[0].mxu0
        %v1927 = vadd.f32 0.0, %v1926
        %v1928 = vpop.f32.mrb[0].mxu0
        %v1929 = vpop.f32.mrb[0].mxu0
        %v1930 = vadd.f32 0.0, %v1929
        %v1931 = vpop.f32.mrb[0].mxu0
        %1932 = vmatprep.mubr.bf16.mxu0 0
        %1933 = vmatmul.mubr.bf16.gmra.mrb[0].mxu0 %v1041
        %v1934 = vpop.f32.mrb[0].mxu0
        %v1935 = vadd.f32 0.0, %v1934
        %v1936 = vpop.f32.mrb[0].mxu0
        %v1937 = vpop.f32.mrb[0].mxu0
        %v1938 = vadd.f32 0.0, %v1937
        %v1939 = vpop.f32.mrb[0].mxu0
        %1940 = vmatprep.mubr.bf16.mxu0 0
        %1941 = vmatmul.mubr.bf16.gmra.mrb[0].mxu0 %v1042
        %v1942 = vpop.f32.mrb[0].mxu0
        %v1943 = vadd.f32 0.0, %v1942
        %v1944 = vpop.f32.mrb[0].mxu0
        %v1945 = vpop.f32.mrb[0].mxu0
        %v1946 = vadd.f32 0.0, %v1945
        %v1947 = vpop.f32.mrb[0].mxu0
        %1948 = vmatprep.mubr.bf16.mxu0 0
        %1949 = vmatmul.mubr.bf16.gmra.mrb[0].mxu0 %v1043
        %v1950 = vpop.f32.mrb[0].mxu0
        %v1951 = vadd.f32 0.0, %v1950
        %v1952 = vpop.f32.mrb[0].mxu0
        %v1953 = vpop.f32.mrb[0].mxu0
        %v1954 = vadd.f32 0.0, %v1953
        %v1955 = vpop.f32.mrb[0].mxu0
        %1956 = vmatprep.mubr.bf16.mxu0 0
        %1957 = vmatmul.mubr.bf16.gmra.mrb[0].mxu0 %v1044
        %v1958 = vpop.f32.mrb[0].mxu0
        %v1959 = vadd.f32 0.0, %v1958
        %v1960 = vpop.f32.mrb[0].mxu0
        %v1961 = vpop.f32.mrb[0].mxu0
        %v1962 = vadd.f32 0.0, %v1961
        %v1963 = vpop.f32.mrb[0].mxu0
        %1964 = vmatprep.mubr.bf16.mxu0 0
        %1965 = vmatmul.mubr.bf16.gmra.mrb[0].mxu0 %v1045
        %v1966 = vpop.f32.mrb[0].mxu0
        %v1967 = vadd.f32 0.0, %v1966
        %v1968 = vpop.f32.mrb[0].mxu0
        %v1969 = vpop.f32.mrb[0].mxu0
        %v1970 = vadd.f32 0.0, %v1969
        %v1971 = vpop.f32.mrb[0].mxu0
        %1972 = vmatprep.mubr.bf16.mxu0 0
        %1973 = vmatmul.mubr.bf16.gmra.mrb[0].mxu0 %v1046
        %v1974 = vpop.f32.mrb[0].mxu0
        %v1975 = vadd.f32 0.0, %v1974
        %v1976 = vpop.f32.mrb[0].mxu0
        %v1977 = vpop.f32.mrb[0].mxu0
        %v1978 = vadd.f32 0.0, %v1977
        %v1979 = vpop.f32.mrb[0].mxu0
        %1980 = vmatprep.mubr.bf16.mxu0 0
        %1981 = vmatmul.mubr.bf16.gmra.mrb[0].mxu0 %v1047
        %v1982 = vpop.f32.mrb[0].mxu0
        %v1983 = vadd.f32 0.0, %v1982
        %v1984 = vpop.f32.mrb[0].mxu0
        %v1985 = vpop.f32.mrb[0].mxu0
        %v1986 = vadd.f32 0.0, %v1985
        %v1987 = vpop.f32.mrb[0].mxu0
        %1988 = vdwg.mxu0
        %v2005 = vunpack.c.l.b16 %v1811
        %v2006 = vunpack.c.l.b16 %v1812
        %v2007 = vunpack.c.l.b16 %v1813
        %v2008 = vunpack.c.l.b16 %v1814
        %v2009 = vunpack.c.l.b16 %v1815
        %v2010 = vunpack.c.l.b16 %v1816
        %v2011 = vunpack.c.l.b16 %v1817
        %v2012 = vunpack.c.l.b16 %v1818
        %v2013 = vunpack.c.l.b16 %v1819
        %v2014 = vunpack.c.l.b16 %v1820
        %v2015 = vunpack.c.l.b16 %v1821
        %v2016 = vunpack.c.l.b16 %v1822
        %v2017 = vunpack.c.l.b16 %v1823
        %v2018 = vunpack.c.l.b16 %v1824
        %v2019 = vunpack.c.l.b16 %v1825
        %v2020 = vunpack.c.l.b16 %v1826
        %v2021 = vpack.c.b16 %v2006, %v2005
        %v2022 = vpack.c.b16 %v2008, %v2007
        %v2023 = vpack.c.b16 %v2010, %v2009
        %v2024 = vpack.c.b16 %v2012, %v2011
        %v2025 = vpack.c.b16 %v2014, %v2013
        %v2026 = vpack.c.b16 %v2016, %v2015
        %v2027 = vpack.c.b16 %v2018, %v2017
        %v2028 = vpack.c.b16 %v2020, %v2019
        %2037 = vmatprep.subr.bf16.mxu0 0
        %2038 = vmatpush1.bf16.msra.mxu0 %v2021
        %2039 = vmatprep.subr.bf16.mxu0 0
        %2040 = vmatpush1.bf16.msra.mxu0 %v2022
        %2041 = vmatprep.subr.bf16.mxu0 0
        %2042 = vmatpush1.bf16.msra.mxu0 %v2023
        %2043 = vmatprep.subr.bf16.mxu0 0
        %2044 = vmatpush1.bf16.msra.mxu0 %v2024
        %2045 = vmatprep.subr.bf16.mxu0 0
        %2046 = vmatpush1.bf16.msra.mxu0 %v2025
        %2047 = vmatprep.subr.bf16.mxu0 0
        %2048 = vmatpush1.bf16.msra.mxu0 %v2026
        %2049 = vmatprep.subr.bf16.mxu0 0
        %2050 = vmatpush1.bf16.msra.mxu0 %v2027
        %2051 = vmatprep.subr.bf16.mxu0 0
        %2052 = vmatpush1.bf16.msra.mxu0 %v2028
        %2053 = vmatprep.subr.bf16.mxu0 0
        %2054 = vmatpush1.bf16.msra.mxu0 0
        %2055 = vmatprep.subr.bf16.mxu0 0
        %2056 = vmatpush1.bf16.msra.mxu0 0
        %2057 = vmatprep.subr.bf16.mxu0 0
        %2058 = vmatpush1.bf16.msra.mxu0 0
        %2059 = vmatprep.subr.bf16.mxu0 0
        %2060 = vmatpush1.bf16.msra.mxu0 0
        %2061 = vmatprep.subr.bf16.mxu0 0
        %2062 = vmatpush1.bf16.msra.mxu0 0
        %2063 = vmatprep.subr.bf16.mxu0 0
        %2064 = vmatpush1.bf16.msra.mxu0 0
        %2065 = vmatprep.subr.bf16.mxu0 0
        %2066 = vmatpush1.bf16.msra.mxu0 0
        %2067 = vmatprep.subr.bf16.mxu0 0
        %2068 = vmatpush1.bf16.msra.mxu0 0
        %2069 = vmatprep.mubr.bf16.mxu0 0
        %2070 = vmatmul.mubr.bf16.gmra.mrb[0].mxu0 %v1802
        %v2071 = vpop.f32.mrb[0].mxu0
        %v2072 = vadd.f32 %v1927, %v2071
        %v2073 = vpop.f32.mrb[0].mxu0
        %v2074 = vpop.f32.mrb[0].mxu0
        %v2075 = vadd.f32 %v1930, %v2074
        %v2076 = vpop.f32.mrb[0].mxu0
        %2077 = vmatprep.mubr.bf16.mxu0 0
        %2078 = vmatmul.mubr.bf16.gmra.mrb[0].mxu0 %v1803
        %v2079 = vpop.f32.mrb[0].mxu0
        %v2080 = vadd.f32 %v1935, %v2079
        %v2081 = vpop.f32.mrb[0].mxu0
        %v2082 = vpop.f32.mrb[0].mxu0
        %v2083 = vadd.f32 %v1938, %v2082
        %v2084 = vpop.f32.mrb[0].mxu0
        %2085 = vmatprep.mubr.bf16.mxu0 0
        %2086 = vmatmul.mubr.bf16.gmra.mrb[0].mxu0 %v1804
        %v2087 = vpop.f32.mrb[0].mxu0
        %v2088 = vadd.f32 %v1943, %v2087
        %v2089 = vpop.f32.mrb[0].mxu0
        %v2090 = vpop.f32.mrb[0].mxu0
        %v2091 = vadd.f32 %v1946, %v2090
        %v2092 = vpop.f32.mrb[0].mxu0
        %2093 = vmatprep.mubr.bf16.mxu0 0
        %2094 = vmatmul.mubr.bf16.gmra.mrb[0].mxu0 %v1805
        %v2095 = vpop.f32.mrb[0].mxu0
        %v2096 = vadd.f32 %v1951, %v2095
        %v2097 = vpop.f32.mrb[0].mxu0
        %v2098 = vpop.f32.mrb[0].mxu0
        %v2099 = vadd.f32 %v1954, %v2098
        %v2100 = vpop.f32.mrb[0].mxu0
        %2101 = vmatprep.mubr.bf16.mxu0 0
        %2102 = vmatmul.mubr.bf16.gmra.mrb[0].mxu0 %v1806
        %v2103 = vpop.f32.mrb[0].mxu0
        %v2104 = vadd.f32 %v1959, %v2103
        %v2105 = vpop.f32.mrb[0].mxu0
        %v2106 = vpop.f32.mrb[0].mxu0
        %v2107 = vadd.f32 %v1962, %v2106
        %v2108 = vpop.f32.mrb[0].mxu0
        %2109 = vmatprep.mubr.bf16.mxu0 0
        %2110 = vmatmul.mubr.bf16.gmra.mrb[0].mxu0 %v1807
        %v2111 = vpop.f32.mrb[0].mxu0
        %v2112 = vadd.f32 %v1967, %v2111
        %v2113 = vpop.f32.mrb[0].mxu0
        %v2114 = vpop.f32.mrb[0].mxu0
        %v2115 = vadd.f32 %v1970, %v2114
        %v2116 = vpop.f32.mrb[0].mxu0
        %2117 = vmatprep.mubr.bf16.mxu0 0
        %2118 = vmatmul.mubr.bf16.gmra.mrb[0].mxu0 %v1808
        %v2119 = vpop.f32.mrb[0].mxu0
        %v2120 = vadd.f32 %v1975, %v2119
        %v2121 = vpop.f32.mrb[0].mxu0
        %v2122 = vpop.f32.mrb[0].mxu0
        %v2123 = vadd.f32 %v1978, %v2122
        %v2124 = vpop.f32.mrb[0].mxu0
        %2125 = vmatprep.mubr.bf16.mxu0 0
        %2126 = vmatmul.mubr.bf16.gmra.mrb[0].mxu0 %v1809
        %v2127 = vpop.f32.mrb[0].mxu0
        %v2128 = vadd.f32 %v1983, %v2127
        %v2129 = vpop.f32.mrb[0].mxu0
        %v2130 = vpop.f32.mrb[0].mxu0
        %v2131 = vadd.f32 %v1986, %v2130
        %v2132 = vpop.f32.mrb[0].mxu0
        %2133 = vdwg.mxu0
        %s2134 = scalar_lea.vmem [#allocation8], 1
        %v2135 = vld [vmem:[%s2134] sm:$0x1]
        %v2137 = vlaneseq
        %v2138 = vshrl.u32 %v2137, 7
        %v2139 = vsub.s32 0, %v2138
        %v2140 = vrot.slane %v2135, %v2139
        %v2142 = vadd.f32 %v2072, %v2140
        %v2143 = vadd.f32 %v2075, %v2140
        %v2144 = vadd.f32 %v2080, %v2140
        %v2145 = vadd.f32 %v2083, %v2140
        %v2146 = vadd.f32 %v2088, %v2140
        %v2147 = vadd.f32 %v2091, %v2140
        %v2148 = vadd.f32 %v2096, %v2140
        %v2149 = vadd.f32 %v2099, %v2140
        %v2150 = vadd.f32 %v2104, %v2140
        %v2151 = vadd.f32 %v2107, %v2140
        %v2152 = vadd.f32 %v2112, %v2140
        %v2153 = vadd.f32 %v2115, %v2140
        %v2154 = vadd.f32 %v2120, %v2140
        %v2155 = vadd.f32 %v2123, %v2140
        %v2156 = vadd.f32 %v2128, %v2140
        %v2157 = vadd.f32 %v2131, %v2140
        %v2158 = vmax.f32 %v2142, 0.0
        %v2159 = vmax.f32 %v2143, 0.0
        %v2160 = vmax.f32 %v2144, 0.0
        %v2161 = vmax.f32 %v2145, 0.0
        %v2162 = vmax.f32 %v2146, 0.0
        %v2163 = vmax.f32 %v2147, 0.0
        %v2164 = vmax.f32 %v2148, 0.0
        %v2165 = vmax.f32 %v2149, 0.0
        %v2166 = vmax.f32 %v2150, 0.0
        %v2167 = vmax.f32 %v2151, 0.0
        %v2168 = vmax.f32 %v2152, 0.0
        %v2169 = vmax.f32 %v2153, 0.0
        %v2170 = vmax.f32 %v2154, 0.0
        %v2171 = vmax.f32 %v2155, 0.0
        %v2172 = vmax.f32 %v2156, 0.0
        %v2173 = vmax.f32 %v2157, 0.0
        %v2174 = vpack.c.bf16 %v2159, %v2158
        %v2175 = vpack.c.bf16 %v2161, %v2160
        %v2176 = vpack.c.bf16 %v2163, %v2162
        %v2177 = vpack.c.bf16 %v2165, %v2164
        %v2178 = vpack.c.bf16 %v2167, %v2166
        %v2179 = vpack.c.bf16 %v2169, %v2168
        %v2180 = vpack.c.bf16 %v2171, %v2170
        %v2181 = vpack.c.bf16 %v2173, %v2172
        %s2182 = scalar_lea.vmem [#allocation10], 64
        %v2183 = vld [vmem:[%s2182] sm:$0xf]
        %v2184 = vld [vmem:[%s2182 + $0x4] sm:$0xf]
        %v2185 = vld [vmem:[%s2182 + $0x8] sm:$0xf]
        %v2186 = vld [vmem:[%s2182 + $0xc] sm:$0xf]
        %v2187 = vld [vmem:[%s2182 + $0x10] sm:$0xf]
        %v2188 = vld [vmem:[%s2182 + $0x14] sm:$0xf]
        %v2189 = vld [vmem:[%s2182 + $0x18] sm:$0xf]
        %v2190 = vld [vmem:[%s2182 + $0x1c] sm:$0xf]
        %v2191 = vld [vmem:[%s2182 + $0x20] sm:$0xf]
        %v2192 = vld [vmem:[%s2182 + $0x24] sm:$0xf]
        %v2193 = vld [vmem:[%s2182 + $0x28] sm:$0xf]
        %v2194 = vld [vmem:[%s2182 + $0x2c] sm:$0xf]
        %v2195 = vld [vmem:[%s2182 + $0x30] sm:$0xf]
        %v2196 = vld [vmem:[%s2182 + $0x34] sm:$0xf]
        %v2197 = vld [vmem:[%s2182 + $0x38] sm:$0xf]
        %v2198 = vld [vmem:[%s2182 + $0x3c] sm:$0xf]
        %s2199 = scalar_lea.vmem [#allocation11], 64
        %v2200 = vld [vmem:[%s2199] sm:$0xf]
        %v2201 = vld [vmem:[%s2199 + $0x4] sm:$0xf]
        %v2202 = vld [vmem:[%s2199 + $0x8] sm:$0xf]
        %v2203 = vld [vmem:[%s2199 + $0xc] sm:$0xf]
        %v2204 = vld [vmem:[%s2199 + $0x10] sm:$0xf]
        %v2205 = vld [vmem:[%s2199 + $0x14] sm:$0xf]
        %v2206 = vld [vmem:[%s2199 + $0x18] sm:$0xf]
        %v2207 = vld [vmem:[%s2199 + $0x1c] sm:$0xf]
        %v2208 = vld [vmem:[%s2199 + $0x20] sm:$0xf]
        %v2209 = vld [vmem:[%s2199 + $0x24] sm:$0xf]
        %v2210 = vld [vmem:[%s2199 + $0x28] sm:$0xf]
        %v2211 = vld [vmem:[%s2199 + $0x2c] sm:$0xf]
        %v2212 = vld [vmem:[%s2199 + $0x30] sm:$0xf]
        %v2213 = vld [vmem:[%s2199 + $0x34] sm:$0xf]
        %v2214 = vld [vmem:[%s2199 + $0x38] sm:$0xf]
        %v2215 = vld [vmem:[%s2199 + $0x3c] sm:$0xf]
        %v2232 = vunpack.c.l.b16 %v2200
        %v2233 = vunpack.c.l.b16 %v2201
        %v2234 = vunpack.c.l.b16 %v2202
        %v2235 = vunpack.c.l.b16 %v2203
        %v2236 = vunpack.c.l.b16 %v2204
        %v2237 = vunpack.c.l.b16 %v2205
        %v2238 = vunpack.c.l.b16 %v2206
        %v2239 = vunpack.c.l.b16 %v2207
        %v2240 = vunpack.c.l.b16 %v2208
        %v2241 = vunpack.c.l.b16 %v2209
        %v2242 = vunpack.c.l.b16 %v2210
        %v2243 = vunpack.c.l.b16 %v2211
        %v2244 = vunpack.c.l.b16 %v2212
        %v2245 = vunpack.c.l.b16 %v2213
        %v2246 = vunpack.c.l.b16 %v2214
        %v2247 = vunpack.c.l.b16 %v2215
        %v2248 = vpack.c.b16 %v2233, %v2232
        %v2249 = vpack.c.b16 %v2235, %v2234
        %v2250 = vpack.c.b16 %v2237, %v2236
        %v2251 = vpack.c.b16 %v2239, %v2238
        %v2252 = vpack.c.b16 %v2241, %v2240
        %v2253 = vpack.c.b16 %v2243, %v2242
        %v2254 = vpack.c.b16 %v2245, %v2244
        %v2255 = vpack.c.b16 %v2247, %v2246
        %2264 = vmatprep.subr.bf16.mxu0 0
        %2265 = vmatpush1.bf16.msra.mxu0 %v2248
        %2266 = vmatprep.subr.bf16.mxu0 0
        %2267 = vmatpush1.bf16.msra.mxu0 %v2249
        %2268 = vmatprep.subr.bf16.mxu0 0
        %2269 = vmatpush1.bf16.msra.mxu0 %v2250
        %2270 = vmatprep.subr.bf16.mxu0 0
        %2271 = vmatpush1.bf16.msra.mxu0 %v2251
        %2272 = vmatprep.subr.bf16.mxu0 0
        %2273 = vmatpush1.bf16.msra.mxu0 %v2252
        %2274 = vmatprep.subr.bf16.mxu0 0
        %2275 = vmatpush1.bf16.msra.mxu0 %v2253
        %2276 = vmatprep.subr.bf16.mxu0 0
        %2277 = vmatpush1.bf16.msra.mxu0 %v2254
        %2278 = vmatprep.subr.bf16.mxu0 0
        %2279 = vmatpush1.bf16.msra.mxu0 %v2255
        %2280 = vmatprep.subr.bf16.mxu0 0
        %2281 = vmatpush1.bf16.msra.mxu0 0
        %2282 = vmatprep.subr.bf16.mxu0 0
        %2283 = vmatpush1.bf16.msra.mxu0 0
        %2284 = vmatprep.subr.bf16.mxu0 0
        %2285 = vmatpush1.bf16.msra.mxu0 0
        %2286 = vmatprep.subr.bf16.mxu0 0
        %2287 = vmatpush1.bf16.msra.mxu0 0
        %2288 = vmatprep.subr.bf16.mxu0 0
        %2289 = vmatpush1.bf16.msra.mxu0 0
        %2290 = vmatprep.subr.bf16.mxu0 0
        %2291 = vmatpush1.bf16.msra.mxu0 0
        %2292 = vmatprep.subr.bf16.mxu0 0
        %2293 = vmatpush1.bf16.msra.mxu0 0
        %2294 = vmatprep.subr.bf16.mxu0 0
        %2295 = vmatpush1.bf16.msra.mxu0 0
        %2296 = vmatprep.mubr.bf16.mxu0 0
        %2297 = vmatmul.mubr.bf16.gmra.mrb[0].mxu0 %v1040
        %v2298 = vpop.f32.mrb[0].mxu0
        %v2299 = vadd.f32 0.0, %v2298
        %v2300 = vpop.f32.mrb[0].mxu0
        %v2301 = vpop.f32.mrb[0].mxu0
        %v2302 = vadd.f32 0.0, %v2301
        %v2303 = vpop.f32.mrb[0].mxu0
        %2304 = vmatprep.mubr.bf16.mxu0 0
        %2305 = vmatmul.mubr.bf16.gmra.mrb[0].mxu0 %v1041
        %v2306 = vpop.f32.mrb[0].mxu0
        %v2307 = vadd.f32 0.0, %v2306
        %v2308 = vpop.f32.mrb[0].mxu0
        %v2309 = vpop.f32.mrb[0].mxu0
        %v2310 = vadd.f32 0.0, %v2309
        %v2311 = vpop.f32.mrb[0].mxu0
        %2312 = vmatprep.mubr.bf16.mxu0 0
        %2313 = vmatmul.mubr.bf16.gmra.mrb[0].mxu0 %v1042
        %v2314 = vpop.f32.mrb[0].mxu0
        %v2315 = vadd.f32 0.0, %v2314
        %v2316 = vpop.f32.mrb[0].mxu0
        %v2317 = vpop.f32.mrb[0].mxu0
        %v2318 = vadd.f32 0.0, %v2317
        %v2319 = vpop.f32.mrb[0].mxu0
        %2320 = vmatprep.mubr.bf16.mxu0 0
        %2321 = vmatmul.mubr.bf16.gmra.mrb[0].mxu0 %v1043
        %v2322 = vpop.f32.mrb[0].mxu0
        %v2323 = vadd.f32 0.0, %v2322
        %v2324 = vpop.f32.mrb[0].mxu0
        %v2325 = vpop.f32.mrb[0].mxu0
        %v2326 = vadd.f32 0.0, %v2325
        %v2327 = vpop.f32.mrb[0].mxu0
        %2328 = vmatprep.mubr.bf16.mxu0 0
        %2329 = vmatmul.mubr.bf16.gmra.mrb[0].mxu0 %v1044
        %v2330 = vpop.f32.mrb[0].mxu0
        %v2331 = vadd.f32 0.0, %v2330
        %v2332 = vpop.f32.mrb[0].mxu0
        %v2333 = vpop.f32.mrb[0].mxu0
        %v2334 = vadd.f32 0.0, %v2333
        %v2335 = vpop.f32.mrb[0].mxu0
        %2336 = vmatprep.mubr.bf16.mxu0 0
        %2337 = vmatmul.mubr.bf16.gmra.mrb[0].mxu0 %v1045
        %v2338 = vpop.f32.mrb[0].mxu0
        %v2339 = vadd.f32 0.0, %v2338
        %v2340 = vpop.f32.mrb[0].mxu0
        %v2341 = vpop.f32.mrb[0].mxu0
        %v2342 = vadd.f32 0.0, %v2341
        %v2343 = vpop.f32.mrb[0].mxu0
        %2344 = vmatprep.mubr.bf16.mxu0 0
        %2345 = vmatmul.mubr.bf16.gmra.mrb[0].mxu0 %v1046
        %v2346 = vpop.f32.mrb[0].mxu0
        %v2347 = vadd.f32 0.0, %v2346
        %v2348 = vpop.f32.mrb[0].mxu0
        %v2349 = vpop.f32.mrb[0].mxu0
        %v2350 = vadd.f32 0.0, %v2349
        %v2351 = vpop.f32.mrb[0].mxu0
        %2352 = vmatprep.mubr.bf16.mxu0 0
        %2353 = vmatmul.mubr.bf16.gmra.mrb[0].mxu0 %v1047
        %v2354 = vpop.f32.mrb[0].mxu0
        %v2355 = vadd.f32 0.0, %v2354
        %v2356 = vpop.f32.mrb[0].mxu0
        %v2357 = vpop.f32.mrb[0].mxu0
        %v2358 = vadd.f32 0.0, %v2357
        %v2359 = vpop.f32.mrb[0].mxu0
        %2360 = vdwg.mxu0
        %v2377 = vunpack.c.l.b16 %v2183
        %v2378 = vunpack.c.l.b16 %v2184
        %v2379 = vunpack.c.l.b16 %v2185
        %v2380 = vunpack.c.l.b16 %v2186
        %v2381 = vunpack.c.l.b16 %v2187
        %v2382 = vunpack.c.l.b16 %v2188
        %v2383 = vunpack.c.l.b16 %v2189
        %v2384 = vunpack.c.l.b16 %v2190
        %v2385 = vunpack.c.l.b16 %v2191
        %v2386 = vunpack.c.l.b16 %v2192
        %v2387 = vunpack.c.l.b16 %v2193
        %v2388 = vunpack.c.l.b16 %v2194
        %v2389 = vunpack.c.l.b16 %v2195
        %v2390 = vunpack.c.l.b16 %v2196
        %v2391 = vunpack.c.l.b16 %v2197
        %v2392 = vunpack.c.l.b16 %v2198
        %v2393 = vpack.c.b16 %v2378, %v2377
        %v2394 = vpack.c.b16 %v2380, %v2379
        %v2395 = vpack.c.b16 %v2382, %v2381
        %v2396 = vpack.c.b16 %v2384, %v2383
        %v2397 = vpack.c.b16 %v2386, %v2385
        %v2398 = vpack.c.b16 %v2388, %v2387
        %v2399 = vpack.c.b16 %v2390, %v2389
        %v2400 = vpack.c.b16 %v2392, %v2391
        %2409 = vmatprep.subr.bf16.mxu0 0
        %2410 = vmatpush1.bf16.msra.mxu0 %v2393
        %2411 = vmatprep.subr.bf16.mxu0 0
        %2412 = vmatpush1.bf16.msra.mxu0 %v2394
        %2413 = vmatprep.subr.bf16.mxu0 0
        %2414 = vmatpush1.bf16.msra.mxu0 %v2395
        %2415 = vmatprep.subr.bf16.mxu0 0
        %2416 = vmatpush1.bf16.msra.mxu0 %v2396
        %2417 = vmatprep.subr.bf16.mxu0 0
        %2418 = vmatpush1.bf16.msra.mxu0 %v2397
        %2419 = vmatprep.subr.bf16.mxu0 0
        %2420 = vmatpush1.bf16.msra.mxu0 %v2398
        %2421 = vmatprep.subr.bf16.mxu0 0
        %2422 = vmatpush1.bf16.msra.mxu0 %v2399
        %2423 = vmatprep.subr.bf16.mxu0 0
        %2424 = vmatpush1.bf16.msra.mxu0 %v2400
        %2425 = vmatprep.subr.bf16.mxu0 0
        %2426 = vmatpush1.bf16.msra.mxu0 0
        %2427 = vmatprep.subr.bf16.mxu0 0
        %2428 = vmatpush1.bf16.msra.mxu0 0
        %2429 = vmatprep.subr.bf16.mxu0 0
        %2430 = vmatpush1.bf16.msra.mxu0 0
        %2431 = vmatprep.subr.bf16.mxu0 0
        %2432 = vmatpush1.bf16.msra.mxu0 0
        %2433 = vmatprep.subr.bf16.mxu0 0
        %2434 = vmatpush1.bf16.msra.mxu0 0
        %2435 = vmatprep.subr.bf16.mxu0 0
        %2436 = vmatpush1.bf16.msra.mxu0 0
        %2437 = vmatprep.subr.bf16.mxu0 0
        %2438 = vmatpush1.bf16.msra.mxu0 0
        %2439 = vmatprep.subr.bf16.mxu0 0
        %2440 = vmatpush1.bf16.msra.mxu0 0
        %2441 = vmatprep.mubr.bf16.mxu0 0
        %2442 = vmatmul.mubr.bf16.gmra.mrb[0].mxu0 %v2174
        %v2443 = vpop.f32.mrb[0].mxu0
        %v2444 = vadd.f32 %v2299, %v2443
        %v2445 = vpop.f32.mrb[0].mxu0
        %v2446 = vpop.f32.mrb[0].mxu0
        %v2447 = vadd.f32 %v2302, %v2446
        %v2448 = vpop.f32.mrb[0].mxu0
        %2449 = vmatprep.mubr.bf16.mxu0 0
        %2450 = vmatmul.mubr.bf16.gmra.mrb[0].mxu0 %v2175
        %v2451 = vpop.f32.mrb[0].mxu0
        %v2452 = vadd.f32 %v2307, %v2451
        %v2453 = vpop.f32.mrb[0].mxu0
        %v2454 = vpop.f32.mrb[0].mxu0
        %v2455 = vadd.f32 %v2310, %v2454
        %v2456 = vpop.f32.mrb[0].mxu0
        %2457 = vmatprep.mubr.bf16.mxu0 0
        %2458 = vmatmul.mubr.bf16.gmra.mrb[0].mxu0 %v2176
        %v2459 = vpop.f32.mrb[0].mxu0
        %v2460 = vadd.f32 %v2315, %v2459
        %v2461 = vpop.f32.mrb[0].mxu0
        %v2462 = vpop.f32.mrb[0].mxu0
        %v2463 = vadd.f32 %v2318, %v2462
        %v2464 = vpop.f32.mrb[0].mxu0
        %2465 = vmatprep.mubr.bf16.mxu0 0
        %2466 = vmatmul.mubr.bf16.gmra.mrb[0].mxu0 %v2177
        %v2467 = vpop.f32.mrb[0].mxu0
        %v2468 = vadd.f32 %v2323, %v2467
        %v2469 = vpop.f32.mrb[0].mxu0
        %v2470 = vpop.f32.mrb[0].mxu0
        %v2471 = vadd.f32 %v2326, %v2470
        %v2472 = vpop.f32.mrb[0].mxu0
        %2473 = vmatprep.mubr.bf16.mxu0 0
        %2474 = vmatmul.mubr.bf16.gmra.mrb[0].mxu0 %v2178
        %v2475 = vpop.f32.mrb[0].mxu0
        %v2476 = vadd.f32 %v2331, %v2475
        %v2477 = vpop.f32.mrb[0].mxu0
        %v2478 = vpop.f32.mrb[0].mxu0
        %v2479 = vadd.f32 %v2334, %v2478
        %v2480 = vpop.f32.mrb[0].mxu0
        %2481 = vmatprep.mubr.bf16.mxu0 0
        %2482 = vmatmul.mubr.bf16.gmra.mrb[0].mxu0 %v2179
        %v2483 = vpop.f32.mrb[0].mxu0
        %v2484 = vadd.f32 %v2339, %v2483
        %v2485 = vpop.f32.mrb[0].mxu0
        %v2486 = vpop.f32.mrb[0].mxu0
        %v2487 = vadd.f32 %v2342, %v2486
        %v2488 = vpop.f32.mrb[0].mxu0
        %2489 = vmatprep.mubr.bf16.mxu0 0
        %2490 = vmatmul.mubr.bf16.gmra.mrb[0].mxu0 %v2180
        %v2491 = vpop.f32.mrb[0].mxu0
        %v2492 = vadd.f32 %v2347, %v2491
        %v2493 = vpop.f32.mrb[0].mxu0
        %v2494 = vpop.f32.mrb[0].mxu0
        %v2495 = vadd.f32 %v2350, %v2494
        %v2496 = vpop.f32.mrb[0].mxu0
        %2497 = vmatprep.mubr.bf16.mxu0 0
        %2498 = vmatmul.mubr.bf16.gmra.mrb[0].mxu0 %v2181
        %v2499 = vpop.f32.mrb[0].mxu0
        %v2500 = vadd.f32 %v2355, %v2499
        %v2501 = vpop.f32.mrb[0].mxu0
        %v2502 = vpop.f32.mrb[0].mxu0
        %v2503 = vadd.f32 %v2358, %v2502
        %v2504 = vpop.f32.mrb[0].mxu0
        %2505 = vdwg.mxu0
        %s2506 = scalar_lea.vmem [#allocation13], 1
        %v2507 = vld [vmem:[%s2506] sm:$0x1]
        %v2509 = vlaneseq
        %v2510 = vshrl.u32 %v2509, 7
        %v2511 = vsub.s32 0, %v2510
        %v2512 = vrot.slane %v2507, %v2511
        %v2514 = vadd.f32 %v2444, %v2512
        %v2515 = vadd.f32 %v2447, %v2512
        %v2516 = vadd.f32 %v2452, %v2512
        %v2517 = vadd.f32 %v2455, %v2512
        %v2518 = vadd.f32 %v2460, %v2512
        %v2519 = vadd.f32 %v2463, %v2512
        %v2520 = vadd.f32 %v2468, %v2512
        %v2521 = vadd.f32 %v2471, %v2512
        %v2522 = vadd.f32 %v2476, %v2512
        %v2523 = vadd.f32 %v2479, %v2512
        %v2524 = vadd.f32 %v2484, %v2512
        %v2525 = vadd.f32 %v2487, %v2512
        %v2526 = vadd.f32 %v2492, %v2512
        %v2527 = vadd.f32 %v2495, %v2512
        %v2528 = vadd.f32 %v2500, %v2512
        %v2529 = vadd.f32 %v2503, %v2512
        %v2530 = vadd.f32 %v2514, %v1786
        %v2531 = vadd.f32 %v2515, %v1787
        %v2532 = vadd.f32 %v2516, %v1788
        %v2533 = vadd.f32 %v2517, %v1789
        %v2534 = vadd.f32 %v2518, %v1790
        %v2535 = vadd.f32 %v2519, %v1791
        %v2536 = vadd.f32 %v2520, %v1792
        %v2537 = vadd.f32 %v2521, %v1793
        %v2538 = vadd.f32 %v2522, %v1794
        %v2539 = vadd.f32 %v2523, %v1795
        %v2540 = vadd.f32 %v2524, %v1796
        %v2541 = vadd.f32 %v2525, %v1797
        %v2542 = vadd.f32 %v2526, %v1798
        %v2543 = vadd.f32 %v2527, %v1799
        %v2544 = vadd.f32 %v2528, %v1800
        %v2545 = vadd.f32 %v2529, %v1801
        %v2546 = vmax.f32 %v2530, 0.0
        %v2547 = vmax.f32 %v2531, 0.0
        %v2548 = vmax.f32 %v2532, 0.0
        %v2549 = vmax.f32 %v2533, 0.0
        %v2550 = vmax.f32 %v2534, 0.0
        %v2551 = vmax.f32 %v2535, 0.0
        %v2552 = vmax.f32 %v2536, 0.0
        %v2553 = vmax.f32 %v2537, 0.0
        %v2554 = vmax.f32 %v2538, 0.0
        %v2555 = vmax.f32 %v2539, 0.0
        %v2556 = vmax.f32 %v2540, 0.0
        %v2557 = vmax.f32 %v2541, 0.0
        %v2558 = vmax.f32 %v2542, 0.0
        %v2559 = vmax.f32 %v2543, 0.0
        %v2560 = vmax.f32 %v2544, 0.0
        %v2561 = vmax.f32 %v2545, 0.0
        %v2562 = vpack.c.bf16 %v2547, %v2546
        %v2563 = vpack.c.bf16 %v2549, %v2548
        %v2564 = vpack.c.bf16 %v2551, %v2550
        %v2565 = vpack.c.bf16 %v2553, %v2552
        %v2566 = vpack.c.bf16 %v2555, %v2554
        %v2567 = vpack.c.bf16 %v2557, %v2556
        %v2568 = vpack.c.bf16 %v2559, %v2558
        %v2569 = vpack.c.bf16 %v2561, %v2560
        %v2570 = vld [vmem:[#allocation14] sm:$0xf]
        %v2571 = vld [vmem:[#allocation14 + $0x4] sm:$0xf]
        %v2572 = vld [vmem:[#allocation14 + $0x8] sm:$0xf]
        %v2573 = vld [vmem:[#allocation14 + $0xc] sm:$0xf]
        %v2574 = vld [vmem:[#allocation14 + $0x10] sm:$0xf]
        %v2575 = vld [vmem:[#allocation14 + $0x14] sm:$0xf]
        %v2576 = vld [vmem:[#allocation14 + $0x18] sm:$0xf]
        %v2577 = vld [vmem:[#allocation14 + $0x1c] sm:$0xf]
        %v2578 = vld [vmem:[#allocation14 + $0x20] sm:$0xf]
        %v2579 = vld [vmem:[#allocation14 + $0x24] sm:$0xf]
        %v2580 = vld [vmem:[#allocation14 + $0x28] sm:$0xf]
        %v2581 = vld [vmem:[#allocation14 + $0x2c] sm:$0xf]
        %v2582 = vld [vmem:[#allocation14 + $0x30] sm:$0xf]
        %v2583 = vld [vmem:[#allocation14 + $0x34] sm:$0xf]
        %v2584 = vld [vmem:[#allocation14 + $0x38] sm:$0xf]
        %v2585 = vld [vmem:[#allocation14 + $0x3c] sm:$0xf]
        %v2586 = vld [vmem:[%s13] sm:$0xf]
        %v2587 = vld [vmem:[%s13 + $0x4] sm:$0xf]
        %v2588 = vld [vmem:[%s13 + $0x8] sm:$0xf]
        %v2589 = vld [vmem:[%s13 + $0xc] sm:$0xf]
        %v2590 = vld [vmem:[%s13 + $0x10] sm:$0xf]
        %v2591 = vld [vmem:[%s13 + $0x14] sm:$0xf]
        %v2592 = vld [vmem:[%s13 + $0x18] sm:$0xf]
        %v2593 = vld [vmem:[%s13 + $0x1c] sm:$0xf]
        %v2594 = vld [vmem:[%s13 + $0x20] sm:$0xf]
        %v2595 = vld [vmem:[%s13 + $0x24] sm:$0xf]
        %v2596 = vld [vmem:[%s13 + $0x28] sm:$0xf]
        %v2597 = vld [vmem:[%s13 + $0x2c] sm:$0xf]
        %v2598 = vld [vmem:[%s13 + $0x30] sm:$0xf]
        %v2599 = vld [vmem:[%s13 + $0x34] sm:$0xf]
        %v2600 = vld [vmem:[%s13 + $0x38] sm:$0xf]
        %v2601 = vld [vmem:[%s13 + $0x3c] sm:$0xf]
        %v2618 = vunpack.c.l.b16 %v2586
        %v2619 = vunpack.c.l.b16 %v2587
        %v2620 = vunpack.c.l.b16 %v2588
        %v2621 = vunpack.c.l.b16 %v2589
        %v2622 = vunpack.c.l.b16 %v2590
        %v2623 = vunpack.c.l.b16 %v2591
        %v2624 = vunpack.c.l.b16 %v2592
        %v2625 = vunpack.c.l.b16 %v2593
        %v2626 = vunpack.c.l.b16 %v2594
        %v2627 = vunpack.c.l.b16 %v2595
        %v2628 = vunpack.c.l.b16 %v2596
        %v2629 = vunpack.c.l.b16 %v2597
        %v2630 = vunpack.c.l.b16 %v2598
        %v2631 = vunpack.c.l.b16 %v2599
        %v2632 = vunpack.c.l.b16 %v2600
        %v2633 = vunpack.c.l.b16 %v2601
        %v2634 = vpack.c.b16 %v2619, %v2618
        %v2635 = vpack.c.b16 %v2621, %v2620
        %v2636 = vpack.c.b16 %v2623, %v2622
        %v2637 = vpack.c.b16 %v2625, %v2624
        %v2638 = vpack.c.b16 %v2627, %v2626
        %v2639 = vpack.c.b16 %v2629, %v2628
        %v2640 = vpack.c.b16 %v2631, %v2630
        %v2641 = vpack.c.b16 %v2633, %v2632
        %2650 = vmatprep.subr.bf16.mxu0 0
        %2651 = vmatpush1.bf16.msra.mxu0 %v2634
        %2652 = vmatprep.subr.bf16.mxu0 0
        %2653 = vmatpush1.bf16.msra.mxu0 %v2635
        %2654 = vmatprep.subr.bf16.mxu0 0
        %2655 = vmatpush1.bf16.msra.mxu0 %v2636
        %2656 = vmatprep.subr.bf16.mxu0 0
        %2657 = vmatpush1.bf16.msra.mxu0 %v2637
        %2658 = vmatprep.subr.bf16.mxu0 0
        %2659 = vmatpush1.bf16.msra.mxu0 %v2638
        %2660 = vmatprep.subr.bf16.mxu0 0
        %2661 = vmatpush1.bf16.msra.mxu0 %v2639
        %2662 = vmatprep.subr.bf16.mxu0 0
        %2663 = vmatpush1.bf16.msra.mxu0 %v2640
        %2664 = vmatprep.subr.bf16.mxu0 0
        %2665 = vmatpush1.bf16.msra.mxu0 %v2641
        %2666 = vmatprep.subr.bf16.mxu0 0
        %2667 = vmatpush1.bf16.msra.mxu0 0
        %2668 = vmatprep.subr.bf16.mxu0 0
        %2669 = vmatpush1.bf16.msra.mxu0 0
        %2670 = vmatprep.subr.bf16.mxu0 0
        %2671 = vmatpush1.bf16.msra.mxu0 0
        %2672 = vmatprep.subr.bf16.mxu0 0
        %2673 = vmatpush1.bf16.msra.mxu0 0
        %2674 = vmatprep.subr.bf16.mxu0 0
        %2675 = vmatpush1.bf16.msra.mxu0 0
        %2676 = vmatprep.subr.bf16.mxu0 0
        %2677 = vmatpush1.bf16.msra.mxu0 0
        %2678 = vmatprep.subr.bf16.mxu0 0
        %2679 = vmatpush1.bf16.msra.mxu0 0
        %2680 = vmatprep.subr.bf16.mxu0 0
        %2681 = vmatpush1.bf16.msra.mxu0 0
        %2682 = vmatprep.mubr.bf16.mxu0 0
        %2683 = vmatmul.mubr.bf16.gmra.mrb[0].mxu0 %v1040
        %v2684 = vpop.f32.mrb[0].mxu0
        %v2685 = vadd.f32 0.0, %v2684
        %v2686 = vpop.f32.mrb[0].mxu0
        %v2687 = vpop.f32.mrb[0].mxu0
        %v2688 = vadd.f32 0.0, %v2687
        %v2689 = vpop.f32.mrb[0].mxu0
        %2690 = vmatprep.mubr.bf16.mxu0 0
        %2691 = vmatmul.mubr.bf16.gmra.mrb[0].mxu0 %v1041
        %v2692 = vpop.f32.mrb[0].mxu0
        %v2693 = vadd.f32 0.0, %v2692
        %v2694 = vpop.f32.mrb[0].mxu0
        %v2695 = vpop.f32.mrb[0].mxu0
        %v2696 = vadd.f32 0.0, %v2695
        %v2697 = vpop.f32.mrb[0].mxu0
        %2698 = vmatprep.mubr.bf16.mxu0 0
        %2699 = vmatmul.mubr.bf16.gmra.mrb[0].mxu0 %v1042
        %v2700 = vpop.f32.mrb[0].mxu0
        %v2701 = vadd.f32 0.0, %v2700
        %v2702 = vpop.f32.mrb[0].mxu0
        %v2703 = vpop.f32.mrb[0].mxu0
        %v2704 = vadd.f32 0.0, %v2703
        %v2705 = vpop.f32.mrb[0].mxu0
        %2706 = vmatprep.mubr.bf16.mxu0 0
        %2707 = vmatmul.mubr.bf16.gmra.mrb[0].mxu0 %v1043
        %v2708 = vpop.f32.mrb[0].mxu0
        %v2709 = vadd.f32 0.0, %v2708
        %v2710 = vpop.f32.mrb[0].mxu0
        %v2711 = vpop.f32.mrb[0].mxu0
        %v2712 = vadd.f32 0.0, %v2711
        %v2713 = vpop.f32.mrb[0].mxu0
        %2714 = vmatprep.mubr.bf16.mxu0 0
        %2715 = vmatmul.mubr.bf16.gmra.mrb[0].mxu0 %v1044
        %v2716 = vpop.f32.mrb[0].mxu0
        %v2717 = vadd.f32 0.0, %v2716
        %v2718 = vpop.f32.mrb[0].mxu0
        %v2719 = vpop.f32.mrb[0].mxu0
        %v2720 = vadd.f32 0.0, %v2719
        %v2721 = vpop.f32.mrb[0].mxu0
        %2722 = vmatprep.mubr.bf16.mxu0 0
        %2723 = vmatmul.mubr.bf16.gmra.mrb[0].mxu0 %v1045
        %v2724 = vpop.f32.mrb[0].mxu0
        %v2725 = vadd.f32 0.0, %v2724
        %v2726 = vpop.f32.mrb[0].mxu0
        %v2727 = vpop.f32.mrb[0].mxu0
        %v2728 = vadd.f32 0.0, %v2727
        %v2729 = vpop.f32.mrb[0].mxu0
        %2730 = vmatprep.mubr.bf16.mxu0 0
        %2731 = vmatmul.mubr.bf16.gmra.mrb[0].mxu0 %v1046
        %v2732 = vpop.f32.mrb[0].mxu0
        %v2733 = vadd.f32 0.0, %v2732
        %v2734 = vpop.f32.mrb[0].mxu0
        %v2735 = vpop.f32.mrb[0].mxu0
        %v2736 = vadd.f32 0.0, %v2735
        %v2737 = vpop.f32.mrb[0].mxu0
        %2738 = vmatprep.mubr.bf16.mxu0 0
        %2739 = vmatmul.mubr.bf16.gmra.mrb[0].mxu0 %v1047
        %v2740 = vpop.f32.mrb[0].mxu0
        %v2741 = vadd.f32 0.0, %v2740
        %v2742 = vpop.f32.mrb[0].mxu0
        %v2743 = vpop.f32.mrb[0].mxu0
        %v2744 = vadd.f32 0.0, %v2743
        %v2745 = vpop.f32.mrb[0].mxu0
        %2746 = vdwg.mxu0
        %v2763 = vunpack.c.l.b16 %v2570
        %v2764 = vunpack.c.l.b16 %v2571
        %v2765 = vunpack.c.l.b16 %v2572
        %v2766 = vunpack.c.l.b16 %v2573
        %v2767 = vunpack.c.l.b16 %v2574
        %v2768 = vunpack.c.l.b16 %v2575
        %v2769 = vunpack.c.l.b16 %v2576
        %v2770 = vunpack.c.l.b16 %v2577
        %v2771 = vunpack.c.l.b16 %v2578
        %v2772 = vunpack.c.l.b16 %v2579
        %v2773 = vunpack.c.l.b16 %v2580
        %v2774 = vunpack.c.l.b16 %v2581
        %v2775 = vunpack.c.l.b16 %v2582
        %v2776 = vunpack.c.l.b16 %v2583
        %v2777 = vunpack.c.l.b16 %v2584
        %v2778 = vunpack.c.l.b16 %v2585
        %v2779 = vpack.c.b16 %v2764, %v2763
        %v2780 = vpack.c.b16 %v2766, %v2765
        %v2781 = vpack.c.b16 %v2768, %v2767
        %v2782 = vpack.c.b16 %v2770, %v2769
        %v2783 = vpack.c.b16 %v2772, %v2771
        %v2784 = vpack.c.b16 %v2774, %v2773
        %v2785 = vpack.c.b16 %v2776, %v2775
        %v2786 = vpack.c.b16 %v2778, %v2777
        %2795 = vmatprep.subr.bf16.mxu0 0
        %2796 = vmatpush1.bf16.msra.mxu0 %v2779
        %2797 = vmatprep.subr.bf16.mxu0 0
        %2798 = vmatpush1.bf16.msra.mxu0 %v2780
        %2799 = vmatprep.subr.bf16.mxu0 0
        %2800 = vmatpush1.bf16.msra.mxu0 %v2781
        %2801 = vmatprep.subr.bf16.mxu0 0
        %2802 = vmatpush1.bf16.msra.mxu0 %v2782
        %2803 = vmatprep.subr.bf16.mxu0 0
        %2804 = vmatpush1.bf16.msra.mxu0 %v2783
        %2805 = vmatprep.subr.bf16.mxu0 0
        %2806 = vmatpush1.bf16.msra.mxu0 %v2784
        %2807 = vmatprep.subr.bf16.mxu0 0
        %2808 = vmatpush1.bf16.msra.mxu0 %v2785
        %2809 = vmatprep.subr.bf16.mxu0 0
        %2810 = vmatpush1.bf16.msra.mxu0 %v2786
        %2811 = vmatprep.subr.bf16.mxu0 0
        %2812 = vmatpush1.bf16.msra.mxu0 0
        %2813 = vmatprep.subr.bf16.mxu0 0
        %2814 = vmatpush1.bf16.msra.mxu0 0
        %2815 = vmatprep.subr.bf16.mxu0 0
        %2816 = vmatpush1.bf16.msra.mxu0 0
        %2817 = vmatprep.subr.bf16.mxu0 0
        %2818 = vmatpush1.bf16.msra.mxu0 0
        %2819 = vmatprep.subr.bf16.mxu0 0
        %2820 = vmatpush1.bf16.msra.mxu0 0
        %2821 = vmatprep.subr.bf16.mxu0 0
        %2822 = vmatpush1.bf16.msra.mxu0 0
        %2823 = vmatprep.subr.bf16.mxu0 0
        %2824 = vmatpush1.bf16.msra.mxu0 0
        %2825 = vmatprep.subr.bf16.mxu0 0
        %2826 = vmatpush1.bf16.msra.mxu0 0
        %2827 = vmatprep.mubr.bf16.mxu0 0
        %2828 = vmatmul.mubr.bf16.gmra.mrb[0].mxu0 %v2562
        %v2829 = vpop.f32.mrb[0].mxu0
        %v2830 = vadd.f32 %v2685, %v2829
        %v2831 = vpop.f32.mrb[0].mxu0
        %v2832 = vpop.f32.mrb[0].mxu0
        %v2833 = vadd.f32 %v2688, %v2832
        %v2834 = vpop.f32.mrb[0].mxu0
        %2835 = vmatprep.mubr.bf16.mxu0 0
        %2836 = vmatmul.mubr.bf16.gmra.mrb[0].mxu0 %v2563
        %v2837 = vpop.f32.mrb[0].mxu0
        %v2838 = vadd.f32 %v2693, %v2837
        %v2839 = vpop.f32.mrb[0].mxu0
        %v2840 = vpop.f32.mrb[0].mxu0
        %v2841 = vadd.f32 %v2696, %v2840
        %v2842 = vpop.f32.mrb[0].mxu0
        %2843 = vmatprep.mubr.bf16.mxu0 0
        %2844 = vmatmul.mubr.bf16.gmra.mrb[0].mxu0 %v2564
        %v2845 = vpop.f32.mrb[0].mxu0
        %v2846 = vadd.f32 %v2701, %v2845
        %v2847 = vpop.f32.mrb[0].mxu0
        %v2848 = vpop.f32.mrb[0].mxu0
        %v2849 = vadd.f32 %v2704, %v2848
        %v2850 = vpop.f32.mrb[0].mxu0
        %2851 = vmatprep.mubr.bf16.mxu0 0
        %2852 = vmatmul.mubr.bf16.gmra.mrb[0].mxu0 %v2565
        %v2853 = vpop.f32.mrb[0].mxu0
        %v2854 = vadd.f32 %v2709, %v2853
        %v2855 = vpop.f32.mrb[0].mxu0
        %v2856 = vpop.f32.mrb[0].mxu0
        %v2857 = vadd.f32 %v2712, %v2856
        %v2858 = vpop.f32.mrb[0].mxu0
        %2859 = vmatprep.mubr.bf16.mxu0 0
        %2860 = vmatmul.mubr.bf16.gmra.mrb[0].mxu0 %v2566
        %v2861 = vpop.f32.mrb[0].mxu0
        %v2862 = vadd.f32 %v2717, %v2861
        %v2863 = vpop.f32.mrb[0].mxu0
        %v2864 = vpop.f32.mrb[0].mxu0
        %v2865 = vadd.f32 %v2720, %v2864
        %v2866 = vpop.f32.mrb[0].mxu0
        %2867 = vmatprep.mubr.bf16.mxu0 0
        %2868 = vmatmul.mubr.bf16.gmra.mrb[0].mxu0 %v2567
        %v2869 = vpop.f32.mrb[0].mxu0
        %v2870 = vadd.f32 %v2725, %v2869
        %v2871 = vpop.f32.mrb[0].mxu0
        %v2872 = vpop.f32.mrb[0].mxu0
        %v2873 = vadd.f32 %v2728, %v2872
        %v2874 = vpop.f32.mrb[0].mxu0
        %2875 = vmatprep.mubr.bf16.mxu0 0
        %2876 = vmatmul.mubr.bf16.gmra.mrb[0].mxu0 %v2568
        %v2877 = vpop.f32.mrb[0].mxu0
        %v2878 = vadd.f32 %v2733, %v2877
        %v2879 = vpop.f32.mrb[0].mxu0
        %v2880 = vpop.f32.mrb[0].mxu0
        %v2881 = vadd.f32 %v2736, %v2880
        %v2882 = vpop.f32.mrb[0].mxu0
        %2883 = vmatprep.mubr.bf16.mxu0 0
        %2884 = vmatmul.mubr.bf16.gmra.mrb[0].mxu0 %v2569
        %v2885 = vpop.f32.mrb[0].mxu0
        %v2886 = vadd.f32 %v2741, %v2885
        %v2887 = vpop.f32.mrb[0].mxu0
        %v2888 = vpop.f32.mrb[0].mxu0
        %v2889 = vadd.f32 %v2744, %v2888
        %v2890 = vpop.f32.mrb[0].mxu0
        %2891 = vdwg.mxu0
        %v2892 = vld [vmem:[%s14] sm:$0x1]
        %v2894 = vlaneseq
        %v2895 = vshrl.u32 %v2894, 7
        %v2896 = vsub.s32 0, %v2895
        %v2897 = vrot.slane %v2892, %v2896
        %v2899 = vadd.f32 %v2830, %v2897
        %v2900 = vadd.f32 %v2833, %v2897
        %v2901 = vadd.f32 %v2838, %v2897
        %v2902 = vadd.f32 %v2841, %v2897
        %v2903 = vadd.f32 %v2846, %v2897
        %v2904 = vadd.f32 %v2849, %v2897
        %v2905 = vadd.f32 %v2854, %v2897
        %v2906 = vadd.f32 %v2857, %v2897
        %v2907 = vadd.f32 %v2862, %v2897
        %v2908 = vadd.f32 %v2865, %v2897
        %v2909 = vadd.f32 %v2870, %v2897
        %v2910 = vadd.f32 %v2873, %v2897
        %v2911 = vadd.f32 %v2878, %v2897
        %v2912 = vadd.f32 %v2881, %v2897
        %v2913 = vadd.f32 %v2886, %v2897
        %v2914 = vadd.f32 %v2889, %v2897
        %2915 = vst [vmem:[%s615] sm:$0xff] %v2899
        %2916 = vst [vmem:[%s615 + $0x8] sm:$0xff] %v2900
        %2917 = vst [vmem:[%s615 + $0x10] sm:$0xff] %v2901
        %2918 = vst [vmem:[%s615 + $0x18] sm:$0xff] %v2902
        %2919 = vst [vmem:[%s615 + $0x20] sm:$0xff] %v2903
        %2920 = vst [vmem:[%s615 + $0x28] sm:$0xff] %v2904
        %2921 = vst [vmem:[%s615 + $0x30] sm:$0xff] %v2905
        %2922 = vst [vmem:[%s615 + $0x38] sm:$0xff] %v2906
        %2923 = vst [vmem:[%s615 + $0x40] sm:$0xff] %v2907
        %2924 = vst [vmem:[%s615 + $0x48] sm:$0xff] %v2908
        %2925 = vst [vmem:[%s615 + $0x50] sm:$0xff] %v2909
        %2926 = vst [vmem:[%s615 + $0x58] sm:$0xff] %v2910
        %2927 = vst [vmem:[%s615 + $0x60] sm:$0xff] %v2911
        %2928 = vst [vmem:[%s615 + $0x68] sm:$0xff] %v2912
        %2929 = vst [vmem:[%s615 + $0x70] sm:$0xff] %v2913
        %2930 = vst [vmem:[%s615 + $0x78] sm:$0xff] %v2914
        %s2931 = sand.u32 %s367, 1
        %s2932 = scalar_lea.sflag [#allocation4], %s2931
        %s2933 = sand.u32 %s367, 1
        %s2934 = smul.addr %s2933, 128
        %s2935 = scalar_lea.vmem [#allocation16], %s2934
        // Predicated region
        $region113: #{tpu_custom_call.1} parent=79 // pred_check
          %p2936 = pneg %p377
        $region114: #{tpu_custom_call.1} parent=79 // pred_check_branch
          %2938 = sbr.rel (%p2936) target = $region116
        $region115: #{tpu_custom_call.1} parent=79 // pred_region
          %s2939 = smul.u32 16, %s34
          %s2941 = ssub.s32 2048, 2048
          %2942 = vsyncadd %s2932, %s2941
          %s2943 = smul.addr %s2939, 128
          %s2944 = scalar_lea.hbm %s15, %s2943
          %s2945 = sshll.u32 %s2935, 4
          %s2946 = int_to_ptr.vmem [resolvable:$true] %s2945
          %2951 = dma.vmem_to_hbm [thread:$0]  %s2946, 2048, %s2944, %s2932, 128, 128, 8
        $region116: #{tpu_custom_call.1} parent=79 // pred_fallthru
          _
      $region80: #{tpu_custom_call.1} parent=5 // pred_fallthru
        _
      %p2952 = scmp.le.s32.totalorder 2, %s29
      // Predicated region
      $region117: #{tpu_custom_call.1} parent=5 // pred_check
        %p2953 = pneg %p2952
      $region118: #{tpu_custom_call.1} parent=5 // pred_check_branch
        %2955 = sbr.rel (%p2953) target = $region120
      $region119: #{tpu_custom_call.1} parent=5 // pred_region
        %s2956 = ssub.s32 %s29, 2
        // Predicated region
        $region121: #{tpu_custom_call.1} parent=119 // pred_check
          %p2957 = pneg %p383
        $region122: #{tpu_custom_call.1} parent=119 // pred_check_branch
          %2959 = sbr.rel (%p2957) target = $region124
        $region123: #{tpu_custom_call.1} parent=119 // pred_region
          %s2960 = sand.u32 %s368, 1
          %s2961 = scalar_lea.sflag [#allocation4], %s2960
          %s2962 = sand.u32 %s368, 1
          %s2963 = smul.addr %s2962, 128
          %s2964 = scalar_lea.vmem [#allocation16], %s2963
          %2965 = dma.done %s2961, 2048
        $region124: #{tpu_custom_call.1} parent=119 // pred_fallthru
          _
      $region120: #{tpu_custom_call.1} parent=5 // pred_fallthru
        _
    $region6: #{tpu_custom_call.1} parent=1 // loop_footer
      %s33 = sadd.s32 1, %s29
    $region7: #{tpu_custom_call.1} parent=1 // loop_footer_branch
      %28 = sbr.rel target = $region3
    $region8: #{tpu_custom_call.1} parent=1 // loop_exit
      _
    %2966 = vsyncpa [#allocation3], 1
    %s2967 = scalar_lea.sflag [#allocation3], 1
    %2968 = vsyncpa %s2967, 1
    %2969 = vsyncpa [#allocation6], 1
    %2970 = vsyncpa [#allocation9], 1
    %2971 = vsyncpa [#allocation12], 1
    %2972 = vsyncpa [#allocation15], 1
    %2973 = vsyncpa [#allocation4], 1
    %s2974 = scalar_lea.sflag [#allocation4], 1
    %2975 = vsyncpa %s2974, 1

// kernel: tpu_custom_call.1
$region0: #{tpu_custom_call.1}
  #allocation0 [shape = 'u32[]', space=smem, size = 0x4, offset = 0x4, fixed_abs, tag = 'smem constant byte address 0x4 - core index']
  #allocation1 [shape = 'u32[144,128]{1,0:T(1,128)}', space=vmem, size = 0x12000, scoped, tag = 'internal scratch']
  %s0 = inlined_call_operand.vmem [shape: bf16[256,8], index: 0, kind: input, shape index: {}]
  %s1 = inlined_call_operand.vmem [shape: bf16[256,8], index: 1, kind: input, shape index: {}]
  %s2 = inlined_call_operand.hbm [shape: bf16[8,128], index: 2, kind: input, shape index: {}]
  %s3 = inlined_call_operand.vmem [shape: f32[1,128], index: 3, kind: input, shape index: {}]
  %s4 = inlined_call_operand.hbm [shape: bf16[8,128], index: 4, kind: input, shape index: {}]
  %s5 = inlined_call_operand.hbm [shape: f32[1,128], index: 5, kind: input, shape index: {}]
  %s6 = inlined_call_operand.vmem [shape: bf16[2,128,128], index: 6, kind: input, shape index: {}]
  %s7 = inlined_call_operand.vmem [shape: bf16[2,128,128], index: 7, kind: input, shape index: {}]
  %s8 = inlined_call_operand.hbm [shape: f32[2,1,128], index: 8, kind: input, shape index: {}]
  %s9 = inlined_call_operand.hbm [shape: bf16[2,128,128], index: 9, kind: input, shape index: {}]
  %s10 = inlined_call_operand.hbm [shape: bf16[2,128,128], index: 10, kind: input, shape index: {}]
  %s11 = inlined_call_operand.hbm [shape: f32[2,1,128], index: 11, kind: input, shape index: {}]
  %s12 = inlined_call_operand.hbm [shape: bf16[128,128], index: 12, kind: input, shape index: {}]
  %s13 = inlined_call_operand.vmem [shape: bf16[128,128], index: 13, kind: input, shape index: {}]
  %s14 = inlined_call_operand.vmem [shape: f32[1,128], index: 14, kind: input, shape index: {}]
  %s15 = inlined_call_operand.hbm [shape: f32[256,128], index: 15, kind: output, shape index: {}]
  %s16 = sld [smem:[#allocation0]]
  $region125: #{tpu_custom_call.1} parent=0
    _
  %s18 = ssub.s32 1, %s16
  %s19 = scalar_select 0, %s18, %s16
  $region1: #{tpu_custom_call.1} parent=0
    #allocation2 [shape = 'u8[2048]{0}', space=vmem, size = 0x800, scoped, tag = 'input window, operand 2, single buffered']
    #allocation3 [shape = 's32[2]{0}', space=sflag, size = 0x8, scoped, tag = 'scoped memory for tpu_custom_call.1']
    #allocation4 [shape = 's32[2]{0}', space=sflag, size = 0x8, scoped, tag = 'scoped memory for tpu_custom_call.1']
    #allocation5 [shape = 'u8[2048]{0}', space=vmem, size = 0x800, scoped, tag = 'input window, operand 4, single buffered']
    #allocation6 [shape = 's32[1]{0}', space=sflag, size = 0x4, scoped, tag = 'scoped memory for tpu_custom_call.1']
    #allocation7 [shape = 'u8[512]{0}', space=vmem, size = 0x400, scoped, tag = 'input window, operand 5, single buffered']
    #allocation8 [shape = 'u8[1024]{0}', space=vmem, size = 0x400, scoped, tag = 'input window, operand 8, single buffered']
    #allocation9 [shape = 's32[1]{0}', space=sflag, size = 0x4, scoped, tag = 'scoped memory for tpu_custom_call.1']
    #allocation10 [shape = 'u8[65536]{0}', space=vmem, size = 0x10000, scoped, tag = 'input window, operand 9, single buffered']
    #allocation11 [shape = 'u8[65536]{0}', space=vmem, size = 0x10000, scoped, tag = 'input window, operand 10, single buffered']
    #allocation12 [shape = 's32[1]{0}', space=sflag, size = 0x4, scoped, tag = 'scoped memory for tpu_custom_call.1']
    #allocation13 [shape = 'u8[1024]{0}', space=vmem, size = 0x400, scoped, tag = 'input window, operand 11, single buffered']
    #allocation14 [shape = 'u8[32768]{0}', space=vmem, size = 0x8000, scoped, tag = 'input window, operand 12, single buffered']
    #allocation15 [shape = 's32[1]{0}', space=sflag, size = 0x4, scoped, tag = 'scoped memory for tpu_custom_call.1']
    #allocation16 [shape = 'u8[131072]{0}', space=vmem, size = 0x20000, scoped, tag = 'output window, operand 0']
    %20 = vsyncpa [#allocation3], 0
    %21 = vsyncpa [#allocation6], 0
    %22 = vsyncpa [#allocation9], 0
    %23 = vsyncpa [#allocation12], 0
    %24 = vsyncpa [#allocation15], 0
    %25 = vsyncpa [#allocation4], 0
    %s26 = scalar_lea.sflag [#allocation4], 1
    %27 = vsyncpa %s26, 0
    loop: start=0, step=1, limit=4
    $region2: #{tpu_custom_call.1} parent=1 // loop_pre_header
      _
    $region3: #{tpu_custom_call.1} parent=1 // loop_header
      %s29 = sphi 0, %s33
      %p30 = scmp.ge.s32.totalorder %s29, 4
      %s39 = sphi 0, %s41
      %s42 = sphi 0, %s39
      %s43 = sphi 0, %s42
      %s59 = sphi 0, %s43
      %s65 = sphi 0, %s67
      %s68 = sphi 0, %s65
      %s69 = sphi 0, %s68
      %s85 = sphi 0, %s69
      %s89 = sphi 0, %s89
      %s91 = sphi 0, %s89
      %s92 = sphi 0, %s91
      %s106 = sphi 0, %s92
      %s110 = sphi 0, %s110
      %s112 = sphi 0, %s110
      %s113 = sphi 0, %s112
      %s127 = sphi 0, %s113
      %s131 = sphi 0, %s131
      %s133 = sphi 0, %s131
      %s134 = sphi 0, %s133
      %s148 = sphi 0, %s134
      %s152 = sphi 0, %s152
      %s154 = sphi 0, %s152
      %s155 = sphi 0, %s154
      %s169 = sphi 0, %s155
      %s173 = sphi 0, %s173
      %s175 = sphi 0, %s173
      %s176 = sphi 0, %s175
      %s190 = sphi 0, %s176
      %s194 = sphi 0, %s194
      %s196 = sphi 0, %s194
      %s197 = sphi 0, %s196
      %s211 = sphi 0, %s197
      %s215 = sphi 0, %s215
      %s217 = sphi 0, %s215
      %s218 = sphi 0, %s217
      %s232 = sphi 0, %s218
      %s236 = sphi 0, %s236
      %s238 = sphi 0, %s236
      %s239 = sphi 0, %s238
      %s253 = sphi 0, %s239
      %s257 = sphi 0, %s257
      %s259 = sphi 0, %s257
      %s260 = sphi 0, %s259
      %s274 = sphi 0, %s260
      %s278 = sphi 0, %s278
      %s280 = sphi 0, %s278
      %s281 = sphi 0, %s280
      %s295 = sphi 0, %s281
      %s299 = sphi 0, %s299
      %s301 = sphi 0, %s299
      %s302 = sphi 0, %s301
      %s316 = sphi 0, %s302
      %s320 = sphi 0, %s320
      %s322 = sphi 0, %s320
      %s323 = sphi 0, %s322
      %s337 = sphi 0, %s323
      %s341 = sphi 0, %s341
      %s343 = sphi 0, %s341
      %s344 = sphi 0, %s343
      %s358 = sphi 0, %s344
      %s364 = sphi 0, %s366
      %s367 = sphi 0, %s364
      %s368 = sphi 0, %s367
      %s384 = sphi 0, %s368
    $region4: #{tpu_custom_call.1} parent=1 // loop_header_branch
      %32 = sbr.rel (%p30) target = $region8
    $region5: #{tpu_custom_call.1} parent=1 // loop_body
      %s34 = ssub.s32 %s29, 1
      %s35 = ssub.s32 %s29, 2
      %s36 = sadd.s32 %s29, 1
      %s37 = ssub.s32 %s29, %s36
      %p38 = scmp.eq.s32.totalorder %s37, 0
      %s40 = sadd.s32 %s39, 1
      %s41 = scalar_select %p38, %s39, %s40
      %p44 = pneg %p38
      %p45 = scmp.eq.s32.totalorder %s29, 1
      %p46 = por %p44, %p45
      %p47 = scmp.ne.s32.totalorder %s39, %s42
      %p48 = scmp.eq.s32.totalorder %s29, 0
      %p49 = por %p47, %p48
      %p50 = scmp.ne.s32.totalorder %s39, %s42
      %p51 = scmp.eq.s32.totalorder %s34, 1
      %p52 = por %p50, %p51
      %p53 = scmp.ne.s32.totalorder %s42, %s43
      %p54 = scmp.eq.s32.totalorder %s34, 0
      %p55 = por %p53, %p54
      %p56 = scmp.ne.s32.totalorder %s42, %s43
      %p57 = scmp.eq.s32.totalorder %s35, 1
      %p58 = por %p56, %p57
      %p60 = scmp.ne.s32.totalorder %s43, %s59
      %p61 = scmp.eq.s32.totalorder %s35, 0
      %p62 = por %p60, %p61
      %s63 = ssub.s32 %s29, %s36
      %p64 = scmp.eq.s32.totalorder %s63, 0
      %s66 = sadd.s32 %s65, 1
      %s67 = scalar_select %p64, %s65, %s66
      %p70 = pneg %p64
      %p71 = scmp.eq.s32.totalorder %s29, 1
      %p72 = por %p70, %p71
      %p73 = scmp.ne.s32.totalorder %s65, %s68
      %p74 = scmp.eq.s32.totalorder %s29, 0
      %p75 = por %p73, %p74
      %p76 = scmp.ne.s32.totalorder %s65, %s68
      %p77 = scmp.eq.s32.totalorder %s34, 1
      %p78 = por %p76, %p77
      %p79 = scmp.ne.s32.totalorder %s68, %s69
      %p80 = scmp.eq.s32.totalorder %s34, 0
      %p81 = por %p79, %p80
      %p82 = scmp.ne.s32.totalorder %s68, %s69
      %p83 = scmp.eq.s32.totalorder %s35, 1
      %p84 = por %p82, %p83
      %p86 = scmp.ne.s32.totalorder %s69, %s85
      %p87 = scmp.eq.s32.totalorder %s35, 0
      %p88 = por %p86, %p87
      %s90 = sadd.s32 %s89, 1
      %p93 = scmp.eq.s32.totalorder %s29, 1
      %p94 = scmp.ne.s32.totalorder %s89, %s91
      %p95 = scmp.eq.s32.totalorder %s29, 0
      %p96 = por %p94, %p95
      %p97 = scmp.ne.s32.totalorder %s89, %s91
      %p98 = scmp.eq.s32.totalorder %s34, 1
      %p99 = por %p97, %p98
      %p100 = scmp.ne.s32.totalorder %s91, %s92
      %p101 = scmp.eq.s32.totalorder %s34, 0
      %p102 = por %p100, %p101
      %p103 = scmp.ne.s32.totalorder %s91, %s92
      %p104 = scmp.eq.s32.totalorder %s35, 1
      %p105 = por %p103, %p104
      %p107 = scmp.ne.s32.totalorder %s92, %s106
      %p108 = scmp.eq.s32.totalorder %s35, 0
      %p109 = por %p107, %p108
      %s111 = sadd.s32 %s110, 1
      %p114 = scmp.eq.s32.totalorder %s29, 1
      %p115 = scmp.ne.s32.totalorder %s110, %s112
      %p116 = scmp.eq.s32.totalorder %s29, 0
      %p117 = por %p115, %p116
      %p118 = scmp.ne.s32.totalorder %s110, %s112
      %p119 = scmp.eq.s32.totalorder %s34, 1
      %p120 = por %p118, %p119
      %p121 = scmp.ne.s32.totalorder %s112, %s113
      %p122 = scmp.eq.s32.totalorder %s34, 0
      %p123 = por %p121, %p122
      %p124 = scmp.ne.s32.totalorder %s112, %s113
      %p125 = scmp.eq.s32.totalorder %s35, 1
      %p126 = por %p124, %p125
      %p128 = scmp.ne.s32.totalorder %s113, %s127
      %p129 = scmp.eq.s32.totalorder %s35, 0
      %p130 = por %p128, %p129
      %s132 = sadd.s32 %s131, 1
      %p135 = scmp.eq.s32.totalorder %s29, 1
      %p136 = scmp.ne.s32.totalorder %s131, %s133
      %p137 = scmp.eq.s32.totalorder %s29, 0
      %p138 = por %p136, %p137
      %p139 = scmp.ne.s32.totalorder %s131, %s133
      %p140 = scmp.eq.s32.totalorder %s34, 1
      %p141 = por %p139, %p140
      %p142 = scmp.ne.s32.totalorder %s133, %s134
      %p143 = scmp.eq.s32.totalorder %s34, 0
      %p144 = por %p142, %p143
      %p145 = scmp.ne.s32.totalorder %s133, %s134
      %p146 = scmp.eq.s32.totalorder %s35, 1
      %p147 = por %p145, %p146
      %p149 = scmp.ne.s32.totalorder %s134, %s148
      %p150 = scmp.eq.s32.totalorder %s35, 0
      %p151 = por %p149, %p150
      %s153 = sadd.s32 %s152, 1
      %p156 = scmp.eq.s32.totalorder %s29, 1
      %p157 = scmp.ne.s32.totalorder %s152, %s154
      %p158 = scmp.eq.s32.totalorder %s29, 0
      %p159 = por %p157, %p158
      %p160 = scmp.ne.s32.totalorder %s152, %s154
      %p161 = scmp.eq.s32.totalorder %s34, 1
      %p162 = por %p160, %p161
      %p163 = scmp.ne.s32.totalorder %s154, %s155
      %p164 = scmp.eq.s32.totalorder %s34, 0
      %p165 = por %p163, %p164
      %p166 = scmp.ne.s32.totalorder %s154, %s155
      %p167 = scmp.eq.s32.totalorder %s35, 1
      %p168 = por %p166, %p167
      %p170 = scmp.ne.s32.totalorder %s155, %s169
      %p171 = scmp.eq.s32.totalorder %s35, 0
      %p172 = por %p170, %p171
      %s174 = sadd.s32 %s173, 1
      %p177 = scmp.eq.s32.totalorder %s29, 1
      %p178 = scmp.ne.s32.totalorder %s173, %s175
      %p179 = scmp.eq.s32.totalorder %s29, 0
      %p180 = por %p178, %p179
      %p181 = scmp.ne.s32.totalorder %s173, %s175
      %p182 = scmp.eq.s32.totalorder %s34, 1
      %p183 = por %p181, %p182
      %p184 = scmp.ne.s32.totalorder %s175, %s176
      %p185 = scmp.eq.s32.totalorder %s34, 0
      %p186 = por %p184, %p185
      %p187 = scmp.ne.s32.totalorder %s175, %s176
      %p188 = scmp.eq.s32.totalorder %s35, 1
      %p189 = por %p187, %p188
      %p191 = scmp.ne.s32.totalorder %s176, %s190
      %p192 = scmp.eq.s32.totalorder %s35, 0
      %p193 = por %p191, %p192
      %s195 = sadd.s32 %s194, 1
      %p198 = scmp.eq.s32.totalorder %s29, 1
      %p199 = scmp.ne.s32.totalorder %s194, %s196
      %p200 = scmp.eq.s32.totalorder %s29, 0
      %p201 = por %p199, %p200
      %p202 = scmp.ne.s32.totalorder %s194, %s196
      %p203 = scmp.eq.s32.totalorder %s34, 1
      %p204 = por %p202, %p203
      %p205 = scmp.ne.s32.totalorder %s196, %s197
      %p206 = scmp.eq.s32.totalorder %s34, 0
      %p207 = por %p205, %p206
      %p208 = scmp.ne.s32.totalorder %s196, %s197
      %p209 = scmp.eq.s32.totalorder %s35, 1
      %p210 = por %p208, %p209
      %p212 = scmp.ne.s32.totalorder %s197, %s211
      %p213 = scmp.eq.s32.totalorder %s35, 0
      %p214 = por %p212, %p213
      %s216 = sadd.s32 %s215, 1
      %p219 = scmp.eq.s32.totalorder %s29, 1
      %p220 = scmp.ne.s32.totalorder %s215, %s217
      %p221 = scmp.eq.s32.totalorder %s29, 0
      %p222 = por %p220, %p221
      %p223 = scmp.ne.s32.totalorder %s215, %s217
      %p224 = scmp.eq.s32.totalorder %s34, 1
      %p225 = por %p223, %p224
      %p226 = scmp.ne.s32.totalorder %s217, %s218
      %p227 = scmp.eq.s32.totalorder %s34, 0
      %p228 = por %p226, %p227
      %p229 = scmp.ne.s32.totalorder %s217, %s218
      %p230 = scmp.eq.s32.totalorder %s35, 1
      %p231 = por %p229, %p230
      %p233 = scmp.ne.s32.totalorder %s218, %s232
      %p234 = scmp.eq.s32.totalorder %s35, 0
      %p235 = por %p233, %p234
      %s237 = sadd.s32 %s236, 1
      %p240 = scmp.eq.s32.totalorder %s29, 1
      %p241 = scmp.ne.s32.totalorder %s236, %s238
      %p242 = scmp.eq.s32.totalorder %s29, 0
      %p243 = por %p241, %p242
      %p244 = scmp.ne.s32.totalorder %s236, %s238
      %p245 = scmp.eq.s32.totalorder %s34, 1
      %p246 = por %p244, %p245
      %p247 = scmp.ne.s32.totalorder %s238, %s239
      %p248 = scmp.eq.s32.totalorder %s34, 0
      %p249 = por %p247, %p248
      %p250 = scmp.ne.s32.totalorder %s238, %s239
      %p251 = scmp.eq.s32.totalorder %s35, 1
      %p252 = por %p250, %p251
      %p254 = scmp.ne.s32.totalorder %s239, %s253
      %p255 = scmp.eq.s32.totalorder %s35, 0
      %p256 = por %p254, %p255
      %s258 = sadd.s32 %s257, 1
      %p261 = scmp.eq.s32.totalorder %s29, 1
      %p262 = scmp.ne.s32.totalorder %s257, %s259
      %p263 = scmp.eq.s32.totalorder %s29, 0
      %p264 = por %p262, %p263
      %p265 = scmp.ne.s32.totalorder %s257, %s259
      %p266 = scmp.eq.s32.totalorder %s34, 1
      %p267 = por %p265, %p266
      %p268 = scmp.ne.s32.totalorder %s259, %s260
      %p269 = scmp.eq.s32.totalorder %s34, 0
      %p270 = por %p268, %p269
      %p271 = scmp.ne.s32.totalorder %s259, %s260
      %p272 = scmp.eq.s32.totalorder %s35, 1
      %p273 = por %p271, %p272
      %p275 = scmp.ne.s32.totalorder %s260, %s274
      %p276 = scmp.eq.s32.totalorder %s35, 0
      %p277 = por %p275, %p276
      %s279 = sadd.s32 %s278, 1
      %p282 = scmp.eq.s32.totalorder %s29, 1
      %p283 = scmp.ne.s32.totalorder %s278, %s280
      %p284 = scmp.eq.s32.totalorder %s29, 0
      %p285 = por %p283, %p284
      %p286 = scmp.ne.s32.totalorder %s278, %s280
      %p287 = scmp.eq.s32.totalorder %s34, 1
      %p288 = por %p286, %p287
      %p289 = scmp.ne.s32.totalorder %s280, %s281
      %p290 = scmp.eq.s32.totalorder %s34, 0
      %p291 = por %p289, %p290
      %p292 = scmp.ne.s32.totalorder %s280, %s281
      %p293 = scmp.eq.s32.totalorder %s35, 1
      %p294 = por %p292, %p293
      %p296 = scmp.ne.s32.totalorder %s281, %s295
      %p297 = scmp.eq.s32.totalorder %s35, 0
      %p298 = por %p296, %p297
      %s300 = sadd.s32 %s299, 1
      %p303 = scmp.eq.s32.totalorder %s29, 1
      %p304 = scmp.ne.s32.totalorder %s299, %s301
      %p305 = scmp.eq.s32.totalorder %s29, 0
      %p306 = por %p304, %p305
      %p307 = scmp.ne.s32.totalorder %s299, %s301
      %p308 = scmp.eq.s32.totalorder %s34, 1
      %p309 = por %p307, %p308
      %p310 = scmp.ne.s32.totalorder %s301, %s302
      %p311 = scmp.eq.s32.totalorder %s34, 0
      %p312 = por %p310, %p311
      %p313 = scmp.ne.s32.totalorder %s301, %s302
      %p314 = scmp.eq.s32.totalorder %s35, 1
      %p315 = por %p313, %p314
      %p317 = scmp.ne.s32.totalorder %s302, %s316
      %p318 = scmp.eq.s32.totalorder %s35, 0
      %p319 = por %p317, %p318
      %s321 = sadd.s32 %s320, 1
      %p324 = scmp.eq.s32.totalorder %s29, 1
      %p325 = scmp.ne.s32.totalorder %s320, %s322
      %p326 = scmp.eq.s32.totalorder %s29, 0
      %p327 = por %p325, %p326
      %p328 = scmp.ne.s32.totalorder %s320, %s322
      %p329 = scmp.eq.s32.totalorder %s34, 1
      %p330 = por %p328, %p329
      %p331 = scmp.ne.s32.totalorder %s322, %s323
      %p332 = scmp.eq.s32.totalorder %s34, 0
      %p333 = por %p331, %p332
      %p334 = scmp.ne.s32.totalorder %s322, %s323
      %p335 = scmp.eq.s32.totalorder %s35, 1
      %p336 = por %p334, %p335
      %p338 = scmp.ne.s32.totalorder %s323, %s337
      %p339 = scmp.eq.s32.totalorder %s35, 0
      %p340 = por %p338, %p339
      %s342 = sadd.s32 %s341, 1
      %p345 = scmp.eq.s32.totalorder %s29, 1
      %p346 = scmp.ne.s32.totalorder %s341, %s343
      %p347 = scmp.eq.s32.totalorder %s29, 0
      %p348 = por %p346, %p347
      %p349 = scmp.ne.s32.totalorder %s341, %s343
      %p350 = scmp.eq.s32.totalorder %s34, 1
      %p351 = por %p349, %p350
      %p352 = scmp.ne.s32.totalorder %s343, %s344
      %p353 = scmp.eq.s32.totalorder %s34, 0
      %p354 = por %p352, %p353
      %p355 = scmp.ne.s32.totalorder %s343, %s344
      %p356 = scmp.eq.s32.totalorder %s35, 1
      %p357 = por %p355, %p356
      %p359 = scmp.ne.s32.totalorder %s344, %s358
      %p360 = scmp.eq.s32.totalorder %s35, 0
      %p361 = por %p359, %p360
      %s362 = ssub.s32 %s29, %s36
      %p363 = scmp.eq.s32.totalorder %s362, 0
      %s365 = sadd.s32 %s364, 1
      %s366 = scalar_select %p363, %s364, %s365
      %p369 = pneg %p363
      %p370 = scmp.eq.s32.totalorder %s29, 1
      %p371 = por %p369, %p370
      %p372 = scmp.ne.s32.totalorder %s364, %s367
      %p373 = scmp.eq.s32.totalorder %s29, 0
      %p374 = por %p372, %p373
      %p375 = scmp.ne.s32.totalorder %s364, %s367
      %p376 = scmp.eq.s32.totalorder %s34, 1
      %p377 = por %p375, %p376
      %p378 = scmp.ne.s32.totalorder %s367, %s368
      %p379 = scmp.eq.s32.totalorder %s34, 0
      %p380 = por %p378, %p379
      %p381 = scmp.ne.s32.totalorder %s367, %s368
      %p382 = scmp.eq.s32.totalorder %s35, 1
      %p383 = por %p381, %p382
      %p385 = scmp.ne.s32.totalorder %s368, %s384
      %p386 = scmp.eq.s32.totalorder %s35, 0
      %p387 = por %p385, %p386
      %p388 = scmp.le.s32.totalorder 1, %s29
      %p389 = scmp.lt.s32.totalorder %s29, 3
      %p390 = pnand %p388, %p389
      %p391 = pneg %p390
      // Predicated region
      $region9: #{tpu_custom_call.1} parent=5 // pred_check
        _
      $region10: #{tpu_custom_call.1} parent=5 // pred_check_branch
        %393 = sbr.rel (%p390) target = $region12
      $region11: #{tpu_custom_call.1} parent=5 // pred_region
        %s394 = ssub.s32 %s29, 1
        // Predicated region
        $region13: #{tpu_custom_call.1} parent=11 // pred_check
          %p395 = pneg %p102
        $region14: #{tpu_custom_call.1} parent=11 // pred_check_branch
          %397 = sbr.rel (%p395) target = $region16
        $region15: #{tpu_custom_call.1} parent=11 // pred_region
          %s399 = ssub.s32 64, 64
          %400 = vsyncadd [#allocation3], %s399
          %s402 = sshll.u32 [#allocation2], 4
          %s403 = int_to_ptr.vmem [resolvable:$true] %s402
          %405 = dma.hbm_to_vmem [thread:$0]  %s2, 64, %s403, [#allocation3]
        $region16: #{tpu_custom_call.1} parent=11 // pred_fallthru
          _
        // Predicated region
        $region17: #{tpu_custom_call.1} parent=11 // pred_check
          %p406 = pneg %p123
        $region18: #{tpu_custom_call.1} parent=11 // pred_check_branch
          %408 = sbr.rel (%p406) target = $region20
        $region19: #{tpu_custom_call.1} parent=11 // pred_region
          _
        $region20: #{tpu_custom_call.1} parent=11 // pred_fallthru
          _
        // Predicated region
        $region21: #{tpu_custom_call.1} parent=11 // pred_check
          %p409 = pneg %p144
        $region22: #{tpu_custom_call.1} parent=11 // pred_check_branch
          %411 = sbr.rel (%p409) target = $region24
        $region23: #{tpu_custom_call.1} parent=11 // pred_region
          %s413 = ssub.s32 64, 64
          %414 = vsyncadd [#allocation6], %s413
          %s416 = sshll.u32 [#allocation5], 4
          %s417 = int_to_ptr.vmem [resolvable:$true] %s416
          %419 = dma.hbm_to_vmem [thread:$0]  %s4, 64, %s417, [#allocation6]
        $region24: #{tpu_custom_call.1} parent=11 // pred_fallthru
          _
        // Predicated region
        $region25: #{tpu_custom_call.1} parent=11 // pred_check
          %p420 = pneg %p165
        $region26: #{tpu_custom_call.1} parent=11 // pred_check_branch
          %422 = sbr.rel (%p420) target = $region28
        $region27: #{tpu_custom_call.1} parent=11 // pred_region
          %s424 = ssub.s32 16, 16
          %425 = vsyncadd [#allocation6], %s424
          %s427 = sshll.u32 [#allocation7], 4
          %s428 = int_to_ptr.vmem [resolvable:$true] %s427
          %430 = dma.hbm_to_vmem [thread:$0]  %s5, 16, %s428, [#allocation6]
        $region28: #{tpu_custom_call.1} parent=11 // pred_fallthru
          _
        // Predicated region
        $region29: #{tpu_custom_call.1} parent=11 // pred_check
          %p431 = pneg %p186
        $region30: #{tpu_custom_call.1} parent=11 // pred_check_branch
          %433 = sbr.rel (%p431) target = $region32
        $region31: #{tpu_custom_call.1} parent=11 // pred_region
          _
        $region32: #{tpu_custom_call.1} parent=11 // pred_fallthru
          _
        // Predicated region
        $region33: #{tpu_custom_call.1} parent=11 // pred_check
          %p434 = pneg %p207
        $region34: #{tpu_custom_call.1} parent=11 // pred_check_branch
          %436 = sbr.rel (%p434) target = $region36
        $region35: #{tpu_custom_call.1} parent=11 // pred_region
          _
        $region36: #{tpu_custom_call.1} parent=11 // pred_fallthru
          _
        // Predicated region
        $region37: #{tpu_custom_call.1} parent=11 // pred_check
          %p437 = pneg %p228
        $region38: #{tpu_custom_call.1} parent=11 // pred_check_branch
          %439 = sbr.rel (%p437) target = $region40
        $region39: #{tpu_custom_call.1} parent=11 // pred_region
          %s441 = ssub.s32 32, 32
          %442 = vsyncadd [#allocation9], %s441
          %s443 = sshll.u32 [#allocation8], 4
          %s444 = int_to_ptr.vmem [resolvable:$true] %s443
          %449 = dma.hbm_to_vmem [thread:$0]  %s8, 32, %s444, [#allocation9], 16, 16, 1
        $region40: #{tpu_custom_call.1} parent=11 // pred_fallthru
          _
        // Predicated region
        $region41: #{tpu_custom_call.1} parent=11 // pred_check
          %p450 = pneg %p249
        $region42: #{tpu_custom_call.1} parent=11 // pred_check_branch
          %452 = sbr.rel (%p450) target = $region44
        $region43: #{tpu_custom_call.1} parent=11 // pred_region
          %s454 = ssub.s32 2048, 2048
          %455 = vsyncadd [#allocation9], %s454
          %s456 = sshll.u32 [#allocation10], 4
          %s457 = int_to_ptr.vmem [resolvable:$true] %s456
          %462 = dma.hbm_to_vmem [thread:$0]  %s9, 2048, %s457, [#allocation9], 64, 64, 4
        $region44: #{tpu_custom_call.1} parent=11 // pred_fallthru
          _
        // Predicated region
        $region45: #{tpu_custom_call.1} parent=11 // pred_check
          %p463 = pneg %p270
        $region46: #{tpu_custom_call.1} parent=11 // pred_check_branch
          %465 = sbr.rel (%p463) target = $region48
        $region47: #{tpu_custom_call.1} parent=11 // pred_region
          %s467 = ssub.s32 2048, 2048
          %468 = vsyncadd [#allocation12], %s467
          %s469 = sshll.u32 [#allocation11], 4
          %s470 = int_to_ptr.vmem [resolvable:$true] %s469
          %475 = dma.hbm_to_vmem [thread:$0]  %s10, 2048, %s470, [#allocation12], 64, 64, 4
        $region48: #{tpu_custom_call.1} parent=11 // pred_fallthru
          _
        // Predicated region
        $region49: #{tpu_custom_call.1} parent=11 // pred_check
          %p476 = pneg %p291
        $region50: #{tpu_custom_call.1} parent=11 // pred_check_branch
          %478 = sbr.rel (%p476) target = $region52
        $region51: #{tpu_custom_call.1} parent=11 // pred_region
          %s480 = ssub.s32 32, 32
          %481 = vsyncadd [#allocation12], %s480
          %s482 = sshll.u32 [#allocation13], 4
          %s483 = int_to_ptr.vmem [resolvable:$true] %s482
          %488 = dma.hbm_to_vmem [thread:$0]  %s11, 32, %s483, [#allocation12], 16, 16, 1
        $region52: #{tpu_custom_call.1} parent=11 // pred_fallthru
          _
        // Predicated region
        $region53: #{tpu_custom_call.1} parent=11 // pred_check
          %p489 = pneg %p312
        $region54: #{tpu_custom_call.1} parent=11 // pred_check_branch
          %491 = sbr.rel (%p489) target = $region56
        $region55: #{tpu_custom_call.1} parent=11 // pred_region
          %s493 = ssub.s32 1024, 1024
          %494 = vsyncadd [#allocation15], %s493
          %s495 = sshll.u32 [#allocation14], 4
          %s496 = int_to_ptr.vmem [resolvable:$true] %s495
          %501 = dma.hbm_to_vmem [thread:$0]  %s12, 1024, %s496, [#allocation15], 64, 64, 4
        $region56: #{tpu_custom_call.1} parent=11 // pred_fallthru
          _
        // Predicated region
        $region57: #{tpu_custom_call.1} parent=11 // pred_check
          %p502 = pneg %p333
        $region58: #{tpu_custom_call.1} parent=11 // pred_check_branch
          %504 = sbr.rel (%p502) target = $region60
        $region59: #{tpu_custom_call.1} parent=11 // pred_region
          _
        $region60: #{tpu_custom_call.1} parent=11 // pred_fallthru
          _
        // Predicated region
        $region61: #{tpu_custom_call.1} parent=11 // pred_check
          %p505 = pneg %p354
        $region62: #{tpu_custom_call.1} parent=11 // pred_check_branch
          %507 = sbr.rel (%p505) target = $region64
        $region63: #{tpu_custom_call.1} parent=11 // pred_region
          _
        $region64: #{tpu_custom_call.1} parent=11 // pred_fallthru
          _
      $region12: #{tpu_custom_call.1} parent=5 // pred_fallthru
        _
      %p508 = scmp.lt.s32.totalorder %s29, 2
      // Predicated region
      $region65: #{tpu_custom_call.1} parent=5 // pred_check
        %p509 = pneg %p508
      $region66: #{tpu_custom_call.1} parent=5 // pred_check_branch
        %511 = sbr.rel (%p509) target = $region68
      $region67: #{tpu_custom_call.1} parent=5 // pred_region
        // Predicated region
        $region69: #{tpu_custom_call.1} parent=67 // pred_check
          %p512 = pneg %p49
        $region70: #{tpu_custom_call.1} parent=67 // pred_check_branch
          %514 = sbr.rel (%p512) target = $region72
        $region71: #{tpu_custom_call.1} parent=67 // pred_region
          %s515 = smul.u32 16, %s29
          %p516 = scmp.lt.s32.totalorder %s515, 31
          %s517 = scalar_select %p516, %s515, 31
          %s518 = smul.addr %s517, 4
          %s519 = scalar_lea.vmem %s0, %s518
          %s520 = smul.u32 16, %s29
        $region72: #{tpu_custom_call.1} parent=67 // pred_fallthru
          _
        // Predicated region
        $region73: #{tpu_custom_call.1} parent=67 // pred_check
          %p521 = pneg %p75
        $region74: #{tpu_custom_call.1} parent=67 // pred_check_branch
          %523 = sbr.rel (%p521) target = $region76
        $region75: #{tpu_custom_call.1} parent=67 // pred_region
          %s524 = smul.u32 16, %s29
          %p525 = scmp.lt.s32.totalorder %s524, 31
          %s526 = scalar_select %p525, %s524, 31
          %s527 = smul.addr %s526, 4
          %s528 = scalar_lea.vmem %s1, %s527
          %s529 = smul.u32 16, %s29
        $region76: #{tpu_custom_call.1} parent=67 // pred_fallthru
          _
      $region68: #{tpu_custom_call.1} parent=5 // pred_fallthru
        _
      %p530 = scmp.le.s32.totalorder 1, %s29
      %p531 = scmp.lt.s32.totalorder %s29, 3
      %p532 = pnand %p530, %p531
      %p533 = pneg %p532
      // Predicated region
      $region77: #{tpu_custom_call.1} parent=5 // pred_check
        _
      $region78: #{tpu_custom_call.1} parent=5 // pred_check_branch
        %535 = sbr.rel (%p532) target = $region80
      $region79: #{tpu_custom_call.1} parent=5 // pred_region
        %s536 = ssub.s32 %s29, 1
        // Predicated region
        $region81: #{tpu_custom_call.1} parent=79 // pred_check
          %p537 = pneg %p102
        $region82: #{tpu_custom_call.1} parent=79 // pred_check_branch
          %539 = sbr.rel (%p537) target = $region84
        $region83: #{tpu_custom_call.1} parent=79 // pred_region
          %540 = dma.done [#allocation3], 64
        $region84: #{tpu_custom_call.1} parent=79 // pred_fallthru
          _
        // Predicated region
        $region85: #{tpu_custom_call.1} parent=79 // pred_check
          %p541 = pneg %p144
        $region86: #{tpu_custom_call.1} parent=79 // pred_check_branch
          %543 = sbr.rel (%p541) target = $region88
        $region87: #{tpu_custom_call.1} parent=79 // pred_region
          %544 = dma.done [#allocation6], 64
        $region88: #{tpu_custom_call.1} parent=79 // pred_fallthru
          _
        // Predicated region
        $region89: #{tpu_custom_call.1} parent=79 // pred_check
          %p545 = pneg %p165
        $region90: #{tpu_custom_call.1} parent=79 // pred_check_branch
          %547 = sbr.rel (%p545) target = $region92
        $region91: #{tpu_custom_call.1} parent=79 // pred_region
          %548 = dma.done [#allocation6], 16
        $region92: #{tpu_custom_call.1} parent=79 // pred_fallthru
          _
        // Predicated region
        $region93: #{tpu_custom_call.1} parent=79 // pred_check
          %p549 = pneg %p228
        $region94: #{tpu_custom_call.1} parent=79 // pred_check_branch
          %551 = sbr.rel (%p549) target = $region96
        $region95: #{tpu_custom_call.1} parent=79 // pred_region
          %552 = dma.done [#allocation9], 32
        $region96: #{tpu_custom_call.1} parent=79 // pred_fallthru
          _
        // Predicated region
        $region97: #{tpu_custom_call.1} parent=79 // pred_check
          %p553 = pneg %p249
        $region98: #{tpu_custom_call.1} parent=79 // pred_check_branch
          %555 = sbr.rel (%p553) target = $region100
        $region99: #{tpu_custom_call.1} parent=79 // pred_region
          %556 = dma.done [#allocation9], 2048
        $region100: #{tpu_custom_call.1} parent=79 // pred_fallthru
          _
        // Predicated region
        $region101: #{tpu_custom_call.1} parent=79 // pred_check
          %p557 = pneg %p270
        $region102: #{tpu_custom_call.1} parent=79 // pred_check_branch
          %559 = sbr.rel (%p557) target = $region104
        $region103: #{tpu_custom_call.1} parent=79 // pred_region
          %560 = dma.done [#allocation12], 2048
        $region104: #{tpu_custom_call.1} parent=79 // pred_fallthru
          _
        // Predicated region
        $region105: #{tpu_custom_call.1} parent=79 // pred_check
          %p561 = pneg %p291
        $region106: #{tpu_custom_call.1} parent=79 // pred_check_branch
          %563 = sbr.rel (%p561) target = $region108
        $region107: #{tpu_custom_call.1} parent=79 // pred_region
          %564 = dma.done [#allocation12], 32
        $region108: #{tpu_custom_call.1} parent=79 // pred_fallthru
          _
        // Predicated region
        $region109: #{tpu_custom_call.1} parent=79 // pred_check
          %p565 = pneg %p312
        $region110: #{tpu_custom_call.1} parent=79 // pred_check_branch
          %567 = sbr.rel (%p565) target = $region112
        $region111: #{tpu_custom_call.1} parent=79 // pred_region
          %568 = dma.done [#allocation15], 1024
        $region112: #{tpu_custom_call.1} parent=79 // pred_fallthru
          _
        %s569 = smul.u32 16, %s34
        %p570 = scmp.lt.s32.totalorder %s569, 31
        %s571 = scalar_select %p570, %s569, 31
        %s572 = smul.addr %s571, 4
        %s573 = scalar_lea.vmem %s0, %s572
        %p574 = pneg %p55
        %p575 = pneg %p52
        %s576 = smul.u32 16, %s34
        %p577 = scmp.lt.s32.totalorder %s576, 31
        %s578 = scalar_select %p577, %s576, 31
        %s579 = smul.addr %s578, 4
        %s580 = scalar_lea.vmem %s1, %s579
        %p581 = pneg %p81
        %p582 = pneg %p78
        %p583 = pneg %p102
        %p584 = pneg %p99
        %p585 = pneg %p123
        %p586 = pneg %p120
        %p587 = pneg %p144
        %p588 = pneg %p141
        %p589 = pneg %p165
        %p590 = pneg %p162
        %p591 = pneg %p186
        %p592 = pneg %p183
        %p593 = pneg %p207
        %p594 = pneg %p204
        %p595 = pneg %p228
        %p596 = pneg %p225
        %p597 = pneg %p249
        %p598 = pneg %p246
        %p599 = pneg %p270
        %p600 = pneg %p267
        %p601 = pneg %p291
        %p602 = pneg %p288
        %p603 = pneg %p312
        %p604 = pneg %p309
        %p605 = pneg %p333
        %p606 = pneg %p330
        %p607 = pneg %p354
        %p608 = pneg %p351
        %p609 = pneg %p380
        %p610 = pneg %p377
        %s611 = sand.u32 %s367, 1
        %s612 = scalar_lea.sflag [#allocation4], %s611
        %s613 = sand.u32 %s367, 1
        %s614 = smul.addr %s613, 128
        %s615 = scalar_lea.vmem [#allocation16], %s614
        %s616 = smul.u32 16, %s34
        %p617 = scmp.lt.s32.totalorder %s616, 31
        %s618 = scalar_select %p617, %s616, 31
        %s619 = smul.addr %s618, 4
        %s620 = scalar_lea.vmem %s0, %s619
        %s621 = smul.u32 16, %s34
        %s622 = smul.u32 16, %s34
        %p623 = scmp.lt.s32.totalorder %s622, 31
        %s624 = scalar_select %p623, %s622, 31
        %s625 = smul.addr %s624, 4
        %s626 = scalar_lea.vmem %s1, %s625
        %s627 = smul.u32 16, %s34
        %s628 = smul.u32 16, %s34
        %v630 = vld [vmem:[%s620] sm:$0xf]
        %v631 = vld [vmem:[%s620 + $0x4] sm:$0xf]
        %v632 = vld [vmem:[%s620 + $0x8] sm:$0xf]
        %v633 = vld [vmem:[%s620 + $0xc] sm:$0xf]
        %v634 = vld [vmem:[%s620 + $0x10] sm:$0xf]
        %v635 = vld [vmem:[%s620 + $0x14] sm:$0xf]
        %v636 = vld [vmem:[%s620 + $0x18] sm:$0xf]
        %v637 = vld [vmem:[%s620 + $0x1c] sm:$0xf]
        %v638 = vld [vmem:[%s620 + $0x20] sm:$0xf]
        %v639 = vld [vmem:[%s620 + $0x24] sm:$0xf]
        %v640 = vld [vmem:[%s620 + $0x28] sm:$0xf]
        %v641 = vld [vmem:[%s620 + $0x2c] sm:$0xf]
        %v642 = vld [vmem:[%s620 + $0x30] sm:$0xf]
        %v643 = vld [vmem:[%s620 + $0x34] sm:$0xf]
        %v644 = vld [vmem:[%s620 + $0x38] sm:$0xf]
        %v645 = vld [vmem:[%s620 + $0x3c] sm:$0xf]
        %v646 = vld [vmem:[#allocation2] sm:$0xf]
        %v647 = vld [vmem:[%s3] sm:$0x1]
        %v649 = vlaneseq
        %v650 = vshrl.u32 %v649, 7
        %v651 = vsub.s32 0, %v650
        %v652 = vrot.slane %v647, %v651
        %v670 = vunpack.c.l.b16 %v630
        %v671 = vunpack.c.l.b16 %v631
        %v672 = vunpack.c.l.b16 %v632
        %v673 = vunpack.c.l.b16 %v633
        %v674 = vunpack.c.l.b16 %v634
        %v675 = vunpack.c.l.b16 %v635
        %v676 = vunpack.c.l.b16 %v636
        %v677 = vunpack.c.l.b16 %v637
        %v678 = vunpack.c.l.b16 %v638
        %v679 = vunpack.c.l.b16 %v639
        %v680 = vunpack.c.l.b16 %v640
        %v681 = vunpack.c.l.b16 %v641
        %v682 = vunpack.c.l.b16 %v642
        %v683 = vunpack.c.l.b16 %v643
        %v684 = vunpack.c.l.b16 %v644
        %v685 = vunpack.c.l.b16 %v645
        %v686 = vpack.c.b16 %v671, %v670
        %v687 = vpack.c.b16 %v673, %v672
        %v688 = vpack.c.b16 %v675, %v674
        %v689 = vpack.c.b16 %v677, %v676
        %v690 = vpack.c.b16 %v679, %v678
        %v691 = vpack.c.b16 %v681, %v680
        %v692 = vpack.c.b16 %v683, %v682
        %v693 = vpack.c.b16 %v685, %v684
        %vm694 = vcmask 64512
        %v696 = vsel %vm694, %v686, 0
        %v699 = vsel %vm694, %v687, 0
        %v702 = vsel %vm694, %v688, 0
        %v705 = vsel %vm694, %v689, 0
        %v708 = vsel %vm694, %v690, 0
        %v711 = vsel %vm694, %v691, 0
        %v714 = vsel %vm694, %v692, 0
        %v717 = vsel %vm694, %v693, 0
        %vm719 = vcmask 1043456
        %v721 = vsel %vm719, %v646, 0
        %723 = vmatprep.subr.bf16.mxu0 0
        %724 = vmatpush1.bf16.msra.mxu0 %v721
        %725 = vmatprep.subr.bf16.mxu0 0
        %726 = vmatpush1.bf16.msra.mxu0 0
        %727 = vmatprep.subr.bf16.mxu0 0
        %728 = vmatpush1.bf16.msra.mxu0 0
        %729 = vmatprep.subr.bf16.mxu0 0
        %730 = vmatpush1.bf16.msra.mxu0 0
        %731 = vmatprep.subr.bf16.mxu0 0
        %732 = vmatpush1.bf16.msra.mxu0 0
        %733 = vmatprep.subr.bf16.mxu0 0
        %734 = vmatpush1.bf16.msra.mxu0 0
        %735 = vmatprep.subr.bf16.mxu0 0
        %736 = vmatpush1.bf16.msra.mxu0 0
        %737 = vmatprep.subr.bf16.mxu0 0
        %738 = vmatpush1.bf16.msra.mxu0 0
        %739 = vmatprep.subr.bf16.mxu0 0
        %740 = vmatpush1.bf16.msra.mxu0 0
        %741 = vmatprep.subr.bf16.mxu0 0
        %742 = vmatpush1.bf16.msra.mxu0 0
        %743 = vmatprep.subr.bf16.mxu0 0
        %744 = vmatpush1.bf16.msra.mxu0 0
        %745 = vmatprep.subr.bf16.mxu0 0
        %746 = vmatpush1.bf16.msra.mxu0 0
        %747 = vmatprep.subr.bf16.mxu0 0
        %748 = vmatpush1.bf16.msra.mxu0 0
        %749 = vmatprep.subr.bf16.mxu0 0
        %750 = vmatpush1.bf16.msra.mxu0 0
        %751 = vmatprep.subr.bf16.mxu0 0
        %752 = vmatpush1.bf16.msra.mxu0 0
        %753 = vmatprep.subr.bf16.mxu0 0
        %754 = vmatpush1.bf16.msra.mxu0 0
        %755 = vmatprep.mubr.bf16.mxu0 0
        %756 = vmatmul.mubr.bf16.gmra.mrb[0].mxu0 %v696
        %v757 = vpop.f32.mrb[0].mxu0
        %v758 = vadd.f32 %v652, %v757
        %v759 = vpop.f32.mrb[0].mxu0
        %v760 = vpop.f32.mrb[0].mxu0
        %v761 = vadd.f32 %v652, %v760
        %v762 = vpop.f32.mrb[0].mxu0
        %763 = vmatprep.mubr.bf16.mxu0 0
        %764 = vmatmul.mubr.bf16.gmra.mrb[0].mxu0 %v699
        %v765 = vpop.f32.mrb[0].mxu0
        %v766 = vadd.f32 %v652, %v765
        %v767 = vpop.f32.mrb[0].mxu0
        %v768 = vpop.f32.mrb[0].mxu0
        %v769 = vadd.f32 %v652, %v768
        %v770 = vpop.f32.mrb[0].mxu0
        %771 = vmatprep.mubr.bf16.mxu0 0
        %772 = vmatmul.mubr.bf16.gmra.mrb[0].mxu0 %v702
        %v773 = vpop.f32.mrb[0].mxu0
        %v774 = vadd.f32 %v652, %v773
        %v775 = vpop.f32.mrb[0].mxu0
        %v776 = vpop.f32.mrb[0].mxu0
        %v777 = vadd.f32 %v652, %v776
        %v778 = vpop.f32.mrb[0].mxu0
        %779 = vmatprep.mubr.bf16.mxu0 0
        %780 = vmatmul.mubr.bf16.gmra.mrb[0].mxu0 %v705
        %v781 = vpop.f32.mrb[0].mxu0
        %v782 = vadd.f32 %v652, %v781
        %v783 = vpop.f32.mrb[0].mxu0
        %v784 = vpop.f32.mrb[0].mxu0
        %v785 = vadd.f32 %v652, %v784
        %v786 = vpop.f32.mrb[0].mxu0
        %787 = vmatprep.mubr.bf16.mxu0 0
        %788 = vmatmul.mubr.bf16.gmra.mrb[0].mxu0 %v708
        %v789 = vpop.f32.mrb[0].mxu0
        %v790 = vadd.f32 %v652, %v789
        %v791 = vpop.f32.mrb[0].mxu0
        %v792 = vpop.f32.mrb[0].mxu0
        %v793 = vadd.f32 %v652, %v792
        %v794 = vpop.f32.mrb[0].mxu0
        %795 = vmatprep.mubr.bf16.mxu0 0
        %796 = vmatmul.mubr.bf16.gmra.mrb[0].mxu0 %v711
        %v797 = vpop.f32.mrb[0].mxu0
        %v798 = vadd.f32 %v652, %v797
        %v799 = vpop.f32.mrb[0].mxu0
        %v800 = vpop.f32.mrb[0].mxu0
        %v801 = vadd.f32 %v652, %v800
        %v802 = vpop.f32.mrb[0].mxu0
        %803 = vmatprep.mubr.bf16.mxu0 0
        %804 = vmatmul.mubr.bf16.gmra.mrb[0].mxu0 %v714
        %v805 = vpop.f32.mrb[0].mxu0
        %v806 = vadd.f32 %v652, %v805
        %v807 = vpop.f32.mrb[0].mxu0
        %v808 = vpop.f32.mrb[0].mxu0
        %v809 = vadd.f32 %v652, %v808
        %v810 = vpop.f32.mrb[0].mxu0
        %811 = vmatprep.mubr.bf16.mxu0 0
        %812 = vmatmul.mubr.bf16.gmra.mrb[0].mxu0 %v717
        %v813 = vpop.f32.mrb[0].mxu0
        %v814 = vadd.f32 %v652, %v813
        %v815 = vpop.f32.mrb[0].mxu0
        %v816 = vpop.f32.mrb[0].mxu0
        %v817 = vadd.f32 %v652, %v816
        %v818 = vpop.f32.mrb[0].mxu0
        %819 = vdwg.mxu0
        %v820 = vmax.f32 %v758, 0.0
        %v821 = vmax.f32 %v761, 0.0
        %v822 = vmax.f32 %v766, 0.0
        %v823 = vmax.f32 %v769, 0.0
        %v824 = vmax.f32 %v774, 0.0
        %v825 = vmax.f32 %v777, 0.0
        %v826 = vmax.f32 %v782, 0.0
        %v827 = vmax.f32 %v785, 0.0
        %v828 = vmax.f32 %v790, 0.0
        %v829 = vmax.f32 %v793, 0.0
        %v830 = vmax.f32 %v798, 0.0
        %v831 = vmax.f32 %v801, 0.0
        %v832 = vmax.f32 %v806, 0.0
        %v833 = vmax.f32 %v809, 0.0
        %v834 = vmax.f32 %v814, 0.0
        %v835 = vmax.f32 %v817, 0.0
        %v836 = vld [vmem:[%s626] sm:$0xf]
        %v837 = vld [vmem:[%s626 + $0x4] sm:$0xf]
        %v838 = vld [vmem:[%s626 + $0x8] sm:$0xf]
        %v839 = vld [vmem:[%s626 + $0xc] sm:$0xf]
        %v840 = vld [vmem:[%s626 + $0x10] sm:$0xf]
        %v841 = vld [vmem:[%s626 + $0x14] sm:$0xf]
        %v842 = vld [vmem:[%s626 + $0x18] sm:$0xf]
        %v843 = vld [vmem:[%s626 + $0x1c] sm:$0xf]
        %v844 = vld [vmem:[%s626 + $0x20] sm:$0xf]
        %v845 = vld [vmem:[%s626 + $0x24] sm:$0xf]
        %v846 = vld [vmem:[%s626 + $0x28] sm:$0xf]
        %v847 = vld [vmem:[%s626 + $0x2c] sm:$0xf]
        %v848 = vld [vmem:[%s626 + $0x30] sm:$0xf]
        %v849 = vld [vmem:[%s626 + $0x34] sm:$0xf]
        %v850 = vld [vmem:[%s626 + $0x38] sm:$0xf]
        %v851 = vld [vmem:[%s626 + $0x3c] sm:$0xf]
        %v852 = vld [vmem:[#allocation5] sm:$0xf]
        %v853 = vld [vmem:[#allocation7] sm:$0x1]
        %v855 = vlaneseq
        %v856 = vshrl.u32 %v855, 7
        %v857 = vsub.s32 0, %v856
        %v858 = vrot.slane %v853, %v857
        %v876 = vunpack.c.l.b16 %v836
        %v877 = vunpack.c.l.b16 %v837
        %v878 = vunpack.c.l.b16 %v838
        %v879 = vunpack.c.l.b16 %v839
        %v880 = vunpack.c.l.b16 %v840
        %v881 = vunpack.c.l.b16 %v841
        %v882 = vunpack.c.l.b16 %v842
        %v883 = vunpack.c.l.b16 %v843
        %v884 = vunpack.c.l.b16 %v844
        %v885 = vunpack.c.l.b16 %v845
        %v886 = vunpack.c.l.b16 %v846
        %v887 = vunpack.c.l.b16 %v847
        %v888 = vunpack.c.l.b16 %v848
        %v889 = vunpack.c.l.b16 %v849
        %v890 = vunpack.c.l.b16 %v850
        %v891 = vunpack.c.l.b16 %v851
        %v892 = vpack.c.b16 %v877, %v876
        %v893 = vpack.c.b16 %v879, %v878
        %v894 = vpack.c.b16 %v881, %v880
        %v895 = vpack.c.b16 %v883, %v882
        %v896 = vpack.c.b16 %v885, %v884
        %v897 = vpack.c.b16 %v887, %v886
        %v898 = vpack.c.b16 %v889, %v888
        %v899 = vpack.c.b16 %v891, %v890
        %v901 = vsel %vm694, %v892, 0
        %v904 = vsel %vm694, %v893, 0
        %v907 = vsel %vm694, %v894, 0
        %v910 = vsel %vm694, %v895, 0
        %v913 = vsel %vm694, %v896, 0
        %v916 = vsel %vm694, %v897, 0
        %v919 = vsel %vm694, %v898, 0
        %v922 = vsel %vm694, %v899, 0
        %v925 = vsel %vm719, %v852, 0
        %927 = vmatprep.subr.bf16.mxu0 0
        %928 = vmatpush1.bf16.msra.mxu0 %v925
        %929 = vmatprep.subr.bf16.mxu0 0
        %930 = vmatpush1.bf16.msra.mxu0 0
        %931 = vmatprep.subr.bf16.mxu0 0
        %932 = vmatpush1.bf16.msra.mxu0 0
        %933 = vmatprep.subr.bf16.mxu0 0
        %934 = vmatpush1.bf16.msra.mxu0 0
        %935 = vmatprep.subr.bf16.mxu0 0
        %936 = vmatpush1.bf16.msra.mxu0 0
        %937 = vmatprep.subr.bf16.mxu0 0
        %938 = vmatpush1.bf16.msra.mxu0 0
        %939 = vmatprep.subr.bf16.mxu0 0
        %940 = vmatpush1.bf16.msra.mxu0 0
        %941 = vmatprep.subr.bf16.mxu0 0
        %942 = vmatpush1.bf16.msra.mxu0 0
        %943 = vmatprep.subr.bf16.mxu0 0
        %944 = vmatpush1.bf16.msra.mxu0 0
        %945 = vmatprep.subr.bf16.mxu0 0
        %946 = vmatpush1.bf16.msra.mxu0 0
        %947 = vmatprep.subr.bf16.mxu0 0
        %948 = vmatpush1.bf16.msra.mxu0 0
        %949 = vmatprep.subr.bf16.mxu0 0
        %950 = vmatpush1.bf16.msra.mxu0 0
        %951 = vmatprep.subr.bf16.mxu0 0
        %952 = vmatpush1.bf16.msra.mxu0 0
        %953 = vmatprep.subr.bf16.mxu0 0
        %954 = vmatpush1.bf16.msra.mxu0 0
        %955 = vmatprep.subr.bf16.mxu0 0
        %956 = vmatpush1.bf16.msra.mxu0 0
        %957 = vmatprep.subr.bf16.mxu0 0
        %958 = vmatpush1.bf16.msra.mxu0 0
        %959 = vmatprep.mubr.bf16.mxu0 0
        %960 = vmatmul.mubr.bf16.gmra.mrb[0].mxu0 %v901
        %v961 = vpop.f32.mrb[0].mxu0
        %v962 = vadd.f32 %v858, %v961
        %v963 = vpop.f32.mrb[0].mxu0
        %v964 = vpop.f32.mrb[0].mxu0
        %v965 = vadd.f32 %v858, %v964
        %v966 = vpop.f32.mrb[0].mxu0
        %967 = vmatprep.mubr.bf16.mxu0 0
        %968 = vmatmul.mubr.bf16.gmra.mrb[0].mxu0 %v904
        %v969 = vpop.f32.mrb[0].mxu0
        %v970 = vadd.f32 %v858, %v969
        %v971 = vpop.f32.mrb[0].mxu0
        %v972 = vpop.f32.mrb[0].mxu0
        %v973 = vadd.f32 %v858, %v972
        %v974 = vpop.f32.mrb[0].mxu0
        %975 = vmatprep.mubr.bf16.mxu0 0
        %976 = vmatmul.mubr.bf16.gmra.mrb[0].mxu0 %v907
        %v977 = vpop.f32.mrb[0].mxu0
        %v978 = vadd.f32 %v858, %v977
        %v979 = vpop.f32.mrb[0].mxu0
        %v980 = vpop.f32.mrb[0].mxu0
        %v981 = vadd.f32 %v858, %v980
        %v982 = vpop.f32.mrb[0].mxu0
        %983 = vmatprep.mubr.bf16.mxu0 0
        %984 = vmatmul.mubr.bf16.gmra.mrb[0].mxu0 %v910
        %v985 = vpop.f32.mrb[0].mxu0
        %v986 = vadd.f32 %v858, %v985
        %v987 = vpop.f32.mrb[0].mxu0
        %v988 = vpop.f32.mrb[0].mxu0
        %v989 = vadd.f32 %v858, %v988
        %v990 = vpop.f32.mrb[0].mxu0
        %991 = vmatprep.mubr.bf16.mxu0 0
        %992 = vmatmul.mubr.bf16.gmra.mrb[0].mxu0 %v913
        %v993 = vpop.f32.mrb[0].mxu0
        %v994 = vadd.f32 %v858, %v993
        %v995 = vpop.f32.mrb[0].mxu0
        %v996 = vpop.f32.mrb[0].mxu0
        %v997 = vadd.f32 %v858, %v996
        %v998 = vpop.f32.mrb[0].mxu0
        %999 = vmatprep.mubr.bf16.mxu0 0
        %1000 = vmatmul.mubr.bf16.gmra.mrb[0].mxu0 %v916
        %v1001 = vpop.f32.mrb[0].mxu0
        %v1002 = vadd.f32 %v858, %v1001
        %v1003 = vpop.f32.mrb[0].mxu0
        %v1004 = vpop.f32.mrb[0].mxu0
        %v1005 = vadd.f32 %v858, %v1004
        %v1006 = vpop.f32.mrb[0].mxu0
        %1007 = vmatprep.mubr.bf16.mxu0 0
        %1008 = vmatmul.mubr.bf16.gmra.mrb[0].mxu0 %v919
        %v1009 = vpop.f32.mrb[0].mxu0
        %v1010 = vadd.f32 %v858, %v1009
        %v1011 = vpop.f32.mrb[0].mxu0
        %v1012 = vpop.f32.mrb[0].mxu0
        %v1013 = vadd.f32 %v858, %v1012
        %v1014 = vpop.f32.mrb[0].mxu0
        %1015 = vmatprep.mubr.bf16.mxu0 0
        %1016 = vmatmul.mubr.bf16.gmra.mrb[0].mxu0 %v922
        %v1017 = vpop.f32.mrb[0].mxu0
        %v1018 = vadd.f32 %v858, %v1017
        %v1019 = vpop.f32.mrb[0].mxu0
        %v1020 = vpop.f32.mrb[0].mxu0
        %v1021 = vadd.f32 %v858, %v1020
        %v1022 = vpop.f32.mrb[0].mxu0
        %1023 = vdwg.mxu0
        %v1024 = vmax.f32 %v962, 0.0
        %v1025 = vmax.f32 %v965, 0.0
        %v1026 = vmax.f32 %v970, 0.0
        %v1027 = vmax.f32 %v973, 0.0
        %v1028 = vmax.f32 %v978, 0.0
        %v1029 = vmax.f32 %v981, 0.0
        %v1030 = vmax.f32 %v986, 0.0
        %v1031 = vmax.f32 %v989, 0.0
        %v1032 = vmax.f32 %v994, 0.0
        %v1033 = vmax.f32 %v997, 0.0
        %v1034 = vmax.f32 %v1002, 0.0
        %v1035 = vmax.f32 %v1005, 0.0
        %v1036 = vmax.f32 %v1010, 0.0
        %v1037 = vmax.f32 %v1013, 0.0
        %v1038 = vmax.f32 %v1018, 0.0
        %v1039 = vmax.f32 %v1021, 0.0
        %v1040 = vpack.c.bf16 %v1025, %v1024
        %v1041 = vpack.c.bf16 %v1027, %v1026
        %v1042 = vpack.c.bf16 %v1029, %v1028
        %v1043 = vpack.c.bf16 %v1031, %v1030
        %v1044 = vpack.c.bf16 %v1033, %v1032
        %v1045 = vpack.c.bf16 %v1035, %v1034
        %v1046 = vpack.c.bf16 %v1037, %v1036
        %v1047 = vpack.c.bf16 %v1039, %v1038
        %v1048 = vpack.c.bf16 %v821, %v820
        %v1049 = vpack.c.bf16 %v823, %v822
        %v1050 = vpack.c.bf16 %v825, %v824
        %v1051 = vpack.c.bf16 %v827, %v826
        %v1052 = vpack.c.bf16 %v829, %v828
        %v1053 = vpack.c.bf16 %v831, %v830
        %v1054 = vpack.c.bf16 %v833, %v832
        %v1055 = vpack.c.bf16 %v835, %v834
        %v1056 = vld [vmem:[%s6] sm:$0xf]
        %v1057 = vld [vmem:[%s6 + $0x4] sm:$0xf]
        %v1058 = vld [vmem:[%s6 + $0x8] sm:$0xf]
        %v1059 = vld [vmem:[%s6 + $0xc] sm:$0xf]
        %v1060 = vld [vmem:[%s6 + $0x10] sm:$0xf]
        %v1061 = vld [vmem:[%s6 + $0x14] sm:$0xf]
        %v1062 = vld [vmem:[%s6 + $0x18] sm:$0xf]
        %v1063 = vld [vmem:[%s6 + $0x1c] sm:$0xf]
        %v1064 = vld [vmem:[%s6 + $0x20] sm:$0xf]
        %v1065 = vld [vmem:[%s6 + $0x24] sm:$0xf]
        %v1066 = vld [vmem:[%s6 + $0x28] sm:$0xf]
        %v1067 = vld [vmem:[%s6 + $0x2c] sm:$0xf]
        %v1068 = vld [vmem:[%s6 + $0x30] sm:$0xf]
        %v1069 = vld [vmem:[%s6 + $0x34] sm:$0xf]
        %v1070 = vld [vmem:[%s6 + $0x38] sm:$0xf]
        %v1071 = vld [vmem:[%s6 + $0x3c] sm:$0xf]
        %v1072 = vld [vmem:[%s7] sm:$0xf]
        %v1073 = vld [vmem:[%s7 + $0x4] sm:$0xf]
        %v1074 = vld [vmem:[%s7 + $0x8] sm:$0xf]
        %v1075 = vld [vmem:[%s7 + $0xc] sm:$0xf]
        %v1076 = vld [vmem:[%s7 + $0x10] sm:$0xf]
        %v1077 = vld [vmem:[%s7 + $0x14] sm:$0xf]
        %v1078 = vld [vmem:[%s7 + $0x18] sm:$0xf]
        %v1079 = vld [vmem:[%s7 + $0x1c] sm:$0xf]
        %v1080 = vld [vmem:[%s7 + $0x20] sm:$0xf]
        %v1081 = vld [vmem:[%s7 + $0x24] sm:$0xf]
        %v1082 = vld [vmem:[%s7 + $0x28] sm:$0xf]
        %v1083 = vld [vmem:[%s7 + $0x2c] sm:$0xf]
        %v1084 = vld [vmem:[%s7 + $0x30] sm:$0xf]
        %v1085 = vld [vmem:[%s7 + $0x34] sm:$0xf]
        %v1086 = vld [vmem:[%s7 + $0x38] sm:$0xf]
        %v1087 = vld [vmem:[%s7 + $0x3c] sm:$0xf]
        %v1104 = vunpack.c.l.b16 %v1072
        %v1105 = vunpack.c.l.b16 %v1073
        %v1106 = vunpack.c.l.b16 %v1074
        %v1107 = vunpack.c.l.b16 %v1075
        %v1108 = vunpack.c.l.b16 %v1076
        %v1109 = vunpack.c.l.b16 %v1077
        %v1110 = vunpack.c.l.b16 %v1078
        %v1111 = vunpack.c.l.b16 %v1079
        %v1112 = vunpack.c.l.b16 %v1080
        %v1113 = vunpack.c.l.b16 %v1081
        %v1114 = vunpack.c.l.b16 %v1082
        %v1115 = vunpack.c.l.b16 %v1083
        %v1116 = vunpack.c.l.b16 %v1084
        %v1117 = vunpack.c.l.b16 %v1085
        %v1118 = vunpack.c.l.b16 %v1086
        %v1119 = vunpack.c.l.b16 %v1087
        %v1120 = vpack.c.b16 %v1105, %v1104
        %v1121 = vpack.c.b16 %v1107, %v1106
        %v1122 = vpack.c.b16 %v1109, %v1108
        %v1123 = vpack.c.b16 %v1111, %v1110
        %v1124 = vpack.c.b16 %v1113, %v1112
        %v1125 = vpack.c.b16 %v1115, %v1114
        %v1126 = vpack.c.b16 %v1117, %v1116
        %v1127 = vpack.c.b16 %v1119, %v1118
        %1136 = vmatprep.subr.bf16.mxu0 0
        %1137 = vmatpush1.bf16.msra.mxu0 %v1120
        %1138 = vmatprep.subr.bf16.mxu0 0
        %1139 = vmatpush1.bf16.msra.mxu0 %v1121
        %1140 = vmatprep.subr.bf16.mxu0 0
        %1141 = vmatpush1.bf16.msra.mxu0 %v1122
        %1142 = vmatprep.subr.bf16.mxu0 0
        %1143 = vmatpush1.bf16.msra.mxu0 %v1123
        %1144 = vmatprep.subr.bf16.mxu0 0
        %1145 = vmatpush1.bf16.msra.mxu0 %v1124
        %1146 = vmatprep.subr.bf16.mxu0 0
        %1147 = vmatpush1.bf16.msra.mxu0 %v1125
        %1148 = vmatprep.subr.bf16.mxu0 0
        %1149 = vmatpush1.bf16.msra.mxu0 %v1126
        %1150 = vmatprep.subr.bf16.mxu0 0
        %1151 = vmatpush1.bf16.msra.mxu0 %v1127
        %1152 = vmatprep.subr.bf16.mxu0 0
        %1153 = vmatpush1.bf16.msra.mxu0 0
        %1154 = vmatprep.subr.bf16.mxu0 0
        %1155 = vmatpush1.bf16.msra.mxu0 0
        %1156 = vmatprep.subr.bf16.mxu0 0
        %1157 = vmatpush1.bf16.msra.mxu0 0
        %1158 = vmatprep.subr.bf16.mxu0 0
        %1159 = vmatpush1.bf16.msra.mxu0 0
        %1160 = vmatprep.subr.bf16.mxu0 0
        %1161 = vmatpush1.bf16.msra.mxu0 0
        %1162 = vmatprep.subr.bf16.mxu0 0
        %1163 = vmatpush1.bf16.msra.mxu0 0
        %1164 = vmatprep.subr.bf16.mxu0 0
        %1165 = vmatpush1.bf16.msra.mxu0 0
        %1166 = vmatprep.subr.bf16.mxu0 0
        %1167 = vmatpush1.bf16.msra.mxu0 0
        %1168 = vmatprep.mubr.bf16.mxu0 0
        %1169 = vmatmul.mubr.bf16.gmra.mrb[0].mxu0 %v1040
        %v1170 = vpop.f32.mrb[0].mxu0
        %v1171 = vadd.f32 0.0, %v1170
        %v1172 = vpop.f32.mrb[0].mxu0
        %v1173 = vpop.f32.mrb[0].mxu0
        %v1174 = vadd.f32 0.0, %v1173
        %v1175 = vpop.f32.mrb[0].mxu0
        %1176 = vmatprep.mubr.bf16.mxu0 0
        %1177 = vmatmul.mubr.bf16.gmra.mrb[0].mxu0 %v1041
        %v1178 = vpop.f32.mrb[0].mxu0
        %v1179 = vadd.f32 0.0, %v1178
        %v1180 = vpop.f32.mrb[0].mxu0
        %v1181 = vpop.f32.mrb[0].mxu0
        %v1182 = vadd.f32 0.0, %v1181
        %v1183 = vpop.f32.mrb[0].mxu0
        %1184 = vmatprep.mubr.bf16.mxu0 0
        %1185 = vmatmul.mubr.bf16.gmra.mrb[0].mxu0 %v1042
        %v1186 = vpop.f32.mrb[0].mxu0
        %v1187 = vadd.f32 0.0, %v1186
        %v1188 = vpop.f32.mrb[0].mxu0
        %v1189 = vpop.f32.mrb[0].mxu0
        %v1190 = vadd.f32 0.0, %v1189
        %v1191 = vpop.f32.mrb[0].mxu0
        %1192 = vmatprep.mubr.bf16.mxu0 0
        %1193 = vmatmul.mubr.bf16.gmra.mrb[0].mxu0 %v1043
        %v1194 = vpop.f32.mrb[0].mxu0
        %v1195 = vadd.f32 0.0, %v1194
        %v1196 = vpop.f32.mrb[0].mxu0
        %v1197 = vpop.f32.mrb[0].mxu0
        %v1198 = vadd.f32 0.0, %v1197
        %v1199 = vpop.f32.mrb[0].mxu0
        %1200 = vmatprep.mubr.bf16.mxu0 0
        %1201 = vmatmul.mubr.bf16.gmra.mrb[0].mxu0 %v1044
        %v1202 = vpop.f32.mrb[0].mxu0
        %v1203 = vadd.f32 0.0, %v1202
        %v1204 = vpop.f32.mrb[0].mxu0
        %v1205 = vpop.f32.mrb[0].mxu0
        %v1206 = vadd.f32 0.0, %v1205
        %v1207 = vpop.f32.mrb[0].mxu0
        %1208 = vmatprep.mubr.bf16.mxu0 0
        %1209 = vmatmul.mubr.bf16.gmra.mrb[0].mxu0 %v1045
        %v1210 = vpop.f32.mrb[0].mxu0
        %v1211 = vadd.f32 0.0, %v1210
        %v1212 = vpop.f32.mrb[0].mxu0
        %v1213 = vpop.f32.mrb[0].mxu0
        %v1214 = vadd.f32 0.0, %v1213
        %v1215 = vpop.f32.mrb[0].mxu0
        %1216 = vmatprep.mubr.bf16.mxu0 0
        %1217 = vmatmul.mubr.bf16.gmra.mrb[0].mxu0 %v1046
        %v1218 = vpop.f32.mrb[0].mxu0
        %v1219 = vadd.f32 0.0, %v1218
        %v1220 = vpop.f32.mrb[0].mxu0
        %v1221 = vpop.f32.mrb[0].mxu0
        %v1222 = vadd.f32 0.0, %v1221
        %v1223 = vpop.f32.mrb[0].mxu0
        %1224 = vmatprep.mubr.bf16.mxu0 0
        %1225 = vmatmul.mubr.bf16.gmra.mrb[0].mxu0 %v1047
        %v1226 = vpop.f32.mrb[0].mxu0
        %v1227 = vadd.f32 0.0, %v1226
        %v1228 = vpop.f32.mrb[0].mxu0
        %v1229 = vpop.f32.mrb[0].mxu0
        %v1230 = vadd.f32 0.0, %v1229
        %v1231 = vpop.f32.mrb[0].mxu0
        %1232 = vdwg.mxu0
        %v1249 = vunpack.c.l.b16 %v1056
        %v1250 = vunpack.c.l.b16 %v1057
        %v1251 = vunpack.c.l.b16 %v1058
        %v1252 = vunpack.c.l.b16 %v1059
        %v1253 = vunpack.c.l.b16 %v1060
        %v1254 = vunpack.c.l.b16 %v1061
        %v1255 = vunpack.c.l.b16 %v1062
        %v1256 = vunpack.c.l.b16 %v1063
        %v1257 = vunpack.c.l.b16 %v1064
        %v1258 = vunpack.c.l.b16 %v1065
        %v1259 = vunpack.c.l.b16 %v1066
        %v1260 = vunpack.c.l.b16 %v1067
        %v1261 = vunpack.c.l.b16 %v1068
        %v1262 = vunpack.c.l.b16 %v1069
        %v1263 = vunpack.c.l.b16 %v1070
        %v1264 = vunpack.c.l.b16 %v1071
        %v1265 = vpack.c.b16 %v1250, %v1249
        %v1266 = vpack.c.b16 %v1252, %v1251
        %v1267 = vpack.c.b16 %v1254, %v1253
        %v1268 = vpack.c.b16 %v1256, %v1255
        %v1269 = vpack.c.b16 %v1258, %v1257
        %v1270 = vpack.c.b16 %v1260, %v1259
        %v1271 = vpack.c.b16 %v1262, %v1261
        %v1272 = vpack.c.b16 %v1264, %v1263
        %1281 = vmatprep.subr.bf16.mxu0 0
        %1282 = vmatpush1.bf16.msra.mxu0 %v1265
        %1283 = vmatprep.subr.bf16.mxu0 0
        %1284 = vmatpush1.bf16.msra.mxu0 %v1266
        %1285 = vmatprep.subr.bf16.mxu0 0
        %1286 = vmatpush1.bf16.msra.mxu0 %v1267
        %1287 = vmatprep.subr.bf16.mxu0 0
        %1288 = vmatpush1.bf16.msra.mxu0 %v1268
        %1289 = vmatprep.subr.bf16.mxu0 0
        %1290 = vmatpush1.bf16.msra.mxu0 %v1269
        %1291 = vmatprep.subr.bf16.mxu0 0
        %1292 = vmatpush1.bf16.msra.mxu0 %v1270
        %1293 = vmatprep.subr.bf16.mxu0 0
        %1294 = vmatpush1.bf16.msra.mxu0 %v1271
        %1295 = vmatprep.subr.bf16.mxu0 0
        %1296 = vmatpush1.bf16.msra.mxu0 %v1272
        %1297 = vmatprep.subr.bf16.mxu0 0
        %1298 = vmatpush1.bf16.msra.mxu0 0
        %1299 = vmatprep.subr.bf16.mxu0 0
        %1300 = vmatpush1.bf16.msra.mxu0 0
        %1301 = vmatprep.subr.bf16.mxu0 0
        %1302 = vmatpush1.bf16.msra.mxu0 0
        %1303 = vmatprep.subr.bf16.mxu0 0
        %1304 = vmatpush1.bf16.msra.mxu0 0
        %1305 = vmatprep.subr.bf16.mxu0 0
        %1306 = vmatpush1.bf16.msra.mxu0 0
        %1307 = vmatprep.subr.bf16.mxu0 0
        %1308 = vmatpush1.bf16.msra.mxu0 0
        %1309 = vmatprep.subr.bf16.mxu0 0
        %1310 = vmatpush1.bf16.msra.mxu0 0
        %1311 = vmatprep.subr.bf16.mxu0 0
        %1312 = vmatpush1.bf16.msra.mxu0 0
        %1313 = vmatprep.mubr.bf16.mxu0 0
        %1314 = vmatmul.mubr.bf16.gmra.mrb[0].mxu0 %v1048
        %v1315 = vpop.f32.mrb[0].mxu0
        %v1316 = vadd.f32 %v1171, %v1315
        %v1317 = vpop.f32.mrb[0].mxu0
        %v1318 = vpop.f32.mrb[0].mxu0
        %v1319 = vadd.f32 %v1174, %v1318
        %v1320 = vpop.f32.mrb[0].mxu0
        %1321 = vmatprep.mubr.bf16.mxu0 0
        %1322 = vmatmul.mubr.bf16.gmra.mrb[0].mxu0 %v1049
        %v1323 = vpop.f32.mrb[0].mxu0
        %v1324 = vadd.f32 %v1179, %v1323
        %v1325 = vpop.f32.mrb[0].mxu0
        %v1326 = vpop.f32.mrb[0].mxu0
        %v1327 = vadd.f32 %v1182, %v1326
        %v1328 = vpop.f32.mrb[0].mxu0
        %1329 = vmatprep.mubr.bf16.mxu0 0
        %1330 = vmatmul.mubr.bf16.gmra.mrb[0].mxu0 %v1050
        %v1331 = vpop.f32.mrb[0].mxu0
        %v1332 = vadd.f32 %v1187, %v1331
        %v1333 = vpop.f32.mrb[0].mxu0
        %v1334 = vpop.f32.mrb[0].mxu0
        %v1335 = vadd.f32 %v1190, %v1334
        %v1336 = vpop.f32.mrb[0].mxu0
        %1337 = vmatprep.mubr.bf16.mxu0 0
        %1338 = vmatmul.mubr.bf16.gmra.mrb[0].mxu0 %v1051
        %v1339 = vpop.f32.mrb[0].mxu0
        %v1340 = vadd.f32 %v1195, %v1339
        %v1341 = vpop.f32.mrb[0].mxu0
        %v1342 = vpop.f32.mrb[0].mxu0
        %v1343 = vadd.f32 %v1198, %v1342
        %v1344 = vpop.f32.mrb[0].mxu0
        %1345 = vmatprep.mubr.bf16.mxu0 0
        %1346 = vmatmul.mubr.bf16.gmra.mrb[0].mxu0 %v1052
        %v1347 = vpop.f32.mrb[0].mxu0
        %v1348 = vadd.f32 %v1203, %v1347
        %v1349 = vpop.f32.mrb[0].mxu0
        %v1350 = vpop.f32.mrb[0].mxu0
        %v1351 = vadd.f32 %v1206, %v1350
        %v1352 = vpop.f32.mrb[0].mxu0
        %1353 = vmatprep.mubr.bf16.mxu0 0
        %1354 = vmatmul.mubr.bf16.gmra.mrb[0].mxu0 %v1053
        %v1355 = vpop.f32.mrb[0].mxu0
        %v1356 = vadd.f32 %v1211, %v1355
        %v1357 = vpop.f32.mrb[0].mxu0
        %v1358 = vpop.f32.mrb[0].mxu0
        %v1359 = vadd.f32 %v1214, %v1358
        %v1360 = vpop.f32.mrb[0].mxu0
        %1361 = vmatprep.mubr.bf16.mxu0 0
        %1362 = vmatmul.mubr.bf16.gmra.mrb[0].mxu0 %v1054
        %v1363 = vpop.f32.mrb[0].mxu0
        %v1364 = vadd.f32 %v1219, %v1363
        %v1365 = vpop.f32.mrb[0].mxu0
        %v1366 = vpop.f32.mrb[0].mxu0
        %v1367 = vadd.f32 %v1222, %v1366
        %v1368 = vpop.f32.mrb[0].mxu0
        %1369 = vmatprep.mubr.bf16.mxu0 0
        %1370 = vmatmul.mubr.bf16.gmra.mrb[0].mxu0 %v1055
        %v1371 = vpop.f32.mrb[0].mxu0
        %v1372 = vadd.f32 %v1227, %v1371
        %v1373 = vpop.f32.mrb[0].mxu0
        %v1374 = vpop.f32.mrb[0].mxu0
        %v1375 = vadd.f32 %v1230, %v1374
        %v1376 = vpop.f32.mrb[0].mxu0
        %1377 = vdwg.mxu0
        %v1378 = vld [vmem:[#allocation8] sm:$0x1]
        %v1380 = vlaneseq
        %v1381 = vshrl.u32 %v1380, 7
        %v1382 = vsub.s32 0, %v1381
        %v1383 = vrot.slane %v1378, %v1382
        %v1385 = vadd.f32 %v1316, %v1383
        %v1386 = vadd.f32 %v1319, %v1383
        %v1387 = vadd.f32 %v1324, %v1383
        %v1388 = vadd.f32 %v1327, %v1383
        %v1389 = vadd.f32 %v1332, %v1383
        %v1390 = vadd.f32 %v1335, %v1383
        %v1391 = vadd.f32 %v1340, %v1383
        %v1392 = vadd.f32 %v1343, %v1383
        %v1393 = vadd.f32 %v1348, %v1383
        %v1394 = vadd.f32 %v1351, %v1383
        %v1395 = vadd.f32 %v1356, %v1383
        %v1396 = vadd.f32 %v1359, %v1383
        %v1397 = vadd.f32 %v1364, %v1383
        %v1398 = vadd.f32 %v1367, %v1383
        %v1399 = vadd.f32 %v1372, %v1383
        %v1400 = vadd.f32 %v1375, %v1383
        %v1401 = vmax.f32 %v1385, 0.0
        %v1402 = vmax.f32 %v1386, 0.0
        %v1403 = vmax.f32 %v1387, 0.0
        %v1404 = vmax.f32 %v1388, 0.0
        %v1405 = vmax.f32 %v1389, 0.0
        %v1406 = vmax.f32 %v1390, 0.0
        %v1407 = vmax.f32 %v1391, 0.0
        %v1408 = vmax.f32 %v1392, 0.0
        %v1409 = vmax.f32 %v1393, 0.0
        %v1410 = vmax.f32 %v1394, 0.0
        %v1411 = vmax.f32 %v1395, 0.0
        %v1412 = vmax.f32 %v1396, 0.0
        %v1413 = vmax.f32 %v1397, 0.0
        %v1414 = vmax.f32 %v1398, 0.0
        %v1415 = vmax.f32 %v1399, 0.0
        %v1416 = vmax.f32 %v1400, 0.0
        %v1417 = vpack.c.bf16 %v1402, %v1401
        %v1418 = vpack.c.bf16 %v1404, %v1403
        %v1419 = vpack.c.bf16 %v1406, %v1405
        %v1420 = vpack.c.bf16 %v1408, %v1407
        %v1421 = vpack.c.bf16 %v1410, %v1409
        %v1422 = vpack.c.bf16 %v1412, %v1411
        %v1423 = vpack.c.bf16 %v1414, %v1413
        %v1424 = vpack.c.bf16 %v1416, %v1415
        %v1425 = vld [vmem:[#allocation10] sm:$0xf]
        %v1426 = vld [vmem:[#allocation10 + $0x4] sm:$0xf]
        %v1427 = vld [vmem:[#allocation10 + $0x8] sm:$0xf]
        %v1428 = vld [vmem:[#allocation10 + $0xc] sm:$0xf]
        %v1429 = vld [vmem:[#allocation10 + $0x10] sm:$0xf]
        %v1430 = vld [vmem:[#allocation10 + $0x14] sm:$0xf]
        %v1431 = vld [vmem:[#allocation10 + $0x18] sm:$0xf]
        %v1432 = vld [vmem:[#allocation10 + $0x1c] sm:$0xf]
        %v1433 = vld [vmem:[#allocation10 + $0x20] sm:$0xf]
        %v1434 = vld [vmem:[#allocation10 + $0x24] sm:$0xf]
        %v1435 = vld [vmem:[#allocation10 + $0x28] sm:$0xf]
        %v1436 = vld [vmem:[#allocation10 + $0x2c] sm:$0xf]
        %v1437 = vld [vmem:[#allocation10 + $0x30] sm:$0xf]
        %v1438 = vld [vmem:[#allocation10 + $0x34] sm:$0xf]
        %v1439 = vld [vmem:[#allocation10 + $0x38] sm:$0xf]
        %v1440 = vld [vmem:[#allocation10 + $0x3c] sm:$0xf]
        %v1441 = vld [vmem:[#allocation11] sm:$0xf]
        %v1442 = vld [vmem:[#allocation11 + $0x4] sm:$0xf]
        %v1443 = vld [vmem:[#allocation11 + $0x8] sm:$0xf]
        %v1444 = vld [vmem:[#allocation11 + $0xc] sm:$0xf]
        %v1445 = vld [vmem:[#allocation11 + $0x10] sm:$0xf]
        %v1446 = vld [vmem:[#allocation11 + $0x14] sm:$0xf]
        %v1447 = vld [vmem:[#allocation11 + $0x18] sm:$0xf]
        %v1448 = vld [vmem:[#allocation11 + $0x1c] sm:$0xf]
        %v1449 = vld [vmem:[#allocation11 + $0x20] sm:$0xf]
        %v1450 = vld [vmem:[#allocation11 + $0x24] sm:$0xf]
        %v1451 = vld [vmem:[#allocation11 + $0x28] sm:$0xf]
        %v1452 = vld [vmem:[#allocation11 + $0x2c] sm:$0xf]
        %v1453 = vld [vmem:[#allocation11 + $0x30] sm:$0xf]
        %v1454 = vld [vmem:[#allocation11 + $0x34] sm:$0xf]
        %v1455 = vld [vmem:[#allocation11 + $0x38] sm:$0xf]
        %v1456 = vld [vmem:[#allocation11 + $0x3c] sm:$0xf]
        %v1473 = vunpack.c.l.b16 %v1441
        %v1474 = vunpack.c.l.b16 %v1442
        %v1475 = vunpack.c.l.b16 %v1443
        %v1476 = vunpack.c.l.b16 %v1444
        %v1477 = vunpack.c.l.b16 %v1445
        %v1478 = vunpack.c.l.b16 %v1446
        %v1479 = vunpack.c.l.b16 %v1447
        %v1480 = vunpack.c.l.b16 %v1448
        %v1481 = vunpack.c.l.b16 %v1449
        %v1482 = vunpack.c.l.b16 %v1450
        %v1483 = vunpack.c.l.b16 %v1451
        %v1484 = vunpack.c.l.b16 %v1452
        %v1485 = vunpack.c.l.b16 %v1453
        %v1486 = vunpack.c.l.b16 %v1454
        %v1487 = vunpack.c.l.b16 %v1455
        %v1488 = vunpack.c.l.b16 %v1456
        %v1489 = vpack.c.b16 %v1474, %v1473
        %v1490 = vpack.c.b16 %v1476, %v1475
        %v1491 = vpack.c.b16 %v1478, %v1477
        %v1492 = vpack.c.b16 %v1480, %v1479
        %v1493 = vpack.c.b16 %v1482, %v1481
        %v1494 = vpack.c.b16 %v1484, %v1483
        %v1495 = vpack.c.b16 %v1486, %v1485
        %v1496 = vpack.c.b16 %v1488, %v1487
        %1505 = vmatprep.subr.bf16.mxu0 0
        %1506 = vmatpush1.bf16.msra.mxu0 %v1489
        %1507 = vmatprep.subr.bf16.mxu0 0
        %1508 = vmatpush1.bf16.msra.mxu0 %v1490
        %1509 = vmatprep.subr.bf16.mxu0 0
        %1510 = vmatpush1.bf16.msra.mxu0 %v1491
        %1511 = vmatprep.subr.bf16.mxu0 0
        %1512 = vmatpush1.bf16.msra.mxu0 %v1492
        %1513 = vmatprep.subr.bf16.mxu0 0
        %1514 = vmatpush1.bf16.msra.mxu0 %v1493
        %1515 = vmatprep.subr.bf16.mxu0 0
        %1516 = vmatpush1.bf16.msra.mxu0 %v1494
        %1517 = vmatprep.subr.bf16.mxu0 0
        %1518 = vmatpush1.bf16.msra.mxu0 %v1495
        %1519 = vmatprep.subr.bf16.mxu0 0
        %1520 = vmatpush1.bf16.msra.mxu0 %v1496
        %1521 = vmatprep.subr.bf16.mxu0 0
        %1522 = vmatpush1.bf16.msra.mxu0 0
        %1523 = vmatprep.subr.bf16.mxu0 0
        %1524 = vmatpush1.bf16.msra.mxu0 0
        %1525 = vmatprep.subr.bf16.mxu0 0
        %1526 = vmatpush1.bf16.msra.mxu0 0
        %1527 = vmatprep.subr.bf16.mxu0 0
        %1528 = vmatpush1.bf16.msra.mxu0 0
        %1529 = vmatprep.subr.bf16.mxu0 0
        %1530 = vmatpush1.bf16.msra.mxu0 0
        %1531 = vmatprep.subr.bf16.mxu0 0
        %1532 = vmatpush1.bf16.msra.mxu0 0
        %1533 = vmatprep.subr.bf16.mxu0 0
        %1534 = vmatpush1.bf16.msra.mxu0 0
        %1535 = vmatprep.subr.bf16.mxu0 0
        %1536 = vmatpush1.bf16.msra.mxu0 0
        %1537 = vmatprep.mubr.bf16.mxu0 0
        %1538 = vmatmul.mubr.bf16.gmra.mrb[0].mxu0 %v1040
        %v1539 = vpop.f32.mrb[0].mxu0
        %v1540 = vadd.f32 0.0, %v1539
        %v1541 = vpop.f32.mrb[0].mxu0
        %v1542 = vpop.f32.mrb[0].mxu0
        %v1543 = vadd.f32 0.0, %v1542
        %v1544 = vpop.f32.mrb[0].mxu0
        %1545 = vmatprep.mubr.bf16.mxu0 0
        %1546 = vmatmul.mubr.bf16.gmra.mrb[0].mxu0 %v1041
        %v1547 = vpop.f32.mrb[0].mxu0
        %v1548 = vadd.f32 0.0, %v1547
        %v1549 = vpop.f32.mrb[0].mxu0
        %v1550 = vpop.f32.mrb[0].mxu0
        %v1551 = vadd.f32 0.0, %v1550
        %v1552 = vpop.f32.mrb[0].mxu0
        %1553 = vmatprep.mubr.bf16.mxu0 0
        %1554 = vmatmul.mubr.bf16.gmra.mrb[0].mxu0 %v1042
        %v1555 = vpop.f32.mrb[0].mxu0
        %v1556 = vadd.f32 0.0, %v1555
        %v1557 = vpop.f32.mrb[0].mxu0
        %v1558 = vpop.f32.mrb[0].mxu0
        %v1559 = vadd.f32 0.0, %v1558
        %v1560 = vpop.f32.mrb[0].mxu0
        %1561 = vmatprep.mubr.bf16.mxu0 0
        %1562 = vmatmul.mubr.bf16.gmra.mrb[0].mxu0 %v1043
        %v1563 = vpop.f32.mrb[0].mxu0
        %v1564 = vadd.f32 0.0, %v1563
        %v1565 = vpop.f32.mrb[0].mxu0
        %v1566 = vpop.f32.mrb[0].mxu0
        %v1567 = vadd.f32 0.0, %v1566
        %v1568 = vpop.f32.mrb[0].mxu0
        %1569 = vmatprep.mubr.bf16.mxu0 0
        %1570 = vmatmul.mubr.bf16.gmra.mrb[0].mxu0 %v1044
        %v1571 = vpop.f32.mrb[0].mxu0
        %v1572 = vadd.f32 0.0, %v1571
        %v1573 = vpop.f32.mrb[0].mxu0
        %v1574 = vpop.f32.mrb[0].mxu0
        %v1575 = vadd.f32 0.0, %v1574
        %v1576 = vpop.f32.mrb[0].mxu0
        %1577 = vmatprep.mubr.bf16.mxu0 0
        %1578 = vmatmul.mubr.bf16.gmra.mrb[0].mxu0 %v1045
        %v1579 = vpop.f32.mrb[0].mxu0
        %v1580 = vadd.f32 0.0, %v1579
        %v1581 = vpop.f32.mrb[0].mxu0
        %v1582 = vpop.f32.mrb[0].mxu0
        %v1583 = vadd.f32 0.0, %v1582
        %v1584 = vpop.f32.mrb[0].mxu0
        %1585 = vmatprep.mubr.bf16.mxu0 0
        %1586 = vmatmul.mubr.bf16.gmra.mrb[0].mxu0 %v1046
        %v1587 = vpop.f32.mrb[0].mxu0
        %v1588 = vadd.f32 0.0, %v1587
        %v1589 = vpop.f32.mrb[0].mxu0
        %v1590 = vpop.f32.mrb[0].mxu0
        %v1591 = vadd.f32 0.0, %v1590
        %v1592 = vpop.f32.mrb[0].mxu0
        %1593 = vmatprep.mubr.bf16.mxu0 0
        %1594 = vmatmul.mubr.bf16.gmra.mrb[0].mxu0 %v1047
        %v1595 = vpop.f32.mrb[0].mxu0
        %v1596 = vadd.f32 0.0, %v1595
        %v1597 = vpop.f32.mrb[0].mxu0
        %v1598 = vpop.f32.mrb[0].mxu0
        %v1599 = vadd.f32 0.0, %v1598
        %v1600 = vpop.f32.mrb[0].mxu0
        %1601 = vdwg.mxu0
        %v1618 = vunpack.c.l.b16 %v1425
        %v1619 = vunpack.c.l.b16 %v1426
        %v1620 = vunpack.c.l.b16 %v1427
        %v1621 = vunpack.c.l.b16 %v1428
        %v1622 = vunpack.c.l.b16 %v1429
        %v1623 = vunpack.c.l.b16 %v1430
        %v1624 = vunpack.c.l.b16 %v1431
        %v1625 = vunpack.c.l.b16 %v1432
        %v1626 = vunpack.c.l.b16 %v1433
        %v1627 = vunpack.c.l.b16 %v1434
        %v1628 = vunpack.c.l.b16 %v1435
        %v1629 = vunpack.c.l.b16 %v1436
        %v1630 = vunpack.c.l.b16 %v1437
        %v1631 = vunpack.c.l.b16 %v1438
        %v1632 = vunpack.c.l.b16 %v1439
        %v1633 = vunpack.c.l.b16 %v1440
        %v1634 = vpack.c.b16 %v1619, %v1618
        %v1635 = vpack.c.b16 %v1621, %v1620
        %v1636 = vpack.c.b16 %v1623, %v1622
        %v1637 = vpack.c.b16 %v1625, %v1624
        %v1638 = vpack.c.b16 %v1627, %v1626
        %v1639 = vpack.c.b16 %v1629, %v1628
        %v1640 = vpack.c.b16 %v1631, %v1630
        %v1641 = vpack.c.b16 %v1633, %v1632
        %1650 = vmatprep.subr.bf16.mxu0 0
        %1651 = vmatpush1.bf16.msra.mxu0 %v1634
        %1652 = vmatprep.subr.bf16.mxu0 0
        %1653 = vmatpush1.bf16.msra.mxu0 %v1635
        %1654 = vmatprep.subr.bf16.mxu0 0
        %1655 = vmatpush1.bf16.msra.mxu0 %v1636
        %1656 = vmatprep.subr.bf16.mxu0 0
        %1657 = vmatpush1.bf16.msra.mxu0 %v1637
        %1658 = vmatprep.subr.bf16.mxu0 0
        %1659 = vmatpush1.bf16.msra.mxu0 %v1638
        %1660 = vmatprep.subr.bf16.mxu0 0
        %1661 = vmatpush1.bf16.msra.mxu0 %v1639
        %1662 = vmatprep.subr.bf16.mxu0 0
        %1663 = vmatpush1.bf16.msra.mxu0 %v1640
        %1664 = vmatprep.subr.bf16.mxu0 0
        %1665 = vmatpush1.bf16.msra.mxu0 %v1641
        %1666 = vmatprep.subr.bf16.mxu0 0
        %1667 = vmatpush1.bf16.msra.mxu0 0
        %1668 = vmatprep.subr.bf16.mxu0 0
        %1669 = vmatpush1.bf16.msra.mxu0 0
        %1670 = vmatprep.subr.bf16.mxu0 0
        %1671 = vmatpush1.bf16.msra.mxu0 0
        %1672 = vmatprep.subr.bf16.mxu0 0
        %1673 = vmatpush1.bf16.msra.mxu0 0
        %1674 = vmatprep.subr.bf16.mxu0 0
        %1675 = vmatpush1.bf16.msra.mxu0 0
        %1676 = vmatprep.subr.bf16.mxu0 0
        %1677 = vmatpush1.bf16.msra.mxu0 0
        %1678 = vmatprep.subr.bf16.mxu0 0
        %1679 = vmatpush1.bf16.msra.mxu0 0
        %1680 = vmatprep.subr.bf16.mxu0 0
        %1681 = vmatpush1.bf16.msra.mxu0 0
        %1682 = vmatprep.mubr.bf16.mxu0 0
        %1683 = vmatmul.mubr.bf16.gmra.mrb[0].mxu0 %v1417
        %v1684 = vpop.f32.mrb[0].mxu0
        %v1685 = vadd.f32 %v1540, %v1684
        %v1686 = vpop.f32.mrb[0].mxu0
        %v1687 = vpop.f32.mrb[0].mxu0
        %v1688 = vadd.f32 %v1543, %v1687
        %v1689 = vpop.f32.mrb[0].mxu0
        %1690 = vmatprep.mubr.bf16.mxu0 0
        %1691 = vmatmul.mubr.bf16.gmra.mrb[0].mxu0 %v1418
        %v1692 = vpop.f32.mrb[0].mxu0
        %v1693 = vadd.f32 %v1548, %v1692
        %v1694 = vpop.f32.mrb[0].mxu0
        %v1695 = vpop.f32.mrb[0].mxu0
        %v1696 = vadd.f32 %v1551, %v1695
        %v1697 = vpop.f32.mrb[0].mxu0
        %1698 = vmatprep.mubr.bf16.mxu0 0
        %1699 = vmatmul.mubr.bf16.gmra.mrb[0].mxu0 %v1419
        %v1700 = vpop.f32.mrb[0].mxu0
        %v1701 = vadd.f32 %v1556, %v1700
        %v1702 = vpop.f32.mrb[0].mxu0
        %v1703 = vpop.f32.mrb[0].mxu0
        %v1704 = vadd.f32 %v1559, %v1703
        %v1705 = vpop.f32.mrb[0].mxu0
        %1706 = vmatprep.mubr.bf16.mxu0 0
        %1707 = vmatmul.mubr.bf16.gmra.mrb[0].mxu0 %v1420
        %v1708 = vpop.f32.mrb[0].mxu0
        %v1709 = vadd.f32 %v1564, %v1708
        %v1710 = vpop.f32.mrb[0].mxu0
        %v1711 = vpop.f32.mrb[0].mxu0
        %v1712 = vadd.f32 %v1567, %v1711
        %v1713 = vpop.f32.mrb[0].mxu0
        %1714 = vmatprep.mubr.bf16.mxu0 0
        %1715 = vmatmul.mubr.bf16.gmra.mrb[0].mxu0 %v1421
        %v1716 = vpop.f32.mrb[0].mxu0
        %v1717 = vadd.f32 %v1572, %v1716
        %v1718 = vpop.f32.mrb[0].mxu0
        %v1719 = vpop.f32.mrb[0].mxu0
        %v1720 = vadd.f32 %v1575, %v1719
        %v1721 = vpop.f32.mrb[0].mxu0
        %1722 = vmatprep.mubr.bf16.mxu0 0
        %1723 = vmatmul.mubr.bf16.gmra.mrb[0].mxu0 %v1422
        %v1724 = vpop.f32.mrb[0].mxu0
        %v1725 = vadd.f32 %v1580, %v1724
        %v1726 = vpop.f32.mrb[0].mxu0
        %v1727 = vpop.f32.mrb[0].mxu0
        %v1728 = vadd.f32 %v1583, %v1727
        %v1729 = vpop.f32.mrb[0].mxu0
        %1730 = vmatprep.mubr.bf16.mxu0 0
        %1731 = vmatmul.mubr.bf16.gmra.mrb[0].mxu0 %v1423
        %v1732 = vpop.f32.mrb[0].mxu0
        %v1733 = vadd.f32 %v1588, %v1732
        %v1734 = vpop.f32.mrb[0].mxu0
        %v1735 = vpop.f32.mrb[0].mxu0
        %v1736 = vadd.f32 %v1591, %v1735
        %v1737 = vpop.f32.mrb[0].mxu0
        %1738 = vmatprep.mubr.bf16.mxu0 0
        %1739 = vmatmul.mubr.bf16.gmra.mrb[0].mxu0 %v1424
        %v1740 = vpop.f32.mrb[0].mxu0
        %v1741 = vadd.f32 %v1596, %v1740
        %v1742 = vpop.f32.mrb[0].mxu0
        %v1743 = vpop.f32.mrb[0].mxu0
        %v1744 = vadd.f32 %v1599, %v1743
        %v1745 = vpop.f32.mrb[0].mxu0
        %1746 = vdwg.mxu0
        %v1747 = vld [vmem:[#allocation13] sm:$0x1]
        %v1749 = vlaneseq
        %v1750 = vshrl.u32 %v1749, 7
        %v1751 = vsub.s32 0, %v1750
        %v1752 = vrot.slane %v1747, %v1751
        %v1754 = vadd.f32 %v1685, %v1752
        %v1755 = vadd.f32 %v1688, %v1752
        %v1756 = vadd.f32 %v1693, %v1752
        %v1757 = vadd.f32 %v1696, %v1752
        %v1758 = vadd.f32 %v1701, %v1752
        %v1759 = vadd.f32 %v1704, %v1752
        %v1760 = vadd.f32 %v1709, %v1752
        %v1761 = vadd.f32 %v1712, %v1752
        %v1762 = vadd.f32 %v1717, %v1752
        %v1763 = vadd.f32 %v1720, %v1752
        %v1764 = vadd.f32 %v1725, %v1752
        %v1765 = vadd.f32 %v1728, %v1752
        %v1766 = vadd.f32 %v1733, %v1752
        %v1767 = vadd.f32 %v1736, %v1752
        %v1768 = vadd.f32 %v1741, %v1752
        %v1769 = vadd.f32 %v1744, %v1752
        %v1770 = vadd.f32 %v1754, %v820
        %v1771 = vadd.f32 %v1755, %v821
        %v1772 = vadd.f32 %v1756, %v822
        %v1773 = vadd.f32 %v1757, %v823
        %v1774 = vadd.f32 %v1758, %v824
        %v1775 = vadd.f32 %v1759, %v825
        %v1776 = vadd.f32 %v1760, %v826
        %v1777 = vadd.f32 %v1761, %v827
        %v1778 = vadd.f32 %v1762, %v828
        %v1779 = vadd.f32 %v1763, %v829
        %v1780 = vadd.f32 %v1764, %v830
        %v1781 = vadd.f32 %v1765, %v831
        %v1782 = vadd.f32 %v1766, %v832
        %v1783 = vadd.f32 %v1767, %v833
        %v1784 = vadd.f32 %v1768, %v834
        %v1785 = vadd.f32 %v1769, %v835
        %v1786 = vmax.f32 %v1770, 0.0
        %v1787 = vmax.f32 %v1771, 0.0
        %v1788 = vmax.f32 %v1772, 0.0
        %v1789 = vmax.f32 %v1773, 0.0
        %v1790 = vmax.f32 %v1774, 0.0
        %v1791 = vmax.f32 %v1775, 0.0
        %v1792 = vmax.f32 %v1776, 0.0
        %v1793 = vmax.f32 %v1777, 0.0
        %v1794 = vmax.f32 %v1778, 0.0
        %v1795 = vmax.f32 %v1779, 0.0
        %v1796 = vmax.f32 %v1780, 0.0
        %v1797 = vmax.f32 %v1781, 0.0
        %v1798 = vmax.f32 %v1782, 0.0
        %v1799 = vmax.f32 %v1783, 0.0
        %v1800 = vmax.f32 %v1784, 0.0
        %v1801 = vmax.f32 %v1785, 0.0
        %v1802 = vpack.c.bf16 %v1787, %v1786
        %v1803 = vpack.c.bf16 %v1789, %v1788
        %v1804 = vpack.c.bf16 %v1791, %v1790
        %v1805 = vpack.c.bf16 %v1793, %v1792
        %v1806 = vpack.c.bf16 %v1795, %v1794
        %v1807 = vpack.c.bf16 %v1797, %v1796
        %v1808 = vpack.c.bf16 %v1799, %v1798
        %v1809 = vpack.c.bf16 %v1801, %v1800
        %s1810 = scalar_lea.vmem %s6, 64
        %v1811 = vld [vmem:[%s1810] sm:$0xf]
        %v1812 = vld [vmem:[%s1810 + $0x4] sm:$0xf]
        %v1813 = vld [vmem:[%s1810 + $0x8] sm:$0xf]
        %v1814 = vld [vmem:[%s1810 + $0xc] sm:$0xf]
        %v1815 = vld [vmem:[%s1810 + $0x10] sm:$0xf]
        %v1816 = vld [vmem:[%s1810 + $0x14] sm:$0xf]
        %v1817 = vld [vmem:[%s1810 + $0x18] sm:$0xf]
        %v1818 = vld [vmem:[%s1810 + $0x1c] sm:$0xf]
        %v1819 = vld [vmem:[%s1810 + $0x20] sm:$0xf]
        %v1820 = vld [vmem:[%s1810 + $0x24] sm:$0xf]
        %v1821 = vld [vmem:[%s1810 + $0x28] sm:$0xf]
        %v1822 = vld [vmem:[%s1810 + $0x2c] sm:$0xf]
        %v1823 = vld [vmem:[%s1810 + $0x30] sm:$0xf]
        %v1824 = vld [vmem:[%s1810 + $0x34] sm:$0xf]
        %v1825 = vld [vmem:[%s1810 + $0x38] sm:$0xf]
        %v1826 = vld [vmem:[%s1810 + $0x3c] sm:$0xf]
        %s1827 = scalar_lea.vmem %s7, 64
        %v1828 = vld [vmem:[%s1827] sm:$0xf]
        %v1829 = vld [vmem:[%s1827 + $0x4] sm:$0xf]
        %v1830 = vld [vmem:[%s1827 + $0x8] sm:$0xf]
        %v1831 = vld [vmem:[%s1827 + $0xc] sm:$0xf]
        %v1832 = vld [vmem:[%s1827 + $0x10] sm:$0xf]
        %v1833 = vld [vmem:[%s1827 + $0x14] sm:$0xf]
        %v1834 = vld [vmem:[%s1827 + $0x18] sm:$0xf]
        %v1835 = vld [vmem:[%s1827 + $0x1c] sm:$0xf]
        %v1836 = vld [vmem:[%s1827 + $0x20] sm:$0xf]
        %v1837 = vld [vmem:[%s1827 + $0x24] sm:$0xf]
        %v1838 = vld [vmem:[%s1827 + $0x28] sm:$0xf]
        %v1839 = vld [vmem:[%s1827 + $0x2c] sm:$0xf]
        %v1840 = vld [vmem:[%s1827 + $0x30] sm:$0xf]
        %v1841 = vld [vmem:[%s1827 + $0x34] sm:$0xf]
        %v1842 = vld [vmem:[%s1827 + $0x38] sm:$0xf]
        %v1843 = vld [vmem:[%s1827 + $0x3c] sm:$0xf]
        %v1860 = vunpack.c.l.b16 %v1828
        %v1861 = vunpack.c.l.b16 %v1829
        %v1862 = vunpack.c.l.b16 %v1830
        %v1863 = vunpack.c.l.b16 %v1831
        %v1864 = vunpack.c.l.b16 %v1832
        %v1865 = vunpack.c.l.b16 %v1833
        %v1866 = vunpack.c.l.b16 %v1834
        %v1867 = vunpack.c.l.b16 %v1835
        %v1868 = vunpack.c.l.b16 %v1836
        %v1869 = vunpack.c.l.b16 %v1837
        %v1870 = vunpack.c.l.b16 %v1838
        %v1871 = vunpack.c.l.b16 %v1839
        %v1872 = vunpack.c.l.b16 %v1840
        %v1873 = vunpack.c.l.b16 %v1841
        %v1874 = vunpack.c.l.b16 %v1842
        %v1875 = vunpack.c.l.b16 %v1843
        %v1876 = vpack.c.b16 %v1861, %v1860
        %v1877 = vpack.c.b16 %v1863, %v1862
        %v1878 = vpack.c.b16 %v1865, %v1864
        %v1879 = vpack.c.b16 %v1867, %v1866
        %v1880 = vpack.c.b16 %v1869, %v1868
        %v1881 = vpack.c.b16 %v1871, %v1870
        %v1882 = vpack.c.b16 %v1873, %v1872
        %v1883 = vpack.c.b16 %v1875, %v1874
        %1892 = vmatprep.subr.bf16.mxu0 0
        %1893 = vmatpush1.bf16.msra.mxu0 %v1876
        %1894 = vmatprep.subr.bf16.mxu0 0
        %1895 = vmatpush1.bf16.msra.mxu0 %v1877
        %1896 = vmatprep.subr.bf16.mxu0 0
        %1897 = vmatpush1.bf16.msra.mxu0 %v1878
        %1898 = vmatprep.subr.bf16.mxu0 0
        %1899 = vmatpush1.bf16.msra.mxu0 %v1879
        %1900 = vmatprep.subr.bf16.mxu0 0
        %1901 = vmatpush1.bf16.msra.mxu0 %v1880
        %1902 = vmatprep.subr.bf16.mxu0 0
        %1903 = vmatpush1.bf16.msra.mxu0 %v1881
        %1904 = vmatprep.subr.bf16.mxu0 0
        %1905 = vmatpush1.bf16.msra.mxu0 %v1882
        %1906 = vmatprep.subr.bf16.mxu0 0
        %1907 = vmatpush1.bf16.msra.mxu0 %v1883
        %1908 = vmatprep.subr.bf16.mxu0 0
        %1909 = vmatpush1.bf16.msra.mxu0 0
        %1910 = vmatprep.subr.bf16.mxu0 0
        %1911 = vmatpush1.bf16.msra.mxu0 0
        %1912 = vmatprep.subr.bf16.mxu0 0
        %1913 = vmatpush1.bf16.msra.mxu0 0
        %1914 = vmatprep.subr.bf16.mxu0 0
        %1915 = vmatpush1.bf16.msra.mxu0 0
        %1916 = vmatprep.subr.bf16.mxu0 0
        %1917 = vmatpush1.bf16.msra.mxu0 0
        %1918 = vmatprep.subr.bf16.mxu0 0
        %1919 = vmatpush1.bf16.msra.mxu0 0
        %1920 = vmatprep.subr.bf16.mxu0 0
        %1921 = vmatpush1.bf16.msra.mxu0 0
        %1922 = vmatprep.subr.bf16.mxu0 0
        %1923 = vmatpush1.bf16.msra.mxu0 0
        %1924 = vmatprep.mubr.bf16.mxu0 0
        %1925 = vmatmul.mubr.bf16.gmra.mrb[0].mxu0 %v1040
        %v1926 = vpop.f32.mrb[0].mxu0
        %v1927 = vadd.f32 0.0, %v1926
        %v1928 = vpop.f32.mrb[0].mxu0
        %v1929 = vpop.f32.mrb[0].mxu0
        %v1930 = vadd.f32 0.0, %v1929
        %v1931 = vpop.f32.mrb[0].mxu0
        %1932 = vmatprep.mubr.bf16.mxu0 0
        %1933 = vmatmul.mubr.bf16.gmra.mrb[0].mxu0 %v1041
        %v1934 = vpop.f32.mrb[0].mxu0
        %v1935 = vadd.f32 0.0, %v1934
        %v1936 = vpop.f32.mrb[0].mxu0
        %v1937 = vpop.f32.mrb[0].mxu0
        %v1938 = vadd.f32 0.0, %v1937
        %v1939 = vpop.f32.mrb[0].mxu0
        %1940 = vmatprep.mubr.bf16.mxu0 0
        %1941 = vmatmul.mubr.bf16.gmra.mrb[0].mxu0 %v1042
        %v1942 = vpop.f32.mrb[0].mxu0
        %v1943 = vadd.f32 0.0, %v1942
        %v1944 = vpop.f32.mrb[0].mxu0
        %v1945 = vpop.f32.mrb[0].mxu0
        %v1946 = vadd.f32 0.0, %v1945
        %v1947 = vpop.f32.mrb[0].mxu0
        %1948 = vmatprep.mubr.bf16.mxu0 0
        %1949 = vmatmul.mubr.bf16.gmra.mrb[0].mxu0 %v1043
        %v1950 = vpop.f32.mrb[0].mxu0
        %v1951 = vadd.f32 0.0, %v1950
        %v1952 = vpop.f32.mrb[0].mxu0
        %v1953 = vpop.f32.mrb[0].mxu0
        %v1954 = vadd.f32 0.0, %v1953
        %v1955 = vpop.f32.mrb[0].mxu0
        %1956 = vmatprep.mubr.bf16.mxu0 0
        %1957 = vmatmul.mubr.bf16.gmra.mrb[0].mxu0 %v1044
        %v1958 = vpop.f32.mrb[0].mxu0
        %v1959 = vadd.f32 0.0, %v1958
        %v1960 = vpop.f32.mrb[0].mxu0
        %v1961 = vpop.f32.mrb[0].mxu0
        %v1962 = vadd.f32 0.0, %v1961
        %v1963 = vpop.f32.mrb[0].mxu0
        %1964 = vmatprep.mubr.bf16.mxu0 0
        %1965 = vmatmul.mubr.bf16.gmra.mrb[0].mxu0 %v1045
        %v1966 = vpop.f32.mrb[0].mxu0
        %v1967 = vadd.f32 0.0, %v1966
        %v1968 = vpop.f32.mrb[0].mxu0
        %v1969 = vpop.f32.mrb[0].mxu0
        %v1970 = vadd.f32 0.0, %v1969
        %v1971 = vpop.f32.mrb[0].mxu0
        %1972 = vmatprep.mubr.bf16.mxu0 0
        %1973 = vmatmul.mubr.bf16.gmra.mrb[0].mxu0 %v1046
        %v1974 = vpop.f32.mrb[0].mxu0
        %v1975 = vadd.f32 0.0, %v1974
        %v1976 = vpop.f32.mrb[0].mxu0
        %v1977 = vpop.f32.mrb[0].mxu0
        %v1978 = vadd.f32 0.0, %v1977
        %v1979 = vpop.f32.mrb[0].mxu0
        %1980 = vmatprep.mubr.bf16.mxu0 0
        %1981 = vmatmul.mubr.bf16.gmra.mrb[0].mxu0 %v1047
        %v1982 = vpop.f32.mrb[0].mxu0
        %v1983 = vadd.f32 0.0, %v1982
        %v1984 = vpop.f32.mrb[0].mxu0
        %v1985 = vpop.f32.mrb[0].mxu0
        %v1986 = vadd.f32 0.0, %v1985
        %v1987 = vpop.f32.mrb[0].mxu0
        %1988 = vdwg.mxu0
        %v2005 = vunpack.c.l.b16 %v1811
        %v2006 = vunpack.c.l.b16 %v1812
        %v2007 = vunpack.c.l.b16 %v1813
        %v2008 = vunpack.c.l.b16 %v1814
        %v2009 = vunpack.c.l.b16 %v1815
        %v2010 = vunpack.c.l.b16 %v1816
        %v2011 = vunpack.c.l.b16 %v1817
        %v2012 = vunpack.c.l.b16 %v1818
        %v2013 = vunpack.c.l.b16 %v1819
        %v2014 = vunpack.c.l.b16 %v1820
        %v2015 = vunpack.c.l.b16 %v1821
        %v2016 = vunpack.c.l.b16 %v1822
        %v2017 = vunpack.c.l.b16 %v1823
        %v2018 = vunpack.c.l.b16 %v1824
        %v2019 = vunpack.c.l.b16 %v1825
        %v2020 = vunpack.c.l.b16 %v1826
        %v2021 = vpack.c.b16 %v2006, %v2005
        %v2022 = vpack.c.b16 %v2008, %v2007
        %v2023 = vpack.c.b16 %v2010, %v2009
        %v2024 = vpack.c.b16 %v2012, %v2011
        %v2025 = vpack.c.b16 %v2014, %v2013
        %v2026 = vpack.c.b16 %v2016, %v2015
        %v2027 = vpack.c.b16 %v2018, %v2017
        %v2028 = vpack.c.b16 %v2020, %v2019
        %2037 = vmatprep.subr.bf16.mxu0 0
        %2038 = vmatpush1.bf16.msra.mxu0 %v2021
        %2039 = vmatprep.subr.bf16.mxu0 0
        %2040 = vmatpush1.bf16.msra.mxu0 %v2022
        %2041 = vmatprep.subr.bf16.mxu0 0
        %2042 = vmatpush1.bf16.msra.mxu0 %v2023
        %2043 = vmatprep.subr.bf16.mxu0 0
        %2044 = vmatpush1.bf16.msra.mxu0 %v2024
        %2045 = vmatprep.subr.bf16.mxu0 0
        %2046 = vmatpush1.bf16.msra.mxu0 %v2025
        %2047 = vmatprep.subr.bf16.mxu0 0
        %2048 = vmatpush1.bf16.msra.mxu0 %v2026
        %2049 = vmatprep.subr.bf16.mxu0 0
        %2050 = vmatpush1.bf16.msra.mxu0 %v2027
        %2051 = vmatprep.subr.bf16.mxu0 0
        %2052 = vmatpush1.bf16.msra.mxu0 %v2028
        %2053 = vmatprep.subr.bf16.mxu0 0
        %2054 = vmatpush1.bf16.msra.mxu0 0
        %2055 = vmatprep.subr.bf16.mxu0 0
        %2056 = vmatpush1.bf16.msra.mxu0 0
        %2057 = vmatprep.subr.bf16.mxu0 0
        %2058 = vmatpush1.bf16.msra.mxu0 0
        %2059 = vmatprep.subr.bf16.mxu0 0
        %2060 = vmatpush1.bf16.msra.mxu0 0
        %2061 = vmatprep.subr.bf16.mxu0 0
        %2062 = vmatpush1.bf16.msra.mxu0 0
        %2063 = vmatprep.subr.bf16.mxu0 0
        %2064 = vmatpush1.bf16.msra.mxu0 0
        %2065 = vmatprep.subr.bf16.mxu0 0
        %2066 = vmatpush1.bf16.msra.mxu0 0
        %2067 = vmatprep.subr.bf16.mxu0 0
        %2068 = vmatpush1.bf16.msra.mxu0 0
        %2069 = vmatprep.mubr.bf16.mxu0 0
        %2070 = vmatmul.mubr.bf16.gmra.mrb[0].mxu0 %v1802
        %v2071 = vpop.f32.mrb[0].mxu0
        %v2072 = vadd.f32 %v1927, %v2071
        %v2073 = vpop.f32.mrb[0].mxu0
        %v2074 = vpop.f32.mrb[0].mxu0
        %v2075 = vadd.f32 %v1930, %v2074
        %v2076 = vpop.f32.mrb[0].mxu0
        %2077 = vmatprep.mubr.bf16.mxu0 0
        %2078 = vmatmul.mubr.bf16.gmra.mrb[0].mxu0 %v1803
        %v2079 = vpop.f32.mrb[0].mxu0
        %v2080 = vadd.f32 %v1935, %v2079
        %v2081 = vpop.f32.mrb[0].mxu0
        %v2082 = vpop.f32.mrb[0].mxu0
        %v2083 = vadd.f32 %v1938, %v2082
        %v2084 = vpop.f32.mrb[0].mxu0
        %2085 = vmatprep.mubr.bf16.mxu0 0
        %2086 = vmatmul.mubr.bf16.gmra.mrb[0].mxu0 %v1804
        %v2087 = vpop.f32.mrb[0].mxu0
        %v2088 = vadd.f32 %v1943, %v2087
        %v2089 = vpop.f32.mrb[0].mxu0
        %v2090 = vpop.f32.mrb[0].mxu0
        %v2091 = vadd.f32 %v1946, %v2090
        %v2092 = vpop.f32.mrb[0].mxu0
        %2093 = vmatprep.mubr.bf16.mxu0 0
        %2094 = vmatmul.mubr.bf16.gmra.mrb[0].mxu0 %v1805
        %v2095 = vpop.f32.mrb[0].mxu0
        %v2096 = vadd.f32 %v1951, %v2095
        %v2097 = vpop.f32.mrb[0].mxu0
        %v2098 = vpop.f32.mrb[0].mxu0
        %v2099 = vadd.f32 %v1954, %v2098
        %v2100 = vpop.f32.mrb[0].mxu0
        %2101 = vmatprep.mubr.bf16.mxu0 0
        %2102 = vmatmul.mubr.bf16.gmra.mrb[0].mxu0 %v1806
        %v2103 = vpop.f32.mrb[0].mxu0
        %v2104 = vadd.f32 %v1959, %v2103
        %v2105 = vpop.f32.mrb[0].mxu0
        %v2106 = vpop.f32.mrb[0].mxu0
        %v2107 = vadd.f32 %v1962, %v2106
        %v2108 = vpop.f32.mrb[0].mxu0
        %2109 = vmatprep.mubr.bf16.mxu0 0
        %2110 = vmatmul.mubr.bf16.gmra.mrb[0].mxu0 %v1807
        %v2111 = vpop.f32.mrb[0].mxu0
        %v2112 = vadd.f32 %v1967, %v2111
        %v2113 = vpop.f32.mrb[0].mxu0
        %v2114 = vpop.f32.mrb[0].mxu0
        %v2115 = vadd.f32 %v1970, %v2114
        %v2116 = vpop.f32.mrb[0].mxu0
        %2117 = vmatprep.mubr.bf16.mxu0 0
        %2118 = vmatmul.mubr.bf16.gmra.mrb[0].mxu0 %v1808
        %v2119 = vpop.f32.mrb[0].mxu0
        %v2120 = vadd.f32 %v1975, %v2119
        %v2121 = vpop.f32.mrb[0].mxu0
        %v2122 = vpop.f32.mrb[0].mxu0
        %v2123 = vadd.f32 %v1978, %v2122
        %v2124 = vpop.f32.mrb[0].mxu0
        %2125 = vmatprep.mubr.bf16.mxu0 0
        %2126 = vmatmul.mubr.bf16.gmra.mrb[0].mxu0 %v1809
        %v2127 = vpop.f32.mrb[0].mxu0
        %v2128 = vadd.f32 %v1983, %v2127
        %v2129 = vpop.f32.mrb[0].mxu0
        %v2130 = vpop.f32.mrb[0].mxu0
        %v2131 = vadd.f32 %v1986, %v2130
        %v2132 = vpop.f32.mrb[0].mxu0
        %2133 = vdwg.mxu0
        %s2134 = scalar_lea.vmem [#allocation8], 1
        %v2135 = vld [vmem:[%s2134] sm:$0x1]
        %v2137 = vlaneseq
        %v2138 = vshrl.u32 %v2137, 7
        %v2139 = vsub.s32 0, %v2138
        %v2140 = vrot.slane %v2135, %v2139
        %v2142 = vadd.f32 %v2072, %v2140
        %v2143 = vadd.f32 %v2075, %v2140
        %v2144 = vadd.f32 %v2080, %v2140
        %v2145 = vadd.f32 %v2083, %v2140
        %v2146 = vadd.f32 %v2088, %v2140
        %v2147 = vadd.f32 %v2091, %v2140
        %v2148 = vadd.f32 %v2096, %v2140
        %v2149 = vadd.f32 %v2099, %v2140
        %v2150 = vadd.f32 %v2104, %v2140
        %v2151 = vadd.f32 %v2107, %v2140
        %v2152 = vadd.f32 %v2112, %v2140
        %v2153 = vadd.f32 %v2115, %v2140
        %v2154 = vadd.f32 %v2120, %v2140
        %v2155 = vadd.f32 %v2123, %v2140
        %v2156 = vadd.f32 %v2128, %v2140
        %v2157 = vadd.f32 %v2131, %v2140
        %v2158 = vmax.f32 %v2142, 0.0
        %v2159 = vmax.f32 %v2143, 0.0
        %v2160 = vmax.f32 %v2144, 0.0
        %v2161 = vmax.f32 %v2145, 0.0
        %v2162 = vmax.f32 %v2146, 0.0
        %v2163 = vmax.f32 %v2147, 0.0
        %v2164 = vmax.f32 %v2148, 0.0
        %v2165 = vmax.f32 %v2149, 0.0
        %v2166 = vmax.f32 %v2150, 0.0
        %v2167 = vmax.f32 %v2151, 0.0
        %v2168 = vmax.f32 %v2152, 0.0
        %v2169 = vmax.f32 %v2153, 0.0
        %v2170 = vmax.f32 %v2154, 0.0
        %v2171 = vmax.f32 %v2155, 0.0
        %v2172 = vmax.f32 %v2156, 0.0
        %v2173 = vmax.f32 %v2157, 0.0
        %v2174 = vpack.c.bf16 %v2159, %v2158
        %v2175 = vpack.c.bf16 %v2161, %v2160
        %v2176 = vpack.c.bf16 %v2163, %v2162
        %v2177 = vpack.c.bf16 %v2165, %v2164
        %v2178 = vpack.c.bf16 %v2167, %v2166
        %v2179 = vpack.c.bf16 %v2169, %v2168
        %v2180 = vpack.c.bf16 %v2171, %v2170
        %v2181 = vpack.c.bf16 %v2173, %v2172
        %s2182 = scalar_lea.vmem [#allocation10], 64
        %v2183 = vld [vmem:[%s2182] sm:$0xf]
        %v2184 = vld [vmem:[%s2182 + $0x4] sm:$0xf]
        %v2185 = vld [vmem:[%s2182 + $0x8] sm:$0xf]
        %v2186 = vld [vmem:[%s2182 + $0xc] sm:$0xf]
        %v2187 = vld [vmem:[%s2182 + $0x10] sm:$0xf]
        %v2188 = vld [vmem:[%s2182 + $0x14] sm:$0xf]
        %v2189 = vld [vmem:[%s2182 + $0x18] sm:$0xf]
        %v2190 = vld [vmem:[%s2182 + $0x1c] sm:$0xf]
        %v2191 = vld [vmem:[%s2182 + $0x20] sm:$0xf]
        %v2192 = vld [vmem:[%s2182 + $0x24] sm:$0xf]
        %v2193 = vld [vmem:[%s2182 + $0x28] sm:$0xf]
        %v2194 = vld [vmem:[%s2182 + $0x2c] sm:$0xf]
        %v2195 = vld [vmem:[%s2182 + $0x30] sm:$0xf]
        %v2196 = vld [vmem:[%s2182 + $0x34] sm:$0xf]
        %v2197 = vld [vmem:[%s2182 + $0x38] sm:$0xf]
        %v2198 = vld [vmem:[%s2182 + $0x3c] sm:$0xf]
        %s2199 = scalar_lea.vmem [#allocation11], 64
        %v2200 = vld [vmem:[%s2199] sm:$0xf]
        %v2201 = vld [vmem:[%s2199 + $0x4] sm:$0xf]
        %v2202 = vld [vmem:[%s2199 + $0x8] sm:$0xf]
        %v2203 = vld [vmem:[%s2199 + $0xc] sm:$0xf]
        %v2204 = vld [vmem:[%s2199 + $0x10] sm:$0xf]
        %v2205 = vld [vmem:[%s2199 + $0x14] sm:$0xf]
        %v2206 = vld [vmem:[%s2199 + $0x18] sm:$0xf]
        %v2207 = vld [vmem:[%s2199 + $0x1c] sm:$0xf]
        %v2208 = vld [vmem:[%s2199 + $0x20] sm:$0xf]
        %v2209 = vld [vmem:[%s2199 + $0x24] sm:$0xf]
        %v2210 = vld [vmem:[%s2199 + $0x28] sm:$0xf]
        %v2211 = vld [vmem:[%s2199 + $0x2c] sm:$0xf]
        %v2212 = vld [vmem:[%s2199 + $0x30] sm:$0xf]
        %v2213 = vld [vmem:[%s2199 + $0x34] sm:$0xf]
        %v2214 = vld [vmem:[%s2199 + $0x38] sm:$0xf]
        %v2215 = vld [vmem:[%s2199 + $0x3c] sm:$0xf]
        %v2232 = vunpack.c.l.b16 %v2200
        %v2233 = vunpack.c.l.b16 %v2201
        %v2234 = vunpack.c.l.b16 %v2202
        %v2235 = vunpack.c.l.b16 %v2203
        %v2236 = vunpack.c.l.b16 %v2204
        %v2237 = vunpack.c.l.b16 %v2205
        %v2238 = vunpack.c.l.b16 %v2206
        %v2239 = vunpack.c.l.b16 %v2207
        %v2240 = vunpack.c.l.b16 %v2208
        %v2241 = vunpack.c.l.b16 %v2209
        %v2242 = vunpack.c.l.b16 %v2210
        %v2243 = vunpack.c.l.b16 %v2211
        %v2244 = vunpack.c.l.b16 %v2212
        %v2245 = vunpack.c.l.b16 %v2213
        %v2246 = vunpack.c.l.b16 %v2214
        %v2247 = vunpack.c.l.b16 %v2215
        %v2248 = vpack.c.b16 %v2233, %v2232
        %v2249 = vpack.c.b16 %v2235, %v2234
        %v2250 = vpack.c.b16 %v2237, %v2236
        %v2251 = vpack.c.b16 %v2239, %v2238
        %v2252 = vpack.c.b16 %v2241, %v2240
        %v2253 = vpack.c.b16 %v2243, %v2242
        %v2254 = vpack.c.b16 %v2245, %v2244
        %v2255 = vpack.c.b16 %v2247, %v2246
        %2264 = vmatprep.subr.bf16.mxu0 0
        %2265 = vmatpush1.bf16.msra.mxu0 %v2248
        %2266 = vmatprep.subr.bf16.mxu0 0
        %2267 = vmatpush1.bf16.msra.mxu0 %v2249
        %2268 = vmatprep.subr.bf16.mxu0 0
        %2269 = vmatpush1.bf16.msra.mxu0 %v2250
        %2270 = vmatprep.subr.bf16.mxu0 0
        %2271 = vmatpush1.bf16.msra.mxu0 %v2251
        %2272 = vmatprep.subr.bf16.mxu0 0
        %2273 = vmatpush1.bf16.msra.mxu0 %v2252
        %2274 = vmatprep.subr.bf16.mxu0 0
        %2275 = vmatpush1.bf16.msra.mxu0 %v2253
        %2276 = vmatprep.subr.bf16.mxu0 0
        %2277 = vmatpush1.bf16.msra.mxu0 %v2254
        %2278 = vmatprep.subr.bf16.mxu0 0
        %2279 = vmatpush1.bf16.msra.mxu0 %v2255
        %2280 = vmatprep.subr.bf16.mxu0 0
        %2281 = vmatpush1.bf16.msra.mxu0 0
        %2282 = vmatprep.subr.bf16.mxu0 0
        %2283 = vmatpush1.bf16.msra.mxu0 0
        %2284 = vmatprep.subr.bf16.mxu0 0
        %2285 = vmatpush1.bf16.msra.mxu0 0
        %2286 = vmatprep.subr.bf16.mxu0 0
        %2287 = vmatpush1.bf16.msra.mxu0 0
        %2288 = vmatprep.subr.bf16.mxu0 0
        %2289 = vmatpush1.bf16.msra.mxu0 0
        %2290 = vmatprep.subr.bf16.mxu0 0
        %2291 = vmatpush1.bf16.msra.mxu0 0
        %2292 = vmatprep.subr.bf16.mxu0 0
        %2293 = vmatpush1.bf16.msra.mxu0 0
        %2294 = vmatprep.subr.bf16.mxu0 0
        %2295 = vmatpush1.bf16.msra.mxu0 0
        %2296 = vmatprep.mubr.bf16.mxu0 0
        %2297 = vmatmul.mubr.bf16.gmra.mrb[0].mxu0 %v1040
        %v2298 = vpop.f32.mrb[0].mxu0
        %v2299 = vadd.f32 0.0, %v2298
        %v2300 = vpop.f32.mrb[0].mxu0
        %v2301 = vpop.f32.mrb[0].mxu0
        %v2302 = vadd.f32 0.0, %v2301
        %v2303 = vpop.f32.mrb[0].mxu0
        %2304 = vmatprep.mubr.bf16.mxu0 0
        %2305 = vmatmul.mubr.bf16.gmra.mrb[0].mxu0 %v1041
        %v2306 = vpop.f32.mrb[0].mxu0
        %v2307 = vadd.f32 0.0, %v2306
        %v2308 = vpop.f32.mrb[0].mxu0
        %v2309 = vpop.f32.mrb[0].mxu0
        %v2310 = vadd.f32 0.0, %v2309
        %v2311 = vpop.f32.mrb[0].mxu0
        %2312 = vmatprep.mubr.bf16.mxu0 0
        %2313 = vmatmul.mubr.bf16.gmra.mrb[0].mxu0 %v1042
        %v2314 = vpop.f32.mrb[0].mxu0
        %v2315 = vadd.f32 0.0, %v2314
        %v2316 = vpop.f32.mrb[0].mxu0
        %v2317 = vpop.f32.mrb[0].mxu0
        %v2318 = vadd.f32 0.0, %v2317
        %v2319 = vpop.f32.mrb[0].mxu0
        %2320 = vmatprep.mubr.bf16.mxu0 0
        %2321 = vmatmul.mubr.bf16.gmra.mrb[0].mxu0 %v1043
        %v2322 = vpop.f32.mrb[0].mxu0
        %v2323 = vadd.f32 0.0, %v2322
        %v2324 = vpop.f32.mrb[0].mxu0
        %v2325 = vpop.f32.mrb[0].mxu0
        %v2326 = vadd.f32 0.0, %v2325
        %v2327 = vpop.f32.mrb[0].mxu0
        %2328 = vmatprep.mubr.bf16.mxu0 0
        %2329 = vmatmul.mubr.bf16.gmra.mrb[0].mxu0 %v1044
        %v2330 = vpop.f32.mrb[0].mxu0
        %v2331 = vadd.f32 0.0, %v2330
        %v2332 = vpop.f32.mrb[0].mxu0
        %v2333 = vpop.f32.mrb[0].mxu0
        %v2334 = vadd.f32 0.0, %v2333
        %v2335 = vpop.f32.mrb[0].mxu0
        %2336 = vmatprep.mubr.bf16.mxu0 0
        %2337 = vmatmul.mubr.bf16.gmra.mrb[0].mxu0 %v1045
        %v2338 = vpop.f32.mrb[0].mxu0
        %v2339 = vadd.f32 0.0, %v2338
        %v2340 = vpop.f32.mrb[0].mxu0
        %v2341 = vpop.f32.mrb[0].mxu0
        %v2342 = vadd.f32 0.0, %v2341
        %v2343 = vpop.f32.mrb[0].mxu0
        %2344 = vmatprep.mubr.bf16.mxu0 0
        %2345 = vmatmul.mubr.bf16.gmra.mrb[0].mxu0 %v1046
        %v2346 = vpop.f32.mrb[0].mxu0
        %v2347 = vadd.f32 0.0, %v2346
        %v2348 = vpop.f32.mrb[0].mxu0
        %v2349 = vpop.f32.mrb[0].mxu0
        %v2350 = vadd.f32 0.0, %v2349
        %v2351 = vpop.f32.mrb[0].mxu0
        %2352 = vmatprep.mubr.bf16.mxu0 0
        %2353 = vmatmul.mubr.bf16.gmra.mrb[0].mxu0 %v1047
        %v2354 = vpop.f32.mrb[0].mxu0
        %v2355 = vadd.f32 0.0, %v2354
        %v2356 = vpop.f32.mrb[0].mxu0
        %v2357 = vpop.f32.mrb[0].mxu0
        %v2358 = vadd.f32 0.0, %v2357
        %v2359 = vpop.f32.mrb[0].mxu0
        %2360 = vdwg.mxu0
        %v2377 = vunpack.c.l.b16 %v2183
        %v2378 = vunpack.c.l.b16 %v2184
        %v2379 = vunpack.c.l.b16 %v2185
        %v2380 = vunpack.c.l.b16 %v2186
        %v2381 = vunpack.c.l.b16 %v2187
        %v2382 = vunpack.c.l.b16 %v2188
        %v2383 = vunpack.c.l.b16 %v2189
        %v2384 = vunpack.c.l.b16 %v2190
        %v2385 = vunpack.c.l.b16 %v2191
        %v2386 = vunpack.c.l.b16 %v2192
        %v2387 = vunpack.c.l.b16 %v2193
        %v2388 = vunpack.c.l.b16 %v2194
        %v2389 = vunpack.c.l.b16 %v2195
        %v2390 = vunpack.c.l.b16 %v2196
        %v2391 = vunpack.c.l.b16 %v2197
        %v2392 = vunpack.c.l.b16 %v2198
        %v2393 = vpack.c.b16 %v2378, %v2377
        %v2394 = vpack.c.b16 %v2380, %v2379
        %v2395 = vpack.c.b16 %v2382, %v2381
        %v2396 = vpack.c.b16 %v2384, %v2383
        %v2397 = vpack.c.b16 %v2386, %v2385
        %v2398 = vpack.c.b16 %v2388, %v2387
        %v2399 = vpack.c.b16 %v2390, %v2389
        %v2400 = vpack.c.b16 %v2392, %v2391
        %2409 = vmatprep.subr.bf16.mxu0 0
        %2410 = vmatpush1.bf16.msra.mxu0 %v2393
        %2411 = vmatprep.subr.bf16.mxu0 0
        %2412 = vmatpush1.bf16.msra.mxu0 %v2394
        %2413 = vmatprep.subr.bf16.mxu0 0
        %2414 = vmatpush1.bf16.msra.mxu0 %v2395
        %2415 = vmatprep.subr.bf16.mxu0 0
        %2416 = vmatpush1.bf16.msra.mxu0 %v2396
        %2417 = vmatprep.subr.bf16.mxu0 0
        %2418 = vmatpush1.bf16.msra.mxu0 %v2397
        %2419 = vmatprep.subr.bf16.mxu0 0
        %2420 = vmatpush1.bf16.msra.mxu0 %v2398
        %2421 = vmatprep.subr.bf16.mxu0 0
        %2422 = vmatpush1.bf16.msra.mxu0 %v2399
        %2423 = vmatprep.subr.bf16.mxu0 0
        %2424 = vmatpush1.bf16.msra.mxu0 %v2400
        %2425 = vmatprep.subr.bf16.mxu0 0
        %2426 = vmatpush1.bf16.msra.mxu0 0
        %2427 = vmatprep.subr.bf16.mxu0 0
        %2428 = vmatpush1.bf16.msra.mxu0 0
        %2429 = vmatprep.subr.bf16.mxu0 0
        %2430 = vmatpush1.bf16.msra.mxu0 0
        %2431 = vmatprep.subr.bf16.mxu0 0
        %2432 = vmatpush1.bf16.msra.mxu0 0
        %2433 = vmatprep.subr.bf16.mxu0 0
        %2434 = vmatpush1.bf16.msra.mxu0 0
        %2435 = vmatprep.subr.bf16.mxu0 0
        %2436 = vmatpush1.bf16.msra.mxu0 0
        %2437 = vmatprep.subr.bf16.mxu0 0
        %2438 = vmatpush1.bf16.msra.mxu0 0
        %2439 = vmatprep.subr.bf16.mxu0 0
        %2440 = vmatpush1.bf16.msra.mxu0 0
        %2441 = vmatprep.mubr.bf16.mxu0 0
        %2442 = vmatmul.mubr.bf16.gmra.mrb[0].mxu0 %v2174
        %v2443 = vpop.f32.mrb[0].mxu0
        %v2444 = vadd.f32 %v2299, %v2443
        %v2445 = vpop.f32.mrb[0].mxu0
        %v2446 = vpop.f32.mrb[0].mxu0
        %v2447 = vadd.f32 %v2302, %v2446
        %v2448 = vpop.f32.mrb[0].mxu0
        %2449 = vmatprep.mubr.bf16.mxu0 0
        %2450 = vmatmul.mubr.bf16.gmra.mrb[0].mxu0 %v2175
        %v2451 = vpop.f32.mrb[0].mxu0
        %v2452 = vadd.f32 %v2307, %v2451
        %v2453 = vpop.f32.mrb[0].mxu0
        %v2454 = vpop.f32.mrb[0].mxu0
        %v2455 = vadd.f32 %v2310, %v2454
        %v2456 = vpop.f32.mrb[0].mxu0
        %2457 = vmatprep.mubr.bf16.mxu0 0
        %2458 = vmatmul.mubr.bf16.gmra.mrb[0].mxu0 %v2176
        %v2459 = vpop.f32.mrb[0].mxu0
        %v2460 = vadd.f32 %v2315, %v2459
        %v2461 = vpop.f32.mrb[0].mxu0
        %v2462 = vpop.f32.mrb[0].mxu0
        %v2463 = vadd.f32 %v2318, %v2462
        %v2464 = vpop.f32.mrb[0].mxu0
        %2465 = vmatprep.mubr.bf16.mxu0 0
        %2466 = vmatmul.mubr.bf16.gmra.mrb[0].mxu0 %v2177
        %v2467 = vpop.f32.mrb[0].mxu0
        %v2468 = vadd.f32 %v2323, %v2467
        %v2469 = vpop.f32.mrb[0].mxu0
        %v2470 = vpop.f32.mrb[0].mxu0
        %v2471 = vadd.f32 %v2326, %v2470
        %v2472 = vpop.f32.mrb[0].mxu0
        %2473 = vmatprep.mubr.bf16.mxu0 0
        %2474 = vmatmul.mubr.bf16.gmra.mrb[0].mxu0 %v2178
        %v2475 = vpop.f32.mrb[0].mxu0
        %v2476 = vadd.f32 %v2331, %v2475
        %v2477 = vpop.f32.mrb[0].mxu0
        %v2478 = vpop.f32.mrb[0].mxu0
        %v2479 = vadd.f32 %v2334, %v2478
        %v2480 = vpop.f32.mrb[0].mxu0
        %2481 = vmatprep.mubr.bf16.mxu0 0
        %2482 = vmatmul.mubr.bf16.gmra.mrb[0].mxu0 %v2179
        %v2483 = vpop.f32.mrb[0].mxu0
        %v2484 = vadd.f32 %v2339, %v2483
        %v2485 = vpop.f32.mrb[0].mxu0
        %v2486 = vpop.f32.mrb[0].mxu0
        %v2487 = vadd.f32 %v2342, %v2486
        %v2488 = vpop.f32.mrb[0].mxu0
        %2489 = vmatprep.mubr.bf16.mxu0 0
        %2490 = vmatmul.mubr.bf16.gmra.mrb[0].mxu0 %v2180
        %v2491 = vpop.f32.mrb[0].mxu0
        %v2492 = vadd.f32 %v2347, %v2491
        %v2493 = vpop.f32.mrb[0].mxu0
        %v2494 = vpop.f32.mrb[0].mxu0
        %v2495 = vadd.f32 %v2350, %v2494
        %v2496 = vpop.f32.mrb[0].mxu0
        %2497 = vmatprep.mubr.bf16.mxu0 0
        %2498 = vmatmul.mubr.bf16.gmra.mrb[0].mxu0 %v2181
        %v2499 = vpop.f32.mrb[0].mxu0
        %v2500 = vadd.f32 %v2355, %v2499
        %v2501 = vpop.f32.mrb[0].mxu0
        %v2502 = vpop.f32.mrb[0].mxu0
        %v2503 = vadd.f32 %v2358, %v2502
        %v2504 = vpop.f32.mrb[0].mxu0
        %2505 = vdwg.mxu0
        %s2506 = scalar_lea.vmem [#allocation13], 1
        %v2507 = vld [vmem:[%s2506] sm:$0x1]
        %v2509 = vlaneseq
        %v2510 = vshrl.u32 %v2509, 7
        %v2511 = vsub.s32 0, %v2510
        %v2512 = vrot.slane %v2507, %v2511
        %v2514 = vadd.f32 %v2444, %v2512
        %v2515 = vadd.f32 %v2447, %v2512
        %v2516 = vadd.f32 %v2452, %v2512
        %v2517 = vadd.f32 %v2455, %v2512
        %v2518 = vadd.f32 %v2460, %v2512
        %v2519 = vadd.f32 %v2463, %v2512
        %v2520 = vadd.f32 %v2468, %v2512
        %v2521 = vadd.f32 %v2471, %v2512
        %v2522 = vadd.f32 %v2476, %v2512
        %v2523 = vadd.f32 %v2479, %v2512
        %v2524 = vadd.f32 %v2484, %v2512
        %v2525 = vadd.f32 %v2487, %v2512
        %v2526 = vadd.f32 %v2492, %v2512
        %v2527 = vadd.f32 %v2495, %v2512
        %v2528 = vadd.f32 %v2500, %v2512
        %v2529 = vadd.f32 %v2503, %v2512
        %v2530 = vadd.f32 %v2514, %v1786
        %v2531 = vadd.f32 %v2515, %v1787
        %v2532 = vadd.f32 %v2516, %v1788
        %v2533 = vadd.f32 %v2517, %v1789
        %v2534 = vadd.f32 %v2518, %v1790
        %v2535 = vadd.f32 %v2519, %v1791
        %v2536 = vadd.f32 %v2520, %v1792
        %v2537 = vadd.f32 %v2521, %v1793
        %v2538 = vadd.f32 %v2522, %v1794
        %v2539 = vadd.f32 %v2523, %v1795
        %v2540 = vadd.f32 %v2524, %v1796
        %v2541 = vadd.f32 %v2525, %v1797
        %v2542 = vadd.f32 %v2526, %v1798
        %v2543 = vadd.f32 %v2527, %v1799
        %v2544 = vadd.f32 %v2528, %v1800
        %v2545 = vadd.f32 %v2529, %v1801
        %v2546 = vmax.f32 %v2530, 0.0
        %v2547 = vmax.f32 %v2531, 0.0
        %v2548 = vmax.f32 %v2532, 0.0
        %v2549 = vmax.f32 %v2533, 0.0
        %v2550 = vmax.f32 %v2534, 0.0
        %v2551 = vmax.f32 %v2535, 0.0
        %v2552 = vmax.f32 %v2536, 0.0
        %v2553 = vmax.f32 %v2537, 0.0
        %v2554 = vmax.f32 %v2538, 0.0
        %v2555 = vmax.f32 %v2539, 0.0
        %v2556 = vmax.f32 %v2540, 0.0
        %v2557 = vmax.f32 %v2541, 0.0
        %v2558 = vmax.f32 %v2542, 0.0
        %v2559 = vmax.f32 %v2543, 0.0
        %v2560 = vmax.f32 %v2544, 0.0
        %v2561 = vmax.f32 %v2545, 0.0
        %v2562 = vpack.c.bf16 %v2547, %v2546
        %v2563 = vpack.c.bf16 %v2549, %v2548
        %v2564 = vpack.c.bf16 %v2551, %v2550
        %v2565 = vpack.c.bf16 %v2553, %v2552
        %v2566 = vpack.c.bf16 %v2555, %v2554
        %v2567 = vpack.c.bf16 %v2557, %v2556
        %v2568 = vpack.c.bf16 %v2559, %v2558
        %v2569 = vpack.c.bf16 %v2561, %v2560
        %v2570 = vld [vmem:[#allocation14] sm:$0xf]
        %v2571 = vld [vmem:[#allocation14 + $0x4] sm:$0xf]
        %v2572 = vld [vmem:[#allocation14 + $0x8] sm:$0xf]
        %v2573 = vld [vmem:[#allocation14 + $0xc] sm:$0xf]
        %v2574 = vld [vmem:[#allocation14 + $0x10] sm:$0xf]
        %v2575 = vld [vmem:[#allocation14 + $0x14] sm:$0xf]
        %v2576 = vld [vmem:[#allocation14 + $0x18] sm:$0xf]
        %v2577 = vld [vmem:[#allocation14 + $0x1c] sm:$0xf]
        %v2578 = vld [vmem:[#allocation14 + $0x20] sm:$0xf]
        %v2579 = vld [vmem:[#allocation14 + $0x24] sm:$0xf]
        %v2580 = vld [vmem:[#allocation14 + $0x28] sm:$0xf]
        %v2581 = vld [vmem:[#allocation14 + $0x2c] sm:$0xf]
        %v2582 = vld [vmem:[#allocation14 + $0x30] sm:$0xf]
        %v2583 = vld [vmem:[#allocation14 + $0x34] sm:$0xf]
        %v2584 = vld [vmem:[#allocation14 + $0x38] sm:$0xf]
        %v2585 = vld [vmem:[#allocation14 + $0x3c] sm:$0xf]
        %v2586 = vld [vmem:[%s13] sm:$0xf]
        %v2587 = vld [vmem:[%s13 + $0x4] sm:$0xf]
        %v2588 = vld [vmem:[%s13 + $0x8] sm:$0xf]
        %v2589 = vld [vmem:[%s13 + $0xc] sm:$0xf]
        %v2590 = vld [vmem:[%s13 + $0x10] sm:$0xf]
        %v2591 = vld [vmem:[%s13 + $0x14] sm:$0xf]
        %v2592 = vld [vmem:[%s13 + $0x18] sm:$0xf]
        %v2593 = vld [vmem:[%s13 + $0x1c] sm:$0xf]
        %v2594 = vld [vmem:[%s13 + $0x20] sm:$0xf]
        %v2595 = vld [vmem:[%s13 + $0x24] sm:$0xf]
        %v2596 = vld [vmem:[%s13 + $0x28] sm:$0xf]
        %v2597 = vld [vmem:[%s13 + $0x2c] sm:$0xf]
        %v2598 = vld [vmem:[%s13 + $0x30] sm:$0xf]
        %v2599 = vld [vmem:[%s13 + $0x34] sm:$0xf]
        %v2600 = vld [vmem:[%s13 + $0x38] sm:$0xf]
        %v2601 = vld [vmem:[%s13 + $0x3c] sm:$0xf]
        %v2618 = vunpack.c.l.b16 %v2586
        %v2619 = vunpack.c.l.b16 %v2587
        %v2620 = vunpack.c.l.b16 %v2588
        %v2621 = vunpack.c.l.b16 %v2589
        %v2622 = vunpack.c.l.b16 %v2590
        %v2623 = vunpack.c.l.b16 %v2591
        %v2624 = vunpack.c.l.b16 %v2592
        %v2625 = vunpack.c.l.b16 %v2593
        %v2626 = vunpack.c.l.b16 %v2594
        %v2627 = vunpack.c.l.b16 %v2595
        %v2628 = vunpack.c.l.b16 %v2596
        %v2629 = vunpack.c.l.b16 %v2597
        %v2630 = vunpack.c.l.b16 %v2598
        %v2631 = vunpack.c.l.b16 %v2599
        %v2632 = vunpack.c.l.b16 %v2600
        %v2633 = vunpack.c.l.b16 %v2601
        %v2634 = vpack.c.b16 %v2619, %v2618
        %v2635 = vpack.c.b16 %v2621, %v2620
        %v2636 = vpack.c.b16 %v2623, %v2622
        %v2637 = vpack.c.b16 %v2625, %v2624
        %v2638 = vpack.c.b16 %v2627, %v2626
        %v2639 = vpack.c.b16 %v2629, %v2628
        %v2640 = vpack.c.b16 %v2631, %v2630
        %v2641 = vpack.c.b16 %v2633, %v2632
        %2650 = vmatprep.subr.bf16.mxu0 0
        %2651 = vmatpush1.bf16.msra.mxu0 %v2634
        %2652 = vmatprep.subr.bf16.mxu0 0
        %2653 = vmatpush1.bf16.msra.mxu0 %v2635
        %2654 = vmatprep.subr.bf16.mxu0 0
        %2655 = vmatpush1.bf16.msra.mxu0 %v2636
        %2656 = vmatprep.subr.bf16.mxu0 0
        %2657 = vmatpush1.bf16.msra.mxu0 %v2637
        %2658 = vmatprep.subr.bf16.mxu0 0
        %2659 = vmatpush1.bf16.msra.mxu0 %v2638
        %2660 = vmatprep.subr.bf16.mxu0 0
        %2661 = vmatpush1.bf16.msra.mxu0 %v2639
        %2662 = vmatprep.subr.bf16.mxu0 0
        %2663 = vmatpush1.bf16.msra.mxu0 %v2640
        %2664 = vmatprep.subr.bf16.mxu0 0
        %2665 = vmatpush1.bf16.msra.mxu0 %v2641
        %2666 = vmatprep.subr.bf16.mxu0 0
        %2667 = vmatpush1.bf16.msra.mxu0 0
        %2668 = vmatprep.subr.bf16.mxu0 0
        %2669 = vmatpush1.bf16.msra.mxu0 0
        %2670 = vmatprep.subr.bf16.mxu0 0
        %2671 = vmatpush1.bf16.msra.mxu0 0
        %2672 = vmatprep.subr.bf16.mxu0 0
        %2673 = vmatpush1.bf16.msra.mxu0 0
        %2674 = vmatprep.subr.bf16.mxu0 0
        %2675 = vmatpush1.bf16.msra.mxu0 0
        %2676 = vmatprep.subr.bf16.mxu0 0
        %2677 = vmatpush1.bf16.msra.mxu0 0
        %2678 = vmatprep.subr.bf16.mxu0 0
        %2679 = vmatpush1.bf16.msra.mxu0 0
        %2680 = vmatprep.subr.bf16.mxu0 0
        %2681 = vmatpush1.bf16.msra.mxu0 0
        %2682 = vmatprep.mubr.bf16.mxu0 0
        %2683 = vmatmul.mubr.bf16.gmra.mrb[0].mxu0 %v1040
        %v2684 = vpop.f32.mrb[0].mxu0
        %v2685 = vadd.f32 0.0, %v2684
        %v2686 = vpop.f32.mrb[0].mxu0
        %v2687 = vpop.f32.mrb[0].mxu0
        %v2688 = vadd.f32 0.0, %v2687
        %v2689 = vpop.f32.mrb[0].mxu0
        %2690 = vmatprep.mubr.bf16.mxu0 0
        %2691 = vmatmul.mubr.bf16.gmra.mrb[0].mxu0 %v1041
        %v2692 = vpop.f32.mrb[0].mxu0
        %v2693 = vadd.f32 0.0, %v2692
        %v2694 = vpop.f32.mrb[0].mxu0
        %v2695 = vpop.f32.mrb[0].mxu0
        %v2696 = vadd.f32 0.0, %v2695
        %v2697 = vpop.f32.mrb[0].mxu0
        %2698 = vmatprep.mubr.bf16.mxu0 0
        %2699 = vmatmul.mubr.bf16.gmra.mrb[0].mxu0 %v1042
        %v2700 = vpop.f32.mrb[0].mxu0
        %v2701 = vadd.f32 0.0, %v2700
        %v2702 = vpop.f32.mrb[0].mxu0
        %v2703 = vpop.f32.mrb[0].mxu0
        %v2704 = vadd.f32 0.0, %v2703
        %v2705 = vpop.f32.mrb[0].mxu0
        %2706 = vmatprep.mubr.bf16.mxu0 0
        %2707 = vmatmul.mubr.bf16.gmra.mrb[0].mxu0 %v1043
        %v2708 = vpop.f32.mrb[0].mxu0
        %v2709 = vadd.f32 0.0, %v2708
        %v2710 = vpop.f32.mrb[0].mxu0
        %v2711 = vpop.f32.mrb[0].mxu0
        %v2712 = vadd.f32 0.0, %v2711
        %v2713 = vpop.f32.mrb[0].mxu0
        %2714 = vmatprep.mubr.bf16.mxu0 0
        %2715 = vmatmul.mubr.bf16.gmra.mrb[0].mxu0 %v1044
        %v2716 = vpop.f32.mrb[0].mxu0
        %v2717 = vadd.f32 0.0, %v2716
        %v2718 = vpop.f32.mrb[0].mxu0
        %v2719 = vpop.f32.mrb[0].mxu0
        %v2720 = vadd.f32 0.0, %v2719
        %v2721 = vpop.f32.mrb[0].mxu0
        %2722 = vmatprep.mubr.bf16.mxu0 0
        %2723 = vmatmul.mubr.bf16.gmra.mrb[0].mxu0 %v1045
        %v2724 = vpop.f32.mrb[0].mxu0
        %v2725 = vadd.f32 0.0, %v2724
        %v2726 = vpop.f32.mrb[0].mxu0
        %v2727 = vpop.f32.mrb[0].mxu0
        %v2728 = vadd.f32 0.0, %v2727
        %v2729 = vpop.f32.mrb[0].mxu0
        %2730 = vmatprep.mubr.bf16.mxu0 0
        %2731 = vmatmul.mubr.bf16.gmra.mrb[0].mxu0 %v1046
        %v2732 = vpop.f32.mrb[0].mxu0
        %v2733 = vadd.f32 0.0, %v2732
        %v2734 = vpop.f32.mrb[0].mxu0
        %v2735 = vpop.f32.mrb[0].mxu0
        %v2736 = vadd.f32 0.0, %v2735
        %v2737 = vpop.f32.mrb[0].mxu0
        %2738 = vmatprep.mubr.bf16.mxu0 0
        %2739 = vmatmul.mubr.bf16.gmra.mrb[0].mxu0 %v1047
        %v2740 = vpop.f32.mrb[0].mxu0
        %v2741 = vadd.f32 0.0, %v2740
        %v2742 = vpop.f32.mrb[0].mxu0
        %v2743 = vpop.f32.mrb[0].mxu0
        %v2744 = vadd.f32 0.0, %v2743
        %v2745 = vpop.f32.mrb[0].mxu0
        %2746 = vdwg.mxu0
        %v2763 = vunpack.c.l.b16 %v2570
        %v2764 = vunpack.c.l.b16 %v2571
        %v2765 = vunpack.c.l.b16 %v2572
        %v2766 = vunpack.c.l.b16 %v2573
        %v2767 = vunpack.c.l.b16 %v2574
        %v2768 = vunpack.c.l.b16 %v2575
        %v2769 = vunpack.c.l.b16 %v2576
        %v2770 = vunpack.c.l.b16 %v2577
        %v2771 = vunpack.c.l.b16 %v2578
        %v2772 = vunpack.c.l.b16 %v2579
        %v2773 = vunpack.c.l.b16 %v2580
        %v2774 = vunpack.c.l.b16 %v2581
        %v2775 = vunpack.c.l.b16 %v2582
        %v2776 = vunpack.c.l.b16 %v2583
        %v2777 = vunpack.c.l.b16 %v2584
        %v2778 = vunpack.c.l.b16 %v2585
        %v2779 = vpack.c.b16 %v2764, %v2763
        %v2780 = vpack.c.b16 %v2766, %v2765
        %v2781 = vpack.c.b16 %v2768, %v2767
        %v2782 = vpack.c.b16 %v2770, %v2769
        %v2783 = vpack.c.b16 %v2772, %v2771
        %v2784 = vpack.c.b16 %v2774, %v2773
        %v2785 = vpack.c.b16 %v2776, %v2775
        %v2786 = vpack.c.b16 %v2778, %v2777
        %2795 = vmatprep.subr.bf16.mxu0 0
        %2796 = vmatpush1.bf16.msra.mxu0 %v2779
        %2797 = vmatprep.subr.bf16.mxu0 0
        %2798 = vmatpush1.bf16.msra.mxu0 %v2780
        %2799 = vmatprep.subr.bf16.mxu0 0
        %2800 = vmatpush1.bf16.msra.mxu0 %v2781
        %2801 = vmatprep.subr.bf16.mxu0 0
        %2802 = vmatpush1.bf16.msra.mxu0 %v2782
        %2803 = vmatprep.subr.bf16.mxu0 0
        %2804 = vmatpush1.bf16.msra.mxu0 %v2783
        %2805 = vmatprep.subr.bf16.mxu0 0
        %2806 = vmatpush1.bf16.msra.mxu0 %v2784
        %2807 = vmatprep.subr.bf16.mxu0 0
        %2808 = vmatpush1.bf16.msra.mxu0 %v2785
        %2809 = vmatprep.subr.bf16.mxu0 0
        %2810 = vmatpush1.bf16.msra.mxu0 %v2786
        %2811 = vmatprep.subr.bf16.mxu0 0
        %2812 = vmatpush1.bf16.msra.mxu0 0
        %2813 = vmatprep.subr.bf16.mxu0 0
        %2814 = vmatpush1.bf16.msra.mxu0 0
        %2815 = vmatprep.subr.bf16.mxu0 0
        %2816 = vmatpush1.bf16.msra.mxu0 0
        %2817 = vmatprep.subr.bf16.mxu0 0
        %2818 = vmatpush1.bf16.msra.mxu0 0
        %2819 = vmatprep.subr.bf16.mxu0 0
        %2820 = vmatpush1.bf16.msra.mxu0 0
        %2821 = vmatprep.subr.bf16.mxu0 0
        %2822 = vmatpush1.bf16.msra.mxu0 0
        %2823 = vmatprep.subr.bf16.mxu0 0
        %2824 = vmatpush1.bf16.msra.mxu0 0
        %2825 = vmatprep.subr.bf16.mxu0 0
        %2826 = vmatpush1.bf16.msra.mxu0 0
        %2827 = vmatprep.mubr.bf16.mxu0 0
        %2828 = vmatmul.mubr.bf16.gmra.mrb[0].mxu0 %v2562
        %v2829 = vpop.f32.mrb[0].mxu0
        %v2830 = vadd.f32 %v2685, %v2829
        %v2831 = vpop.f32.mrb[0].mxu0
        %v2832 = vpop.f32.mrb[0].mxu0
        %v2833 = vadd.f32 %v2688, %v2832
        %v2834 = vpop.f32.mrb[0].mxu0
        %2835 = vmatprep.mubr.bf16.mxu0 0
        %2836 = vmatmul.mubr.bf16.gmra.mrb[0].mxu0 %v2563
        %v2837 = vpop.f32.mrb[0].mxu0
        %v2838 = vadd.f32 %v2693, %v2837
        %v2839 = vpop.f32.mrb[0].mxu0
        %v2840 = vpop.f32.mrb[0].mxu0
        %v2841 = vadd.f32 %v2696, %v2840
        %v2842 = vpop.f32.mrb[0].mxu0
        %2843 = vmatprep.mubr.bf16.mxu0 0
        %2844 = vmatmul.mubr.bf16.gmra.mrb[0].mxu0 %v2564
        %v2845 = vpop.f32.mrb[0].mxu0
        %v2846 = vadd.f32 %v2701, %v2845
        %v2847 = vpop.f32.mrb[0].mxu0
        %v2848 = vpop.f32.mrb[0].mxu0
        %v2849 = vadd.f32 %v2704, %v2848
        %v2850 = vpop.f32.mrb[0].mxu0
        %2851 = vmatprep.mubr.bf16.mxu0 0
        %2852 = vmatmul.mubr.bf16.gmra.mrb[0].mxu0 %v2565
        %v2853 = vpop.f32.mrb[0].mxu0
        %v2854 = vadd.f32 %v2709, %v2853
        %v2855 = vpop.f32.mrb[0].mxu0
        %v2856 = vpop.f32.mrb[0].mxu0
        %v2857 = vadd.f32 %v2712, %v2856
        %v2858 = vpop.f32.mrb[0].mxu0
        %2859 = vmatprep.mubr.bf16.mxu0 0
        %2860 = vmatmul.mubr.bf16.gmra.mrb[0].mxu0 %v2566
        %v2861 = vpop.f32.mrb[0].mxu0
        %v2862 = vadd.f32 %v2717, %v2861
        %v2863 = vpop.f32.mrb[0].mxu0
        %v2864 = vpop.f32.mrb[0].mxu0
        %v2865 = vadd.f32 %v2720, %v2864
        %v2866 = vpop.f32.mrb[0].mxu0
        %2867 = vmatprep.mubr.bf16.mxu0 0
        %2868 = vmatmul.mubr.bf16.gmra.mrb[0].mxu0 %v2567
        %v2869 = vpop.f32.mrb[0].mxu0
        %v2870 = vadd.f32 %v2725, %v2869
        %v2871 = vpop.f32.mrb[0].mxu0
        %v2872 = vpop.f32.mrb[0].mxu0
        %v2873 = vadd.f32 %v2728, %v2872
        %v2874 = vpop.f32.mrb[0].mxu0
        %2875 = vmatprep.mubr.bf16.mxu0 0
        %2876 = vmatmul.mubr.bf16.gmra.mrb[0].mxu0 %v2568
        %v2877 = vpop.f32.mrb[0].mxu0
        %v2878 = vadd.f32 %v2733, %v2877
        %v2879 = vpop.f32.mrb[0].mxu0
        %v2880 = vpop.f32.mrb[0].mxu0
        %v2881 = vadd.f32 %v2736, %v2880
        %v2882 = vpop.f32.mrb[0].mxu0
        %2883 = vmatprep.mubr.bf16.mxu0 0
        %2884 = vmatmul.mubr.bf16.gmra.mrb[0].mxu0 %v2569
        %v2885 = vpop.f32.mrb[0].mxu0
        %v2886 = vadd.f32 %v2741, %v2885
        %v2887 = vpop.f32.mrb[0].mxu0
        %v2888 = vpop.f32.mrb[0].mxu0
        %v2889 = vadd.f32 %v2744, %v2888
        %v2890 = vpop.f32.mrb[0].mxu0
        %2891 = vdwg.mxu0
        %v2892 = vld [vmem:[%s14] sm:$0x1]
        %v2894 = vlaneseq
        %v2895 = vshrl.u32 %v2894, 7
        %v2896 = vsub.s32 0, %v2895
        %v2897 = vrot.slane %v2892, %v2896
        %v2899 = vadd.f32 %v2830, %v2897
        %v2900 = vadd.f32 %v2833, %v2897
        %v2901 = vadd.f32 %v2838, %v2897
        %v2902 = vadd.f32 %v2841, %v2897
        %v2903 = vadd.f32 %v2846, %v2897
        %v2904 = vadd.f32 %v2849, %v2897
        %v2905 = vadd.f32 %v2854, %v2897
        %v2906 = vadd.f32 %v2857, %v2897
        %v2907 = vadd.f32 %v2862, %v2897
        %v2908 = vadd.f32 %v2865, %v2897
        %v2909 = vadd.f32 %v2870, %v2897
        %v2910 = vadd.f32 %v2873, %v2897
        %v2911 = vadd.f32 %v2878, %v2897
        %v2912 = vadd.f32 %v2881, %v2897
        %v2913 = vadd.f32 %v2886, %v2897
        %v2914 = vadd.f32 %v2889, %v2897
        %2915 = vst [vmem:[%s615] sm:$0xff] %v2899
        %2916 = vst [vmem:[%s615 + $0x8] sm:$0xff] %v2900
        %2917 = vst [vmem:[%s615 + $0x10] sm:$0xff] %v2901
        %2918 = vst [vmem:[%s615 + $0x18] sm:$0xff] %v2902
        %2919 = vst [vmem:[%s615 + $0x20] sm:$0xff] %v2903
        %2920 = vst [vmem:[%s615 + $0x28] sm:$0xff] %v2904
        %2921 = vst [vmem:[%s615 + $0x30] sm:$0xff] %v2905
        %2922 = vst [vmem:[%s615 + $0x38] sm:$0xff] %v2906
        %2923 = vst [vmem:[%s615 + $0x40] sm:$0xff] %v2907
        %2924 = vst [vmem:[%s615 + $0x48] sm:$0xff] %v2908
        %2925 = vst [vmem:[%s615 + $0x50] sm:$0xff] %v2909
        %2926 = vst [vmem:[%s615 + $0x58] sm:$0xff] %v2910
        %2927 = vst [vmem:[%s615 + $0x60] sm:$0xff] %v2911
        %2928 = vst [vmem:[%s615 + $0x68] sm:$0xff] %v2912
        %2929 = vst [vmem:[%s615 + $0x70] sm:$0xff] %v2913
        %2930 = vst [vmem:[%s615 + $0x78] sm:$0xff] %v2914
        %s2931 = sand.u32 %s367, 1
        %s2932 = scalar_lea.sflag [#allocation4], %s2931
        %s2933 = sand.u32 %s367, 1
        %s2934 = smul.addr %s2933, 128
        %s2935 = scalar_lea.vmem [#allocation16], %s2934
        // Predicated region
        $region113: #{tpu_custom_call.1} parent=79 // pred_check
          %p2936 = pneg %p377
        $region114: #{tpu_custom_call.1} parent=79 // pred_check_branch
          %2938 = sbr.rel (%p2936) target = $region116
        $region115: #{tpu_custom_call.1} parent=79 // pred_region
          %s2939 = smul.u32 16, %s34
          %s2941 = ssub.s32 2048, 2048
          %2942 = vsyncadd %s2932, %s2941
          %s2943 = smul.addr %s2939, 128
          %s2944 = scalar_lea.hbm %s15, %s2943
          %s2945 = sshll.u32 %s2935, 4
          %s2946 = int_to_ptr.vmem [resolvable:$true] %s2945
          %2951 = dma.vmem_to_hbm [thread:$0]  %s2946, 2048, %s2944, %s2932, 128, 128, 8
        $region116: #{tpu_custom_call.1} parent=79 // pred_fallthru
          _
      $region80: #{tpu_custom_call.1} parent=5 // pred_fallthru
        _
      %p2952 = scmp.le.s32.totalorder 2, %s29
      // Predicated region
      $region117: #{tpu_custom_call.1} parent=5 // pred_check
        %p2953 = pneg %p2952
      $region118: #{tpu_custom_call.1} parent=5 // pred_check_branch
        %2955 = sbr.rel (%p2953) target = $region120
      $region119: #{tpu_custom_call.1} parent=5 // pred_region
        %s2956 = ssub.s32 %s29, 2
        // Predicated region
        $region121: #{tpu_custom_call.1} parent=119 // pred_check
          %p2957 = pneg %p383
        $region122: #{tpu_custom_call.1} parent=119 // pred_check_branch
          %2959 = sbr.rel (%p2957) target = $region124
        $region123: #{tpu_custom_call.1} parent=119 // pred_region
          %s2960 = sand.u32 %s368, 1
          %s2961 = scalar_lea.sflag [#allocation4], %s2960
          %s2962 = sand.u32 %s368, 1
          %s2963 = smul.addr %s2962, 128
          %s2964 = scalar_lea.vmem [#allocation16], %s2963
          %2965 = dma.done %s2961, 2048
        $region124: #{tpu_custom_call.1} parent=119 // pred_fallthru
          _
      $region120: #{tpu_custom_call.1} parent=5 // pred_fallthru
        _
    $region6: #{tpu_custom_call.1} parent=1 // loop_footer
      %s33 = sadd.s32 1, %s29
    $region7: #{tpu_custom_call.1} parent=1 // loop_footer_branch
      %28 = sbr.rel target = $region3
    $region8: #{tpu_custom_call.1} parent=1 // loop_exit
      _
    %2966 = vsyncpa [#allocation3], 1
    %s2967 = scalar_lea.sflag [#allocation3], 1
    %2968 = vsyncpa %s2967, 1
    %2969 = vsyncpa [#allocation6], 1
    %2970 = vsyncpa [#allocation9], 1
    %2971 = vsyncpa [#allocation12], 1
    %2972 = vsyncpa [#allocation15], 1
    %2973 = vsyncpa [#allocation4], 1
    %s2974 = scalar_lea.sflag [#allocation4], 1
    %2975 = vsyncpa %s2974, 1

</llo_original>
